<compile_context>
chip_gen: v5e
topology: v5e:2x2
jax: 0.10.0
libtpu: 0.0.40
codegen_flags: <defaults>
</compile_context>

<pallas_src>
import functools
import math

import jax
import jax.numpy as jnp
from jax.experimental import pallas as pl
from jax.experimental.pallas import tpu as pltpu


# -----------------------------------------------------------------------------
# Generation-aware VMEM budget
# -----------------------------------------------------------------------------
def _phys_vmem_bytes():
    try:
        info = pltpu.get_tpu_info()
        cap = int(getattr(info, "vmem_capacity_bytes", 0) or 0)
        if cap > 0:
            return cap
    except Exception:
        pass
    return 64 << 20          # conservative default (v7x per-core VMEM)


_VMEM_PHYS = _phys_vmem_bytes()
_VMEM_LIMIT = max(32 << 20, min(int(_VMEM_PHYS * 3 // 4), 100 << 20))
_BLOCK_BUDGET = _VMEM_LIMIT // 3   # per-block budget (headroom for pipelining)


def _compiler_params(n_axes):
    return pltpu.CompilerParams(
        dimension_semantics=("parallel",) * n_axes,
        vmem_limit_bytes=int(_VMEM_LIMIT),
    )


# -----------------------------------------------------------------------------
# In-kernel helpers
# -----------------------------------------------------------------------------
def _dot_acc(w, rhs):
    """(Cout, Kc) x (Kc, M) bf16 matmul with f32 accumulation.

    Contractions deeper than 128 are split in two so the contraction never
    exceeds v5e's 128-deep MXU.
    """
    kc = w.shape[1]
    if kc <= 128:
        return jnp.dot(w, rhs, preferred_element_type=jnp.float32)
    h = (((kc + 1) // 2) + 7) // 8 * 8
    return (jnp.dot(w[:, :h], rhs[:h], preferred_element_type=jnp.float32) +
            jnp.dot(w[:, h:], rhs[h:], preferred_element_type=jnp.float32))


def _extend(x, K):
    """Append K-1 zero lanes so the last row's kw shifts stay in bounds."""
    if K == 1:
        return x
    c = x.shape[0]
    return jnp.concatenate([x, jnp.zeros((c, K - 1), x.dtype)], axis=1)


def _im2row(x, K, Wp, M):
    """Stack the K*K lane-shifted slices of a flattened padded canvas.

    x: (Cin, L), L >= (K-1)*Wp + (K-1) + M.  Returns (K*K*Cin, M): tap-major,
    channel-minor, matching the packed weight layout.
    """
    if K == 1:
        return x[:, :M]
    slices = [x[:, kh * Wp + kw: kh * Wp + kw + M]
              for kh in range(K) for kw in range(K)]
    return jnp.concatenate(slices, axis=0)


# -----------------------------------------------------------------------------
# Pallas kernels
# -----------------------------------------------------------------------------
def _conv_kernel(x_ref, w_ref, b_ref, o_ref, *, K, Wp, M, act):
    """Single stride-1 KxK conv on one flattened padded canvas.

    x_ref : (Cin, Lin)       bf16, Lin = (Ho + K - 1) * Wp
    w_ref : (Cout, K*K*Cin)  bf16 (resident)
    b_ref : (Cout, 1)        f32  (resident)
    o_ref : (Cout, M)        M = Ho * Wp  (spatial flattened in the lane axis)
    """
    x = _extend(x_ref[...], K)
    acc = _dot_acc(w_ref[...], _im2row(x, K, Wp, M)) + b_ref[...]
    if act == "relu":
        acc = jnp.maximum(acc, 0.0)
    o_ref[...] = acc.astype(o_ref.dtype)


def _conv_chain_kernel(*refs, L, H, Wp, acts):
    """L fused stride-1 3x3 pad-1 convs on one flattened padded canvas.

    refs = (x_ref, mask_ref, w_0, b_0, ..., w_{L-1}, b_{L-1}, o_ref)
    x_ref    : (Cin0, (H+2)*Wp)  bf16 zero-padded canvas
    mask_ref : (1, H*Wp)         bf16 (1 on valid columns, 0 on pad columns)
    o_ref    : (Cout_{L-1}, H*Wp)
    Intermediates are re-padded in VMEM; they never touch HBM.
    """
    x_ref, mask_ref = refs[0], refs[1]
    o_ref = refs[2 + 2 * L]
    M = H * Wp
    mask = mask_ref[...]
    z = x_ref[...]
    for l in range(L):
        w = refs[2 + 2 * l][...]
        b = refs[3 + 2 * l][...]
        h = _dot_acc(w, _im2row(_extend(z, 3), 3, Wp, M)) + b
        if acts[l] == "relu":
            h = jnp.maximum(h, 0.0)
        if l + 1 < L:
            # Zero the pad columns, then shift by Wp+1 so the valid pixels land
            # exactly in the interior of the next layer's zero-padded canvas.
            h = (h * mask).astype(jnp.bfloat16)
            c = h.shape[0]
            z = jnp.concatenate(
                [jnp.zeros((c, Wp + 1), jnp.bfloat16), h,
                 jnp.zeros((c, Wp - 1), jnp.bfloat16)], axis=1)
        else:
            o_ref[...] = h.astype(o_ref.dtype)


def _conv_tiled_kernel(x_hbm, w_ref, b_ref, o_ref, xbuf, sem, *, K, Wq, th, act):
    """Row-tiled single conv for inputs too large for one VMEM canvas.

    The padded flattened input stays in HBM (memory_space=pl.ANY); each grid
    step DMAs one overlapping (th + K - 1)-row slab, so halos are never
    materialised in HBM.
    TODO(synk): double-buffer the slab DMA across grid steps.
    """
    n = pl.program_id(0)
    t = pl.program_id(1)
    rows_in = th + K - 1
    start = pl.multiple_of(t * (th * Wq), th * Wq)
    cp = pltpu.make_async_copy(x_hbm.at[n, :, pl.ds(start, rows_in * Wq)],
                               xbuf, sem)
    cp.start()
    cp.wait()
    M = th * Wq
    x = _extend(xbuf[...], K)
    acc = _dot_acc(w_ref[...], _im2row(x, K, Wq, M)) + b_ref[...]
    if act == "relu":
        acc = jnp.maximum(acc, 0.0)
    o_ref[...] = acc.astype(o_ref.dtype)


# -----------------------------------------------------------------------------
# Host-side conv wrappers (NCHW, stride 1)
# -----------------------------------------------------------------------------
def _w_mat(w):
    """(Cout, Cin, K, K) -> (Cout, K*K*Cin) bf16, tap-major / channel-minor."""
    cout, cin, k, _ = w.shape
    return (jnp.transpose(w, (0, 2, 3, 1))
            .reshape(cout, k * k * cin).astype(jnp.bfloat16))


def _bias_col(b):
    return b.astype(jnp.float32).reshape(-1, 1)


def _pick_th(Ho, Wq, Cin, Cout, K, out_isz):
    """Largest multiple-of-8 row tile whose working set fits the budget."""
    best = 8
    th = 8
    while th <= Ho + 7:
        m_in = (th + K - 1) * Wq
        m_out = th * Wq
        need = (2 * Cin * m_in + 2 * 2 * Cout * m_out * out_isz
                + K * K * Cin * m_out * 2 + Cout * m_out * 4)
        if need <= _BLOCK_BUDGET:
            best = th
        th += 8
    return best


def conv2d(x, w, b, *, pad, act="none", out_dtype=jnp.bfloat16):
    """Stride-1 KxK conv (+bias, +optional ReLU), NCHW in / NCHW out."""
    N, Cin, H, W = x.shape
    Cout, Cin_w, K, _ = w.shape
    assert Cin_w == Cin, (w.shape, x.shape)
    Hp, Wp = H + 2 * pad, W + 2 * pad
    Ho, Wo = Hp - K + 1, Wp - K + 1

    xh = x.astype(jnp.bfloat16)
    if pad:
        xh = jnp.pad(xh, ((0, 0), (0, 0), (pad, pad), (pad, pad)))

    wm, bc = _w_mat(w), _bias_col(b)
    out_isz = jnp.dtype(out_dtype).itemsize
    M = Ho * Wp
    Lin = Hp * Wp
    need = (2 * 2 * Cin * Lin + 2 * Cout * M * out_isz
            + K * K * Cin * M * 2 + Cout * M * 4)

    if need <= _BLOCK_BUDGET:
        # Resident path: one flattened padded canvas per batch sample.
        xf = xh.reshape(N, Cin, Lin)
        flops = 2 * N * M * Cout * K * K * Cin
        out = pl.pallas_call(
            functools.partial(_conv_kernel, K=K, Wp=Wp, M=M, act=act),
            out_shape=jax.ShapeDtypeStruct((N, Cout, M), out_dtype),
            grid=(N,),
            in_specs=[
                pl.BlockSpec((None, Cin, Lin), lambda n: (n, 0, 0)),
                pl.BlockSpec((Cout, K * K * Cin), lambda n: (0, 0)),
                pl.BlockSpec((Cout, 1), lambda n: (0, 0)),
            ],
            out_specs=pl.BlockSpec((None, Cout, M), lambda n: (n, 0, 0)),
            compiler_params=_compiler_params(1),
            cost_estimate=pl.CostEstimate(
                flops=flops, transcendentals=0,
                bytes_accessed=xf.size * 2 + wm.size * 2 + N * Cout * M * out_isz),
        )(xf, wm, bc)
        out = out.reshape(N, Cout, Ho, Wp)
        return out[..., :Wo] if Wo != Wp else out

    # Row-tiled fallback for large images: lane width padded to a multiple of
    # 128 (lane-aligned tiled output blocks), rows padded to a whole tile.
    Wq = ((Wp + 127) // 128) * 128
    th = _pick_th(Ho, Wq, Cin, Cout, K, out_isz)
    nt = pl.cdiv(Ho, th)
    Hq = nt * th + K - 1
    xh = jnp.pad(xh, ((0, 0), (0, 0), (0, Hq - Hp), (0, Wq - Wp)))
    xf = xh.reshape(N, Cin, Hq * Wq)
    Mout = th * Wq
    flops = 2 * N * nt * Mout * Cout * K * K * Cin
    out = pl.pallas_call(
        functools.partial(_conv_tiled_kernel, K=K, Wq=Wq, th=th, act=act),
        out_shape=jax.ShapeDtypeStruct((N, Cout, nt * Mout), out_dtype),
        grid=(N, nt),
        in_specs=[
            pl.BlockSpec(memory_space=pl.ANY),
            pl.BlockSpec((Cout, K * K * Cin), lambda n, t: (0, 0)),
            pl.BlockSpec((Cout, 1), lambda n, t: (0, 0)),
        ],
        out_specs=pl.BlockSpec((None, Cout, Mout), lambda n, t: (n, 0, t)),
        scratch_shapes=[
            pltpu.VMEM((Cin, (th + K - 1) * Wq), jnp.bfloat16),
            pltpu.SemaphoreType.DMA(()),
        ],
        compiler_params=_compiler_params(2),
        cost_estimate=pl.CostEstimate(
            flops=flops, transcendentals=0,
            bytes_accessed=xf.size * 2 + wm.size * 2
            + N * Cout * nt * Mout * out_isz),
    )(xf, wm, bc)
    out = out.reshape(N, Cout, nt * th, Wq)
    return out[:, :, :Ho, :Wo]


def conv_chain(x, layers, *, out_dtype=jnp.bfloat16):
    """Chain of stride-1 3x3 pad-1 convs fused into one pallas_call.

    layers: sequence of (w (Cout, Cin, 3, 3), b (Cout,), act) tuples.  Falls
    back to per-layer conv2d calls when the fused working set does not fit
    the per-block VMEM budget.
    """
    L = len(layers)
    if L == 1:
        w, b, act = layers[0]
        return conv2d(x, w, b, pad=1, act=act, out_dtype=out_dtype)

    N, Cin, H, W = x.shape
    Wp, Hp = W + 2, H + 2
    M = H * Wp
    Lin = Hp * Wp
    CoutL = layers[-1][0].shape[0]
    out_isz = jnp.dtype(out_dtype).itemsize

    need = 0
    for (w, _, _) in layers:
        co, ci = int(w.shape[0]), int(w.shape[1])
        need = max(need, 2 * 2 * Cin * Lin + 2 * CoutL * M * out_isz
                   + 9 * ci * M * 2 + co * M * 4 + ci * Lin * 2)
    if need > _BLOCK_BUDGET:
        out = x
        for i, (w, b, act) in enumerate(layers):
            od = out_dtype if i == L - 1 else jnp.bfloat16
            out = conv2d(out, w, b, pad=1, act=act, out_dtype=od)
        return out

    xh = jnp.pad(x.astype(jnp.bfloat16), ((0, 0), (0, 0), (1, 1), (1, 1)))
    xf = xh.reshape(N, Cin, Lin)
    mask = ((jnp.arange(M, dtype=jnp.int32) % Wp) < W)
    mask = mask.astype(jnp.bfloat16).reshape(1, M)

    operands = [xf, mask]
    in_specs = [pl.BlockSpec((None, Cin, Lin), lambda n: (n, 0, 0)),
                pl.BlockSpec((1, M), lambda n: (0, 0))]
    acts = []
    flops = 0
    for (w, b, act) in layers:
        wm, bc = _w_mat(w), _bias_col(b)
        operands += [wm, bc]
        in_specs += [pl.BlockSpec(wm.shape, lambda n: (0, 0)),
                     pl.BlockSpec(bc.shape, lambda n: (0, 0))]
        acts.append(act)
        flops += 2 * N * M * int(w.shape[0]) * 9 * int(w.shape[1])

    out = pl.pallas_call(
        functools.partial(_conv_chain_kernel, L=L, H=H, Wp=Wp, acts=tuple(acts)),
        out_shape=jax.ShapeDtypeStruct((N, CoutL, M), out_dtype),
        grid=(N,),
        in_specs=in_specs,
        out_specs=pl.BlockSpec((None, CoutL, M), lambda n: (n, 0, 0)),
        compiler_params=_compiler_params(1),
        cost_estimate=pl.CostEstimate(
            flops=flops, transcendentals=0,
            bytes_accessed=xf.size * 2
            + sum(int(o.size) * o.dtype.itemsize for o in operands[1:])
            + N * CoutL * M * out_isz),
    )(*operands)
    out = out.reshape(N, CoutL, H, Wp)
    return out[..., :W]


def conv2d_stride2(x, w, b, *, act="none", out_dtype=jnp.bfloat16):
    """KxK stride-2 pad-1 conv as a stride-1 2x2 conv on a space-to-depth
    input (no strided gathers, no wasted taps)."""
    N, Cin, H, W = x.shape
    assert H % 2 == 0 and W % 2 == 0, "stride-2 path assumes even H, W"
    Cout, _, K, _ = w.shape
    assert K <= 4
    xp = jnp.pad(x.astype(jnp.bfloat16), ((0, 0), (0, 0), (1, 1), (1, 1)))
    Hp, Wp = H + 2, W + 2
    xs = xp.reshape(N, Cin, Hp // 2, 2, Wp // 2, 2)
    xs = xs.transpose(0, 3, 5, 1, 2, 4).reshape(N, 4 * Cin, Hp // 2, Wp // 2)
    we = jnp.zeros((Cout, 2, 2, Cin, 2, 2), w.dtype)
    for dh in range(2):
        for qy in range(2):
            kh = 2 * dh + qy
            if kh >= K:
                continue
            for dw in range(2):
                for qx in range(2):
                    kw = 2 * dw + qx
                    if kw >= K:
                        continue
                    we = we.at[:, qy, qx, :, dh, dw].set(w[:, :, kh, kw])
    we = we.reshape(Cout, 4 * Cin, 2, 2)
    return conv2d(xs, we, b, pad=0, act=act, out_dtype=out_dtype)


def convT_as_conv3x3(w, b):
    """ConvTranspose2d(Cin, Cout, 4, stride=2, padding=1) == a stride-1 3x3
    pad-1 conv producing 4*Cout sub-pixel channels + a pixel shuffle."""
    Cin, Cout = w.shape[0], w.shape[1]
    rmap = {0: {0: 3, 1: 1}, 1: {1: 2, 2: 0}}   # phase -> {3x3 tap: convT tap}
    we = jnp.zeros((2, 2, Cout, Cin, 3, 3), w.dtype)
    for py in (0, 1):
        for kh3, a in rmap[py].items():
            for px in (0, 1):
                for kw3, bb in rmap[px].items():
                    we = we.at[py, px, :, :, kh3, kw3].set(
                        jnp.transpose(w[:, :, a, bb]))
    we = we.reshape(4 * Cout, Cin, 3, 3)
    return we, jnp.tile(b, 4)


def pixel_shuffle2(y, Cout):
    N, _, H, W = y.shape
    y = y.reshape(N, 2, 2, Cout, H, W).transpose(0, 3, 4, 1, 5, 2)
    return y.reshape(N, Cout, 2 * H, 2 * W)


# -----------------------------------------------------------------------------
# Modulated deformable conv (DCNv2), deformable_groups == in_channels.
# -----------------------------------------------------------------------------
def modulated_deform_conv(x, offset, mask, w, b, *, K, pad, act="relu"):
    """Bilinear corner gather (bf16, batched take_along_axis) + Pallas 1x1
    reduction over the C*K*K expanded channels (+bias, +ReLU).
    TODO(synk): fuse the gather/bilinear weighting into the Pallas kernel so
    the K*K-expanded tensor never materialises in HBM.
    """
    N, C, H, W = x.shape
    K2 = K * K
    off = offset.astype(jnp.float32).reshape(N, C, K2, 2, H, W)
    msk = mask.astype(jnp.float32).reshape(N, C, K2, H, W)

    kh = (jnp.arange(K2) // K).astype(jnp.float32).reshape(1, 1, K2, 1, 1)
    kw = (jnp.arange(K2) % K).astype(jnp.float32).reshape(1, 1, K2, 1, 1)
    hh = jnp.arange(H, dtype=jnp.float32).reshape(1, 1, 1, H, 1)
    ww = jnp.arange(W, dtype=jnp.float32).reshape(1, 1, 1, 1, W)
    y_pos = hh - pad + kh + off[:, :, :, 0]
    x_pos = ww - pad + kw + off[:, :, :, 1]

    planes = x.astype(jnp.bfloat16).reshape(N * C, H * W)

    def corner(yy, xx):
        valid = (yy >= 0) & (yy <= H - 1) & (xx >= 0) & (xx <= W - 1)
        yc = jnp.clip(yy, 0, H - 1).astype(jnp.int32)
        xc = jnp.clip(xx, 0, W - 1).astype(jnp.int32)
        idx = (yc * W + xc).reshape(N * C, K2 * H * W)
        v = jnp.take_along_axis(planes, idx, axis=1).reshape(N, C, K2, H, W)
        return jnp.where(valid, v.astype(jnp.float32), 0.0)

    y0 = jnp.floor(y_pos)
    x0 = jnp.floor(x_pos)
    y1 = y0 + 1.0
    x1 = x0 + 1.0
    wy1, wx1 = y_pos - y0, x_pos - x0
    wy0, wx0 = 1.0 - wy1, 1.0 - wx1
    sampled = (wy0 * wx0 * corner(y0, x0) + wy0 * wx1 * corner(y0, x1)
               + wy1 * wx0 * corner(y1, x0) + wy1 * wx1 * corner(y1, x1))
    sampled = (sampled * msk).astype(jnp.bfloat16)

    cols = sampled.reshape(N, C * K2, H, W)
    Cout = w.shape[0]
    wk = w.reshape(Cout, C * K2, 1, 1)
    return conv2d(cols, wk, b, pad=0, act=act, out_dtype=jnp.bfloat16)


# -----------------------------------------------------------------------------
# Parameter construction (deterministic, synthetic, PyTorch layouts)
# -----------------------------------------------------------------------------
def _conv_p(key, cout, cin, k):
    k1, k2 = jax.random.split(key)
    fan = cin * k * k
    w = jax.random.normal(k1, (cout, cin, k, k), jnp.float32) / math.sqrt(fan)
    b = 0.01 * jax.random.normal(k2, (cout,), jnp.float32)
    return (w, b)


def _convT_p(key, cin, cout, k):
    k1, k2 = jax.random.split(key)
    fan = cin * k * k
    w = jax.random.normal(k1, (cin, cout, k, k), jnp.float32) / math.sqrt(fan)
    b = 0.01 * jax.random.normal(k2, (cout,), jnp.float32)
    return (w, b)


def make_stdf_params(key, in_nc, out_nc, nf, nb, deform_ks):
    keys = iter(jax.random.split(key, 64))
    p = {}
    p["in_conv"] = _conv_p(next(keys), nf, in_nc, 3)
    for i in range(1, nb):
        p[f"dn_conv{i}"] = [_conv_p(next(keys), nf, nf, 3),
                            _conv_p(next(keys), nf, nf, 3)]
        p[f"up_conv{i}"] = [_conv_p(next(keys), nf, 2 * nf, 3),
                            _convT_p(next(keys), nf, nf, 4)]
    p["tr_conv"] = [_conv_p(next(keys), nf, nf, 3),
                    _conv_p(next(keys), nf, nf, 3),
                    _convT_p(next(keys), nf, nf, 4)]
    p["out_conv"] = _conv_p(next(keys), nf, nf, 3)
    p["offset_mask"] = _conv_p(next(keys), in_nc * 3 * deform_ks * deform_ks, nf, 3)
    p["deform_conv"] = _conv_p(next(keys), out_nc, in_nc, deform_ks)
    return p


def make_plaincnn_params(key, in_nc, nf, nb, out_nc):
    keys = iter(jax.random.split(key, 32))
    return {"in_conv": _conv_p(next(keys), nf, in_nc, 3),
            "hid_conv": [_conv_p(next(keys), nf, nf, 3) for _ in range(nb - 2)],
            "out_conv": _conv_p(next(keys), out_nc, nf, 3)}


# -----------------------------------------------------------------------------
# Forward passes (NCHW)
# -----------------------------------------------------------------------------
def stdf_forward(p, x, *, in_nc, nb, deform_ks):
    K2 = deform_ks * deform_ks
    out_lst = [conv2d(x, *p["in_conv"], pad=1, act="relu")]
    for i in range(1, nb):
        dn = p[f"dn_conv{i}"]
        h = conv2d_stride2(out_lst[i - 1], *dn[0], act="relu")
        # TODO(synk): fuse the stride-2 and trailing 3x3 conv (mixed geometry).
        h = conv2d(h, *dn[1], pad=1, act="relu")
        out_lst.append(h)

    tr = p["tr_conv"]
    out = conv2d_stride2(out_lst[-1], *tr[0], act="relu")
    wT, bT = convT_as_conv3x3(*tr[2])
    out = conv_chain(out, [(tr[1][0], tr[1][1], "relu"), (wT, bT, "relu")])
    out = pixel_shuffle2(out, tr[2][0].shape[1])

    for i in range(nb - 1, 0, -1):
        up = p[f"up_conv{i}"]
        wT, bT = convT_as_conv3x3(*up[1])
        h = jnp.concatenate([out, out_lst[i]], axis=1)
        h = conv_chain(h, [(up[0][0], up[0][1], "relu"), (wT, bT, "relu")])
        out = pixel_shuffle2(h, up[1][0].shape[1])

    # out_conv (+ReLU) and offset_mask fused into a single kernel.
    off_msk = conv_chain(
        out,
        [(p["out_conv"][0], p["out_conv"][1], "relu"),
         (p["offset_mask"][0], p["offset_mask"][1], "none")],
        out_dtype=jnp.float32)
    off = off_msk[:, :in_nc * 2 * K2]
    msk = jax.nn.sigmoid(off_msk[:, in_nc * 2 * K2:])
    fused = modulated_deform_conv(x, off, msk, *p["deform_conv"],
                                  K=deform_ks, pad=deform_ks // 2, act="relu")
    return fused


def plaincnn_forward(p, x):
    layers = [(p["in_conv"][0], p["in_conv"][1], "relu")]
    layers += [(w, b, "relu") for (w, b) in p["hid_conv"]]
    layers += [(p["out_conv"][0], p["out_conv"][1], "none")]
    return conv_chain(x, layers, out_dtype=jnp.float32)


def rfda_forward(params, cfg, x, y=None):
    out = stdf_forward(params["ffnet"], x, in_nc=cfg["ff_in_nc"],
                       nb=cfg["nb"], deform_ks=cfg["deform_ks"])
    if y is None:
        y = jnp.zeros_like(out)
    org = out
    out = jnp.concatenate([out, y], axis=1)
    out = stdf_forward(params["wpnet"], out, in_nc=cfg["stdf_out_nc"] * 2,
                       nb=cfg["nb"], deform_ks=1)
    cat = jnp.concatenate([org, out], axis=1)
    f = conv_chain(cat, [(params["fuse"][0][0], params["fuse"][0][1], "relu"),
                         (params["fuse"][1][0], params["fuse"][1][1], "relu")])
    out = f.astype(jnp.float32) * 0.2 + org.astype(jnp.float32)
    hidden = out

    q = plaincnn_forward(params["qenet"], out)
    idxs = jnp.array([cfg["radius"] + i * (2 * cfg["radius"] + 1)
                      for i in range(cfg["color"])])
    res = q + x[:, idxs]
    return res, hidden


# -----------------------------------------------------------------------------
# Main
# -----------------------------------------------------------------------------
if __name__ == "__main__":
    opts = {
        "stdf": {"in_nc": 1, "out_nc": 8, "nf": 8, "nb": 2, "deform_ks": 3},
        "qenet": {"in_nc": 8, "nf": 8, "nb": 3, "out_nc": 1,
                  "netname": "default", "att": False},
    }
    radius = 3
    input_len = 2 * radius + 1            # 7
    color = opts["qenet"]["out_nc"]       # 1
    ff_in_nc = opts["stdf"]["in_nc"] * input_len  # 7

    cfg = {
        "radius": radius,
        "color": color,
        "ff_in_nc": ff_in_nc,
        "stdf_out_nc": opts["stdf"]["out_nc"],
        "nb": opts["stdf"]["nb"],
        "deform_ks": opts["stdf"]["deform_ks"],
    }

    root = jax.random.PRNGKey(0)
    k_ff, k_wp, k_fuse1, k_fuse2, k_qe, k_x = jax.random.split(root, 6)

    params = {
        "ffnet": make_stdf_params(k_ff, in_nc=ff_in_nc,
                                  out_nc=opts["stdf"]["out_nc"],
                                  nf=opts["stdf"]["nf"], nb=opts["stdf"]["nb"],
                                  deform_ks=opts["stdf"]["deform_ks"]),
        "wpnet": make_stdf_params(k_wp, in_nc=opts["stdf"]["out_nc"] * 2,
                                  out_nc=opts["stdf"]["out_nc"],
                                  nf=opts["stdf"]["nf"], nb=opts["stdf"]["nb"],
                                  deform_ks=1),
        "fuse": [
            _conv_p(k_fuse1, opts["stdf"]["out_nc"], opts["stdf"]["out_nc"] * 2, 3),
            _conv_p(k_fuse2, opts["stdf"]["out_nc"], opts["stdf"]["out_nc"], 3),
        ],
        "qenet": make_plaincnn_params(k_qe, in_nc=opts["qenet"]["in_nc"],
                                      nf=opts["qenet"]["nf"],
                                      nb=opts["qenet"]["nb"],
                                      out_nc=opts["qenet"]["out_nc"]),
    }

    # x: (N, in_nc * input_len, H, W) in NCHW, matching the PyTorch module.
    N, C, H, W = 2, ff_in_nc, 16, 16
    x = jax.random.normal(k_x, (N, C, H, W), jnp.float32)

    fwd = jax.jit(functools.partial(rfda_forward, params, cfg))
    out, hidden = fwd(x)
    jax.block_until_ready(out)
    jax.block_until_ready(hidden)

    assert out.shape == (N, color, H, W), out.shape
    assert hidden.shape == (N, opts["stdf"]["out_nc"], H, W), hidden.shape
    assert jnp.all(jnp.isfinite(out)) and jnp.all(jnp.isfinite(hidden))
    print("KERNEL_OK")
</pallas_src>

<mosaic_0001>
module attributes {stable_mosaic.version = 11 : i64} {
  func.func @_conv_kernel(%arg0: i32, %arg1: memref<1x7x324xbf16, #tpu.memory_space<vmem>>, %arg2: memref<8x63xbf16, #tpu.memory_space<vmem>>, %arg3: memref<8x1xf32, #tpu.memory_space<vmem>>, %arg4: memref<1x8x288xbf16, #tpu.memory_space<vmem>>) attributes {dimension_semantics = [#tpu.dimension_semantics<parallel>], iteration_bounds = array<i64: 2>, scalar_prefetch = 0 : i64, scratch_operands = 0 : i64, tpu.core_type = #tpu.core_type<tc>, window_params = [{transform_indices = @transform_0, window_bounds = array<i64: 1, 7, 324>}, {pipeline_mode = #tpu.pipeline_mode<synchronous>, transform_indices = @transform_1, window_bounds = array<i64: 8, 63>}, {pipeline_mode = #tpu.pipeline_mode<synchronous>, transform_indices = @transform_2, window_bounds = array<i64: 8, 1>}, {transform_indices = @transform_3, window_bounds = array<i64: 1, 8, 288>}]} {
    %c0 = arith.constant 0 : index
    %c0_0 = arith.constant 0 : index
    %c0_1 = arith.constant 0 : index
    %0 = vector.load %arg1[%c0, %c0_0, %c0_1] : memref<1x7x324xbf16, #tpu.memory_space<vmem>>, vector<1x7x324xbf16>
    %1 = vector.shape_cast %0 : vector<1x7x324xbf16> to vector<7x324xbf16>
    %cst = arith.constant 0.000000e+00 : bf16
    %2 = vector.broadcast %cst : bf16 to vector<7x2xbf16>
    %3 = tpu.concatenate %1, %2 in 1 : vector<7x324xbf16>, vector<7x2xbf16> -> vector<7x326xbf16>
    %c0_2 = arith.constant 0 : index
    %c0_3 = arith.constant 0 : index
    %4 = vector.load %arg2[%c0_2, %c0_3] : memref<8x63xbf16, #tpu.memory_space<vmem>>, vector<8x63xbf16>
    %5 = vector.extract_strided_slice %3 {offsets = [0, 0], sizes = [7, 288], strides = [1, 1]} : vector<7x326xbf16> to vector<7x288xbf16>
    %6 = vector.extract_strided_slice %3 {offsets = [0, 1], sizes = [7, 288], strides = [1, 1]} : vector<7x326xbf16> to vector<7x288xbf16>
    %7 = vector.extract_strided_slice %3 {offsets = [0, 2], sizes = [7, 288], strides = [1, 1]} : vector<7x326xbf16> to vector<7x288xbf16>
    %8 = vector.extract_strided_slice %3 {offsets = [0, 18], sizes = [7, 288], strides = [1, 1]} : vector<7x326xbf16> to vector<7x288xbf16>
    %9 = vector.extract_strided_slice %3 {offsets = [0, 19], sizes = [7, 288], strides = [1, 1]} : vector<7x326xbf16> to vector<7x288xbf16>
    %10 = vector.extract_strided_slice %3 {offsets = [0, 20], sizes = [7, 288], strides = [1, 1]} : vector<7x326xbf16> to vector<7x288xbf16>
    %11 = vector.extract_strided_slice %3 {offsets = [0, 36], sizes = [7, 288], strides = [1, 1]} : vector<7x326xbf16> to vector<7x288xbf16>
    %12 = vector.extract_strided_slice %3 {offsets = [0, 37], sizes = [7, 288], strides = [1, 1]} : vector<7x326xbf16> to vector<7x288xbf16>
    %13 = vector.extract_strided_slice %3 {offsets = [0, 38], sizes = [7, 288], strides = [1, 1]} : vector<7x326xbf16> to vector<7x288xbf16>
    %14 = tpu.concatenate %5, %6, %7, %8, %9, %10, %11, %12, %13 in 0 : vector<7x288xbf16>, vector<7x288xbf16>, vector<7x288xbf16>, vector<7x288xbf16>, vector<7x288xbf16>, vector<7x288xbf16>, vector<7x288xbf16>, vector<7x288xbf16>, vector<7x288xbf16> -> vector<63x288xbf16>
    %cst_4 = arith.constant dense<0.000000e+00> : vector<8x288xf32>
    %15 = tpu.matmul %4, %14, %cst_4 {dimension_numbers = #tpu.dot_dimension_numbers<[1], [0], [0], [1], [0, 0, 1, 1], [], []>} : vector<8x63xbf16>, vector<63x288xbf16>, vector<8x288xf32> -> vector<8x288xf32>
    %c0_5 = arith.constant 0 : index
    %c0_6 = arith.constant 0 : index
    %16 = vector.load %arg3[%c0_5, %c0_6] : memref<8x1xf32, #tpu.memory_space<vmem>>, vector<8x1xf32>
    %17 = vector.broadcast %16 : vector<8x1xf32> to vector<8x288xf32>
    %18 = arith.addf %15, %17 : vector<8x288xf32>
    %cst_7 = arith.constant 0.000000e+00 : f32
    %19 = vector.broadcast %cst_7 : f32 to vector<8x288xf32>
    %20 = arith.maximumf %18, %19 : vector<8x288xf32>
    %21 = arith.truncf %20 : vector<8x288xf32> to vector<8x288xbf16>
    %c0_8 = arith.constant 0 : index
    %c0_9 = arith.constant 0 : index
    %c0_10 = arith.constant 0 : index
    %22 = vector.load %arg4[%c0_8, %c0_9, %c0_10] : memref<1x8x288xbf16, #tpu.memory_space<vmem>>, vector<1x8x288xbf16>
    %23 = vector.shape_cast %22 : vector<1x8x288xbf16> to vector<8x288xbf16>
    %24 = vector.shape_cast %21 : vector<8x288xbf16> to vector<1x8x288xbf16>
    tpu.vector_store %arg4[%c0_8, %c0_9, %c0_10], %24 {strides = array<i32>} : memref<1x8x288xbf16, #tpu.memory_space<vmem>>, vector<1x8x288xbf16>,
    return
  }
  func.func @transform_0(%arg0: i32) -> (i32, i32, i32) {
    %c0_i32 = arith.constant 0 : i32
    %c0_i32_0 = arith.constant 0 : i32
    %c0_i32_1 = arith.constant 0 : i32
    return %arg0, %c0_i32, %c0_i32_0 : i32, i32, i32
  }
  func.func @transform_1(%arg0: i32) -> (i32, i32) {
    %c0_i32 = arith.constant 0 : i32
    %c0_i32_0 = arith.constant 0 : i32
    %c0_i32_1 = arith.constant 0 : i32
    return %c0_i32, %c0_i32_0 : i32, i32
  }
  func.func @transform_2(%arg0: i32) -> (i32, i32) {
    %c0_i32 = arith.constant 0 : i32
    %c0_i32_0 = arith.constant 0 : i32
    %c0_i32_1 = arith.constant 0 : i32
    return %c0_i32, %c0_i32_0 : i32, i32
  }
  func.func @transform_3(%arg0: i32) -> (i32, i32, i32) {
    %c0_i32 = arith.constant 0 : i32
    %c0_i32_0 = arith.constant 0 : i32
    %c0_i32_1 = arith.constant 0 : i32
    return %arg0, %c0_i32, %c0_i32_0 : i32, i32, i32
  }
}

module attributes {stable_mosaic.version = 11 : i64} {
  func.func @_conv_kernel(%arg0: i32, %arg1: memref<1x32x81xbf16, #tpu.memory_space<vmem>>, %arg2: memref<8x128xbf16, #tpu.memory_space<vmem>>, %arg3: memref<8x1xf32, #tpu.memory_space<vmem>>, %arg4: memref<1x8x72xbf16, #tpu.memory_space<vmem>>) attributes {dimension_semantics = [#tpu.dimension_semantics<parallel>], iteration_bounds = array<i64: 2>, scalar_prefetch = 0 : i64, scratch_operands = 0 : i64, tpu.core_type = #tpu.core_type<tc>, window_params = [{transform_indices = @transform_0, window_bounds = array<i64: 1, 32, 81>}, {pipeline_mode = #tpu.pipeline_mode<synchronous>, transform_indices = @transform_1, window_bounds = array<i64: 8, 128>}, {pipeline_mode = #tpu.pipeline_mode<synchronous>, transform_indices = @transform_2, window_bounds = array<i64: 8, 1>}, {transform_indices = @transform_3, window_bounds = array<i64: 1, 8, 72>}]} {
    %c0 = arith.constant 0 : index
    %c0_0 = arith.constant 0 : index
    %c0_1 = arith.constant 0 : index
    %0 = vector.load %arg1[%c0, %c0_0, %c0_1] : memref<1x32x81xbf16, #tpu.memory_space<vmem>>, vector<1x32x81xbf16>
    %1 = vector.shape_cast %0 : vector<1x32x81xbf16> to vector<32x81xbf16>
    %cst = arith.constant 0.000000e+00 : bf16
    %2 = vector.broadcast %cst : bf16 to vector<32x1xbf16>
    %3 = tpu.concatenate %1, %2 in 1 : vector<32x81xbf16>, vector<32x1xbf16> -> vector<32x82xbf16>
    %c0_2 = arith.constant 0 : index
    %c0_3 = arith.constant 0 : index
    %4 = vector.load %arg2[%c0_2, %c0_3] : memref<8x128xbf16, #tpu.memory_space<vmem>>, vector<8x128xbf16>
    %5 = vector.extract_strided_slice %3 {offsets = [0, 0], sizes = [32, 72], strides = [1, 1]} : vector<32x82xbf16> to vector<32x72xbf16>
    %6 = vector.extract_strided_slice %3 {offsets = [0, 1], sizes = [32, 72], strides = [1, 1]} : vector<32x82xbf16> to vector<32x72xbf16>
    %7 = vector.extract_strided_slice %3 {offsets = [0, 9], sizes = [32, 72], strides = [1, 1]} : vector<32x82xbf16> to vector<32x72xbf16>
    %8 = vector.extract_strided_slice %3 {offsets = [0, 10], sizes = [32, 72], strides = [1, 1]} : vector<32x82xbf16> to vector<32x72xbf16>
    %9 = tpu.concatenate %5, %6, %7, %8 in 0 : vector<32x72xbf16>, vector<32x72xbf16>, vector<32x72xbf16>, vector<32x72xbf16> -> vector<128x72xbf16>
    %cst_4 = arith.constant dense<0.000000e+00> : vector<8x72xf32>
    %10 = tpu.matmul %4, %9, %cst_4 {dimension_numbers = #tpu.dot_dimension_numbers<[1], [0], [0], [1], [0, 0, 1, 1], [], []>} : vector<8x128xbf16>, vector<128x72xbf16>, vector<8x72xf32> -> vector<8x72xf32>
    %c0_5 = arith.constant 0 : index
    %c0_6 = arith.constant 0 : index
    %11 = vector.load %arg3[%c0_5, %c0_6] : memref<8x1xf32, #tpu.memory_space<vmem>>, vector<8x1xf32>
    %12 = vector.broadcast %11 : vector<8x1xf32> to vector<8x72xf32>
    %13 = arith.addf %10, %12 : vector<8x72xf32>
    %cst_7 = arith.constant 0.000000e+00 : f32
    %14 = vector.broadcast %cst_7 : f32 to vector<8x72xf32>
    %15 = arith.maximumf %13, %14 : vector<8x72xf32>
    %16 = arith.truncf %15 : vector<8x72xf32> to vector<8x72xbf16>
    %c0_8 = arith.constant 0 : index
    %c0_9 = arith.constant 0 : index
    %c0_10 = arith.constant 0 : index
    %17 = vector.load %arg4[%c0_8, %c0_9, %c0_10] : memref<1x8x72xbf16, #tpu.memory_space<vmem>>, vector<1x8x72xbf16>
    %18 = vector.shape_cast %17 : vector<1x8x72xbf16> to vector<8x72xbf16>
    %19 = vector.shape_cast %16 : vector<8x72xbf16> to vector<1x8x72xbf16>
    tpu.vector_store %arg4[%c0_8, %c0_9, %c0_10], %19 {strides = array<i32>} : memref<1x8x72xbf16, #tpu.memory_space<vmem>>, vector<1x8x72xbf16>,
    return
  }
  func.func @transform_0(%arg0: i32) -> (i32, i32, i32) {
    %c0_i32 = arith.constant 0 : i32
    %c0_i32_0 = arith.constant 0 : i32
    %c0_i32_1 = arith.constant 0 : i32
    return %arg0, %c0_i32, %c0_i32_0 : i32, i32, i32
  }
  func.func @transform_1(%arg0: i32) -> (i32, i32) {
    %c0_i32 = arith.constant 0 : i32
    %c0_i32_0 = arith.constant 0 : i32
    %c0_i32_1 = arith.constant 0 : i32
    return %c0_i32, %c0_i32_0 : i32, i32
  }
  func.func @transform_2(%arg0: i32) -> (i32, i32) {
    %c0_i32 = arith.constant 0 : i32
    %c0_i32_0 = arith.constant 0 : i32
    %c0_i32_1 = arith.constant 0 : i32
    return %c0_i32, %c0_i32_0 : i32, i32
  }
  func.func @transform_3(%arg0: i32) -> (i32, i32, i32) {
    %c0_i32 = arith.constant 0 : i32
    %c0_i32_0 = arith.constant 0 : i32
    %c0_i32_1 = arith.constant 0 : i32
    return %arg0, %c0_i32, %c0_i32_0 : i32, i32, i32
  }
}

module attributes {stable_mosaic.version = 11 : i64} {
  func.func @_conv_kernel(%arg0: i32, %arg1: memref<1x8x100xbf16, #tpu.memory_space<vmem>>, %arg2: memref<8x72xbf16, #tpu.memory_space<vmem>>, %arg3: memref<8x1xf32, #tpu.memory_space<vmem>>, %arg4: memref<1x8x80xbf16, #tpu.memory_space<vmem>>) attributes {dimension_semantics = [#tpu.dimension_semantics<parallel>], iteration_bounds = array<i64: 2>, scalar_prefetch = 0 : i64, scratch_operands = 0 : i64, tpu.core_type = #tpu.core_type<tc>, window_params = [{transform_indices = @transform_0, window_bounds = array<i64: 1, 8, 100>}, {pipeline_mode = #tpu.pipeline_mode<synchronous>, transform_indices = @transform_1, window_bounds = array<i64: 8, 72>}, {pipeline_mode = #tpu.pipeline_mode<synchronous>, transform_indices = @transform_2, window_bounds = array<i64: 8, 1>}, {transform_indices = @transform_3, window_bounds = array<i64: 1, 8, 80>}]} {
    %c0 = arith.constant 0 : index
    %c0_0 = arith.constant 0 : index
    %c0_1 = arith.constant 0 : index
    %0 = vector.load %arg1[%c0, %c0_0, %c0_1] : memref<1x8x100xbf16, #tpu.memory_space<vmem>>, vector<1x8x100xbf16>
    %1 = vector.shape_cast %0 : vector<1x8x100xbf16> to vector<8x100xbf16>
    %cst = arith.constant 0.000000e+00 : bf16
    %2 = vector.broadcast %cst : bf16 to vector<8x2xbf16>
    %3 = tpu.concatenate %1, %2 in 1 : vector<8x100xbf16>, vector<8x2xbf16> -> vector<8x102xbf16>
    %c0_2 = arith.constant 0 : index
    %c0_3 = arith.constant 0 : index
    %4 = vector.load %arg2[%c0_2, %c0_3] : memref<8x72xbf16, #tpu.memory_space<vmem>>, vector<8x72xbf16>
    %5 = vector.extract_strided_slice %3 {offsets = [0, 0], sizes = [8, 80], strides = [1, 1]} : vector<8x102xbf16> to vector<8x80xbf16>
    %6 = vector.extract_strided_slice %3 {offsets = [0, 1], sizes = [8, 80], strides = [1, 1]} : vector<8x102xbf16> to vector<8x80xbf16>
    %7 = vector.extract_strided_slice %3 {offsets = [0, 2], sizes = [8, 80], strides = [1, 1]} : vector<8x102xbf16> to vector<8x80xbf16>
    %8 = vector.extract_strided_slice %3 {offsets = [0, 10], sizes = [8, 80], strides = [1, 1]} : vector<8x102xbf16> to vector<8x80xbf16>
    %9 = vector.extract_strided_slice %3 {offsets = [0, 11], sizes = [8, 80], strides = [1, 1]} : vector<8x102xbf16> to vector<8x80xbf16>
    %10 = vector.extract_strided_slice %3 {offsets = [0, 12], sizes = [8, 80], strides = [1, 1]} : vector<8x102xbf16> to vector<8x80xbf16>
    %11 = vector.extract_strided_slice %3 {offsets = [0, 20], sizes = [8, 80], strides = [1, 1]} : vector<8x102xbf16> to vector<8x80xbf16>
    %12 = vector.extract_strided_slice %3 {offsets = [0, 21], sizes = [8, 80], strides = [1, 1]} : vector<8x102xbf16> to vector<8x80xbf16>
    %13 = vector.extract_strided_slice %3 {offsets = [0, 22], sizes = [8, 80], strides = [1, 1]} : vector<8x102xbf16> to vector<8x80xbf16>
    %14 = tpu.concatenate %5, %6, %7, %8, %9, %10, %11, %12, %13 in 0 : vector<8x80xbf16>, vector<8x80xbf16>, vector<8x80xbf16>, vector<8x80xbf16>, vector<8x80xbf16>, vector<8x80xbf16>, vector<8x80xbf16>, vector<8x80xbf16>, vector<8x80xbf16> -> vector<72x80xbf16>
    %cst_4 = arith.constant dense<0.000000e+00> : vector<8x80xf32>
    %15 = tpu.matmul %4, %14, %cst_4 {dimension_numbers = #tpu.dot_dimension_numbers<[1], [0], [0], [1], [0, 0, 1, 1], [], []>} : vector<8x72xbf16>, vector<72x80xbf16>, vector<8x80xf32> -> vector<8x80xf32>
    %c0_5 = arith.constant 0 : index
    %c0_6 = arith.constant 0 : index
    %16 = vector.load %arg3[%c0_5, %c0_6] : memref<8x1xf32, #tpu.memory_space<vmem>>, vector<8x1xf32>
    %17 = vector.broadcast %16 : vector<8x1xf32> to vector<8x80xf32>
    %18 = arith.addf %15, %17 : vector<8x80xf32>
    %cst_7 = arith.constant 0.000000e+00 : f32
    %19 = vector.broadcast %cst_7 : f32 to vector<8x80xf32>
    %20 = arith.maximumf %18, %19 : vector<8x80xf32>
    %21 = arith.truncf %20 : vector<8x80xf32> to vector<8x80xbf16>
    %c0_8 = arith.constant 0 : index
    %c0_9 = arith.constant 0 : index
    %c0_10 = arith.constant 0 : index
    %22 = vector.load %arg4[%c0_8, %c0_9, %c0_10] : memref<1x8x80xbf16, #tpu.memory_space<vmem>>, vector<1x8x80xbf16>
    %23 = vector.shape_cast %22 : vector<1x8x80xbf16> to vector<8x80xbf16>
    %24 = vector.shape_cast %21 : vector<8x80xbf16> to vector<1x8x80xbf16>
    tpu.vector_store %arg4[%c0_8, %c0_9, %c0_10], %24 {strides = array<i32>} : memref<1x8x80xbf16, #tpu.memory_space<vmem>>, vector<1x8x80xbf16>,
    return
  }
  func.func @transform_0(%arg0: i32) -> (i32, i32, i32) {
    %c0_i32 = arith.constant 0 : i32
    %c0_i32_0 = arith.constant 0 : i32
    %c0_i32_1 = arith.constant 0 : i32
    return %arg0, %c0_i32, %c0_i32_0 : i32, i32, i32
  }
  func.func @transform_1(%arg0: i32) -> (i32, i32) {
    %c0_i32 = arith.constant 0 : i32
    %c0_i32_0 = arith.constant 0 : i32
    %c0_i32_1 = arith.constant 0 : i32
    return %c0_i32, %c0_i32_0 : i32, i32
  }
  func.func @transform_2(%arg0: i32) -> (i32, i32) {
    %c0_i32 = arith.constant 0 : i32
    %c0_i32_0 = arith.constant 0 : i32
    %c0_i32_1 = arith.constant 0 : i32
    return %c0_i32, %c0_i32_0 : i32, i32
  }
  func.func @transform_3(%arg0: i32) -> (i32, i32, i32) {
    %c0_i32 = arith.constant 0 : i32
    %c0_i32_0 = arith.constant 0 : i32
    %c0_i32_1 = arith.constant 0 : i32
    return %arg0, %c0_i32, %c0_i32_0 : i32, i32, i32
  }
}

module attributes {stable_mosaic.version = 11 : i64} {
  func.func @_conv_kernel(%arg0: i32, %arg1: memref<1x32x25xbf16, #tpu.memory_space<vmem>>, %arg2: memref<8x128xbf16, #tpu.memory_space<vmem>>, %arg3: memref<8x1xf32, #tpu.memory_space<vmem>>, %arg4: memref<1x8x20xbf16, #tpu.memory_space<vmem>>) attributes {dimension_semantics = [#tpu.dimension_semantics<parallel>], iteration_bounds = array<i64: 2>, scalar_prefetch = 0 : i64, scratch_operands = 0 : i64, tpu.core_type = #tpu.core_type<tc>, window_params = [{transform_indices = @transform_0, window_bounds = array<i64: 1, 32, 25>}, {pipeline_mode = #tpu.pipeline_mode<synchronous>, transform_indices = @transform_1, window_bounds = array<i64: 8, 128>}, {pipeline_mode = #tpu.pipeline_mode<synchronous>, transform_indices = @transform_2, window_bounds = array<i64: 8, 1>}, {transform_indices = @transform_3, window_bounds = array<i64: 1, 8, 20>}]} {
    %c0 = arith.constant 0 : index
    %c0_0 = arith.constant 0 : index
    %c0_1 = arith.constant 0 : index
    %0 = vector.load %arg1[%c0, %c0_0, %c0_1] : memref<1x32x25xbf16, #tpu.memory_space<vmem>>, vector<1x32x25xbf16>
    %1 = vector.shape_cast %0 : vector<1x32x25xbf16> to vector<32x25xbf16>
    %cst = arith.constant 0.000000e+00 : bf16
    %2 = vector.broadcast %cst : bf16 to vector<32x1xbf16>
    %3 = tpu.concatenate %1, %2 in 1 : vector<32x25xbf16>, vector<32x1xbf16> -> vector<32x26xbf16>
    %c0_2 = arith.constant 0 : index
    %c0_3 = arith.constant 0 : index
    %4 = vector.load %arg2[%c0_2, %c0_3] : memref<8x128xbf16, #tpu.memory_space<vmem>>, vector<8x128xbf16>
    %5 = vector.extract_strided_slice %3 {offsets = [0, 0], sizes = [32, 20], strides = [1, 1]} : vector<32x26xbf16> to vector<32x20xbf16>
    %6 = vector.extract_strided_slice %3 {offsets = [0, 1], sizes = [32, 20], strides = [1, 1]} : vector<32x26xbf16> to vector<32x20xbf16>
    %7 = vector.extract_strided_slice %3 {offsets = [0, 5], sizes = [32, 20], strides = [1, 1]} : vector<32x26xbf16> to vector<32x20xbf16>
    %8 = vector.extract_strided_slice %3 {offsets = [0, 6], sizes = [32, 20], strides = [1, 1]} : vector<32x26xbf16> to vector<32x20xbf16>
    %9 = tpu.concatenate %5, %6, %7, %8 in 0 : vector<32x20xbf16>, vector<32x20xbf16>, vector<32x20xbf16>, vector<32x20xbf16> -> vector<128x20xbf16>
    %cst_4 = arith.constant dense<0.000000e+00> : vector<8x20xf32>
    %10 = tpu.matmul %4, %9, %cst_4 {dimension_numbers = #tpu.dot_dimension_numbers<[1], [0], [0], [1], [0, 0, 1, 1], [], []>} : vector<8x128xbf16>, vector<128x20xbf16>, vector<8x20xf32> -> vector<8x20xf32>
    %c0_5 = arith.constant 0 : index
    %c0_6 = arith.constant 0 : index
    %11 = vector.load %arg3[%c0_5, %c0_6] : memref<8x1xf32, #tpu.memory_space<vmem>>, vector<8x1xf32>
    %12 = vector.broadcast %11 : vector<8x1xf32> to vector<8x20xf32>
    %13 = arith.addf %10, %12 : vector<8x20xf32>
    %cst_7 = arith.constant 0.000000e+00 : f32
    %14 = vector.broadcast %cst_7 : f32 to vector<8x20xf32>
    %15 = arith.maximumf %13, %14 : vector<8x20xf32>
    %16 = arith.truncf %15 : vector<8x20xf32> to vector<8x20xbf16>
    %c0_8 = arith.constant 0 : index
    %c0_9 = arith.constant 0 : index
    %c0_10 = arith.constant 0 : index
    %17 = vector.load %arg4[%c0_8, %c0_9, %c0_10] : memref<1x8x20xbf16, #tpu.memory_space<vmem>>, vector<1x8x20xbf16>
    %18 = vector.shape_cast %17 : vector<1x8x20xbf16> to vector<8x20xbf16>
    %19 = vector.shape_cast %16 : vector<8x20xbf16> to vector<1x8x20xbf16>
    tpu.vector_store %arg4[%c0_8, %c0_9, %c0_10], %19 {strides = array<i32>} : memref<1x8x20xbf16, #tpu.memory_space<vmem>>, vector<1x8x20xbf16>,
    return
  }
  func.func @transform_0(%arg0: i32) -> (i32, i32, i32) {
    %c0_i32 = arith.constant 0 : i32
    %c0_i32_0 = arith.constant 0 : i32
    %c0_i32_1 = arith.constant 0 : i32
    return %arg0, %c0_i32, %c0_i32_0 : i32, i32, i32
  }
  func.func @transform_1(%arg0: i32) -> (i32, i32) {
    %c0_i32 = arith.constant 0 : i32
    %c0_i32_0 = arith.constant 0 : i32
    %c0_i32_1 = arith.constant 0 : i32
    return %c0_i32, %c0_i32_0 : i32, i32
  }
  func.func @transform_2(%arg0: i32) -> (i32, i32) {
    %c0_i32 = arith.constant 0 : i32
    %c0_i32_0 = arith.constant 0 : i32
    %c0_i32_1 = arith.constant 0 : i32
    return %c0_i32, %c0_i32_0 : i32, i32
  }
  func.func @transform_3(%arg0: i32) -> (i32, i32, i32) {
    %c0_i32 = arith.constant 0 : i32
    %c0_i32_0 = arith.constant 0 : i32
    %c0_i32_1 = arith.constant 0 : i32
    return %arg0, %c0_i32, %c0_i32_0 : i32, i32, i32
  }
}

module attributes {stable_mosaic.version = 11 : i64} {
  func.func @_conv_chain_kernel(%arg0: i32, %arg1: memref<1x8x36xbf16, #tpu.memory_space<vmem>>, %arg2: memref<1x24xbf16, #tpu.memory_space<vmem>>, %arg3: memref<8x72xbf16, #tpu.memory_space<vmem>>, %arg4: memref<8x1xf32, #tpu.memory_space<vmem>>, %arg5: memref<32x72xbf16, #tpu.memory_space<vmem>>, %arg6: memref<32x1xf32, #tpu.memory_space<vmem>>, %arg7: memref<1x32x24xbf16, #tpu.memory_space<vmem>>) attributes {dimension_semantics = [#tpu.dimension_semantics<parallel>], iteration_bounds = array<i64: 2>, scalar_prefetch = 0 : i64, scratch_operands = 0 : i64, tpu.core_type = #tpu.core_type<tc>, window_params = [{transform_indices = @transform_0, window_bounds = array<i64: 1, 8, 36>}, {pipeline_mode = #tpu.pipeline_mode<synchronous>, transform_indices = @transform_1, window_bounds = array<i64: 1, 24>}, {pipeline_mode = #tpu.pipeline_mode<synchronous>, transform_indices = @transform_2, window_bounds = array<i64: 8, 72>}, {pipeline_mode = #tpu.pipeline_mode<synchronous>, transform_indices = @transform_3, window_bounds = array<i64: 8, 1>}, {pipeline_mode = #tpu.pipeline_mode<synchronous>, transform_indices = @transform_4, window_bounds = array<i64: 32, 72>}, {pipeline_mode = #tpu.pipeline_mode<synchronous>, transform_indices = @transform_5, window_bounds = array<i64: 32, 1>}, {transform_indices = @transform_6, window_bounds = array<i64: 1, 32, 24>}]} {
    %c0 = arith.constant 0 : index
    %c0_0 = arith.constant 0 : index
    %0 = vector.load %arg2[%c0, %c0_0] : memref<1x24xbf16, #tpu.memory_space<vmem>>, vector<1x24xbf16>
    %c0_1 = arith.constant 0 : index
    %c0_2 = arith.constant 0 : index
    %c0_3 = arith.constant 0 : index
    %1 = vector.load %arg1[%c0_1, %c0_2, %c0_3] : memref<1x8x36xbf16, #tpu.memory_space<vmem>>, vector<1x8x36xbf16>
    %2 = vector.shape_cast %1 : vector<1x8x36xbf16> to vector<8x36xbf16>
    %c0_4 = arith.constant 0 : index
    %c0_5 = arith.constant 0 : index
    %3 = vector.load %arg3[%c0_4, %c0_5] : memref<8x72xbf16, #tpu.memory_space<vmem>>, vector<8x72xbf16>
    %c0_6 = arith.constant 0 : index
    %c0_7 = arith.constant 0 : index
    %4 = vector.load %arg4[%c0_6, %c0_7] : memref<8x1xf32, #tpu.memory_space<vmem>>, vector<8x1xf32>
    %cst = arith.constant 0.000000e+00 : bf16
    %5 = vector.broadcast %cst : bf16 to vector<8x2xbf16>
    %6 = tpu.concatenate %2, %5 in 1 : vector<8x36xbf16>, vector<8x2xbf16> -> vector<8x38xbf16>
    %7 = vector.extract_strided_slice %6 {offsets = [0, 0], sizes = [8, 24], strides = [1, 1]} : vector<8x38xbf16> to vector<8x24xbf16>
    %8 = vector.extract_strided_slice %6 {offsets = [0, 1], sizes = [8, 24], strides = [1, 1]} : vector<8x38xbf16> to vector<8x24xbf16>
    %9 = vector.extract_strided_slice %6 {offsets = [0, 2], sizes = [8, 24], strides = [1, 1]} : vector<8x38xbf16> to vector<8x24xbf16>
    %10 = vector.extract_strided_slice %6 {offsets = [0, 6], sizes = [8, 24], strides = [1, 1]} : vector<8x38xbf16> to vector<8x24xbf16>
    %11 = vector.extract_strided_slice %6 {offsets = [0, 7], sizes = [8, 24], strides = [1, 1]} : vector<8x38xbf16> to vector<8x24xbf16>
    %12 = vector.extract_strided_slice %6 {offsets = [0, 8], sizes = [8, 24], strides = [1, 1]} : vector<8x38xbf16> to vector<8x24xbf16>
    %13 = vector.extract_strided_slice %6 {offsets = [0, 12], sizes = [8, 24], strides = [1, 1]} : vector<8x38xbf16> to vector<8x24xbf16>
    %14 = vector.extract_strided_slice %6 {offsets = [0, 13], sizes = [8, 24], strides = [1, 1]} : vector<8x38xbf16> to vector<8x24xbf16>
    %15 = vector.extract_strided_slice %6 {offsets = [0, 14], sizes = [8, 24], strides = [1, 1]} : vector<8x38xbf16> to vector<8x24xbf16>
    %16 = tpu.concatenate %7, %8, %9, %10, %11, %12, %13, %14, %15 in 0 : vector<8x24xbf16>, vector<8x24xbf16>, vector<8x24xbf16>, vector<8x24xbf16>, vector<8x24xbf16>, vector<8x24xbf16>, vector<8x24xbf16>, vector<8x24xbf16>, vector<8x24xbf16> -> vector<72x24xbf16>
    %cst_8 = arith.constant dense<0.000000e+00> : vector<8x24xf32>
    %17 = tpu.matmul %3, %16, %cst_8 {dimension_numbers = #tpu.dot_dimension_numbers<[1], [0], [0], [1], [0, 0, 1, 1], [], []>} : vector<8x72xbf16>, vector<72x24xbf16>, vector<8x24xf32> -> vector<8x24xf32>
    %18 = vector.broadcast %4 : vector<8x1xf32> to vector<8x24xf32>
    %19 = arith.addf %17, %18 : vector<8x24xf32>
    %cst_9 = arith.constant 0.000000e+00 : f32
    %20 = vector.broadcast %cst_9 : f32 to vector<8x24xf32>
    %21 = arith.maximumf %19, %20 : vector<8x24xf32>
    %22 = arith.extf %0 : vector<1x24xbf16> to vector<1x24xf32>
    %23 = vector.broadcast %22 : vector<1x24xf32> to vector<8x24xf32>
    %24 = arith.mulf %21, %23 : vector<8x24xf32>
    %25 = arith.truncf %24 : vector<8x24xf32> to vector<8x24xbf16>
    %cst_10 = arith.constant 0.000000e+00 : bf16
    %26 = vector.broadcast %cst_10 : bf16 to vector<8x7xbf16>
    %cst_11 = arith.constant 0.000000e+00 : bf16
    %27 = vector.broadcast %cst_11 : bf16 to vector<8x5xbf16>
    %28 = tpu.concatenate %26, %25, %27 in 1 : vector<8x7xbf16>, vector<8x24xbf16>, vector<8x5xbf16> -> vector<8x36xbf16>
    %c0_12 = arith.constant 0 : index
    %c0_13 = arith.constant 0 : index
    %29 = vector.load %arg5[%c0_12, %c0_13] : memref<32x72xbf16, #tpu.memory_space<vmem>>, vector<32x72xbf16>
    %c0_14 = arith.constant 0 : index
    %c0_15 = arith.constant 0 : index
    %30 = vector.load %arg6[%c0_14, %c0_15] : memref<32x1xf32, #tpu.memory_space<vmem>>, vector<32x1xf32>
    %cst_16 = arith.constant 0.000000e+00 : bf16
    %31 = vector.broadcast %cst_16 : bf16 to vector<8x2xbf16>
    %32 = tpu.concatenate %28, %31 in 1 : vector<8x36xbf16>, vector<8x2xbf16> -> vector<8x38xbf16>
    %33 = vector.extract_strided_slice %32 {offsets = [0, 0], sizes = [8, 24], strides = [1, 1]} : vector<8x38xbf16> to vector<8x24xbf16>
    %34 = vector.extract_strided_slice %32 {offsets = [0, 1], sizes = [8, 24], strides = [1, 1]} : vector<8x38xbf16> to vector<8x24xbf16>
    %35 = vector.extract_strided_slice %32 {offsets = [0, 2], sizes = [8, 24], strides = [1, 1]} : vector<8x38xbf16> to vector<8x24xbf16>
    %36 = vector.extract_strided_slice %32 {offsets = [0, 6], sizes = [8, 24], strides = [1, 1]} : vector<8x38xbf16> to vector<8x24xbf16>
    %37 = vector.extract_strided_slice %32 {offsets = [0, 7], sizes = [8, 24], strides = [1, 1]} : vector<8x38xbf16> to vector<8x24xbf16>
    %38 = vector.extract_strided_slice %32 {offsets = [0, 8], sizes = [8, 24], strides = [1, 1]} : vector<8x38xbf16> to vector<8x24xbf16>
    %39 = vector.extract_strided_slice %32 {offsets = [0, 12], sizes = [8, 24], strides = [1, 1]} : vector<8x38xbf16> to vector<8x24xbf16>
    %40 = vector.extract_strided_slice %32 {offsets = [0, 13], sizes = [8, 24], strides = [1, 1]} : vector<8x38xbf16> to vector<8x24xbf16>
    %41 = vector.extract_strided_slice %32 {offsets = [0, 14], sizes = [8, 24], strides = [1, 1]} : vector<8x38xbf16> to vector<8x24xbf16>
    %42 = tpu.concatenate %33, %34, %35, %36, %37, %38, %39, %40, %41 in 0 : vector<8x24xbf16>, vector<8x24xbf16>, vector<8x24xbf16>, vector<8x24xbf16>, vector<8x24xbf16>, vector<8x24xbf16>, vector<8x24xbf16>, vector<8x24xbf16>, vector<8x24xbf16> -> vector<72x24xbf16>
    %cst_17 = arith.constant dense<0.000000e+00> : vector<32x24xf32>
    %43 = tpu.matmul %29, %42, %cst_17 {dimension_numbers = #tpu.dot_dimension_numbers<[1], [0], [0], [1], [0, 0, 1, 1], [], []>} : vector<32x72xbf16>, vector<72x24xbf16>, vector<32x24xf32> -> vector<32x24xf32>
    %44 = vector.broadcast %30 : vector<32x1xf32> to vector<32x24xf32>
    %45 = arith.addf %43, %44 : vector<32x24xf32>
    %cst_18 = arith.constant 0.000000e+00 : f32
    %46 = vector.broadcast %cst_18 : f32 to vector<32x24xf32>
    %47 = arith.maximumf %45, %46 : vector<32x24xf32>
    %48 = arith.truncf %47 : vector<32x24xf32> to vector<32x24xbf16>
    %c0_19 = arith.constant 0 : index
    %c0_20 = arith.constant 0 : index
    %c0_21 = arith.constant 0 : index
    %49 = vector.load %arg7[%c0_19, %c0_20, %c0_21] : memref<1x32x24xbf16, #tpu.memory_space<vmem>>, vector<1x32x24xbf16>
    %50 = vector.shape_cast %49 : vector<1x32x24xbf16> to vector<32x24xbf16>
    %51 = vector.shape_cast %48 : vector<32x24xbf16> to vector<1x32x24xbf16>
    tpu.vector_store %arg7[%c0_19, %c0_20, %c0_21], %51 {strides = array<i32>} : memref<1x32x24xbf16, #tpu.memory_space<vmem>>, vector<1x32x24xbf16>,
    return
  }
  func.func @transform_0(%arg0: i32) -> (i32, i32, i32) {
    %c0_i32 = arith.constant 0 : i32
    %c0_i32_0 = arith.constant 0 : i32
    %c0_i32_1 = arith.constant 0 : i32
    return %arg0, %c0_i32, %c0_i32_0 : i32, i32, i32
  }
  func.func @transform_1(%arg0: i32) -> (i32, i32) {
    %c0_i32 = arith.constant 0 : i32
    %c0_i32_0 = arith.constant 0 : i32
    %c0_i32_1 = arith.constant 0 : i32
    return %c0_i32, %c0_i32_0 : i32, i32
  }
  func.func @transform_2(%arg0: i32) -> (i32, i32) {
    %c0_i32 = arith.constant 0 : i32
    %c0_i32_0 = arith.constant 0 : i32
    %c0_i32_1 = arith.constant 0 : i32
    return %c0_i32, %c0_i32_0 : i32, i32
  }
  func.func @transform_3(%arg0: i32) -> (i32, i32) {
    %c0_i32 = arith.constant 0 : i32
    %c0_i32_0 = arith.constant 0 : i32
    %c0_i32_1 = arith.constant 0 : i32
    return %c0_i32, %c0_i32_0 : i32, i32
  }
  func.func @transform_4(%arg0: i32) -> (i32, i32) {
    %c0_i32 = arith.constant 0 : i32
    %c0_i32_0 = arith.constant 0 : i32
    %c0_i32_1 = arith.constant 0 : i32
    return %c0_i32, %c0_i32_0 : i32, i32
  }
  func.func @transform_5(%arg0: i32) -> (i32, i32) {
    %c0_i32 = arith.constant 0 : i32
    %c0_i32_0 = arith.constant 0 : i32
    %c0_i32_1 = arith.constant 0 : i32
    return %c0_i32, %c0_i32_0 : i32, i32
  }
  func.func @transform_6(%arg0: i32) -> (i32, i32, i32) {
    %c0_i32 = arith.constant 0 : i32
    %c0_i32_0 = arith.constant 0 : i32
    %c0_i32_1 = arith.constant 0 : i32
    return %arg0, %c0_i32, %c0_i32_0 : i32, i32, i32
  }
}

module attributes {stable_mosaic.version = 11 : i64} {
  func.func @_conv_chain_kernel(%arg0: i32, %arg1: memref<1x16x100xbf16, #tpu.memory_space<vmem>>, %arg2: memref<1x80xbf16, #tpu.memory_space<vmem>>, %arg3: memref<8x144xbf16, #tpu.memory_space<vmem>>, %arg4: memref<8x1xf32, #tpu.memory_space<vmem>>, %arg5: memref<32x72xbf16, #tpu.memory_space<vmem>>, %arg6: memref<32x1xf32, #tpu.memory_space<vmem>>, %arg7: memref<1x32x80xbf16, #tpu.memory_space<vmem>>) attributes {dimension_semantics = [#tpu.dimension_semantics<parallel>], iteration_bounds = array<i64: 2>, scalar_prefetch = 0 : i64, scratch_operands = 0 : i64, tpu.core_type = #tpu.core_type<tc>, window_params = [{transform_indices = @transform_0, window_bounds = array<i64: 1, 16, 100>}, {pipeline_mode = #tpu.pipeline_mode<synchronous>, transform_indices = @transform_1, window_bounds = array<i64: 1, 80>}, {pipeline_mode = #tpu.pipeline_mode<synchronous>, transform_indices = @transform_2, window_bounds = array<i64: 8, 144>}, {pipeline_mode = #tpu.pipeline_mode<synchronous>, transform_indices = @transform_3, window_bounds = array<i64: 8, 1>}, {pipeline_mode = #tpu.pipeline_mode<synchronous>, transform_indices = @transform_4, window_bounds = array<i64: 32, 72>}, {pipeline_mode = #tpu.pipeline_mode<synchronous>, transform_indices = @transform_5, window_bounds = array<i64: 32, 1>}, {transform_indices = @transform_6, window_bounds = array<i64: 1, 32, 80>}]} {
    %c0 = arith.constant 0 : index
    %c0_0 = arith.constant 0 : index
    %0 = vector.load %arg2[%c0, %c0_0] : memref<1x80xbf16, #tpu.memory_space<vmem>>, vector<1x80xbf16>
    %c0_1 = arith.constant 0 : index
    %c0_2 = arith.constant 0 : index
    %c0_3 = arith.constant 0 : index
    %1 = vector.load %arg1[%c0_1, %c0_2, %c0_3] : memref<1x16x100xbf16, #tpu.memory_space<vmem>>, vector<1x16x100xbf16>
    %2 = vector.shape_cast %1 : vector<1x16x100xbf16> to vector<16x100xbf16>
    %c0_4 = arith.constant 0 : index
    %c0_5 = arith.constant 0 : index
    %3 = vector.load %arg3[%c0_4, %c0_5] : memref<8x144xbf16, #tpu.memory_space<vmem>>, vector<8x144xbf16>
    %c0_6 = arith.constant 0 : index
    %c0_7 = arith.constant 0 : index
    %4 = vector.load %arg4[%c0_6, %c0_7] : memref<8x1xf32, #tpu.memory_space<vmem>>, vector<8x1xf32>
    %cst = arith.constant 0.000000e+00 : bf16
    %5 = vector.broadcast %cst : bf16 to vector<16x2xbf16>
    %6 = tpu.concatenate %2, %5 in 1 : vector<16x100xbf16>, vector<16x2xbf16> -> vector<16x102xbf16>
    %7 = vector.extract_strided_slice %6 {offsets = [0, 0], sizes = [16, 80], strides = [1, 1]} : vector<16x102xbf16> to vector<16x80xbf16>
    %8 = vector.extract_strided_slice %6 {offsets = [0, 1], sizes = [16, 80], strides = [1, 1]} : vector<16x102xbf16> to vector<16x80xbf16>
    %9 = vector.extract_strided_slice %6 {offsets = [0, 2], sizes = [16, 80], strides = [1, 1]} : vector<16x102xbf16> to vector<16x80xbf16>
    %10 = vector.extract_strided_slice %6 {offsets = [0, 10], sizes = [16, 80], strides = [1, 1]} : vector<16x102xbf16> to vector<16x80xbf16>
    %11 = vector.extract_strided_slice %6 {offsets = [0, 11], sizes = [16, 80], strides = [1, 1]} : vector<16x102xbf16> to vector<16x80xbf16>
    %12 = vector.extract_strided_slice %6 {offsets = [0, 12], sizes = [16, 80], strides = [1, 1]} : vector<16x102xbf16> to vector<16x80xbf16>
    %13 = vector.extract_strided_slice %6 {offsets = [0, 20], sizes = [16, 80], strides = [1, 1]} : vector<16x102xbf16> to vector<16x80xbf16>
    %14 = vector.extract_strided_slice %6 {offsets = [0, 21], sizes = [16, 80], strides = [1, 1]} : vector<16x102xbf16> to vector<16x80xbf16>
    %15 = vector.extract_strided_slice %6 {offsets = [0, 22], sizes = [16, 80], strides = [1, 1]} : vector<16x102xbf16> to vector<16x80xbf16>
    %16 = tpu.concatenate %7, %8, %9, %10, %11, %12, %13, %14, %15 in 0 : vector<16x80xbf16>, vector<16x80xbf16>, vector<16x80xbf16>, vector<16x80xbf16>, vector<16x80xbf16>, vector<16x80xbf16>, vector<16x80xbf16>, vector<16x80xbf16>, vector<16x80xbf16> -> vector<144x80xbf16>
    %17 = vector.extract_strided_slice %3 {offsets = [0, 0], sizes = [8, 72], strides = [1, 1]} : vector<8x144xbf16> to vector<8x72xbf16>
    %18 = vector.extract_strided_slice %16 {offsets = [0, 0], sizes = [72, 80], strides = [1, 1]} : vector<144x80xbf16> to vector<72x80xbf16>
    %cst_8 = arith.constant dense<0.000000e+00> : vector<8x80xf32>
    %19 = tpu.matmul %17, %18, %cst_8 {dimension_numbers = #tpu.dot_dimension_numbers<[1], [0], [0], [1], [0, 0, 1, 1], [], []>} : vector<8x72xbf16>, vector<72x80xbf16>, vector<8x80xf32> -> vector<8x80xf32>
    %20 = vector.extract_strided_slice %3 {offsets = [0, 72], sizes = [8, 72], strides = [1, 1]} : vector<8x144xbf16> to vector<8x72xbf16>
    %21 = vector.extract_strided_slice %16 {offsets = [72, 0], sizes = [72, 80], strides = [1, 1]} : vector<144x80xbf16> to vector<72x80xbf16>
    %cst_9 = arith.constant dense<0.000000e+00> : vector<8x80xf32>
    %22 = tpu.matmul %20, %21, %cst_9 {dimension_numbers = #tpu.dot_dimension_numbers<[1], [0], [0], [1], [0, 0, 1, 1], [], []>} : vector<8x72xbf16>, vector<72x80xbf16>, vector<8x80xf32> -> vector<8x80xf32>
    %23 = arith.addf %19, %22 : vector<8x80xf32>
    %24 = vector.broadcast %4 : vector<8x1xf32> to vector<8x80xf32>
    %25 = arith.addf %23, %24 : vector<8x80xf32>
    %cst_10 = arith.constant 0.000000e+00 : f32
    %26 = vector.broadcast %cst_10 : f32 to vector<8x80xf32>
    %27 = arith.maximumf %25, %26 : vector<8x80xf32>
    %28 = arith.extf %0 : vector<1x80xbf16> to vector<1x80xf32>
    %29 = vector.broadcast %28 : vector<1x80xf32> to vector<8x80xf32>
    %30 = arith.mulf %27, %29 : vector<8x80xf32>
    %31 = arith.truncf %30 : vector<8x80xf32> to vector<8x80xbf16>
    %cst_11 = arith.constant 0.000000e+00 : bf16
    %32 = vector.broadcast %cst_11 : bf16 to vector<8x11xbf16>
    %cst_12 = arith.constant 0.000000e+00 : bf16
    %33 = vector.broadcast %cst_12 : bf16 to vector<8x9xbf16>
    %34 = tpu.concatenate %32, %31, %33 in 1 : vector<8x11xbf16>, vector<8x80xbf16>, vector<8x9xbf16> -> vector<8x100xbf16>
    %c0_13 = arith.constant 0 : index
    %c0_14 = arith.constant 0 : index
    %35 = vector.load %arg5[%c0_13, %c0_14] : memref<32x72xbf16, #tpu.memory_space<vmem>>, vector<32x72xbf16>
    %c0_15 = arith.constant 0 : index
    %c0_16 = arith.constant 0 : index
    %36 = vector.load %arg6[%c0_15, %c0_16] : memref<32x1xf32, #tpu.memory_space<vmem>>, vector<32x1xf32>
    %cst_17 = arith.constant 0.000000e+00 : bf16
    %37 = vector.broadcast %cst_17 : bf16 to vector<8x2xbf16>
    %38 = tpu.concatenate %34, %37 in 1 : vector<8x100xbf16>, vector<8x2xbf16> -> vector<8x102xbf16>
    %39 = vector.extract_strided_slice %38 {offsets = [0, 0], sizes = [8, 80], strides = [1, 1]} : vector<8x102xbf16> to vector<8x80xbf16>
    %40 = vector.extract_strided_slice %38 {offsets = [0, 1], sizes = [8, 80], strides = [1, 1]} : vector<8x102xbf16> to vector<8x80xbf16>
    %41 = vector.extract_strided_slice %38 {offsets = [0, 2], sizes = [8, 80], strides = [1, 1]} : vector<8x102xbf16> to vector<8x80xbf16>
    %42 = vector.extract_strided_slice %38 {offsets = [0, 10], sizes = [8, 80], strides = [1, 1]} : vector<8x102xbf16> to vector<8x80xbf16>
    %43 = vector.extract_strided_slice %38 {offsets = [0, 11], sizes = [8, 80], strides = [1, 1]} : vector<8x102xbf16> to vector<8x80xbf16>
    %44 = vector.extract_strided_slice %38 {offsets = [0, 12], sizes = [8, 80], strides = [1, 1]} : vector<8x102xbf16> to vector<8x80xbf16>
    %45 = vector.extract_strided_slice %38 {offsets = [0, 20], sizes = [8, 80], strides = [1, 1]} : vector<8x102xbf16> to vector<8x80xbf16>
    %46 = vector.extract_strided_slice %38 {offsets = [0, 21], sizes = [8, 80], strides = [1, 1]} : vector<8x102xbf16> to vector<8x80xbf16>
    %47 = vector.extract_strided_slice %38 {offsets = [0, 22], sizes = [8, 80], strides = [1, 1]} : vector<8x102xbf16> to vector<8x80xbf16>
    %48 = tpu.concatenate %39, %40, %41, %42, %43, %44, %45, %46, %47 in 0 : vector<8x80xbf16>, vector<8x80xbf16>, vector<8x80xbf16>, vector<8x80xbf16>, vector<8x80xbf16>, vector<8x80xbf16>, vector<8x80xbf16>, vector<8x80xbf16>, vector<8x80xbf16> -> vector<72x80xbf16>
    %cst_18 = arith.constant dense<0.000000e+00> : vector<32x80xf32>
    %49 = tpu.matmul %35, %48, %cst_18 {dimension_numbers = #tpu.dot_dimension_numbers<[1], [0], [0], [1], [0, 0, 1, 1], [], []>} : vector<32x72xbf16>, vector<72x80xbf16>, vector<32x80xf32> -> vector<32x80xf32>
    %50 = vector.broadcast %36 : vector<32x1xf32> to vector<32x80xf32>
    %51 = arith.addf %49, %50 : vector<32x80xf32>
    %cst_19 = arith.constant 0.000000e+00 : f32
    %52 = vector.broadcast %cst_19 : f32 to vector<32x80xf32>
    %53 = arith.maximumf %51, %52 : vector<32x80xf32>
    %54 = arith.truncf %53 : vector<32x80xf32> to vector<32x80xbf16>
    %c0_20 = arith.constant 0 : index
    %c0_21 = arith.constant 0 : index
    %c0_22 = arith.constant 0 : index
    %55 = vector.load %arg7[%c0_20, %c0_21, %c0_22] : memref<1x32x80xbf16, #tpu.memory_space<vmem>>, vector<1x32x80xbf16>
    %56 = vector.shape_cast %55 : vector<1x32x80xbf16> to vector<32x80xbf16>
    %57 = vector.shape_cast %54 : vector<32x80xbf16> to vector<1x32x80xbf16>
    tpu.vector_store %arg7[%c0_20, %c0_21, %c0_22], %57 {strides = array<i32>} : memref<1x32x80xbf16, #tpu.memory_space<vmem>>, vector<1x32x80xbf16>,
    return
  }
  func.func @transform_0(%arg0: i32) -> (i32, i32, i32) {
    %c0_i32 = arith.constant 0 : i32
    %c0_i32_0 = arith.constant 0 : i32
    %c0_i32_1 = arith.constant 0 : i32
    return %arg0, %c0_i32, %c0_i32_0 : i32, i32, i32
  }
  func.func @transform_1(%arg0: i32) -> (i32, i32) {
    %c0_i32 = arith.constant 0 : i32
    %c0_i32_0 = arith.constant 0 : i32
    %c0_i32_1 = arith.constant 0 : i32
    return %c0_i32, %c0_i32_0 : i32, i32
  }
  func.func @transform_2(%arg0: i32) -> (i32, i32) {
    %c0_i32 = arith.constant 0 : i32
    %c0_i32_0 = arith.constant 0 : i32
    %c0_i32_1 = arith.constant 0 : i32
    return %c0_i32, %c0_i32_0 : i32, i32
  }
  func.func @transform_3(%arg0: i32) -> (i32, i32) {
    %c0_i32 = arith.constant 0 : i32
    %c0_i32_0 = arith.constant 0 : i32
    %c0_i32_1 = arith.constant 0 : i32
    return %c0_i32, %c0_i32_0 : i32, i32
  }
  func.func @transform_4(%arg0: i32) -> (i32, i32) {
    %c0_i32 = arith.constant 0 : i32
    %c0_i32_0 = arith.constant 0 : i32
    %c0_i32_1 = arith.constant 0 : i32
    return %c0_i32, %c0_i32_0 : i32, i32
  }
  func.func @transform_5(%arg0: i32) -> (i32, i32) {
    %c0_i32 = arith.constant 0 : i32
    %c0_i32_0 = arith.constant 0 : i32
    %c0_i32_1 = arith.constant 0 : i32
    return %c0_i32, %c0_i32_0 : i32, i32
  }
  func.func @transform_6(%arg0: i32) -> (i32, i32, i32) {
    %c0_i32 = arith.constant 0 : i32
    %c0_i32_0 = arith.constant 0 : i32
    %c0_i32_1 = arith.constant 0 : i32
    return %arg0, %c0_i32, %c0_i32_0 : i32, i32, i32
  }
}

module attributes {stable_mosaic.version = 11 : i64} {
  func.func @_conv_chain_kernel(%arg0: i32, %arg1: memref<1x8x324xbf16, #tpu.memory_space<vmem>>, %arg2: memref<1x288xbf16, #tpu.memory_space<vmem>>, %arg3: memref<8x72xbf16, #tpu.memory_space<vmem>>, %arg4: memref<8x1xf32, #tpu.memory_space<vmem>>, %arg5: memref<189x72xbf16, #tpu.memory_space<vmem>>, %arg6: memref<189x1xf32, #tpu.memory_space<vmem>>, %arg7: memref<1x189x288xf32, #tpu.memory_space<vmem>>) attributes {dimension_semantics = [#tpu.dimension_semantics<parallel>], iteration_bounds = array<i64: 2>, scalar_prefetch = 0 : i64, scratch_operands = 0 : i64, tpu.core_type = #tpu.core_type<tc>, window_params = [{transform_indices = @transform_0, window_bounds = array<i64: 1, 8, 324>}, {pipeline_mode = #tpu.pipeline_mode<synchronous>, transform_indices = @transform_1, window_bounds = array<i64: 1, 288>}, {pipeline_mode = #tpu.pipeline_mode<synchronous>, transform_indices = @transform_2, window_bounds = array<i64: 8, 72>}, {pipeline_mode = #tpu.pipeline_mode<synchronous>, transform_indices = @transform_3, window_bounds = array<i64: 8, 1>}, {pipeline_mode = #tpu.pipeline_mode<synchronous>, transform_indices = @transform_4, window_bounds = array<i64: 189, 72>}, {pipeline_mode = #tpu.pipeline_mode<synchronous>, transform_indices = @transform_5, window_bounds = array<i64: 189, 1>}, {transform_indices = @transform_6, window_bounds = array<i64: 1, 189, 288>}]} {
    %c0 = arith.constant 0 : index
    %c0_0 = arith.constant 0 : index
    %0 = vector.load %arg2[%c0, %c0_0] : memref<1x288xbf16, #tpu.memory_space<vmem>>, vector<1x288xbf16>
    %c0_1 = arith.constant 0 : index
    %c0_2 = arith.constant 0 : index
    %c0_3 = arith.constant 0 : index
    %1 = vector.load %arg1[%c0_1, %c0_2, %c0_3] : memref<1x8x324xbf16, #tpu.memory_space<vmem>>, vector<1x8x324xbf16>
    %2 = vector.shape_cast %1 : vector<1x8x324xbf16> to vector<8x324xbf16>
    %c0_4 = arith.constant 0 : index
    %c0_5 = arith.constant 0 : index
    %3 = vector.load %arg3[%c0_4, %c0_5] : memref<8x72xbf16, #tpu.memory_space<vmem>>, vector<8x72xbf16>
    %c0_6 = arith.constant 0 : index
    %c0_7 = arith.constant 0 : index
    %4 = vector.load %arg4[%c0_6, %c0_7] : memref<8x1xf32, #tpu.memory_space<vmem>>, vector<8x1xf32>
    %cst = arith.constant 0.000000e+00 : bf16
    %5 = vector.broadcast %cst : bf16 to vector<8x2xbf16>
    %6 = tpu.concatenate %2, %5 in 1 : vector<8x324xbf16>, vector<8x2xbf16> -> vector<8x326xbf16>
    %7 = vector.extract_strided_slice %6 {offsets = [0, 0], sizes = [8, 288], strides = [1, 1]} : vector<8x326xbf16> to vector<8x288xbf16>
    %8 = vector.extract_strided_slice %6 {offsets = [0, 1], sizes = [8, 288], strides = [1, 1]} : vector<8x326xbf16> to vector<8x288xbf16>
    %9 = vector.extract_strided_slice %6 {offsets = [0, 2], sizes = [8, 288], strides = [1, 1]} : vector<8x326xbf16> to vector<8x288xbf16>
    %10 = vector.extract_strided_slice %6 {offsets = [0, 18], sizes = [8, 288], strides = [1, 1]} : vector<8x326xbf16> to vector<8x288xbf16>
    %11 = vector.extract_strided_slice %6 {offsets = [0, 19], sizes = [8, 288], strides = [1, 1]} : vector<8x326xbf16> to vector<8x288xbf16>
    %12 = vector.extract_strided_slice %6 {offsets = [0, 20], sizes = [8, 288], strides = [1, 1]} : vector<8x326xbf16> to vector<8x288xbf16>
    %13 = vector.extract_strided_slice %6 {offsets = [0, 36], sizes = [8, 288], strides = [1, 1]} : vector<8x326xbf16> to vector<8x288xbf16>
    %14 = vector.extract_strided_slice %6 {offsets = [0, 37], sizes = [8, 288], strides = [1, 1]} : vector<8x326xbf16> to vector<8x288xbf16>
    %15 = vector.extract_strided_slice %6 {offsets = [0, 38], sizes = [8, 288], strides = [1, 1]} : vector<8x326xbf16> to vector<8x288xbf16>
    %16 = tpu.concatenate %7, %8, %9, %10, %11, %12, %13, %14, %15 in 0 : vector<8x288xbf16>, vector<8x288xbf16>, vector<8x288xbf16>, vector<8x288xbf16>, vector<8x288xbf16>, vector<8x288xbf16>, vector<8x288xbf16>, vector<8x288xbf16>, vector<8x288xbf16> -> vector<72x288xbf16>
    %cst_8 = arith.constant dense<0.000000e+00> : vector<8x288xf32>
    %17 = tpu.matmul %3, %16, %cst_8 {dimension_numbers = #tpu.dot_dimension_numbers<[1], [0], [0], [1], [0, 0, 1, 1], [], []>} : vector<8x72xbf16>, vector<72x288xbf16>, vector<8x288xf32> -> vector<8x288xf32>
    %18 = vector.broadcast %4 : vector<8x1xf32> to vector<8x288xf32>
    %19 = arith.addf %17, %18 : vector<8x288xf32>
    %cst_9 = arith.constant 0.000000e+00 : f32
    %20 = vector.broadcast %cst_9 : f32 to vector<8x288xf32>
    %21 = arith.maximumf %19, %20 : vector<8x288xf32>
    %22 = arith.extf %0 : vector<1x288xbf16> to vector<1x288xf32>
    %23 = vector.broadcast %22 : vector<1x288xf32> to vector<8x288xf32>
    %24 = arith.mulf %21, %23 : vector<8x288xf32>
    %25 = arith.truncf %24 : vector<8x288xf32> to vector<8x288xbf16>
    %cst_10 = arith.constant 0.000000e+00 : bf16
    %26 = vector.broadcast %cst_10 : bf16 to vector<8x19xbf16>
    %cst_11 = arith.constant 0.000000e+00 : bf16
    %27 = vector.broadcast %cst_11 : bf16 to vector<8x17xbf16>
    %28 = tpu.concatenate %26, %25, %27 in 1 : vector<8x19xbf16>, vector<8x288xbf16>, vector<8x17xbf16> -> vector<8x324xbf16>
    %c0_12 = arith.constant 0 : index
    %c0_13 = arith.constant 0 : index
    %29 = vector.load %arg5[%c0_12, %c0_13] : memref<189x72xbf16, #tpu.memory_space<vmem>>, vector<189x72xbf16>
    %c0_14 = arith.constant 0 : index
    %c0_15 = arith.constant 0 : index
    %30 = vector.load %arg6[%c0_14, %c0_15] : memref<189x1xf32, #tpu.memory_space<vmem>>, vector<189x1xf32>
    %cst_16 = arith.constant 0.000000e+00 : bf16
    %31 = vector.broadcast %cst_16 : bf16 to vector<8x2xbf16>
    %32 = tpu.concatenate %28, %31 in 1 : vector<8x324xbf16>, vector<8x2xbf16> -> vector<8x326xbf16>
    %33 = vector.extract_strided_slice %32 {offsets = [0, 0], sizes = [8, 288], strides = [1, 1]} : vector<8x326xbf16> to vector<8x288xbf16>
    %34 = vector.extract_strided_slice %32 {offsets = [0, 1], sizes = [8, 288], strides = [1, 1]} : vector<8x326xbf16> to vector<8x288xbf16>
    %35 = vector.extract_strided_slice %32 {offsets = [0, 2], sizes = [8, 288], strides = [1, 1]} : vector<8x326xbf16> to vector<8x288xbf16>
    %36 = vector.extract_strided_slice %32 {offsets = [0, 18], sizes = [8, 288], strides = [1, 1]} : vector<8x326xbf16> to vector<8x288xbf16>
    %37 = vector.extract_strided_slice %32 {offsets = [0, 19], sizes = [8, 288], strides = [1, 1]} : vector<8x326xbf16> to vector<8x288xbf16>
    %38 = vector.extract_strided_slice %32 {offsets = [0, 20], sizes = [8, 288], strides = [1, 1]} : vector<8x326xbf16> to vector<8x288xbf16>
    %39 = vector.extract_strided_slice %32 {offsets = [0, 36], sizes = [8, 288], strides = [1, 1]} : vector<8x326xbf16> to vector<8x288xbf16>
    %40 = vector.extract_strided_slice %32 {offsets = [0, 37], sizes = [8, 288], strides = [1, 1]} : vector<8x326xbf16> to vector<8x288xbf16>
    %41 = vector.extract_strided_slice %32 {offsets = [0, 38], sizes = [8, 288], strides = [1, 1]} : vector<8x326xbf16> to vector<8x288xbf16>
    %42 = tpu.concatenate %33, %34, %35, %36, %37, %38, %39, %40, %41 in 0 : vector<8x288xbf16>, vector<8x288xbf16>, vector<8x288xbf16>, vector<8x288xbf16>, vector<8x288xbf16>, vector<8x288xbf16>, vector<8x288xbf16>, vector<8x288xbf16>, vector<8x288xbf16> -> vector<72x288xbf16>
    %cst_17 = arith.constant dense<0.000000e+00> : vector<189x288xf32>
    %43 = tpu.matmul %29, %42, %cst_17 {dimension_numbers = #tpu.dot_dimension_numbers<[1], [0], [0], [1], [0, 0, 1, 1], [], []>} : vector<189x72xbf16>, vector<72x288xbf16>, vector<189x288xf32> -> vector<189x288xf32>
    %44 = vector.broadcast %30 : vector<189x1xf32> to vector<189x288xf32>
    %45 = arith.addf %43, %44 : vector<189x288xf32>
    %c0_18 = arith.constant 0 : index
    %c0_19 = arith.constant 0 : index
    %c0_20 = arith.constant 0 : index
    %46 = vector.load %arg7[%c0_18, %c0_19, %c0_20] : memref<1x189x288xf32, #tpu.memory_space<vmem>>, vector<1x189x288xf32>
    %47 = vector.shape_cast %46 : vector<1x189x288xf32> to vector<189x288xf32>
    %48 = vector.shape_cast %45 : vector<189x288xf32> to vector<1x189x288xf32>
    tpu.vector_store %arg7[%c0_18, %c0_19, %c0_20], %48 {strides = array<i32>} : memref<1x189x288xf32, #tpu.memory_space<vmem>>, vector<1x189x288xf32>,
    return
  }
  func.func @transform_0(%arg0: i32) -> (i32, i32, i32) {
    %c0_i32 = arith.constant 0 : i32
    %c0_i32_0 = arith.constant 0 : i32
    %c0_i32_1 = arith.constant 0 : i32
    return %arg0, %c0_i32, %c0_i32_0 : i32, i32, i32
  }
  func.func @transform_1(%arg0: i32) -> (i32, i32) {
    %c0_i32 = arith.constant 0 : i32
    %c0_i32_0 = arith.constant 0 : i32
    %c0_i32_1 = arith.constant 0 : i32
    return %c0_i32, %c0_i32_0 : i32, i32
  }
  func.func @transform_2(%arg0: i32) -> (i32, i32) {
    %c0_i32 = arith.constant 0 : i32
    %c0_i32_0 = arith.constant 0 : i32
    %c0_i32_1 = arith.constant 0 : i32
    return %c0_i32, %c0_i32_0 : i32, i32
  }
  func.func @transform_3(%arg0: i32) -> (i32, i32) {
    %c0_i32 = arith.constant 0 : i32
    %c0_i32_0 = arith.constant 0 : i32
    %c0_i32_1 = arith.constant 0 : i32
    return %c0_i32, %c0_i32_0 : i32, i32
  }
  func.func @transform_4(%arg0: i32) -> (i32, i32) {
    %c0_i32 = arith.constant 0 : i32
    %c0_i32_0 = arith.constant 0 : i32
    %c0_i32_1 = arith.constant 0 : i32
    return %c0_i32, %c0_i32_0 : i32, i32
  }
  func.func @transform_5(%arg0: i32) -> (i32, i32) {
    %c0_i32 = arith.constant 0 : i32
    %c0_i32_0 = arith.constant 0 : i32
    %c0_i32_1 = arith.constant 0 : i32
    return %c0_i32, %c0_i32_0 : i32, i32
  }
  func.func @transform_6(%arg0: i32) -> (i32, i32, i32) {
    %c0_i32 = arith.constant 0 : i32
    %c0_i32_0 = arith.constant 0 : i32
    %c0_i32_1 = arith.constant 0 : i32
    return %arg0, %c0_i32, %c0_i32_0 : i32, i32, i32
  }
}

module attributes {stable_mosaic.version = 11 : i64} {
  func.func @_conv_kernel(%arg0: i32, %arg1: memref<1x63x256xbf16, #tpu.memory_space<vmem>>, %arg2: memref<8x63xbf16, #tpu.memory_space<vmem>>, %arg3: memref<8x1xf32, #tpu.memory_space<vmem>>, %arg4: memref<1x8x256xbf16, #tpu.memory_space<vmem>>) attributes {dimension_semantics = [#tpu.dimension_semantics<parallel>], iteration_bounds = array<i64: 2>, scalar_prefetch = 0 : i64, scratch_operands = 0 : i64, tpu.core_type = #tpu.core_type<tc>, window_params = [{transform_indices = @transform_0, window_bounds = array<i64: 1, 63, 256>}, {pipeline_mode = #tpu.pipeline_mode<synchronous>, transform_indices = @transform_1, window_bounds = array<i64: 8, 63>}, {pipeline_mode = #tpu.pipeline_mode<synchronous>, transform_indices = @transform_2, window_bounds = array<i64: 8, 1>}, {transform_indices = @transform_3, window_bounds = array<i64: 1, 8, 256>}]} {
    %c0 = arith.constant 0 : index
    %c0_0 = arith.constant 0 : index
    %c0_1 = arith.constant 0 : index
    %0 = vector.load %arg1[%c0, %c0_0, %c0_1] : memref<1x63x256xbf16, #tpu.memory_space<vmem>>, vector<1x63x256xbf16>
    %1 = vector.shape_cast %0 : vector<1x63x256xbf16> to vector<63x256xbf16>
    %c0_2 = arith.constant 0 : index
    %c0_3 = arith.constant 0 : index
    %2 = vector.load %arg2[%c0_2, %c0_3] : memref<8x63xbf16, #tpu.memory_space<vmem>>, vector<8x63xbf16>
    %cst = arith.constant dense<0.000000e+00> : vector<8x256xf32>
    %3 = tpu.matmul %2, %1, %cst {dimension_numbers = #tpu.dot_dimension_numbers<[1], [0], [0], [1], [0, 0, 1, 1], [], []>} : vector<8x63xbf16>, vector<63x256xbf16>, vector<8x256xf32> -> vector<8x256xf32>
    %c0_4 = arith.constant 0 : index
    %c0_5 = arith.constant 0 : index
    %4 = vector.load %arg3[%c0_4, %c0_5] : memref<8x1xf32, #tpu.memory_space<vmem>>, vector<8x1xf32>
    %5 = vector.broadcast %4 : vector<8x1xf32> to vector<8x256xf32>
    %6 = arith.addf %3, %5 : vector<8x256xf32>
    %cst_6 = arith.constant 0.000000e+00 : f32
    %7 = vector.broadcast %cst_6 : f32 to vector<8x256xf32>
    %8 = arith.maximumf %6, %7 : vector<8x256xf32>
    %9 = arith.truncf %8 : vector<8x256xf32> to vector<8x256xbf16>
    %c0_7 = arith.constant 0 : index
    %c0_8 = arith.constant 0 : index
    %c0_9 = arith.constant 0 : index
    %10 = vector.load %arg4[%c0_7, %c0_8, %c0_9] : memref<1x8x256xbf16, #tpu.memory_space<vmem>>, vector<1x8x256xbf16>
    %11 = vector.shape_cast %10 : vector<1x8x256xbf16> to vector<8x256xbf16>
    %12 = vector.shape_cast %9 : vector<8x256xbf16> to vector<1x8x256xbf16>
    tpu.vector_store %arg4[%c0_7, %c0_8, %c0_9], %12 {strides = array<i32>} : memref<1x8x256xbf16, #tpu.memory_space<vmem>>, vector<1x8x256xbf16>,
    return
  }
  func.func @transform_0(%arg0: i32) -> (i32, i32, i32) {
    %c0_i32 = arith.constant 0 : i32
    %c0_i32_0 = arith.constant 0 : i32
    %c0_i32_1 = arith.constant 0 : i32
    return %arg0, %c0_i32, %c0_i32_0 : i32, i32, i32
  }
  func.func @transform_1(%arg0: i32) -> (i32, i32) {
    %c0_i32 = arith.constant 0 : i32
    %c0_i32_0 = arith.constant 0 : i32
    %c0_i32_1 = arith.constant 0 : i32
    return %c0_i32, %c0_i32_0 : i32, i32
  }
  func.func @transform_2(%arg0: i32) -> (i32, i32) {
    %c0_i32 = arith.constant 0 : i32
    %c0_i32_0 = arith.constant 0 : i32
    %c0_i32_1 = arith.constant 0 : i32
    return %c0_i32, %c0_i32_0 : i32, i32
  }
  func.func @transform_3(%arg0: i32) -> (i32, i32, i32) {
    %c0_i32 = arith.constant 0 : i32
    %c0_i32_0 = arith.constant 0 : i32
    %c0_i32_1 = arith.constant 0 : i32
    return %arg0, %c0_i32, %c0_i32_0 : i32, i32, i32
  }
}

module attributes {stable_mosaic.version = 11 : i64} {
  func.func @_conv_kernel(%arg0: i32, %arg1: memref<1x16x324xbf16, #tpu.memory_space<vmem>>, %arg2: memref<8x144xbf16, #tpu.memory_space<vmem>>, %arg3: memref<8x1xf32, #tpu.memory_space<vmem>>, %arg4: memref<1x8x288xbf16, #tpu.memory_space<vmem>>) attributes {dimension_semantics = [#tpu.dimension_semantics<parallel>], iteration_bounds = array<i64: 2>, scalar_prefetch = 0 : i64, scratch_operands = 0 : i64, tpu.core_type = #tpu.core_type<tc>, window_params = [{transform_indices = @transform_0, window_bounds = array<i64: 1, 16, 324>}, {pipeline_mode = #tpu.pipeline_mode<synchronous>, transform_indices = @transform_1, window_bounds = array<i64: 8, 144>}, {pipeline_mode = #tpu.pipeline_mode<synchronous>, transform_indices = @transform_2, window_bounds = array<i64: 8, 1>}, {transform_indices = @transform_3, window_bounds = array<i64: 1, 8, 288>}]} {
    %c0 = arith.constant 0 : index
    %c0_0 = arith.constant 0 : index
    %c0_1 = arith.constant 0 : index
    %0 = vector.load %arg1[%c0, %c0_0, %c0_1] : memref<1x16x324xbf16, #tpu.memory_space<vmem>>, vector<1x16x324xbf16>
    %1 = vector.shape_cast %0 : vector<1x16x324xbf16> to vector<16x324xbf16>
    %cst = arith.constant 0.000000e+00 : bf16
    %2 = vector.broadcast %cst : bf16 to vector<16x2xbf16>
    %3 = tpu.concatenate %1, %2 in 1 : vector<16x324xbf16>, vector<16x2xbf16> -> vector<16x326xbf16>
    %c0_2 = arith.constant 0 : index
    %c0_3 = arith.constant 0 : index
    %4 = vector.load %arg2[%c0_2, %c0_3] : memref<8x144xbf16, #tpu.memory_space<vmem>>, vector<8x144xbf16>
    %5 = vector.extract_strided_slice %3 {offsets = [0, 0], sizes = [16, 288], strides = [1, 1]} : vector<16x326xbf16> to vector<16x288xbf16>
    %6 = vector.extract_strided_slice %3 {offsets = [0, 1], sizes = [16, 288], strides = [1, 1]} : vector<16x326xbf16> to vector<16x288xbf16>
    %7 = vector.extract_strided_slice %3 {offsets = [0, 2], sizes = [16, 288], strides = [1, 1]} : vector<16x326xbf16> to vector<16x288xbf16>
    %8 = vector.extract_strided_slice %3 {offsets = [0, 18], sizes = [16, 288], strides = [1, 1]} : vector<16x326xbf16> to vector<16x288xbf16>
    %9 = vector.extract_strided_slice %3 {offsets = [0, 19], sizes = [16, 288], strides = [1, 1]} : vector<16x326xbf16> to vector<16x288xbf16>
    %10 = vector.extract_strided_slice %3 {offsets = [0, 20], sizes = [16, 288], strides = [1, 1]} : vector<16x326xbf16> to vector<16x288xbf16>
    %11 = vector.extract_strided_slice %3 {offsets = [0, 36], sizes = [16, 288], strides = [1, 1]} : vector<16x326xbf16> to vector<16x288xbf16>
    %12 = vector.extract_strided_slice %3 {offsets = [0, 37], sizes = [16, 288], strides = [1, 1]} : vector<16x326xbf16> to vector<16x288xbf16>
    %13 = vector.extract_strided_slice %3 {offsets = [0, 38], sizes = [16, 288], strides = [1, 1]} : vector<16x326xbf16> to vector<16x288xbf16>
    %14 = tpu.concatenate %5, %6, %7, %8, %9, %10, %11, %12, %13 in 0 : vector<16x288xbf16>, vector<16x288xbf16>, vector<16x288xbf16>, vector<16x288xbf16>, vector<16x288xbf16>, vector<16x288xbf16>, vector<16x288xbf16>, vector<16x288xbf16>, vector<16x288xbf16> -> vector<144x288xbf16>
    %15 = vector.extract_strided_slice %4 {offsets = [0, 0], sizes = [8, 72], strides = [1, 1]} : vector<8x144xbf16> to vector<8x72xbf16>
    %16 = vector.extract_strided_slice %14 {offsets = [0, 0], sizes = [72, 288], strides = [1, 1]} : vector<144x288xbf16> to vector<72x288xbf16>
    %cst_4 = arith.constant dense<0.000000e+00> : vector<8x288xf32>
    %17 = tpu.matmul %15, %16, %cst_4 {dimension_numbers = #tpu.dot_dimension_numbers<[1], [0], [0], [1], [0, 0, 1, 1], [], []>} : vector<8x72xbf16>, vector<72x288xbf16>, vector<8x288xf32> -> vector<8x288xf32>
    %18 = vector.extract_strided_slice %4 {offsets = [0, 72], sizes = [8, 72], strides = [1, 1]} : vector<8x144xbf16> to vector<8x72xbf16>
    %19 = vector.extract_strided_slice %14 {offsets = [72, 0], sizes = [72, 288], strides = [1, 1]} : vector<144x288xbf16> to vector<72x288xbf16>
    %cst_5 = arith.constant dense<0.000000e+00> : vector<8x288xf32>
    %20 = tpu.matmul %18, %19, %cst_5 {dimension_numbers = #tpu.dot_dimension_numbers<[1], [0], [0], [1], [0, 0, 1, 1], [], []>} : vector<8x72xbf16>, vector<72x288xbf16>, vector<8x288xf32> -> vector<8x288xf32>
    %21 = arith.addf %17, %20 : vector<8x288xf32>
    %c0_6 = arith.constant 0 : index
    %c0_7 = arith.constant 0 : index
    %22 = vector.load %arg3[%c0_6, %c0_7] : memref<8x1xf32, #tpu.memory_space<vmem>>, vector<8x1xf32>
    %23 = vector.broadcast %22 : vector<8x1xf32> to vector<8x288xf32>
    %24 = arith.addf %21, %23 : vector<8x288xf32>
    %cst_8 = arith.constant 0.000000e+00 : f32
    %25 = vector.broadcast %cst_8 : f32 to vector<8x288xf32>
    %26 = arith.maximumf %24, %25 : vector<8x288xf32>
    %27 = arith.truncf %26 : vector<8x288xf32> to vector<8x288xbf16>
    %c0_9 = arith.constant 0 : index
    %c0_10 = arith.constant 0 : index
    %c0_11 = arith.constant 0 : index
    %28 = vector.load %arg4[%c0_9, %c0_10, %c0_11] : memref<1x8x288xbf16, #tpu.memory_space<vmem>>, vector<1x8x288xbf16>
    %29 = vector.shape_cast %28 : vector<1x8x288xbf16> to vector<8x288xbf16>
    %30 = vector.shape_cast %27 : vector<8x288xbf16> to vector<1x8x288xbf16>
    tpu.vector_store %arg4[%c0_9, %c0_10, %c0_11], %30 {strides = array<i32>} : memref<1x8x288xbf16, #tpu.memory_space<vmem>>, vector<1x8x288xbf16>,
    return
  }
  func.func @transform_0(%arg0: i32) -> (i32, i32, i32) {
    %c0_i32 = arith.constant 0 : i32
    %c0_i32_0 = arith.constant 0 : i32
    %c0_i32_1 = arith.constant 0 : i32
    return %arg0, %c0_i32, %c0_i32_0 : i32, i32, i32
  }
  func.func @transform_1(%arg0: i32) -> (i32, i32) {
    %c0_i32 = arith.constant 0 : i32
    %c0_i32_0 = arith.constant 0 : i32
    %c0_i32_1 = arith.constant 0 : i32
    return %c0_i32, %c0_i32_0 : i32, i32
  }
  func.func @transform_2(%arg0: i32) -> (i32, i32) {
    %c0_i32 = arith.constant 0 : i32
    %c0_i32_0 = arith.constant 0 : i32
    %c0_i32_1 = arith.constant 0 : i32
    return %c0_i32, %c0_i32_0 : i32, i32
  }
  func.func @transform_3(%arg0: i32) -> (i32, i32, i32) {
    %c0_i32 = arith.constant 0 : i32
    %c0_i32_0 = arith.constant 0 : i32
    %c0_i32_1 = arith.constant 0 : i32
    return %arg0, %c0_i32, %c0_i32_0 : i32, i32, i32
  }
}

module attributes {stable_mosaic.version = 11 : i64} {
  func.func @_conv_chain_kernel(%arg0: i32, %arg1: memref<1x8x324xbf16, #tpu.memory_space<vmem>>, %arg2: memref<1x288xbf16, #tpu.memory_space<vmem>>, %arg3: memref<8x72xbf16, #tpu.memory_space<vmem>>, %arg4: memref<8x1xf32, #tpu.memory_space<vmem>>, %arg5: memref<48x72xbf16, #tpu.memory_space<vmem>>, %arg6: memref<48x1xf32, #tpu.memory_space<vmem>>, %arg7: memref<1x48x288xf32, #tpu.memory_space<vmem>>) attributes {dimension_semantics = [#tpu.dimension_semantics<parallel>], iteration_bounds = array<i64: 2>, scalar_prefetch = 0 : i64, scratch_operands = 0 : i64, tpu.core_type = #tpu.core_type<tc>, window_params = [{transform_indices = @transform_0, window_bounds = array<i64: 1, 8, 324>}, {pipeline_mode = #tpu.pipeline_mode<synchronous>, transform_indices = @transform_1, window_bounds = array<i64: 1, 288>}, {pipeline_mode = #tpu.pipeline_mode<synchronous>, transform_indices = @transform_2, window_bounds = array<i64: 8, 72>}, {pipeline_mode = #tpu.pipeline_mode<synchronous>, transform_indices = @transform_3, window_bounds = array<i64: 8, 1>}, {pipeline_mode = #tpu.pipeline_mode<synchronous>, transform_indices = @transform_4, window_bounds = array<i64: 48, 72>}, {pipeline_mode = #tpu.pipeline_mode<synchronous>, transform_indices = @transform_5, window_bounds = array<i64: 48, 1>}, {transform_indices = @transform_6, window_bounds = array<i64: 1, 48, 288>}]} {
    %c0 = arith.constant 0 : index
    %c0_0 = arith.constant 0 : index
    %0 = vector.load %arg2[%c0, %c0_0] : memref<1x288xbf16, #tpu.memory_space<vmem>>, vector<1x288xbf16>
    %c0_1 = arith.constant 0 : index
    %c0_2 = arith.constant 0 : index
    %c0_3 = arith.constant 0 : index
    %1 = vector.load %arg1[%c0_1, %c0_2, %c0_3] : memref<1x8x324xbf16, #tpu.memory_space<vmem>>, vector<1x8x324xbf16>
    %2 = vector.shape_cast %1 : vector<1x8x324xbf16> to vector<8x324xbf16>
    %c0_4 = arith.constant 0 : index
    %c0_5 = arith.constant 0 : index
    %3 = vector.load %arg3[%c0_4, %c0_5] : memref<8x72xbf16, #tpu.memory_space<vmem>>, vector<8x72xbf16>
    %c0_6 = arith.constant 0 : index
    %c0_7 = arith.constant 0 : index
    %4 = vector.load %arg4[%c0_6, %c0_7] : memref<8x1xf32, #tpu.memory_space<vmem>>, vector<8x1xf32>
    %cst = arith.constant 0.000000e+00 : bf16
    %5 = vector.broadcast %cst : bf16 to vector<8x2xbf16>
    %6 = tpu.concatenate %2, %5 in 1 : vector<8x324xbf16>, vector<8x2xbf16> -> vector<8x326xbf16>
    %7 = vector.extract_strided_slice %6 {offsets = [0, 0], sizes = [8, 288], strides = [1, 1]} : vector<8x326xbf16> to vector<8x288xbf16>
    %8 = vector.extract_strided_slice %6 {offsets = [0, 1], sizes = [8, 288], strides = [1, 1]} : vector<8x326xbf16> to vector<8x288xbf16>
    %9 = vector.extract_strided_slice %6 {offsets = [0, 2], sizes = [8, 288], strides = [1, 1]} : vector<8x326xbf16> to vector<8x288xbf16>
    %10 = vector.extract_strided_slice %6 {offsets = [0, 18], sizes = [8, 288], strides = [1, 1]} : vector<8x326xbf16> to vector<8x288xbf16>
    %11 = vector.extract_strided_slice %6 {offsets = [0, 19], sizes = [8, 288], strides = [1, 1]} : vector<8x326xbf16> to vector<8x288xbf16>
    %12 = vector.extract_strided_slice %6 {offsets = [0, 20], sizes = [8, 288], strides = [1, 1]} : vector<8x326xbf16> to vector<8x288xbf16>
    %13 = vector.extract_strided_slice %6 {offsets = [0, 36], sizes = [8, 288], strides = [1, 1]} : vector<8x326xbf16> to vector<8x288xbf16>
    %14 = vector.extract_strided_slice %6 {offsets = [0, 37], sizes = [8, 288], strides = [1, 1]} : vector<8x326xbf16> to vector<8x288xbf16>
    %15 = vector.extract_strided_slice %6 {offsets = [0, 38], sizes = [8, 288], strides = [1, 1]} : vector<8x326xbf16> to vector<8x288xbf16>
    %16 = tpu.concatenate %7, %8, %9, %10, %11, %12, %13, %14, %15 in 0 : vector<8x288xbf16>, vector<8x288xbf16>, vector<8x288xbf16>, vector<8x288xbf16>, vector<8x288xbf16>, vector<8x288xbf16>, vector<8x288xbf16>, vector<8x288xbf16>, vector<8x288xbf16> -> vector<72x288xbf16>
    %cst_8 = arith.constant dense<0.000000e+00> : vector<8x288xf32>
    %17 = tpu.matmul %3, %16, %cst_8 {dimension_numbers = #tpu.dot_dimension_numbers<[1], [0], [0], [1], [0, 0, 1, 1], [], []>} : vector<8x72xbf16>, vector<72x288xbf16>, vector<8x288xf32> -> vector<8x288xf32>
    %18 = vector.broadcast %4 : vector<8x1xf32> to vector<8x288xf32>
    %19 = arith.addf %17, %18 : vector<8x288xf32>
    %cst_9 = arith.constant 0.000000e+00 : f32
    %20 = vector.broadcast %cst_9 : f32 to vector<8x288xf32>
    %21 = arith.maximumf %19, %20 : vector<8x288xf32>
    %22 = arith.extf %0 : vector<1x288xbf16> to vector<1x288xf32>
    %23 = vector.broadcast %22 : vector<1x288xf32> to vector<8x288xf32>
    %24 = arith.mulf %21, %23 : vector<8x288xf32>
    %25 = arith.truncf %24 : vector<8x288xf32> to vector<8x288xbf16>
    %cst_10 = arith.constant 0.000000e+00 : bf16
    %26 = vector.broadcast %cst_10 : bf16 to vector<8x19xbf16>
    %cst_11 = arith.constant 0.000000e+00 : bf16
    %27 = vector.broadcast %cst_11 : bf16 to vector<8x17xbf16>
    %28 = tpu.concatenate %26, %25, %27 in 1 : vector<8x19xbf16>, vector<8x288xbf16>, vector<8x17xbf16> -> vector<8x324xbf16>
    %c0_12 = arith.constant 0 : index
    %c0_13 = arith.constant 0 : index
    %29 = vector.load %arg5[%c0_12, %c0_13] : memref<48x72xbf16, #tpu.memory_space<vmem>>, vector<48x72xbf16>
    %c0_14 = arith.constant 0 : index
    %c0_15 = arith.constant 0 : index
    %30 = vector.load %arg6[%c0_14, %c0_15] : memref<48x1xf32, #tpu.memory_space<vmem>>, vector<48x1xf32>
    %cst_16 = arith.constant 0.000000e+00 : bf16
    %31 = vector.broadcast %cst_16 : bf16 to vector<8x2xbf16>
    %32 = tpu.concatenate %28, %31 in 1 : vector<8x324xbf16>, vector<8x2xbf16> -> vector<8x326xbf16>
    %33 = vector.extract_strided_slice %32 {offsets = [0, 0], sizes = [8, 288], strides = [1, 1]} : vector<8x326xbf16> to vector<8x288xbf16>
    %34 = vector.extract_strided_slice %32 {offsets = [0, 1], sizes = [8, 288], strides = [1, 1]} : vector<8x326xbf16> to vector<8x288xbf16>
    %35 = vector.extract_strided_slice %32 {offsets = [0, 2], sizes = [8, 288], strides = [1, 1]} : vector<8x326xbf16> to vector<8x288xbf16>
    %36 = vector.extract_strided_slice %32 {offsets = [0, 18], sizes = [8, 288], strides = [1, 1]} : vector<8x326xbf16> to vector<8x288xbf16>
    %37 = vector.extract_strided_slice %32 {offsets = [0, 19], sizes = [8, 288], strides = [1, 1]} : vector<8x326xbf16> to vector<8x288xbf16>
    %38 = vector.extract_strided_slice %32 {offsets = [0, 20], sizes = [8, 288], strides = [1, 1]} : vector<8x326xbf16> to vector<8x288xbf16>
    %39 = vector.extract_strided_slice %32 {offsets = [0, 36], sizes = [8, 288], strides = [1, 1]} : vector<8x326xbf16> to vector<8x288xbf16>
    %40 = vector.extract_strided_slice %32 {offsets = [0, 37], sizes = [8, 288], strides = [1, 1]} : vector<8x326xbf16> to vector<8x288xbf16>
    %41 = vector.extract_strided_slice %32 {offsets = [0, 38], sizes = [8, 288], strides = [1, 1]} : vector<8x326xbf16> to vector<8x288xbf16>
    %42 = tpu.concatenate %33, %34, %35, %36, %37, %38, %39, %40, %41 in 0 : vector<8x288xbf16>, vector<8x288xbf16>, vector<8x288xbf16>, vector<8x288xbf16>, vector<8x288xbf16>, vector<8x288xbf16>, vector<8x288xbf16>, vector<8x288xbf16>, vector<8x288xbf16> -> vector<72x288xbf16>
    %cst_17 = arith.constant dense<0.000000e+00> : vector<48x288xf32>
    %43 = tpu.matmul %29, %42, %cst_17 {dimension_numbers = #tpu.dot_dimension_numbers<[1], [0], [0], [1], [0, 0, 1, 1], [], []>} : vector<48x72xbf16>, vector<72x288xbf16>, vector<48x288xf32> -> vector<48x288xf32>
    %44 = vector.broadcast %30 : vector<48x1xf32> to vector<48x288xf32>
    %45 = arith.addf %43, %44 : vector<48x288xf32>
    %c0_18 = arith.constant 0 : index
    %c0_19 = arith.constant 0 : index
    %c0_20 = arith.constant 0 : index
    %46 = vector.load %arg7[%c0_18, %c0_19, %c0_20] : memref<1x48x288xf32, #tpu.memory_space<vmem>>, vector<1x48x288xf32>
    %47 = vector.shape_cast %46 : vector<1x48x288xf32> to vector<48x288xf32>
    %48 = vector.shape_cast %45 : vector<48x288xf32> to vector<1x48x288xf32>
    tpu.vector_store %arg7[%c0_18, %c0_19, %c0_20], %48 {strides = array<i32>} : memref<1x48x288xf32, #tpu.memory_space<vmem>>, vector<1x48x288xf32>,
    return
  }
  func.func @transform_0(%arg0: i32) -> (i32, i32, i32) {
    %c0_i32 = arith.constant 0 : i32
    %c0_i32_0 = arith.constant 0 : i32
    %c0_i32_1 = arith.constant 0 : i32
    return %arg0, %c0_i32, %c0_i32_0 : i32, i32, i32
  }
  func.func @transform_1(%arg0: i32) -> (i32, i32) {
    %c0_i32 = arith.constant 0 : i32
    %c0_i32_0 = arith.constant 0 : i32
    %c0_i32_1 = arith.constant 0 : i32
    return %c0_i32, %c0_i32_0 : i32, i32
  }
  func.func @transform_2(%arg0: i32) -> (i32, i32) {
    %c0_i32 = arith.constant 0 : i32
    %c0_i32_0 = arith.constant 0 : i32
    %c0_i32_1 = arith.constant 0 : i32
    return %c0_i32, %c0_i32_0 : i32, i32
  }
  func.func @transform_3(%arg0: i32) -> (i32, i32) {
    %c0_i32 = arith.constant 0 : i32
    %c0_i32_0 = arith.constant 0 : i32
    %c0_i32_1 = arith.constant 0 : i32
    return %c0_i32, %c0_i32_0 : i32, i32
  }
  func.func @transform_4(%arg0: i32) -> (i32, i32) {
    %c0_i32 = arith.constant 0 : i32
    %c0_i32_0 = arith.constant 0 : i32
    %c0_i32_1 = arith.constant 0 : i32
    return %c0_i32, %c0_i32_0 : i32, i32
  }
  func.func @transform_5(%arg0: i32) -> (i32, i32) {
    %c0_i32 = arith.constant 0 : i32
    %c0_i32_0 = arith.constant 0 : i32
    %c0_i32_1 = arith.constant 0 : i32
    return %c0_i32, %c0_i32_0 : i32, i32
  }
  func.func @transform_6(%arg0: i32) -> (i32, i32, i32) {
    %c0_i32 = arith.constant 0 : i32
    %c0_i32_0 = arith.constant 0 : i32
    %c0_i32_1 = arith.constant 0 : i32
    return %arg0, %c0_i32, %c0_i32_0 : i32, i32, i32
  }
}

module attributes {stable_mosaic.version = 11 : i64} {
  func.func @_conv_kernel(%arg0: i32, %arg1: memref<1x32x81xbf16, #tpu.memory_space<vmem>>, %arg2: memref<8x128xbf16, #tpu.memory_space<vmem>>, %arg3: memref<8x1xf32, #tpu.memory_space<vmem>>, %arg4: memref<1x8x72xbf16, #tpu.memory_space<vmem>>) attributes {dimension_semantics = [#tpu.dimension_semantics<parallel>], iteration_bounds = array<i64: 2>, scalar_prefetch = 0 : i64, scratch_operands = 0 : i64, tpu.core_type = #tpu.core_type<tc>, window_params = [{transform_indices = @transform_0, window_bounds = array<i64: 1, 32, 81>}, {pipeline_mode = #tpu.pipeline_mode<synchronous>, transform_indices = @transform_1, window_bounds = array<i64: 8, 128>}, {pipeline_mode = #tpu.pipeline_mode<synchronous>, transform_indices = @transform_2, window_bounds = array<i64: 8, 1>}, {transform_indices = @transform_3, window_bounds = array<i64: 1, 8, 72>}]} {
    %c0 = arith.constant 0 : index
    %c0_0 = arith.constant 0 : index
    %c0_1 = arith.constant 0 : index
    %0 = vector.load %arg1[%c0, %c0_0, %c0_1] : memref<1x32x81xbf16, #tpu.memory_space<vmem>>, vector<1x32x81xbf16>
    %1 = vector.shape_cast %0 : vector<1x32x81xbf16> to vector<32x81xbf16>
    %cst = arith.constant 0.000000e+00 : bf16
    %2 = vector.broadcast %cst : bf16 to vector<32x1xbf16>
    %3 = tpu.concatenate %1, %2 in 1 : vector<32x81xbf16>, vector<32x1xbf16> -> vector<32x82xbf16>
    %c0_2 = arith.constant 0 : index
    %c0_3 = arith.constant 0 : index
    %4 = vector.load %arg2[%c0_2, %c0_3] : memref<8x128xbf16, #tpu.memory_space<vmem>>, vector<8x128xbf16>
    %5 = vector.extract_strided_slice %3 {offsets = [0, 0], sizes = [32, 72], strides = [1, 1]} : vector<32x82xbf16> to vector<32x72xbf16>
    %6 = vector.extract_strided_slice %3 {offsets = [0, 1], sizes = [32, 72], strides = [1, 1]} : vector<32x82xbf16> to vector<32x72xbf16>
    %7 = vector.extract_strided_slice %3 {offsets = [0, 9], sizes = [32, 72], strides = [1, 1]} : vector<32x82xbf16> to vector<32x72xbf16>
    %8 = vector.extract_strided_slice %3 {offsets = [0, 10], sizes = [32, 72], strides = [1, 1]} : vector<32x82xbf16> to vector<32x72xbf16>
    %9 = tpu.concatenate %5, %6, %7, %8 in 0 : vector<32x72xbf16>, vector<32x72xbf16>, vector<32x72xbf16>, vector<32x72xbf16> -> vector<128x72xbf16>
    %cst_4 = arith.constant dense<0.000000e+00> : vector<8x72xf32>
    %10 = tpu.matmul %4, %9, %cst_4 {dimension_numbers = #tpu.dot_dimension_numbers<[1], [0], [0], [1], [0, 0, 1, 1], [], []>} : vector<8x128xbf16>, vector<128x72xbf16>, vector<8x72xf32> -> vector<8x72xf32>
    %c0_5 = arith.constant 0 : index
    %c0_6 = arith.constant 0 : index
    %11 = vector.load %arg3[%c0_5, %c0_6] : memref<8x1xf32, #tpu.memory_space<vmem>>, vector<8x1xf32>
    %12 = vector.broadcast %11 : vector<8x1xf32> to vector<8x72xf32>
    %13 = arith.addf %10, %12 : vector<8x72xf32>
    %cst_7 = arith.constant 0.000000e+00 : f32
    %14 = vector.broadcast %cst_7 : f32 to vector<8x72xf32>
    %15 = arith.maximumf %13, %14 : vector<8x72xf32>
    %16 = arith.truncf %15 : vector<8x72xf32> to vector<8x72xbf16>
    %c0_8 = arith.constant 0 : index
    %c0_9 = arith.constant 0 : index
    %c0_10 = arith.constant 0 : index
    %17 = vector.load %arg4[%c0_8, %c0_9, %c0_10] : memref<1x8x72xbf16, #tpu.memory_space<vmem>>, vector<1x8x72xbf16>
    %18 = vector.shape_cast %17 : vector<1x8x72xbf16> to vector<8x72xbf16>
    %19 = vector.shape_cast %16 : vector<8x72xbf16> to vector<1x8x72xbf16>
    tpu.vector_store %arg4[%c0_8, %c0_9, %c0_10], %19 {strides = array<i32>} : memref<1x8x72xbf16, #tpu.memory_space<vmem>>, vector<1x8x72xbf16>,
    return
  }
  func.func @transform_0(%arg0: i32) -> (i32, i32, i32) {
    %c0_i32 = arith.constant 0 : i32
    %c0_i32_0 = arith.constant 0 : i32
    %c0_i32_1 = arith.constant 0 : i32
    return %arg0, %c0_i32, %c0_i32_0 : i32, i32, i32
  }
  func.func @transform_1(%arg0: i32) -> (i32, i32) {
    %c0_i32 = arith.constant 0 : i32
    %c0_i32_0 = arith.constant 0 : i32
    %c0_i32_1 = arith.constant 0 : i32
    return %c0_i32, %c0_i32_0 : i32, i32
  }
  func.func @transform_2(%arg0: i32) -> (i32, i32) {
    %c0_i32 = arith.constant 0 : i32
    %c0_i32_0 = arith.constant 0 : i32
    %c0_i32_1 = arith.constant 0 : i32
    return %c0_i32, %c0_i32_0 : i32, i32
  }
  func.func @transform_3(%arg0: i32) -> (i32, i32, i32) {
    %c0_i32 = arith.constant 0 : i32
    %c0_i32_0 = arith.constant 0 : i32
    %c0_i32_1 = arith.constant 0 : i32
    return %arg0, %c0_i32, %c0_i32_0 : i32, i32, i32
  }
}

module attributes {stable_mosaic.version = 11 : i64} {
  func.func @_conv_kernel(%arg0: i32, %arg1: memref<1x8x100xbf16, #tpu.memory_space<vmem>>, %arg2: memref<8x72xbf16, #tpu.memory_space<vmem>>, %arg3: memref<8x1xf32, #tpu.memory_space<vmem>>, %arg4: memref<1x8x80xbf16, #tpu.memory_space<vmem>>) attributes {dimension_semantics = [#tpu.dimension_semantics<parallel>], iteration_bounds = array<i64: 2>, scalar_prefetch = 0 : i64, scratch_operands = 0 : i64, tpu.core_type = #tpu.core_type<tc>, window_params = [{transform_indices = @transform_0, window_bounds = array<i64: 1, 8, 100>}, {pipeline_mode = #tpu.pipeline_mode<synchronous>, transform_indices = @transform_1, window_bounds = array<i64: 8, 72>}, {pipeline_mode = #tpu.pipeline_mode<synchronous>, transform_indices = @transform_2, window_bounds = array<i64: 8, 1>}, {transform_indices = @transform_3, window_bounds = array<i64: 1, 8, 80>}]} {
    %c0 = arith.constant 0 : index
    %c0_0 = arith.constant 0 : index
    %c0_1 = arith.constant 0 : index
    %0 = vector.load %arg1[%c0, %c0_0, %c0_1] : memref<1x8x100xbf16, #tpu.memory_space<vmem>>, vector<1x8x100xbf16>
    %1 = vector.shape_cast %0 : vector<1x8x100xbf16> to vector<8x100xbf16>
    %cst = arith.constant 0.000000e+00 : bf16
    %2 = vector.broadcast %cst : bf16 to vector<8x2xbf16>
    %3 = tpu.concatenate %1, %2 in 1 : vector<8x100xbf16>, vector<8x2xbf16> -> vector<8x102xbf16>
    %c0_2 = arith.constant 0 : index
    %c0_3 = arith.constant 0 : index
    %4 = vector.load %arg2[%c0_2, %c0_3] : memref<8x72xbf16, #tpu.memory_space<vmem>>, vector<8x72xbf16>
    %5 = vector.extract_strided_slice %3 {offsets = [0, 0], sizes = [8, 80], strides = [1, 1]} : vector<8x102xbf16> to vector<8x80xbf16>
    %6 = vector.extract_strided_slice %3 {offsets = [0, 1], sizes = [8, 80], strides = [1, 1]} : vector<8x102xbf16> to vector<8x80xbf16>
    %7 = vector.extract_strided_slice %3 {offsets = [0, 2], sizes = [8, 80], strides = [1, 1]} : vector<8x102xbf16> to vector<8x80xbf16>
    %8 = vector.extract_strided_slice %3 {offsets = [0, 10], sizes = [8, 80], strides = [1, 1]} : vector<8x102xbf16> to vector<8x80xbf16>
    %9 = vector.extract_strided_slice %3 {offsets = [0, 11], sizes = [8, 80], strides = [1, 1]} : vector<8x102xbf16> to vector<8x80xbf16>
    %10 = vector.extract_strided_slice %3 {offsets = [0, 12], sizes = [8, 80], strides = [1, 1]} : vector<8x102xbf16> to vector<8x80xbf16>
    %11 = vector.extract_strided_slice %3 {offsets = [0, 20], sizes = [8, 80], strides = [1, 1]} : vector<8x102xbf16> to vector<8x80xbf16>
    %12 = vector.extract_strided_slice %3 {offsets = [0, 21], sizes = [8, 80], strides = [1, 1]} : vector<8x102xbf16> to vector<8x80xbf16>
    %13 = vector.extract_strided_slice %3 {offsets = [0, 22], sizes = [8, 80], strides = [1, 1]} : vector<8x102xbf16> to vector<8x80xbf16>
    %14 = tpu.concatenate %5, %6, %7, %8, %9, %10, %11, %12, %13 in 0 : vector<8x80xbf16>, vector<8x80xbf16>, vector<8x80xbf16>, vector<8x80xbf16>, vector<8x80xbf16>, vector<8x80xbf16>, vector<8x80xbf16>, vector<8x80xbf16>, vector<8x80xbf16> -> vector<72x80xbf16>
    %cst_4 = arith.constant dense<0.000000e+00> : vector<8x80xf32>
    %15 = tpu.matmul %4, %14, %cst_4 {dimension_numbers = #tpu.dot_dimension_numbers<[1], [0], [0], [1], [0, 0, 1, 1], [], []>} : vector<8x72xbf16>, vector<72x80xbf16>, vector<8x80xf32> -> vector<8x80xf32>
    %c0_5 = arith.constant 0 : index
    %c0_6 = arith.constant 0 : index
    %16 = vector.load %arg3[%c0_5, %c0_6] : memref<8x1xf32, #tpu.memory_space<vmem>>, vector<8x1xf32>
    %17 = vector.broadcast %16 : vector<8x1xf32> to vector<8x80xf32>
    %18 = arith.addf %15, %17 : vector<8x80xf32>
    %cst_7 = arith.constant 0.000000e+00 : f32
    %19 = vector.broadcast %cst_7 : f32 to vector<8x80xf32>
    %20 = arith.maximumf %18, %19 : vector<8x80xf32>
    %21 = arith.truncf %20 : vector<8x80xf32> to vector<8x80xbf16>
    %c0_8 = arith.constant 0 : index
    %c0_9 = arith.constant 0 : index
    %c0_10 = arith.constant 0 : index
    %22 = vector.load %arg4[%c0_8, %c0_9, %c0_10] : memref<1x8x80xbf16, #tpu.memory_space<vmem>>, vector<1x8x80xbf16>
    %23 = vector.shape_cast %22 : vector<1x8x80xbf16> to vector<8x80xbf16>
    %24 = vector.shape_cast %21 : vector<8x80xbf16> to vector<1x8x80xbf16>
    tpu.vector_store %arg4[%c0_8, %c0_9, %c0_10], %24 {strides = array<i32>} : memref<1x8x80xbf16, #tpu.memory_space<vmem>>, vector<1x8x80xbf16>,
    return
  }
  func.func @transform_0(%arg0: i32) -> (i32, i32, i32) {
    %c0_i32 = arith.constant 0 : i32
    %c0_i32_0 = arith.constant 0 : i32
    %c0_i32_1 = arith.constant 0 : i32
    return %arg0, %c0_i32, %c0_i32_0 : i32, i32, i32
  }
  func.func @transform_1(%arg0: i32) -> (i32, i32) {
    %c0_i32 = arith.constant 0 : i32
    %c0_i32_0 = arith.constant 0 : i32
    %c0_i32_1 = arith.constant 0 : i32
    return %c0_i32, %c0_i32_0 : i32, i32
  }
  func.func @transform_2(%arg0: i32) -> (i32, i32) {
    %c0_i32 = arith.constant 0 : i32
    %c0_i32_0 = arith.constant 0 : i32
    %c0_i32_1 = arith.constant 0 : i32
    return %c0_i32, %c0_i32_0 : i32, i32
  }
  func.func @transform_3(%arg0: i32) -> (i32, i32, i32) {
    %c0_i32 = arith.constant 0 : i32
    %c0_i32_0 = arith.constant 0 : i32
    %c0_i32_1 = arith.constant 0 : i32
    return %arg0, %c0_i32, %c0_i32_0 : i32, i32, i32
  }
}

module attributes {stable_mosaic.version = 11 : i64} {
  func.func @_conv_kernel(%arg0: i32, %arg1: memref<1x16x256xbf16, #tpu.memory_space<vmem>>, %arg2: memref<8x16xbf16, #tpu.memory_space<vmem>>, %arg3: memref<8x1xf32, #tpu.memory_space<vmem>>, %arg4: memref<1x8x256xbf16, #tpu.memory_space<vmem>>) attributes {dimension_semantics = [#tpu.dimension_semantics<parallel>], iteration_bounds = array<i64: 2>, scalar_prefetch = 0 : i64, scratch_operands = 0 : i64, tpu.core_type = #tpu.core_type<tc>, window_params = [{transform_indices = @transform_0, window_bounds = array<i64: 1, 16, 256>}, {pipeline_mode = #tpu.pipeline_mode<synchronous>, transform_indices = @transform_1, window_bounds = array<i64: 8, 16>}, {pipeline_mode = #tpu.pipeline_mode<synchronous>, transform_indices = @transform_2, window_bounds = array<i64: 8, 1>}, {transform_indices = @transform_3, window_bounds = array<i64: 1, 8, 256>}]} {
    %c0 = arith.constant 0 : index
    %c0_0 = arith.constant 0 : index
    %c0_1 = arith.constant 0 : index
    %0 = vector.load %arg1[%c0, %c0_0, %c0_1] : memref<1x16x256xbf16, #tpu.memory_space<vmem>>, vector<1x16x256xbf16>
    %1 = vector.shape_cast %0 : vector<1x16x256xbf16> to vector<16x256xbf16>
    %c0_2 = arith.constant 0 : index
    %c0_3 = arith.constant 0 : index
    %2 = vector.load %arg2[%c0_2, %c0_3] : memref<8x16xbf16, #tpu.memory_space<vmem>>, vector<8x16xbf16>
    %cst = arith.constant dense<0.000000e+00> : vector<8x256xf32>
    %3 = tpu.matmul %2, %1, %cst {dimension_numbers = #tpu.dot_dimension_numbers<[1], [0], [0], [1], [0, 0, 1, 1], [], []>} : vector<8x16xbf16>, vector<16x256xbf16>, vector<8x256xf32> -> vector<8x256xf32>
    %c0_4 = arith.constant 0 : index
    %c0_5 = arith.constant 0 : index
    %4 = vector.load %arg3[%c0_4, %c0_5] : memref<8x1xf32, #tpu.memory_space<vmem>>, vector<8x1xf32>
    %5 = vector.broadcast %4 : vector<8x1xf32> to vector<8x256xf32>
    %6 = arith.addf %3, %5 : vector<8x256xf32>
    %cst_6 = arith.constant 0.000000e+00 : f32
    %7 = vector.broadcast %cst_6 : f32 to vector<8x256xf32>
    %8 = arith.maximumf %6, %7 : vector<8x256xf32>
    %9 = arith.truncf %8 : vector<8x256xf32> to vector<8x256xbf16>
    %c0_7 = arith.constant 0 : index
    %c0_8 = arith.constant 0 : index
    %c0_9 = arith.constant 0 : index
    %10 = vector.load %arg4[%c0_7, %c0_8, %c0_9] : memref<1x8x256xbf16, #tpu.memory_space<vmem>>, vector<1x8x256xbf16>
    %11 = vector.shape_cast %10 : vector<1x8x256xbf16> to vector<8x256xbf16>
    %12 = vector.shape_cast %9 : vector<8x256xbf16> to vector<1x8x256xbf16>
    tpu.vector_store %arg4[%c0_7, %c0_8, %c0_9], %12 {strides = array<i32>} : memref<1x8x256xbf16, #tpu.memory_space<vmem>>, vector<1x8x256xbf16>,
    return
  }
  func.func @transform_0(%arg0: i32) -> (i32, i32, i32) {
    %c0_i32 = arith.constant 0 : i32
    %c0_i32_0 = arith.constant 0 : i32
    %c0_i32_1 = arith.constant 0 : i32
    return %arg0, %c0_i32, %c0_i32_0 : i32, i32, i32
  }
  func.func @transform_1(%arg0: i32) -> (i32, i32) {
    %c0_i32 = arith.constant 0 : i32
    %c0_i32_0 = arith.constant 0 : i32
    %c0_i32_1 = arith.constant 0 : i32
    return %c0_i32, %c0_i32_0 : i32, i32
  }
  func.func @transform_2(%arg0: i32) -> (i32, i32) {
    %c0_i32 = arith.constant 0 : i32
    %c0_i32_0 = arith.constant 0 : i32
    %c0_i32_1 = arith.constant 0 : i32
    return %c0_i32, %c0_i32_0 : i32, i32
  }
  func.func @transform_3(%arg0: i32) -> (i32, i32, i32) {
    %c0_i32 = arith.constant 0 : i32
    %c0_i32_0 = arith.constant 0 : i32
    %c0_i32_1 = arith.constant 0 : i32
    return %arg0, %c0_i32, %c0_i32_0 : i32, i32, i32
  }
}

module attributes {stable_mosaic.version = 11 : i64} {
  func.func @_conv_chain_kernel(%arg0: i32, %arg1: memref<1x16x324xbf16, #tpu.memory_space<vmem>>, %arg2: memref<1x288xbf16, #tpu.memory_space<vmem>>, %arg3: memref<8x144xbf16, #tpu.memory_space<vmem>>, %arg4: memref<8x1xf32, #tpu.memory_space<vmem>>, %arg5: memref<8x72xbf16, #tpu.memory_space<vmem>>, %arg6: memref<8x1xf32, #tpu.memory_space<vmem>>, %arg7: memref<1x8x288xbf16, #tpu.memory_space<vmem>>) attributes {dimension_semantics = [#tpu.dimension_semantics<parallel>], iteration_bounds = array<i64: 2>, scalar_prefetch = 0 : i64, scratch_operands = 0 : i64, tpu.core_type = #tpu.core_type<tc>, window_params = [{transform_indices = @transform_0, window_bounds = array<i64: 1, 16, 324>}, {pipeline_mode = #tpu.pipeline_mode<synchronous>, transform_indices = @transform_1, window_bounds = array<i64: 1, 288>}, {pipeline_mode = #tpu.pipeline_mode<synchronous>, transform_indices = @transform_2, window_bounds = array<i64: 8, 144>}, {pipeline_mode = #tpu.pipeline_mode<synchronous>, transform_indices = @transform_3, window_bounds = array<i64: 8, 1>}, {pipeline_mode = #tpu.pipeline_mode<synchronous>, transform_indices = @transform_4, window_bounds = array<i64: 8, 72>}, {pipeline_mode = #tpu.pipeline_mode<synchronous>, transform_indices = @transform_5, window_bounds = array<i64: 8, 1>}, {transform_indices = @transform_6, window_bounds = array<i64: 1, 8, 288>}]} {
    %c0 = arith.constant 0 : index
    %c0_0 = arith.constant 0 : index
    %0 = vector.load %arg2[%c0, %c0_0] : memref<1x288xbf16, #tpu.memory_space<vmem>>, vector<1x288xbf16>
    %c0_1 = arith.constant 0 : index
    %c0_2 = arith.constant 0 : index
    %c0_3 = arith.constant 0 : index
    %1 = vector.load %arg1[%c0_1, %c0_2, %c0_3] : memref<1x16x324xbf16, #tpu.memory_space<vmem>>, vector<1x16x324xbf16>
    %2 = vector.shape_cast %1 : vector<1x16x324xbf16> to vector<16x324xbf16>
    %c0_4 = arith.constant 0 : index
    %c0_5 = arith.constant 0 : index
    %3 = vector.load %arg3[%c0_4, %c0_5] : memref<8x144xbf16, #tpu.memory_space<vmem>>, vector<8x144xbf16>
    %c0_6 = arith.constant 0 : index
    %c0_7 = arith.constant 0 : index
    %4 = vector.load %arg4[%c0_6, %c0_7] : memref<8x1xf32, #tpu.memory_space<vmem>>, vector<8x1xf32>
    %cst = arith.constant 0.000000e+00 : bf16
    %5 = vector.broadcast %cst : bf16 to vector<16x2xbf16>
    %6 = tpu.concatenate %2, %5 in 1 : vector<16x324xbf16>, vector<16x2xbf16> -> vector<16x326xbf16>
    %7 = vector.extract_strided_slice %6 {offsets = [0, 0], sizes = [16, 288], strides = [1, 1]} : vector<16x326xbf16> to vector<16x288xbf16>
    %8 = vector.extract_strided_slice %6 {offsets = [0, 1], sizes = [16, 288], strides = [1, 1]} : vector<16x326xbf16> to vector<16x288xbf16>
    %9 = vector.extract_strided_slice %6 {offsets = [0, 2], sizes = [16, 288], strides = [1, 1]} : vector<16x326xbf16> to vector<16x288xbf16>
    %10 = vector.extract_strided_slice %6 {offsets = [0, 18], sizes = [16, 288], strides = [1, 1]} : vector<16x326xbf16> to vector<16x288xbf16>
    %11 = vector.extract_strided_slice %6 {offsets = [0, 19], sizes = [16, 288], strides = [1, 1]} : vector<16x326xbf16> to vector<16x288xbf16>
    %12 = vector.extract_strided_slice %6 {offsets = [0, 20], sizes = [16, 288], strides = [1, 1]} : vector<16x326xbf16> to vector<16x288xbf16>
    %13 = vector.extract_strided_slice %6 {offsets = [0, 36], sizes = [16, 288], strides = [1, 1]} : vector<16x326xbf16> to vector<16x288xbf16>
    %14 = vector.extract_strided_slice %6 {offsets = [0, 37], sizes = [16, 288], strides = [1, 1]} : vector<16x326xbf16> to vector<16x288xbf16>
    %15 = vector.extract_strided_slice %6 {offsets = [0, 38], sizes = [16, 288], strides = [1, 1]} : vector<16x326xbf16> to vector<16x288xbf16>
    %16 = tpu.concatenate %7, %8, %9, %10, %11, %12, %13, %14, %15 in 0 : vector<16x288xbf16>, vector<16x288xbf16>, vector<16x288xbf16>, vector<16x288xbf16>, vector<16x288xbf16>, vector<16x288xbf16>, vector<16x288xbf16>, vector<16x288xbf16>, vector<16x288xbf16> -> vector<144x288xbf16>
    %17 = vector.extract_strided_slice %3 {offsets = [0, 0], sizes = [8, 72], strides = [1, 1]} : vector<8x144xbf16> to vector<8x72xbf16>
    %18 = vector.extract_strided_slice %16 {offsets = [0, 0], sizes = [72, 288], strides = [1, 1]} : vector<144x288xbf16> to vector<72x288xbf16>
    %cst_8 = arith.constant dense<0.000000e+00> : vector<8x288xf32>
    %19 = tpu.matmul %17, %18, %cst_8 {dimension_numbers = #tpu.dot_dimension_numbers<[1], [0], [0], [1], [0, 0, 1, 1], [], []>} : vector<8x72xbf16>, vector<72x288xbf16>, vector<8x288xf32> -> vector<8x288xf32>
    %20 = vector.extract_strided_slice %3 {offsets = [0, 72], sizes = [8, 72], strides = [1, 1]} : vector<8x144xbf16> to vector<8x72xbf16>
    %21 = vector.extract_strided_slice %16 {offsets = [72, 0], sizes = [72, 288], strides = [1, 1]} : vector<144x288xbf16> to vector<72x288xbf16>
    %cst_9 = arith.constant dense<0.000000e+00> : vector<8x288xf32>
    %22 = tpu.matmul %20, %21, %cst_9 {dimension_numbers = #tpu.dot_dimension_numbers<[1], [0], [0], [1], [0, 0, 1, 1], [], []>} : vector<8x72xbf16>, vector<72x288xbf16>, vector<8x288xf32> -> vector<8x288xf32>
    %23 = arith.addf %19, %22 : vector<8x288xf32>
    %24 = vector.broadcast %4 : vector<8x1xf32> to vector<8x288xf32>
    %25 = arith.addf %23, %24 : vector<8x288xf32>
    %cst_10 = arith.constant 0.000000e+00 : f32
    %26 = vector.broadcast %cst_10 : f32 to vector<8x288xf32>
    %27 = arith.maximumf %25, %26 : vector<8x288xf32>
    %28 = arith.extf %0 : vector<1x288xbf16> to vector<1x288xf32>
    %29 = vector.broadcast %28 : vector<1x288xf32> to vector<8x288xf32>
    %30 = arith.mulf %27, %29 : vector<8x288xf32>
    %31 = arith.truncf %30 : vector<8x288xf32> to vector<8x288xbf16>
    %cst_11 = arith.constant 0.000000e+00 : bf16
    %32 = vector.broadcast %cst_11 : bf16 to vector<8x19xbf16>
    %cst_12 = arith.constant 0.000000e+00 : bf16
    %33 = vector.broadcast %cst_12 : bf16 to vector<8x17xbf16>
    %34 = tpu.concatenate %32, %31, %33 in 1 : vector<8x19xbf16>, vector<8x288xbf16>, vector<8x17xbf16> -> vector<8x324xbf16>
    %c0_13 = arith.constant 0 : index
    %c0_14 = arith.constant 0 : index
    %35 = vector.load %arg5[%c0_13, %c0_14] : memref<8x72xbf16, #tpu.memory_space<vmem>>, vector<8x72xbf16>
    %c0_15 = arith.constant 0 : index
    %c0_16 = arith.constant 0 : index
    %36 = vector.load %arg6[%c0_15, %c0_16] : memref<8x1xf32, #tpu.memory_space<vmem>>, vector<8x1xf32>
    %cst_17 = arith.constant 0.000000e+00 : bf16
    %37 = vector.broadcast %cst_17 : bf16 to vector<8x2xbf16>
    %38 = tpu.concatenate %34, %37 in 1 : vector<8x324xbf16>, vector<8x2xbf16> -> vector<8x326xbf16>
    %39 = vector.extract_strided_slice %38 {offsets = [0, 0], sizes = [8, 288], strides = [1, 1]} : vector<8x326xbf16> to vector<8x288xbf16>
    %40 = vector.extract_strided_slice %38 {offsets = [0, 1], sizes = [8, 288], strides = [1, 1]} : vector<8x326xbf16> to vector<8x288xbf16>
    %41 = vector.extract_strided_slice %38 {offsets = [0, 2], sizes = [8, 288], strides = [1, 1]} : vector<8x326xbf16> to vector<8x288xbf16>
    %42 = vector.extract_strided_slice %38 {offsets = [0, 18], sizes = [8, 288], strides = [1, 1]} : vector<8x326xbf16> to vector<8x288xbf16>
    %43 = vector.extract_strided_slice %38 {offsets = [0, 19], sizes = [8, 288], strides = [1, 1]} : vector<8x326xbf16> to vector<8x288xbf16>
    %44 = vector.extract_strided_slice %38 {offsets = [0, 20], sizes = [8, 288], strides = [1, 1]} : vector<8x326xbf16> to vector<8x288xbf16>
    %45 = vector.extract_strided_slice %38 {offsets = [0, 36], sizes = [8, 288], strides = [1, 1]} : vector<8x326xbf16> to vector<8x288xbf16>
    %46 = vector.extract_strided_slice %38 {offsets = [0, 37], sizes = [8, 288], strides = [1, 1]} : vector<8x326xbf16> to vector<8x288xbf16>
    %47 = vector.extract_strided_slice %38 {offsets = [0, 38], sizes = [8, 288], strides = [1, 1]} : vector<8x326xbf16> to vector<8x288xbf16>
    %48 = tpu.concatenate %39, %40, %41, %42, %43, %44, %45, %46, %47 in 0 : vector<8x288xbf16>, vector<8x288xbf16>, vector<8x288xbf16>, vector<8x288xbf16>, vector<8x288xbf16>, vector<8x288xbf16>, vector<8x288xbf16>, vector<8x288xbf16>, vector<8x288xbf16> -> vector<72x288xbf16>
    %cst_18 = arith.constant dense<0.000000e+00> : vector<8x288xf32>
    %49 = tpu.matmul %35, %48, %cst_18 {dimension_numbers = #tpu.dot_dimension_numbers<[1], [0], [0], [1], [0, 0, 1, 1], [], []>} : vector<8x72xbf16>, vector<72x288xbf16>, vector<8x288xf32> -> vector<8x288xf32>
    %50 = vector.broadcast %36 : vector<8x1xf32> to vector<8x288xf32>
    %51 = arith.addf %49, %50 : vector<8x288xf32>
    %cst_19 = arith.constant 0.000000e+00 : f32
    %52 = vector.broadcast %cst_19 : f32 to vector<8x288xf32>
    %53 = arith.maximumf %51, %52 : vector<8x288xf32>
    %54 = arith.truncf %53 : vector<8x288xf32> to vector<8x288xbf16>
    %c0_20 = arith.constant 0 : index
    %c0_21 = arith.constant 0 : index
    %c0_22 = arith.constant 0 : index
    %55 = vector.load %arg7[%c0_20, %c0_21, %c0_22] : memref<1x8x288xbf16, #tpu.memory_space<vmem>>, vector<1x8x288xbf16>
    %56 = vector.shape_cast %55 : vector<1x8x288xbf16> to vector<8x288xbf16>
    %57 = vector.shape_cast %54 : vector<8x288xbf16> to vector<1x8x288xbf16>
    tpu.vector_store %arg7[%c0_20, %c0_21, %c0_22], %57 {strides = array<i32>} : memref<1x8x288xbf16, #tpu.memory_space<vmem>>, vector<1x8x288xbf16>,
    return
  }
  func.func @transform_0(%arg0: i32) -> (i32, i32, i32) {
    %c0_i32 = arith.constant 0 : i32
    %c0_i32_0 = arith.constant 0 : i32
    %c0_i32_1 = arith.constant 0 : i32
    return %arg0, %c0_i32, %c0_i32_0 : i32, i32, i32
  }
  func.func @transform_1(%arg0: i32) -> (i32, i32) {
    %c0_i32 = arith.constant 0 : i32
    %c0_i32_0 = arith.constant 0 : i32
    %c0_i32_1 = arith.constant 0 : i32
    return %c0_i32, %c0_i32_0 : i32, i32
  }
  func.func @transform_2(%arg0: i32) -> (i32, i32) {
    %c0_i32 = arith.constant 0 : i32
    %c0_i32_0 = arith.constant 0 : i32
    %c0_i32_1 = arith.constant 0 : i32
    return %c0_i32, %c0_i32_0 : i32, i32
  }
  func.func @transform_3(%arg0: i32) -> (i32, i32) {
    %c0_i32 = arith.constant 0 : i32
    %c0_i32_0 = arith.constant 0 : i32
    %c0_i32_1 = arith.constant 0 : i32
    return %c0_i32, %c0_i32_0 : i32, i32
  }
  func.func @transform_4(%arg0: i32) -> (i32, i32) {
    %c0_i32 = arith.constant 0 : i32
    %c0_i32_0 = arith.constant 0 : i32
    %c0_i32_1 = arith.constant 0 : i32
    return %c0_i32, %c0_i32_0 : i32, i32
  }
  func.func @transform_5(%arg0: i32) -> (i32, i32) {
    %c0_i32 = arith.constant 0 : i32
    %c0_i32_0 = arith.constant 0 : i32
    %c0_i32_1 = arith.constant 0 : i32
    return %c0_i32, %c0_i32_0 : i32, i32
  }
  func.func @transform_6(%arg0: i32) -> (i32, i32, i32) {
    %c0_i32 = arith.constant 0 : i32
    %c0_i32_0 = arith.constant 0 : i32
    %c0_i32_1 = arith.constant 0 : i32
    return %arg0, %c0_i32, %c0_i32_0 : i32, i32, i32
  }
}

module attributes {stable_mosaic.version = 11 : i64} {
  func.func @_conv_chain_kernel(%arg0: i32, %arg1: memref<1x8x324xbf16, #tpu.memory_space<vmem>>, %arg2: memref<1x288xbf16, #tpu.memory_space<vmem>>, %arg3: memref<8x72xbf16, #tpu.memory_space<vmem>>, %arg4: memref<8x1xf32, #tpu.memory_space<vmem>>, %arg5: memref<8x72xbf16, #tpu.memory_space<vmem>>, %arg6: memref<8x1xf32, #tpu.memory_space<vmem>>, %arg7: memref<1x72xbf16, #tpu.memory_space<vmem>>, %arg8: memref<1x1xf32, #tpu.memory_space<vmem>>, %arg9: memref<1x1x288xf32, #tpu.memory_space<vmem>>) attributes {dimension_semantics = [#tpu.dimension_semantics<parallel>], iteration_bounds = array<i64: 2>, scalar_prefetch = 0 : i64, scratch_operands = 0 : i64, tpu.core_type = #tpu.core_type<tc>, window_params = [{transform_indices = @transform_0, window_bounds = array<i64: 1, 8, 324>}, {pipeline_mode = #tpu.pipeline_mode<synchronous>, transform_indices = @transform_1, window_bounds = array<i64: 1, 288>}, {pipeline_mode = #tpu.pipeline_mode<synchronous>, transform_indices = @transform_2, window_bounds = array<i64: 8, 72>}, {pipeline_mode = #tpu.pipeline_mode<synchronous>, transform_indices = @transform_3, window_bounds = array<i64: 8, 1>}, {pipeline_mode = #tpu.pipeline_mode<synchronous>, transform_indices = @transform_4, window_bounds = array<i64: 8, 72>}, {pipeline_mode = #tpu.pipeline_mode<synchronous>, transform_indices = @transform_5, window_bounds = array<i64: 8, 1>}, {pipeline_mode = #tpu.pipeline_mode<synchronous>, transform_indices = @transform_6, window_bounds = array<i64: 1, 72>}, {pipeline_mode = #tpu.pipeline_mode<synchronous>, transform_indices = @transform_7, window_bounds = array<i64: 1, 1>}, {transform_indices = @transform_8, window_bounds = array<i64: 1, 1, 288>}]} {
    %c0 = arith.constant 0 : index
    %c0_0 = arith.constant 0 : index
    %0 = vector.load %arg2[%c0, %c0_0] : memref<1x288xbf16, #tpu.memory_space<vmem>>, vector<1x288xbf16>
    %c0_1 = arith.constant 0 : index
    %c0_2 = arith.constant 0 : index
    %c0_3 = arith.constant 0 : index
    %1 = vector.load %arg1[%c0_1, %c0_2, %c0_3] : memref<1x8x324xbf16, #tpu.memory_space<vmem>>, vector<1x8x324xbf16>
    %2 = vector.shape_cast %1 : vector<1x8x324xbf16> to vector<8x324xbf16>
    %c0_4 = arith.constant 0 : index
    %c0_5 = arith.constant 0 : index
    %3 = vector.load %arg3[%c0_4, %c0_5] : memref<8x72xbf16, #tpu.memory_space<vmem>>, vector<8x72xbf16>
    %c0_6 = arith.constant 0 : index
    %c0_7 = arith.constant 0 : index
    %4 = vector.load %arg4[%c0_6, %c0_7] : memref<8x1xf32, #tpu.memory_space<vmem>>, vector<8x1xf32>
    %cst = arith.constant 0.000000e+00 : bf16
    %5 = vector.broadcast %cst : bf16 to vector<8x2xbf16>
    %6 = tpu.concatenate %2, %5 in 1 : vector<8x324xbf16>, vector<8x2xbf16> -> vector<8x326xbf16>
    %7 = vector.extract_strided_slice %6 {offsets = [0, 0], sizes = [8, 288], strides = [1, 1]} : vector<8x326xbf16> to vector<8x288xbf16>
    %8 = vector.extract_strided_slice %6 {offsets = [0, 1], sizes = [8, 288], strides = [1, 1]} : vector<8x326xbf16> to vector<8x288xbf16>
    %9 = vector.extract_strided_slice %6 {offsets = [0, 2], sizes = [8, 288], strides = [1, 1]} : vector<8x326xbf16> to vector<8x288xbf16>
    %10 = vector.extract_strided_slice %6 {offsets = [0, 18], sizes = [8, 288], strides = [1, 1]} : vector<8x326xbf16> to vector<8x288xbf16>
    %11 = vector.extract_strided_slice %6 {offsets = [0, 19], sizes = [8, 288], strides = [1, 1]} : vector<8x326xbf16> to vector<8x288xbf16>
    %12 = vector.extract_strided_slice %6 {offsets = [0, 20], sizes = [8, 288], strides = [1, 1]} : vector<8x326xbf16> to vector<8x288xbf16>
    %13 = vector.extract_strided_slice %6 {offsets = [0, 36], sizes = [8, 288], strides = [1, 1]} : vector<8x326xbf16> to vector<8x288xbf16>
    %14 = vector.extract_strided_slice %6 {offsets = [0, 37], sizes = [8, 288], strides = [1, 1]} : vector<8x326xbf16> to vector<8x288xbf16>
    %15 = vector.extract_strided_slice %6 {offsets = [0, 38], sizes = [8, 288], strides = [1, 1]} : vector<8x326xbf16> to vector<8x288xbf16>
    %16 = tpu.concatenate %7, %8, %9, %10, %11, %12, %13, %14, %15 in 0 : vector<8x288xbf16>, vector<8x288xbf16>, vector<8x288xbf16>, vector<8x288xbf16>, vector<8x288xbf16>, vector<8x288xbf16>, vector<8x288xbf16>, vector<8x288xbf16>, vector<8x288xbf16> -> vector<72x288xbf16>
    %cst_8 = arith.constant dense<0.000000e+00> : vector<8x288xf32>
    %17 = tpu.matmul %3, %16, %cst_8 {dimension_numbers = #tpu.dot_dimension_numbers<[1], [0], [0], [1], [0, 0, 1, 1], [], []>} : vector<8x72xbf16>, vector<72x288xbf16>, vector<8x288xf32> -> vector<8x288xf32>
    %18 = vector.broadcast %4 : vector<8x1xf32> to vector<8x288xf32>
    %19 = arith.addf %17, %18 : vector<8x288xf32>
    %cst_9 = arith.constant 0.000000e+00 : f32
    %20 = vector.broadcast %cst_9 : f32 to vector<8x288xf32>
    %21 = arith.maximumf %19, %20 : vector<8x288xf32>
    %22 = arith.extf %0 : vector<1x288xbf16> to vector<1x288xf32>
    %23 = vector.broadcast %22 : vector<1x288xf32> to vector<8x288xf32>
    %24 = arith.mulf %21, %23 : vector<8x288xf32>
    %25 = arith.truncf %24 : vector<8x288xf32> to vector<8x288xbf16>
    %cst_10 = arith.constant 0.000000e+00 : bf16
    %26 = vector.broadcast %cst_10 : bf16 to vector<8x19xbf16>
    %cst_11 = arith.constant 0.000000e+00 : bf16
    %27 = vector.broadcast %cst_11 : bf16 to vector<8x17xbf16>
    %28 = tpu.concatenate %26, %25, %27 in 1 : vector<8x19xbf16>, vector<8x288xbf16>, vector<8x17xbf16> -> vector<8x324xbf16>
    %c0_12 = arith.constant 0 : index
    %c0_13 = arith.constant 0 : index
    %29 = vector.load %arg5[%c0_12, %c0_13] : memref<8x72xbf16, #tpu.memory_space<vmem>>, vector<8x72xbf16>
    %c0_14 = arith.constant 0 : index
    %c0_15 = arith.constant 0 : index
    %30 = vector.load %arg6[%c0_14, %c0_15] : memref<8x1xf32, #tpu.memory_space<vmem>>, vector<8x1xf32>
    %cst_16 = arith.constant 0.000000e+00 : bf16
    %31 = vector.broadcast %cst_16 : bf16 to vector<8x2xbf16>
    %32 = tpu.concatenate %28, %31 in 1 : vector<8x324xbf16>, vector<8x2xbf16> -> vector<8x326xbf16>
    %33 = vector.extract_strided_slice %32 {offsets = [0, 0], sizes = [8, 288], strides = [1, 1]} : vector<8x326xbf16> to vector<8x288xbf16>
    %34 = vector.extract_strided_slice %32 {offsets = [0, 1], sizes = [8, 288], strides = [1, 1]} : vector<8x326xbf16> to vector<8x288xbf16>
    %35 = vector.extract_strided_slice %32 {offsets = [0, 2], sizes = [8, 288], strides = [1, 1]} : vector<8x326xbf16> to vector<8x288xbf16>
    %36 = vector.extract_strided_slice %32 {offsets = [0, 18], sizes = [8, 288], strides = [1, 1]} : vector<8x326xbf16> to vector<8x288xbf16>
    %37 = vector.extract_strided_slice %32 {offsets = [0, 19], sizes = [8, 288], strides = [1, 1]} : vector<8x326xbf16> to vector<8x288xbf16>
    %38 = vector.extract_strided_slice %32 {offsets = [0, 20], sizes = [8, 288], strides = [1, 1]} : vector<8x326xbf16> to vector<8x288xbf16>
    %39 = vector.extract_strided_slice %32 {offsets = [0, 36], sizes = [8, 288], strides = [1, 1]} : vector<8x326xbf16> to vector<8x288xbf16>
    %40 = vector.extract_strided_slice %32 {offsets = [0, 37], sizes = [8, 288], strides = [1, 1]} : vector<8x326xbf16> to vector<8x288xbf16>
    %41 = vector.extract_strided_slice %32 {offsets = [0, 38], sizes = [8, 288], strides = [1, 1]} : vector<8x326xbf16> to vector<8x288xbf16>
    %42 = tpu.concatenate %33, %34, %35, %36, %37, %38, %39, %40, %41 in 0 : vector<8x288xbf16>, vector<8x288xbf16>, vector<8x288xbf16>, vector<8x288xbf16>, vector<8x288xbf16>, vector<8x288xbf16>, vector<8x288xbf16>, vector<8x288xbf16>, vector<8x288xbf16> -> vector<72x288xbf16>
    %cst_17 = arith.constant dense<0.000000e+00> : vector<8x288xf32>
    %43 = tpu.matmul %29, %42, %cst_17 {dimension_numbers = #tpu.dot_dimension_numbers<[1], [0], [0], [1], [0, 0, 1, 1], [], []>} : vector<8x72xbf16>, vector<72x288xbf16>, vector<8x288xf32> -> vector<8x288xf32>
    %44 = vector.broadcast %30 : vector<8x1xf32> to vector<8x288xf32>
    %45 = arith.addf %43, %44 : vector<8x288xf32>
    %cst_18 = arith.constant 0.000000e+00 : f32
    %46 = vector.broadcast %cst_18 : f32 to vector<8x288xf32>
    %47 = arith.maximumf %45, %46 : vector<8x288xf32>
    %48 = arith.extf %0 : vector<1x288xbf16> to vector<1x288xf32>
    %49 = vector.broadcast %48 : vector<1x288xf32> to vector<8x288xf32>
    %50 = arith.mulf %47, %49 : vector<8x288xf32>
    %51 = arith.truncf %50 : vector<8x288xf32> to vector<8x288xbf16>
    %cst_19 = arith.constant 0.000000e+00 : bf16
    %52 = vector.broadcast %cst_19 : bf16 to vector<8x19xbf16>
    %cst_20 = arith.constant 0.000000e+00 : bf16
    %53 = vector.broadcast %cst_20 : bf16 to vector<8x17xbf16>
    %54 = tpu.concatenate %52, %51, %53 in 1 : vector<8x19xbf16>, vector<8x288xbf16>, vector<8x17xbf16> -> vector<8x324xbf16>
    %c0_21 = arith.constant 0 : index
    %c0_22 = arith.constant 0 : index
    %55 = vector.load %arg7[%c0_21, %c0_22] : memref<1x72xbf16, #tpu.memory_space<vmem>>, vector<1x72xbf16>
    %c0_23 = arith.constant 0 : index
    %c0_24 = arith.constant 0 : index
    %56 = vector.load %arg8[%c0_23, %c0_24] : memref<1x1xf32, #tpu.memory_space<vmem>>, vector<1x1xf32>
    %cst_25 = arith.constant 0.000000e+00 : bf16
    %57 = vector.broadcast %cst_25 : bf16 to vector<8x2xbf16>
    %58 = tpu.concatenate %54, %57 in 1 : vector<8x324xbf16>, vector<8x2xbf16> -> vector<8x326xbf16>
    %59 = vector.extract_strided_slice %58 {offsets = [0, 0], sizes = [8, 288], strides = [1, 1]} : vector<8x326xbf16> to vector<8x288xbf16>
    %60 = vector.extract_strided_slice %58 {offsets = [0, 1], sizes = [8, 288], strides = [1, 1]} : vector<8x326xbf16> to vector<8x288xbf16>
    %61 = vector.extract_strided_slice %58 {offsets = [0, 2], sizes = [8, 288], strides = [1, 1]} : vector<8x326xbf16> to vector<8x288xbf16>
    %62 = vector.extract_strided_slice %58 {offsets = [0, 18], sizes = [8, 288], strides = [1, 1]} : vector<8x326xbf16> to vector<8x288xbf16>
    %63 = vector.extract_strided_slice %58 {offsets = [0, 19], sizes = [8, 288], strides = [1, 1]} : vector<8x326xbf16> to vector<8x288xbf16>
    %64 = vector.extract_strided_slice %58 {offsets = [0, 20], sizes = [8, 288], strides = [1, 1]} : vector<8x326xbf16> to vector<8x288xbf16>
    %65 = vector.extract_strided_slice %58 {offsets = [0, 36], sizes = [8, 288], strides = [1, 1]} : vector<8x326xbf16> to vector<8x288xbf16>
    %66 = vector.extract_strided_slice %58 {offsets = [0, 37], sizes = [8, 288], strides = [1, 1]} : vector<8x326xbf16> to vector<8x288xbf16>
    %67 = vector.extract_strided_slice %58 {offsets = [0, 38], sizes = [8, 288], strides = [1, 1]} : vector<8x326xbf16> to vector<8x288xbf16>
    %68 = tpu.concatenate %59, %60, %61, %62, %63, %64, %65, %66, %67 in 0 : vector<8x288xbf16>, vector<8x288xbf16>, vector<8x288xbf16>, vector<8x288xbf16>, vector<8x288xbf16>, vector<8x288xbf16>, vector<8x288xbf16>, vector<8x288xbf16>, vector<8x288xbf16> -> vector<72x288xbf16>
    %cst_26 = arith.constant dense<0.000000e+00> : vector<1x288xf32>
    %69 = tpu.matmul %55, %68, %cst_26 {dimension_numbers = #tpu.dot_dimension_numbers<[1], [0], [0], [1], [0, 0, 1, 1], [], []>} : vector<1x72xbf16>, vector<72x288xbf16>, vector<1x288xf32> -> vector<1x288xf32>
    %70 = vector.broadcast %56 : vector<1x1xf32> to vector<1x288xf32>
    %71 = arith.addf %69, %70 : vector<1x288xf32>
    %c0_27 = arith.constant 0 : index
    %c0_28 = arith.constant 0 : index
    %c0_29 = arith.constant 0 : index
    %72 = vector.load %arg9[%c0_27, %c0_28, %c0_29] : memref<1x1x288xf32, #tpu.memory_space<vmem>>, vector<1x1x288xf32>
    %73 = vector.shape_cast %72 : vector<1x1x288xf32> to vector<1x288xf32>
    %74 = vector.shape_cast %71 : vector<1x288xf32> to vector<1x1x288xf32>
    tpu.vector_store %arg9[%c0_27, %c0_28, %c0_29], %74 {strides = array<i32>} : memref<1x1x288xf32, #tpu.memory_space<vmem>>, vector<1x1x288xf32>,
    return
  }
  func.func @transform_0(%arg0: i32) -> (i32, i32, i32) {
    %c0_i32 = arith.constant 0 : i32
    %c0_i32_0 = arith.constant 0 : i32
    %c0_i32_1 = arith.constant 0 : i32
    return %arg0, %c0_i32, %c0_i32_0 : i32, i32, i32
  }
  func.func @transform_1(%arg0: i32) -> (i32, i32) {
    %c0_i32 = arith.constant 0 : i32
    %c0_i32_0 = arith.constant 0 : i32
    %c0_i32_1 = arith.constant 0 : i32
    return %c0_i32, %c0_i32_0 : i32, i32
  }
  func.func @transform_2(%arg0: i32) -> (i32, i32) {
    %c0_i32 = arith.constant 0 : i32
    %c0_i32_0 = arith.constant 0 : i32
    %c0_i32_1 = arith.constant 0 : i32
    return %c0_i32, %c0_i32_0 : i32, i32
  }
  func.func @transform_3(%arg0: i32) -> (i32, i32) {
    %c0_i32 = arith.constant 0 : i32
    %c0_i32_0 = arith.constant 0 : i32
    %c0_i32_1 = arith.constant 0 : i32
    return %c0_i32, %c0_i32_0 : i32, i32
  }
  func.func @transform_4(%arg0: i32) -> (i32, i32) {
    %c0_i32 = arith.constant 0 : i32
    %c0_i32_0 = arith.constant 0 : i32
    %c0_i32_1 = arith.constant 0 : i32
    return %c0_i32, %c0_i32_0 : i32, i32
  }
  func.func @transform_5(%arg0: i32) -> (i32, i32) {
    %c0_i32 = arith.constant 0 : i32
    %c0_i32_0 = arith.constant 0 : i32
    %c0_i32_1 = arith.constant 0 : i32
    return %c0_i32, %c0_i32_0 : i32, i32
  }
  func.func @transform_6(%arg0: i32) -> (i32, i32) {
    %c0_i32 = arith.constant 0 : i32
    %c0_i32_0 = arith.constant 0 : i32
    %c0_i32_1 = arith.constant 0 : i32
    return %c0_i32, %c0_i32_0 : i32, i32
  }
  func.func @transform_7(%arg0: i32) -> (i32, i32) {
    %c0_i32 = arith.constant 0 : i32
    %c0_i32_0 = arith.constant 0 : i32
    %c0_i32_1 = arith.constant 0 : i32
    return %c0_i32, %c0_i32_0 : i32, i32
  }
  func.func @transform_8(%arg0: i32) -> (i32, i32, i32) {
    %c0_i32 = arith.constant 0 : i32
    %c0_i32_0 = arith.constant 0 : i32
    %c0_i32_1 = arith.constant 0 : i32
    return %arg0, %c0_i32, %c0_i32_0 : i32, i32, i32
  }
}

</mosaic_0001>

<llo_original>
// kernel: rfda_forward.18
$region0: #{rfda_forward.18}
  #allocation0 [shape = 'u32[]', space=smem, size = 0x4, offset = 0x4, fixed_abs, tag = 'smem constant byte address 0x4 - core index']
  #allocation1 [shape = 'u32[72,128]{1,0:T(1,128)}', space=vmem, size = 0x9000, scoped, tag = 'internal scratch']
  %s0 = inlined_call_operand.vmem [shape: bf16[2,7,324], index: 0, kind: input, shape index: {}]
  %s1 = inlined_call_operand.hbm [shape: bf16[8,63], index: 1, kind: input, shape index: {}]
  %s2 = inlined_call_operand.hbm [shape: f32[8,1], index: 2, kind: input, shape index: {}]
  %s3 = inlined_call_operand.vmem [shape: bf16[2,8,288], index: 3, kind: output, shape index: {}]
  %s4 = sld [smem:[#allocation0]]
  $region53: #{rfda_forward.18} parent=0
    _
  %s6 = ssub.s32 1, %s4
  %s7 = scalar_select 0, %s6, %s4
  $region1: #{rfda_forward.18} parent=0
    #allocation2 [shape = 'u8[2048]{0}', space=vmem, size = 0x800, scoped, tag = 'input window, operand 1, single buffered']
    #allocation3 [shape = 's32[2]{0}', space=sflag, size = 0x8, scoped, tag = 'scoped memory for rfda_forward.18']
    #allocation4 [shape = 'u8[4096]{0}', space=vmem, size = 0x1000, scoped, tag = 'input window, operand 2, single buffered']
    #allocation5 [shape = 's32[1]{0}', space=sflag, size = 0x4, scoped, tag = 'scoped memory for rfda_forward.18']
    %8 = vsyncpa [#allocation3], 0
    %9 = vsyncpa [#allocation5], 0
    loop: start=0, step=1, limit=4
    $region2: #{rfda_forward.18} parent=1 // loop_pre_header
      _
    $region3: #{rfda_forward.18} parent=1 // loop_header
      %s11 = sphi 0, %s15
      %p12 = scmp.ge.s32.totalorder %s11, 4
      %s21 = sphi 0, %s23
      %s24 = sphi 0, %s21
      %s25 = sphi 0, %s24
      %s41 = sphi 0, %s25
      %s45 = sphi 0, %s45
      %s47 = sphi 0, %s45
      %s48 = sphi 0, %s47
      %s62 = sphi 0, %s48
      %s66 = sphi 0, %s66
      %s68 = sphi 0, %s66
      %s69 = sphi 0, %s68
      %s83 = sphi 0, %s69
      %s89 = sphi 0, %s91
      %s92 = sphi 0, %s89
      %s93 = sphi 0, %s92
      %s109 = sphi 0, %s93
    $region4: #{rfda_forward.18} parent=1 // loop_header_branch
      %14 = sbr.rel (%p12) target = $region8
    $region5: #{rfda_forward.18} parent=1 // loop_body
      %s16 = ssub.s32 %s11, 1
      %s17 = ssub.s32 %s11, 2
      %s18 = sadd.s32 %s11, 1
      %s19 = ssub.s32 %s11, %s18
      %p20 = scmp.eq.s32.totalorder %s19, 0
      %s22 = sadd.s32 %s21, 1
      %s23 = scalar_select %p20, %s21, %s22
      %p26 = pneg %p20
      %p27 = scmp.eq.s32.totalorder %s11, 1
      %p28 = por %p26, %p27
      %p29 = scmp.ne.s32.totalorder %s21, %s24
      %p30 = scmp.eq.s32.totalorder %s11, 0
      %p31 = por %p29, %p30
      %p32 = scmp.ne.s32.totalorder %s21, %s24
      %p33 = scmp.eq.s32.totalorder %s16, 1
      %p34 = por %p32, %p33
      %p35 = scmp.ne.s32.totalorder %s24, %s25
      %p36 = scmp.eq.s32.totalorder %s16, 0
      %p37 = por %p35, %p36
      %p38 = scmp.ne.s32.totalorder %s24, %s25
      %p39 = scmp.eq.s32.totalorder %s17, 1
      %p40 = por %p38, %p39
      %p42 = scmp.ne.s32.totalorder %s25, %s41
      %p43 = scmp.eq.s32.totalorder %s17, 0
      %p44 = por %p42, %p43
      %s46 = sadd.s32 %s45, 1
      %p49 = scmp.eq.s32.totalorder %s11, 1
      %p50 = scmp.ne.s32.totalorder %s45, %s47
      %p51 = scmp.eq.s32.totalorder %s11, 0
      %p52 = por %p50, %p51
      %p53 = scmp.ne.s32.totalorder %s45, %s47
      %p54 = scmp.eq.s32.totalorder %s16, 1
      %p55 = por %p53, %p54
      %p56 = scmp.ne.s32.totalorder %s47, %s48
      %p57 = scmp.eq.s32.totalorder %s16, 0
      %p58 = por %p56, %p57
      %p59 = scmp.ne.s32.totalorder %s47, %s48
      %p60 = scmp.eq.s32.totalorder %s17, 1
      %p61 = por %p59, %p60
      %p63 = scmp.ne.s32.totalorder %s48, %s62
      %p64 = scmp.eq.s32.totalorder %s17, 0
      %p65 = por %p63, %p64
      %s67 = sadd.s32 %s66, 1
      %p70 = scmp.eq.s32.totalorder %s11, 1
      %p71 = scmp.ne.s32.totalorder %s66, %s68
      %p72 = scmp.eq.s32.totalorder %s11, 0
      %p73 = por %p71, %p72
      %p74 = scmp.ne.s32.totalorder %s66, %s68
      %p75 = scmp.eq.s32.totalorder %s16, 1
      %p76 = por %p74, %p75
      %p77 = scmp.ne.s32.totalorder %s68, %s69
      %p78 = scmp.eq.s32.totalorder %s16, 0
      %p79 = por %p77, %p78
      %p80 = scmp.ne.s32.totalorder %s68, %s69
      %p81 = scmp.eq.s32.totalorder %s17, 1
      %p82 = por %p80, %p81
      %p84 = scmp.ne.s32.totalorder %s69, %s83
      %p85 = scmp.eq.s32.totalorder %s17, 0
      %p86 = por %p84, %p85
      %s87 = ssub.s32 %s11, %s18
      %p88 = scmp.eq.s32.totalorder %s87, 0
      %s90 = sadd.s32 %s89, 1
      %s91 = scalar_select %p88, %s89, %s90
      %p94 = pneg %p88
      %p95 = scmp.eq.s32.totalorder %s11, 1
      %p96 = por %p94, %p95
      %p97 = scmp.ne.s32.totalorder %s89, %s92
      %p98 = scmp.eq.s32.totalorder %s11, 0
      %p99 = por %p97, %p98
      %p100 = scmp.ne.s32.totalorder %s89, %s92
      %p101 = scmp.eq.s32.totalorder %s16, 1
      %p102 = por %p100, %p101
      %p103 = scmp.ne.s32.totalorder %s92, %s93
      %p104 = scmp.eq.s32.totalorder %s16, 0
      %p105 = por %p103, %p104
      %p106 = scmp.ne.s32.totalorder %s92, %s93
      %p107 = scmp.eq.s32.totalorder %s17, 1
      %p108 = por %p106, %p107
      %p110 = scmp.ne.s32.totalorder %s93, %s109
      %p111 = scmp.eq.s32.totalorder %s17, 0
      %p112 = por %p110, %p111
      %p113 = scmp.le.s32.totalorder 1, %s11
      %p114 = scmp.lt.s32.totalorder %s11, 3
      %p115 = pnand %p113, %p114
      %p116 = pneg %p115
      // Predicated region
      $region9: #{rfda_forward.18} parent=5 // pred_check
        _
      $region10: #{rfda_forward.18} parent=5 // pred_check_branch
        %118 = sbr.rel (%p115) target = $region12
      $region11: #{rfda_forward.18} parent=5 // pred_region
        %s119 = ssub.s32 %s11, 1
        // Predicated region
        $region13: #{rfda_forward.18} parent=11 // pred_check
          %p120 = pneg %p58
        $region14: #{rfda_forward.18} parent=11 // pred_check_branch
          %122 = sbr.rel (%p120) target = $region16
        $region15: #{rfda_forward.18} parent=11 // pred_region
          %124 = vsyncadd [#allocation3], 0
          %s126 = sshll.u32 %s1, 4
          %s127 = int_to_ptr.hbm [resolvable:$true] %s126
          %s128 = sshll.u32 [#allocation2], 4
          %s129 = int_to_ptr.vmem [resolvable:$true] %s128
          %131 = dma.hbm_to_vmem [thread:$0]  %s127, 64, %s129, [#allocation3]
        $region16: #{rfda_forward.18} parent=11 // pred_fallthru
          _
        // Predicated region
        $region17: #{rfda_forward.18} parent=11 // pred_check
          %p132 = pneg %p79
        $region18: #{rfda_forward.18} parent=11 // pred_check_branch
          %134 = sbr.rel (%p132) target = $region20
        $region19: #{rfda_forward.18} parent=11 // pred_region
          %136 = vsyncadd [#allocation5], 0
          %s138 = sshll.u32 %s2, 4
          %s139 = int_to_ptr.hbm [resolvable:$true] %s138
          %s140 = sshll.u32 [#allocation4], 4
          %s141 = int_to_ptr.vmem [resolvable:$true] %s140
          %143 = dma.hbm_to_vmem [thread:$0]  %s139, 128, %s141, [#allocation5]
        $region20: #{rfda_forward.18} parent=11 // pred_fallthru
          _
      $region12: #{rfda_forward.18} parent=5 // pred_fallthru
        _
      %p144 = scmp.lt.s32.totalorder %s11, 2
      // Predicated region
      $region21: #{rfda_forward.18} parent=5 // pred_check
        %p145 = pneg %p144
      $region22: #{rfda_forward.18} parent=5 // pred_check_branch
        %147 = sbr.rel (%p145) target = $region24
      $region23: #{rfda_forward.18} parent=5 // pred_region
        // Predicated region
        $region25: #{rfda_forward.18} parent=23 // pred_check
          %p148 = pneg %p31
        $region26: #{rfda_forward.18} parent=23 // pred_check_branch
          %150 = sbr.rel (%p148) target = $region28
        $region27: #{rfda_forward.18} parent=23 // pred_region
          %p151 = scmp.lt.s32.totalorder %s11, 1
          %s152 = scalar_select %p151, %s11, 1
          %s153 = smul.addr %s152, 3
          %s154 = smul.addr %s153, 4
          %s155 = scalar_lea.vmem %s0, %s154
        $region28: #{rfda_forward.18} parent=23 // pred_fallthru
          _
      $region24: #{rfda_forward.18} parent=5 // pred_fallthru
        _
      %p156 = scmp.le.s32.totalorder 1, %s11
      %p157 = scmp.lt.s32.totalorder %s11, 3
      %p158 = pnand %p156, %p157
      %p159 = pneg %p158
      // Predicated region
      $region29: #{rfda_forward.18} parent=5 // pred_check
        _
      $region30: #{rfda_forward.18} parent=5 // pred_check_branch
        %161 = sbr.rel (%p158) target = $region32
      $region31: #{rfda_forward.18} parent=5 // pred_region
        %s162 = ssub.s32 %s11, 1
        // Predicated region
        $region33: #{rfda_forward.18} parent=31 // pred_check
          %p163 = pneg %p58
        $region34: #{rfda_forward.18} parent=31 // pred_check_branch
          %165 = sbr.rel (%p163) target = $region36
        $region35: #{rfda_forward.18} parent=31 // pred_region
          %167 = dma.done [#allocation3], 64
        $region36: #{rfda_forward.18} parent=31 // pred_fallthru
          _
        // Predicated region
        $region37: #{rfda_forward.18} parent=31 // pred_check
          %p168 = pneg %p79
        $region38: #{rfda_forward.18} parent=31 // pred_check_branch
          %170 = sbr.rel (%p168) target = $region40
        $region39: #{rfda_forward.18} parent=31 // pred_region
          %172 = dma.done [#allocation5], 128
        $region40: #{rfda_forward.18} parent=31 // pred_fallthru
          _
        %p173 = scmp.lt.s32.totalorder %s16, 1
        %s174 = scalar_select %p173, %s16, 1
        %s175 = smul.addr %s174, 3
        %s176 = smul.addr %s175, 4
        %s177 = scalar_lea.vmem %s0, %s176
        %p178 = pneg %p37
        %p179 = pneg %p34
        %p180 = pneg %p58
        %p181 = pneg %p55
        %p182 = pneg %p79
        %p183 = pneg %p76
        %p184 = pneg %p105
        %p185 = pneg %p102
        %p186 = scmp.lt.s32.totalorder %s16, 1
        %s187 = scalar_select %p186, %s16, 1
        %s188 = smul.addr %s187, 3
        %s189 = smul.addr %s188, 4
        %s190 = scalar_lea.vmem %s3, %s189
        %p191 = scmp.lt.s32.totalorder %s16, 1
        %s192 = scalar_select %p191, %s16, 1
        %s193 = smul.addr %s192, 3
        %s194 = smul.addr %s193, 4
        %s195 = scalar_lea.vmem %s0, %s194
        %p196 = scmp.lt.s32.totalorder %s16, 1
        %s197 = scalar_select %p196, %s16, 1
        %s198 = smul.addr %s197, 3
        %s199 = smul.addr %s198, 4
        %s200 = scalar_lea.vmem %s3, %s199
        %v202 = vld [vmem:[%s195] sm:$0xff]
        %v203 = vld [vmem:[%s195 + $0x8] sm:$0xf]
        %v206 = vunpack.c.l.b16 %v202
        %v207 = vunpack.c.h.b16 %v202
        %v208 = vunpack.c.l.b16 %v203
        %v209 = vpack.c.b16 %v206, %v206
        %v210 = vpack.c.b16 %v207, %v207
        %v211 = vpack.c.b16 %v208, %v208
        %vm214 = vcmask 556032
        %v217 = vsel %vm214, %v211, 0
        %v219 = vld [vmem:[#allocation2] sm:$0xf]
        %v221 = vshrl.u32 %v209, 16
        %v223 = vrot.slane %v221, 4
        %v224 = vshll.u32 %v209, 16
        %v226 = vrot.slane %v224, 5
        %v227 = vor.u32 %v223, %v226
        %v229 = vshrl.u32 %v210, 16
        %v231 = vrot.slane %v229, 4
        %v232 = vshll.u32 %v210, 16
        %v234 = vrot.slane %v232, 5
        %v235 = vor.u32 %v231, %v234
        %v236 = vshrl.u32 %v217, 16
        %v238 = vrot.slane %v236, 4
        %v239 = vshll.u32 %v217, 16
        %v241 = vrot.slane %v239, 5
        %v242 = vor.u32 %v238, %v241
        %243 = vrot.lane.b32.xlu0 %v227, 127
        %v244 = vpop.permute.xlu0 %243
        %245 = vrot.lane.b32.xlu0 %v235, 127
        %v246 = vpop.permute.xlu0 %245
        %247 = vrot.lane.b32.xlu0 %v242, 127
        %v248 = vpop.permute.xlu0 %247
        %vm249 = vcmask 1039360
        %v250 = vsel %vm249, %v244, %v246
        %v251 = vsel %vm249, %v246, %v248
        %v256 = vrot.slane %v209, 1
        %v257 = vrot.slane %v210, 1
        %v258 = vrot.slane %v217, 1
        %259 = vrot.lane.b32.xlu0 %v256, 126
        %v260 = vpop.permute.xlu0 %259
        %261 = vrot.lane.b32.xlu0 %v257, 126
        %v262 = vpop.permute.xlu0 %261
        %263 = vrot.lane.b32.xlu0 %v258, 126
        %v264 = vpop.permute.xlu0 %263
        %vm265 = vcmask 1031168
        %v266 = vsel %vm265, %v260, %v262
        %v267 = vsel %vm265, %v262, %v264
        %v271 = vrot.slane %v221, 5
        %v272 = vrot.slane %v224, 6
        %v273 = vor.u32 %v271, %v272
        %v274 = vrot.slane %v229, 5
        %v275 = vrot.slane %v232, 6
        %v276 = vor.u32 %v274, %v275
        %v277 = vrot.slane %v236, 5
        %v278 = vrot.slane %v239, 6
        %v279 = vor.u32 %v277, %v278
        %280 = vrot.lane.b32.xlu0 %v273, 110
        %v281 = vpop.permute.xlu0 %280
        %282 = vrot.lane.b32.xlu0 %v276, 110
        %v283 = vpop.permute.xlu0 %282
        %284 = vrot.lane.b32.xlu0 %v279, 110
        %v285 = vpop.permute.xlu0 %284
        %vm286 = vcmask 900096
        %v287 = vsel %vm286, %v281, %v283
        %v288 = vsel %vm286, %v283, %v285
        %v292 = vrot.slane %v209, 2
        %v293 = vrot.slane %v210, 2
        %v294 = vrot.slane %v217, 2
        %295 = vrot.lane.b32.xlu0 %v292, 109
        %v296 = vpop.permute.xlu0 %295
        %297 = vrot.lane.b32.xlu0 %v293, 109
        %v298 = vpop.permute.xlu0 %297
        %299 = vrot.lane.b32.xlu0 %v294, 109
        %v300 = vpop.permute.xlu0 %299
        %vm301 = vcmask 891904
        %v302 = vsel %vm301, %v296, %v298
        %v303 = vsel %vm301, %v298, %v300
        %v307 = vrot.slane %v221, 6
        %v308 = vrot.slane %v224, 7
        %v309 = vor.u32 %v307, %v308
        %v310 = vrot.slane %v229, 6
        %v311 = vrot.slane %v232, 7
        %v312 = vor.u32 %v310, %v311
        %v313 = vrot.slane %v236, 6
        %v314 = vrot.slane %v239, 7
        %v315 = vor.u32 %v313, %v314
        %316 = vrot.lane.b32.xlu0 %v309, 108
        %v317 = vpop.permute.xlu0 %316
        %318 = vrot.lane.b32.xlu0 %v312, 108
        %v319 = vpop.permute.xlu0 %318
        %320 = vrot.lane.b32.xlu0 %v315, 108
        %v321 = vpop.permute.xlu0 %320
        %vm322 = vcmask 883712
        %v323 = vsel %vm322, %v317, %v319
        %v324 = vsel %vm322, %v319, %v321
        %v328 = vrot.slane %v209, 3
        %v329 = vrot.slane %v210, 3
        %v330 = vrot.slane %v217, 3
        %331 = vrot.lane.b32.xlu0 %v328, 92
        %v332 = vpop.permute.xlu0 %331
        %333 = vrot.lane.b32.xlu0 %v329, 92
        %v334 = vpop.permute.xlu0 %333
        %335 = vrot.lane.b32.xlu0 %v330, 92
        %v336 = vpop.permute.xlu0 %335
        %vm337 = vcmask 752640
        %v338 = vsel %vm337, %v332, %v334
        %v339 = vsel %vm337, %v334, %v336
        %v343 = vrot.slane %v221, 7
        %v344 = vor.u32 %v343, %v224
        %v345 = vrot.slane %v229, 7
        %v346 = vor.u32 %v345, %v232
        %v347 = vrot.slane %v236, 7
        %v348 = vor.u32 %v347, %v239
        %349 = vrot.lane.b32.xlu0 %v344, 91
        %v350 = vpop.permute.xlu0 %349
        %351 = vrot.lane.b32.xlu0 %v346, 91
        %v352 = vpop.permute.xlu0 %351
        %353 = vrot.lane.b32.xlu0 %v348, 91
        %v354 = vpop.permute.xlu0 %353
        %vm355 = vcmask 744448
        %v356 = vsel %vm355, %v350, %v352
        %v357 = vsel %vm355, %v352, %v354
        %v361 = vrot.slane %v209, 4
        %v362 = vrot.slane %v210, 4
        %v363 = vrot.slane %v217, 4
        %364 = vrot.lane.b32.xlu0 %v361, 90
        %v365 = vpop.permute.xlu0 %364
        %366 = vrot.lane.b32.xlu0 %v362, 90
        %v367 = vpop.permute.xlu0 %366
        %368 = vrot.lane.b32.xlu0 %v363, 90
        %v369 = vpop.permute.xlu0 %368
        %vm370 = vcmask 736256
        %v371 = vsel %vm370, %v365, %v367
        %v372 = vsel %vm370, %v367, %v369
        %vm373 = vcmask 1043456
        %vm374 = vsmask.f32 3328
        %vm375 = vmand %vm373, %vm374
        %v376 = vsel %vm375, %v209, %v250
        %v377 = vsel %vm375, %v210, %v251
        %v378 = vsel %vm375, %v217, %v248
        %vm379 = vcmask 1046528
        %v382 = vsel %vm379, %v376, %v266
        %v386 = vsel %vm379, %v377, %v267
        %v390 = vsel %vm379, %v378, %v264
        %vm392 = vcmask 1042432
        %vm393 = vsmask.f32 2304
        %vm394 = vmand %vm392, %vm393
        %v395 = vsel %vm394, %v266, %v287
        %v396 = vsel %vm394, %v267, %v288
        %v397 = vsel %vm394, %v264, %v285
        %vm398 = vcmask 1045504
        %v401 = vsel %vm398, %v395, %v302
        %v405 = vsel %vm398, %v396, %v303
        %v409 = vsel %vm398, %v397, %v300
        %vm411 = vcmask 1041408
        %vm412 = vsmask.f32 1280
        %vm413 = vmand %vm411, %vm412
        %v414 = vsel %vm413, %v302, %v323
        %v415 = vsel %vm413, %v303, %v324
        %v416 = vsel %vm413, %v300, %v321
        %vm417 = vcmask 1044480
        %v420 = vsel %vm417, %v414, %v338
        %v424 = vsel %vm417, %v415, %v339
        %v428 = vsel %vm417, %v416, %v336
        %vm430 = vcmask 1040384
        %vm431 = vsmask.f32 256
        %vm432 = vmand %vm430, %vm431
        %v433 = vsel %vm432, %v338, %v356
        %v434 = vsel %vm432, %v339, %v357
        %v435 = vsel %vm432, %v336, %v354
        %vm436 = vcmask 1043456
        %v439 = vsel %vm436, %v433, %v371
        %v442 = vsel %vm436, %v434, %v372
        %v445 = vsel %vm436, %v435, %v369
        %v446 = vld [vmem:[#allocation4] sm:$0xff]
        %448 = vset.pattern.permute.xlu0 0
        %449 = vperm.xlu0 %448, %v446
        %v450 = vpop.permute.xlu0 %449
        %vm452 = vcmask 515072
        %v454 = vsel %vm452, %v219, 0
        %vm456 = vcmask 1047552
        %v457 = vsel %vm379, 4294967295, 65535
        %v458 = vsel %vm456, %v457, 0
        %v459 = vand.u32 %v439, %v458
        %v461 = vand.u32 %v442, %v458
        %v463 = vand.u32 %v445, %v458
        %465 = vmatpush.bf16.msra.mxu0 0
        %466 = vmatpush.bf16.msra.mxu0 0
        %467 = vmatpush.bf16.msra.mxu0 0
        %468 = vmatpush.bf16.msra.mxu0 0
        %469 = vmatpush.bf16.msra.mxu0 %v459
        %470 = vmatpush.bf16.msra.mxu0 %v420
        %471 = vmatpush.bf16.msra.mxu0 %v401
        %472 = vmatpush.bf16.msra.mxu0 %v382
        %473 = vmatmul.bf16.gmra.mxu0 %v454
        %v474 = vpop.f32.mrf.mxu0
        %v475 = vadd.f32 %v450, %v474
        %v476 = vpop.f32.mrf.mxu0
        %477 = vdwg.mxu0
        %478 = vmatpush.bf16.msra.mxu0 0
        %479 = vmatpush.bf16.msra.mxu0 0
        %480 = vmatpush.bf16.msra.mxu0 0
        %481 = vmatpush.bf16.msra.mxu0 0
        %482 = vmatpush.bf16.msra.mxu0 %v461
        %483 = vmatpush.bf16.msra.mxu0 %v424
        %484 = vmatpush.bf16.msra.mxu0 %v405
        %485 = vmatpush.bf16.msra.mxu0 %v386
        %486 = vmatmul.bf16.gmra.mxu0 %v454
        %v487 = vpop.f32.mrf.mxu0
        %v488 = vadd.f32 %v450, %v487
        %v489 = vpop.f32.mrf.mxu0
        %490 = vdwg.mxu0
        %491 = vmatpush.bf16.msra.mxu0 0
        %492 = vmatpush.bf16.msra.mxu0 0
        %493 = vmatpush.bf16.msra.mxu0 0
        %494 = vmatpush.bf16.msra.mxu0 0
        %495 = vmatpush.bf16.msra.mxu0 %v463
        %496 = vmatpush.bf16.msra.mxu0 %v428
        %497 = vmatpush.bf16.msra.mxu0 %v409
        %498 = vmatpush.bf16.msra.mxu0 %v390
        %499 = vmatmul.bf16.gmra.mxu0 %v454
        %v500 = vpop.f32.mrf.mxu0
        %v501 = vadd.f32 %v450, %v500
        %v502 = vpop.f32.mrf.mxu0
        %503 = vdwg.mxu0
        %v504 = vmax.f32 %v475, 0.0
        %v505 = vmax.f32 %v488, 0.0
        %v506 = vmax.f32 %v501, 0.0
        %v507 = vpack.c.bf16 %v505, %v504
        %v508 = vpack.c.bf16 %v506, %v506
        %509 = vst [vmem:[%s200] sm:$0xff] %v507
        %vm510 = vcmask 257024
        %511 = vst.msk [vmem:[%s200 + $0x8] sm:$0xf] %vm510, %v508
        %p512 = scmp.lt.s32.totalorder %s16, 1
        %s513 = scalar_select %p512, %s16, 1
        %s514 = smul.addr %s513, 3
        %s515 = smul.addr %s514, 4
        %s516 = scalar_lea.vmem %s3, %s515
        // Predicated region
        $region41: #{rfda_forward.18} parent=31 // pred_check
          %p517 = pneg %p102
        $region42: #{rfda_forward.18} parent=31 // pred_check_branch
          %519 = sbr.rel (%p517) target = $region44
        $region43: #{rfda_forward.18} parent=31 // pred_region
          _
        $region44: #{rfda_forward.18} parent=31 // pred_fallthru
          _
      $region32: #{rfda_forward.18} parent=5 // pred_fallthru
        _
      %p520 = scmp.le.s32.totalorder 2, %s11
      // Predicated region
      $region45: #{rfda_forward.18} parent=5 // pred_check
        %p521 = pneg %p520
      $region46: #{rfda_forward.18} parent=5 // pred_check_branch
        %523 = sbr.rel (%p521) target = $region48
      $region47: #{rfda_forward.18} parent=5 // pred_region
        %s524 = ssub.s32 %s11, 2
        // Predicated region
        $region49: #{rfda_forward.18} parent=47 // pred_check
          %p525 = pneg %p108
        $region50: #{rfda_forward.18} parent=47 // pred_check_branch
          %527 = sbr.rel (%p525) target = $region52
        $region51: #{rfda_forward.18} parent=47 // pred_region
          %p528 = scmp.lt.s32.totalorder %s17, 1
          %s529 = scalar_select %p528, %s17, 1
          %s530 = smul.addr %s529, 3
          %s531 = smul.addr %s530, 4
          %s532 = scalar_lea.vmem %s3, %s531
        $region52: #{rfda_forward.18} parent=47 // pred_fallthru
          _
      $region48: #{rfda_forward.18} parent=5 // pred_fallthru
        _
    $region6: #{rfda_forward.18} parent=1 // loop_footer
      %s15 = sadd.s32 1, %s11
    $region7: #{rfda_forward.18} parent=1 // loop_footer_branch
      %10 = sbr.rel target = $region3
    $region8: #{rfda_forward.18} parent=1 // loop_exit
      _
    %533 = vsyncpa [#allocation3], 1
    %s534 = scalar_lea.sflag [#allocation3], 1
    %535 = vsyncpa %s534, 1
    %536 = vsyncpa [#allocation5], 1

// kernel: rfda_forward.19
$region0: #{rfda_forward.19}
  #allocation0 [shape = 'u32[]', space=smem, size = 0x4, offset = 0x4, fixed_abs, tag = 'smem constant byte address 0x4 - core index']
  #allocation1 [shape = 'u32[72,128]{1,0:T(1,128)}', space=vmem, size = 0x9000, scoped, tag = 'internal scratch']
  %s0 = inlined_call_operand.vmem [shape: bf16[2,32,81], index: 0, kind: input, shape index: {}]
  %s1 = inlined_call_operand.hbm [shape: bf16[8,128], index: 1, kind: input, shape index: {}]
  %s2 = inlined_call_operand.hbm [shape: f32[8,1], index: 2, kind: input, shape index: {}]
  %s3 = inlined_call_operand.vmem [shape: bf16[2,8,72], index: 3, kind: output, shape index: {}]
  %s4 = sld [smem:[#allocation0]]
  $region53: #{rfda_forward.19} parent=0
    _
  %s6 = ssub.s32 1, %s4
  %s7 = scalar_select 0, %s6, %s4
  $region1: #{rfda_forward.19} parent=0
    #allocation2 [shape = 'u8[2048]{0}', space=vmem, size = 0x800, scoped, tag = 'input window, operand 1, single buffered']
    #allocation3 [shape = 's32[2]{0}', space=sflag, size = 0x8, scoped, tag = 'scoped memory for rfda_forward.19']
    #allocation4 [shape = 'u8[4096]{0}', space=vmem, size = 0x1000, scoped, tag = 'input window, operand 2, single buffered']
    #allocation5 [shape = 's32[1]{0}', space=sflag, size = 0x4, scoped, tag = 'scoped memory for rfda_forward.19']
    %8 = vsyncpa [#allocation3], 0
    %9 = vsyncpa [#allocation5], 0
    loop: start=0, step=1, limit=4
    $region2: #{rfda_forward.19} parent=1 // loop_pre_header
      _
    $region3: #{rfda_forward.19} parent=1 // loop_header
      %s11 = sphi 0, %s15
      %p12 = scmp.ge.s32.totalorder %s11, 4
      %s21 = sphi 0, %s23
      %s24 = sphi 0, %s21
      %s25 = sphi 0, %s24
      %s41 = sphi 0, %s25
      %s45 = sphi 0, %s45
      %s47 = sphi 0, %s45
      %s48 = sphi 0, %s47
      %s62 = sphi 0, %s48
      %s66 = sphi 0, %s66
      %s68 = sphi 0, %s66
      %s69 = sphi 0, %s68
      %s83 = sphi 0, %s69
      %s89 = sphi 0, %s91
      %s92 = sphi 0, %s89
      %s93 = sphi 0, %s92
      %s109 = sphi 0, %s93
    $region4: #{rfda_forward.19} parent=1 // loop_header_branch
      %14 = sbr.rel (%p12) target = $region8
    $region5: #{rfda_forward.19} parent=1 // loop_body
      %s16 = ssub.s32 %s11, 1
      %s17 = ssub.s32 %s11, 2
      %s18 = sadd.s32 %s11, 1
      %s19 = ssub.s32 %s11, %s18
      %p20 = scmp.eq.s32.totalorder %s19, 0
      %s22 = sadd.s32 %s21, 1
      %s23 = scalar_select %p20, %s21, %s22
      %p26 = pneg %p20
      %p27 = scmp.eq.s32.totalorder %s11, 1
      %p28 = por %p26, %p27
      %p29 = scmp.ne.s32.totalorder %s21, %s24
      %p30 = scmp.eq.s32.totalorder %s11, 0
      %p31 = por %p29, %p30
      %p32 = scmp.ne.s32.totalorder %s21, %s24
      %p33 = scmp.eq.s32.totalorder %s16, 1
      %p34 = por %p32, %p33
      %p35 = scmp.ne.s32.totalorder %s24, %s25
      %p36 = scmp.eq.s32.totalorder %s16, 0
      %p37 = por %p35, %p36
      %p38 = scmp.ne.s32.totalorder %s24, %s25
      %p39 = scmp.eq.s32.totalorder %s17, 1
      %p40 = por %p38, %p39
      %p42 = scmp.ne.s32.totalorder %s25, %s41
      %p43 = scmp.eq.s32.totalorder %s17, 0
      %p44 = por %p42, %p43
      %s46 = sadd.s32 %s45, 1
      %p49 = scmp.eq.s32.totalorder %s11, 1
      %p50 = scmp.ne.s32.totalorder %s45, %s47
      %p51 = scmp.eq.s32.totalorder %s11, 0
      %p52 = por %p50, %p51
      %p53 = scmp.ne.s32.totalorder %s45, %s47
      %p54 = scmp.eq.s32.totalorder %s16, 1
      %p55 = por %p53, %p54
      %p56 = scmp.ne.s32.totalorder %s47, %s48
      %p57 = scmp.eq.s32.totalorder %s16, 0
      %p58 = por %p56, %p57
      %p59 = scmp.ne.s32.totalorder %s47, %s48
      %p60 = scmp.eq.s32.totalorder %s17, 1
      %p61 = por %p59, %p60
      %p63 = scmp.ne.s32.totalorder %s48, %s62
      %p64 = scmp.eq.s32.totalorder %s17, 0
      %p65 = por %p63, %p64
      %s67 = sadd.s32 %s66, 1
      %p70 = scmp.eq.s32.totalorder %s11, 1
      %p71 = scmp.ne.s32.totalorder %s66, %s68
      %p72 = scmp.eq.s32.totalorder %s11, 0
      %p73 = por %p71, %p72
      %p74 = scmp.ne.s32.totalorder %s66, %s68
      %p75 = scmp.eq.s32.totalorder %s16, 1
      %p76 = por %p74, %p75
      %p77 = scmp.ne.s32.totalorder %s68, %s69
      %p78 = scmp.eq.s32.totalorder %s16, 0
      %p79 = por %p77, %p78
      %p80 = scmp.ne.s32.totalorder %s68, %s69
      %p81 = scmp.eq.s32.totalorder %s17, 1
      %p82 = por %p80, %p81
      %p84 = scmp.ne.s32.totalorder %s69, %s83
      %p85 = scmp.eq.s32.totalorder %s17, 0
      %p86 = por %p84, %p85
      %s87 = ssub.s32 %s11, %s18
      %p88 = scmp.eq.s32.totalorder %s87, 0
      %s90 = sadd.s32 %s89, 1
      %s91 = scalar_select %p88, %s89, %s90
      %p94 = pneg %p88
      %p95 = scmp.eq.s32.totalorder %s11, 1
      %p96 = por %p94, %p95
      %p97 = scmp.ne.s32.totalorder %s89, %s92
      %p98 = scmp.eq.s32.totalorder %s11, 0
      %p99 = por %p97, %p98
      %p100 = scmp.ne.s32.totalorder %s89, %s92
      %p101 = scmp.eq.s32.totalorder %s16, 1
      %p102 = por %p100, %p101
      %p103 = scmp.ne.s32.totalorder %s92, %s93
      %p104 = scmp.eq.s32.totalorder %s16, 0
      %p105 = por %p103, %p104
      %p106 = scmp.ne.s32.totalorder %s92, %s93
      %p107 = scmp.eq.s32.totalorder %s17, 1
      %p108 = por %p106, %p107
      %p110 = scmp.ne.s32.totalorder %s93, %s109
      %p111 = scmp.eq.s32.totalorder %s17, 0
      %p112 = por %p110, %p111
      %p113 = scmp.le.s32.totalorder 1, %s11
      %p114 = scmp.lt.s32.totalorder %s11, 3
      %p115 = pnand %p113, %p114
      %p116 = pneg %p115
      // Predicated region
      $region9: #{rfda_forward.19} parent=5 // pred_check
        _
      $region10: #{rfda_forward.19} parent=5 // pred_check_branch
        %118 = sbr.rel (%p115) target = $region12
      $region11: #{rfda_forward.19} parent=5 // pred_region
        %s119 = ssub.s32 %s11, 1
        // Predicated region
        $region13: #{rfda_forward.19} parent=11 // pred_check
          %p120 = pneg %p58
        $region14: #{rfda_forward.19} parent=11 // pred_check_branch
          %122 = sbr.rel (%p120) target = $region16
        $region15: #{rfda_forward.19} parent=11 // pred_region
          %124 = vsyncadd [#allocation3], 0
          %s126 = sshll.u32 %s1, 4
          %s127 = int_to_ptr.hbm [resolvable:$true] %s126
          %s128 = sshll.u32 [#allocation2], 4
          %s129 = int_to_ptr.vmem [resolvable:$true] %s128
          %131 = dma.hbm_to_vmem [thread:$0]  %s127, 64, %s129, [#allocation3]
        $region16: #{rfda_forward.19} parent=11 // pred_fallthru
          _
        // Predicated region
        $region17: #{rfda_forward.19} parent=11 // pred_check
          %p132 = pneg %p79
        $region18: #{rfda_forward.19} parent=11 // pred_check_branch
          %134 = sbr.rel (%p132) target = $region20
        $region19: #{rfda_forward.19} parent=11 // pred_region
          %136 = vsyncadd [#allocation5], 0
          %s138 = sshll.u32 %s2, 4
          %s139 = int_to_ptr.hbm [resolvable:$true] %s138
          %s140 = sshll.u32 [#allocation4], 4
          %s141 = int_to_ptr.vmem [resolvable:$true] %s140
          %143 = dma.hbm_to_vmem [thread:$0]  %s139, 128, %s141, [#allocation5]
        $region20: #{rfda_forward.19} parent=11 // pred_fallthru
          _
      $region12: #{rfda_forward.19} parent=5 // pred_fallthru
        _
      %p144 = scmp.lt.s32.totalorder %s11, 2
      // Predicated region
      $region21: #{rfda_forward.19} parent=5 // pred_check
        %p145 = pneg %p144
      $region22: #{rfda_forward.19} parent=5 // pred_check_branch
        %147 = sbr.rel (%p145) target = $region24
      $region23: #{rfda_forward.19} parent=5 // pred_region
        // Predicated region
        $region25: #{rfda_forward.19} parent=23 // pred_check
          %p148 = pneg %p31
        $region26: #{rfda_forward.19} parent=23 // pred_check_branch
          %150 = sbr.rel (%p148) target = $region28
        $region27: #{rfda_forward.19} parent=23 // pred_region
          %p151 = scmp.lt.s32.totalorder %s11, 1
          %s152 = scalar_select %p151, %s11, 1
          %s153 = smul.addr %s152, 4
          %s154 = smul.addr %s153, 4
          %s155 = scalar_lea.vmem %s0, %s154
        $region28: #{rfda_forward.19} parent=23 // pred_fallthru
          _
      $region24: #{rfda_forward.19} parent=5 // pred_fallthru
        _
      %p156 = scmp.le.s32.totalorder 1, %s11
      %p157 = scmp.lt.s32.totalorder %s11, 3
      %p158 = pnand %p156, %p157
      %p159 = pneg %p158
      // Predicated region
      $region29: #{rfda_forward.19} parent=5 // pred_check
        _
      $region30: #{rfda_forward.19} parent=5 // pred_check_branch
        %161 = sbr.rel (%p158) target = $region32
      $region31: #{rfda_forward.19} parent=5 // pred_region
        %s162 = ssub.s32 %s11, 1
        // Predicated region
        $region33: #{rfda_forward.19} parent=31 // pred_check
          %p163 = pneg %p58
        $region34: #{rfda_forward.19} parent=31 // pred_check_branch
          %165 = sbr.rel (%p163) target = $region36
        $region35: #{rfda_forward.19} parent=31 // pred_region
          %167 = dma.done [#allocation3], 64
        $region36: #{rfda_forward.19} parent=31 // pred_fallthru
          _
        // Predicated region
        $region37: #{rfda_forward.19} parent=31 // pred_check
          %p168 = pneg %p79
        $region38: #{rfda_forward.19} parent=31 // pred_check_branch
          %170 = sbr.rel (%p168) target = $region40
        $region39: #{rfda_forward.19} parent=31 // pred_region
          %172 = dma.done [#allocation5], 128
        $region40: #{rfda_forward.19} parent=31 // pred_fallthru
          _
        %p173 = scmp.lt.s32.totalorder %s16, 1
        %s174 = scalar_select %p173, %s16, 1
        %s175 = smul.addr %s174, 4
        %s176 = smul.addr %s175, 4
        %s177 = scalar_lea.vmem %s0, %s176
        %p178 = pneg %p37
        %p179 = pneg %p34
        %p180 = pneg %p58
        %p181 = pneg %p55
        %p182 = pneg %p79
        %p183 = pneg %p76
        %p184 = pneg %p105
        %p185 = pneg %p102
        %p186 = scmp.lt.s32.totalorder %s16, 1
        %s187 = scalar_select %p186, %s16, 1
        %s188 = smul.addr %s187, 4
        %s189 = scalar_lea.vmem %s3, %s188
        %p190 = scmp.lt.s32.totalorder %s16, 1
        %s191 = scalar_select %p190, %s16, 1
        %s192 = smul.addr %s191, 4
        %s193 = smul.addr %s192, 4
        %s194 = scalar_lea.vmem %s0, %s193
        %p195 = scmp.lt.s32.totalorder %s16, 1
        %s196 = scalar_select %p195, %s16, 1
        %s197 = smul.addr %s196, 4
        %s198 = scalar_lea.vmem %s3, %s197
        %v200 = vld [vmem:[%s194] sm:$0xf]
        %v201 = vld [vmem:[%s194 + $0x4] sm:$0xf]
        %v202 = vld [vmem:[%s194 + $0x8] sm:$0xf]
        %v203 = vld [vmem:[%s194 + $0xc] sm:$0xf]
        %v208 = vunpack.c.l.b16 %v200
        %v209 = vunpack.c.l.b16 %v201
        %v210 = vunpack.c.l.b16 %v202
        %v211 = vunpack.c.l.b16 %v203
        %v212 = vpack.c.b16 %v209, %v208
        %v213 = vpack.c.b16 %v211, %v210
        %vm214 = vcmask 662528
        %v217 = vsel %vm214, %v212, 0
        %v220 = vsel %vm214, %v213, 0
        %v222 = vld [vmem:[#allocation2] sm:$0xf]
        %225 = vrot.lane.b32.xlu0 %v217, 127
        %v226 = vpop.permute.xlu0 %225
        %227 = vrot.lane.b32.xlu0 %v220, 127
        %v228 = vpop.permute.xlu0 %227
        %231 = vrot.lane.b32.xlu0 %v217, 119
        %v232 = vpop.permute.xlu0 %231
        %233 = vrot.lane.b32.xlu0 %v220, 119
        %v234 = vpop.permute.xlu0 %233
        %237 = vrot.lane.b32.xlu0 %v217, 118
        %v238 = vpop.permute.xlu0 %237
        %239 = vrot.lane.b32.xlu0 %v220, 118
        %v240 = vpop.permute.xlu0 %239
        %v243 = vld [vmem:[#allocation4] sm:$0xff]
        %245 = vset.pattern.permute.xlu0 0
        %246 = vperm.xlu0 %245, %v243
        %v247 = vpop.permute.xlu0 %246
        %249 = vmatpush.bf16.msra.mxu0 %v240
        %250 = vmatpush.bf16.msra.mxu0 %v238
        %251 = vmatpush.bf16.msra.mxu0 %v234
        %252 = vmatpush.bf16.msra.mxu0 %v232
        %253 = vmatpush.bf16.msra.mxu0 %v228
        %254 = vmatpush.bf16.msra.mxu0 %v226
        %255 = vmatpush.bf16.msra.mxu0 %v220
        %256 = vmatpush.bf16.msra.mxu0 %v217
        %257 = vmatmul.bf16.gmra.mxu0 %v222
        %v258 = vpop.f32.mrf.mxu0
        %v259 = vadd.f32 %v247, %v258
        %v260 = vpop.f32.mrf.mxu0
        %261 = vdwg.mxu0
        %v262 = vmax.f32 %v259, 0.0
        %v263 = vpack.c.bf16 %v262, %v262
        %vm264 = vcmask 584704
        %265 = vst.msk [vmem:[%s198] sm:$0xf] %vm264, %v263
        %p266 = scmp.lt.s32.totalorder %s16, 1
        %s267 = scalar_select %p266, %s16, 1
        %s268 = smul.addr %s267, 4
        %s269 = scalar_lea.vmem %s3, %s268
        // Predicated region
        $region41: #{rfda_forward.19} parent=31 // pred_check
          %p270 = pneg %p102
        $region42: #{rfda_forward.19} parent=31 // pred_check_branch
          %272 = sbr.rel (%p270) target = $region44
        $region43: #{rfda_forward.19} parent=31 // pred_region
          _
        $region44: #{rfda_forward.19} parent=31 // pred_fallthru
          _
      $region32: #{rfda_forward.19} parent=5 // pred_fallthru
        _
      %p273 = scmp.le.s32.totalorder 2, %s11
      // Predicated region
      $region45: #{rfda_forward.19} parent=5 // pred_check
        %p274 = pneg %p273
      $region46: #{rfda_forward.19} parent=5 // pred_check_branch
        %276 = sbr.rel (%p274) target = $region48
      $region47: #{rfda_forward.19} parent=5 // pred_region
        %s277 = ssub.s32 %s11, 2
        // Predicated region
        $region49: #{rfda_forward.19} parent=47 // pred_check
          %p278 = pneg %p108
        $region50: #{rfda_forward.19} parent=47 // pred_check_branch
          %280 = sbr.rel (%p278) target = $region52
        $region51: #{rfda_forward.19} parent=47 // pred_region
          %p281 = scmp.lt.s32.totalorder %s17, 1
          %s282 = scalar_select %p281, %s17, 1
          %s283 = smul.addr %s282, 4
          %s284 = scalar_lea.vmem %s3, %s283
        $region52: #{rfda_forward.19} parent=47 // pred_fallthru
          _
      $region48: #{rfda_forward.19} parent=5 // pred_fallthru
        _
    $region6: #{rfda_forward.19} parent=1 // loop_footer
      %s15 = sadd.s32 1, %s11
    $region7: #{rfda_forward.19} parent=1 // loop_footer_branch
      %10 = sbr.rel target = $region3
    $region8: #{rfda_forward.19} parent=1 // loop_exit
      _
    %285 = vsyncpa [#allocation3], 1
    %s286 = scalar_lea.sflag [#allocation3], 1
    %287 = vsyncpa %s286, 1
    %288 = vsyncpa [#allocation5], 1

// kernel: rfda_forward.20
$region0: #{rfda_forward.20}
  #allocation0 [shape = 'u32[]', space=smem, size = 0x4, offset = 0x4, fixed_abs, tag = 'smem constant byte address 0x4 - core index']
  #allocation1 [shape = 'u32[72,128]{1,0:T(1,128)}', space=vmem, size = 0x9000, scoped, tag = 'internal scratch']
  %s0 = inlined_call_operand.vmem [shape: bf16[2,8,100], index: 0, kind: input, shape index: {}]
  %s1 = inlined_call_operand.hbm [shape: bf16[8,72], index: 1, kind: input, shape index: {}]
  %s2 = inlined_call_operand.hbm [shape: f32[8,1], index: 2, kind: input, shape index: {}]
  %s3 = inlined_call_operand.vmem [shape: bf16[2,8,80], index: 3, kind: output, shape index: {}]
  %s4 = sld [smem:[#allocation0]]
  $region53: #{rfda_forward.20} parent=0
    _
  %s6 = ssub.s32 1, %s4
  %s7 = scalar_select 0, %s6, %s4
  $region1: #{rfda_forward.20} parent=0
    #allocation2 [shape = 'u8[2048]{0}', space=vmem, size = 0x800, scoped, tag = 'input window, operand 1, single buffered']
    #allocation3 [shape = 's32[2]{0}', space=sflag, size = 0x8, scoped, tag = 'scoped memory for rfda_forward.20']
    #allocation4 [shape = 'u8[4096]{0}', space=vmem, size = 0x1000, scoped, tag = 'input window, operand 2, single buffered']
    #allocation5 [shape = 's32[1]{0}', space=sflag, size = 0x4, scoped, tag = 'scoped memory for rfda_forward.20']
    %8 = vsyncpa [#allocation3], 0
    %9 = vsyncpa [#allocation5], 0
    loop: start=0, step=1, limit=4
    $region2: #{rfda_forward.20} parent=1 // loop_pre_header
      _
    $region3: #{rfda_forward.20} parent=1 // loop_header
      %s11 = sphi 0, %s15
      %p12 = scmp.ge.s32.totalorder %s11, 4
      %s21 = sphi 0, %s23
      %s24 = sphi 0, %s21
      %s25 = sphi 0, %s24
      %s41 = sphi 0, %s25
      %s45 = sphi 0, %s45
      %s47 = sphi 0, %s45
      %s48 = sphi 0, %s47
      %s62 = sphi 0, %s48
      %s66 = sphi 0, %s66
      %s68 = sphi 0, %s66
      %s69 = sphi 0, %s68
      %s83 = sphi 0, %s69
      %s89 = sphi 0, %s91
      %s92 = sphi 0, %s89
      %s93 = sphi 0, %s92
      %s109 = sphi 0, %s93
    $region4: #{rfda_forward.20} parent=1 // loop_header_branch
      %14 = sbr.rel (%p12) target = $region8
    $region5: #{rfda_forward.20} parent=1 // loop_body
      %s16 = ssub.s32 %s11, 1
      %s17 = ssub.s32 %s11, 2
      %s18 = sadd.s32 %s11, 1
      %s19 = ssub.s32 %s11, %s18
      %p20 = scmp.eq.s32.totalorder %s19, 0
      %s22 = sadd.s32 %s21, 1
      %s23 = scalar_select %p20, %s21, %s22
      %p26 = pneg %p20
      %p27 = scmp.eq.s32.totalorder %s11, 1
      %p28 = por %p26, %p27
      %p29 = scmp.ne.s32.totalorder %s21, %s24
      %p30 = scmp.eq.s32.totalorder %s11, 0
      %p31 = por %p29, %p30
      %p32 = scmp.ne.s32.totalorder %s21, %s24
      %p33 = scmp.eq.s32.totalorder %s16, 1
      %p34 = por %p32, %p33
      %p35 = scmp.ne.s32.totalorder %s24, %s25
      %p36 = scmp.eq.s32.totalorder %s16, 0
      %p37 = por %p35, %p36
      %p38 = scmp.ne.s32.totalorder %s24, %s25
      %p39 = scmp.eq.s32.totalorder %s17, 1
      %p40 = por %p38, %p39
      %p42 = scmp.ne.s32.totalorder %s25, %s41
      %p43 = scmp.eq.s32.totalorder %s17, 0
      %p44 = por %p42, %p43
      %s46 = sadd.s32 %s45, 1
      %p49 = scmp.eq.s32.totalorder %s11, 1
      %p50 = scmp.ne.s32.totalorder %s45, %s47
      %p51 = scmp.eq.s32.totalorder %s11, 0
      %p52 = por %p50, %p51
      %p53 = scmp.ne.s32.totalorder %s45, %s47
      %p54 = scmp.eq.s32.totalorder %s16, 1
      %p55 = por %p53, %p54
      %p56 = scmp.ne.s32.totalorder %s47, %s48
      %p57 = scmp.eq.s32.totalorder %s16, 0
      %p58 = por %p56, %p57
      %p59 = scmp.ne.s32.totalorder %s47, %s48
      %p60 = scmp.eq.s32.totalorder %s17, 1
      %p61 = por %p59, %p60
      %p63 = scmp.ne.s32.totalorder %s48, %s62
      %p64 = scmp.eq.s32.totalorder %s17, 0
      %p65 = por %p63, %p64
      %s67 = sadd.s32 %s66, 1
      %p70 = scmp.eq.s32.totalorder %s11, 1
      %p71 = scmp.ne.s32.totalorder %s66, %s68
      %p72 = scmp.eq.s32.totalorder %s11, 0
      %p73 = por %p71, %p72
      %p74 = scmp.ne.s32.totalorder %s66, %s68
      %p75 = scmp.eq.s32.totalorder %s16, 1
      %p76 = por %p74, %p75
      %p77 = scmp.ne.s32.totalorder %s68, %s69
      %p78 = scmp.eq.s32.totalorder %s16, 0
      %p79 = por %p77, %p78
      %p80 = scmp.ne.s32.totalorder %s68, %s69
      %p81 = scmp.eq.s32.totalorder %s17, 1
      %p82 = por %p80, %p81
      %p84 = scmp.ne.s32.totalorder %s69, %s83
      %p85 = scmp.eq.s32.totalorder %s17, 0
      %p86 = por %p84, %p85
      %s87 = ssub.s32 %s11, %s18
      %p88 = scmp.eq.s32.totalorder %s87, 0
      %s90 = sadd.s32 %s89, 1
      %s91 = scalar_select %p88, %s89, %s90
      %p94 = pneg %p88
      %p95 = scmp.eq.s32.totalorder %s11, 1
      %p96 = por %p94, %p95
      %p97 = scmp.ne.s32.totalorder %s89, %s92
      %p98 = scmp.eq.s32.totalorder %s11, 0
      %p99 = por %p97, %p98
      %p100 = scmp.ne.s32.totalorder %s89, %s92
      %p101 = scmp.eq.s32.totalorder %s16, 1
      %p102 = por %p100, %p101
      %p103 = scmp.ne.s32.totalorder %s92, %s93
      %p104 = scmp.eq.s32.totalorder %s16, 0
      %p105 = por %p103, %p104
      %p106 = scmp.ne.s32.totalorder %s92, %s93
      %p107 = scmp.eq.s32.totalorder %s17, 1
      %p108 = por %p106, %p107
      %p110 = scmp.ne.s32.totalorder %s93, %s109
      %p111 = scmp.eq.s32.totalorder %s17, 0
      %p112 = por %p110, %p111
      %p113 = scmp.le.s32.totalorder 1, %s11
      %p114 = scmp.lt.s32.totalorder %s11, 3
      %p115 = pnand %p113, %p114
      %p116 = pneg %p115
      // Predicated region
      $region9: #{rfda_forward.20} parent=5 // pred_check
        _
      $region10: #{rfda_forward.20} parent=5 // pred_check_branch
        %118 = sbr.rel (%p115) target = $region12
      $region11: #{rfda_forward.20} parent=5 // pred_region
        %s119 = ssub.s32 %s11, 1
        // Predicated region
        $region13: #{rfda_forward.20} parent=11 // pred_check
          %p120 = pneg %p58
        $region14: #{rfda_forward.20} parent=11 // pred_check_branch
          %122 = sbr.rel (%p120) target = $region16
        $region15: #{rfda_forward.20} parent=11 // pred_region
          %124 = vsyncadd [#allocation3], 0
          %s126 = sshll.u32 %s1, 4
          %s127 = int_to_ptr.hbm [resolvable:$true] %s126
          %s128 = sshll.u32 [#allocation2], 4
          %s129 = int_to_ptr.vmem [resolvable:$true] %s128
          %131 = dma.hbm_to_vmem [thread:$0]  %s127, 64, %s129, [#allocation3]
        $region16: #{rfda_forward.20} parent=11 // pred_fallthru
          _
        // Predicated region
        $region17: #{rfda_forward.20} parent=11 // pred_check
          %p132 = pneg %p79
        $region18: #{rfda_forward.20} parent=11 // pred_check_branch
          %134 = sbr.rel (%p132) target = $region20
        $region19: #{rfda_forward.20} parent=11 // pred_region
          %136 = vsyncadd [#allocation5], 0
          %s138 = sshll.u32 %s2, 4
          %s139 = int_to_ptr.hbm [resolvable:$true] %s138
          %s140 = sshll.u32 [#allocation4], 4
          %s141 = int_to_ptr.vmem [resolvable:$true] %s140
          %143 = dma.hbm_to_vmem [thread:$0]  %s139, 128, %s141, [#allocation5]
        $region20: #{rfda_forward.20} parent=11 // pred_fallthru
          _
      $region12: #{rfda_forward.20} parent=5 // pred_fallthru
        _
      %p144 = scmp.lt.s32.totalorder %s11, 2
      // Predicated region
      $region21: #{rfda_forward.20} parent=5 // pred_check
        %p145 = pneg %p144
      $region22: #{rfda_forward.20} parent=5 // pred_check_branch
        %147 = sbr.rel (%p145) target = $region24
      $region23: #{rfda_forward.20} parent=5 // pred_region
        // Predicated region
        $region25: #{rfda_forward.20} parent=23 // pred_check
          %p148 = pneg %p31
        $region26: #{rfda_forward.20} parent=23 // pred_check_branch
          %150 = sbr.rel (%p148) target = $region28
        $region27: #{rfda_forward.20} parent=23 // pred_region
          %p151 = scmp.lt.s32.totalorder %s11, 1
          %s152 = scalar_select %p151, %s11, 1
          %s153 = smul.addr %s152, 4
          %s154 = scalar_lea.vmem %s0, %s153
        $region28: #{rfda_forward.20} parent=23 // pred_fallthru
          _
      $region24: #{rfda_forward.20} parent=5 // pred_fallthru
        _
      %p155 = scmp.le.s32.totalorder 1, %s11
      %p156 = scmp.lt.s32.totalorder %s11, 3
      %p157 = pnand %p155, %p156
      %p158 = pneg %p157
      // Predicated region
      $region29: #{rfda_forward.20} parent=5 // pred_check
        _
      $region30: #{rfda_forward.20} parent=5 // pred_check_branch
        %160 = sbr.rel (%p157) target = $region32
      $region31: #{rfda_forward.20} parent=5 // pred_region
        %s161 = ssub.s32 %s11, 1
        // Predicated region
        $region33: #{rfda_forward.20} parent=31 // pred_check
          %p162 = pneg %p58
        $region34: #{rfda_forward.20} parent=31 // pred_check_branch
          %164 = sbr.rel (%p162) target = $region36
        $region35: #{rfda_forward.20} parent=31 // pred_region
          %166 = dma.done [#allocation3], 64
        $region36: #{rfda_forward.20} parent=31 // pred_fallthru
          _
        // Predicated region
        $region37: #{rfda_forward.20} parent=31 // pred_check
          %p167 = pneg %p79
        $region38: #{rfda_forward.20} parent=31 // pred_check_branch
          %169 = sbr.rel (%p167) target = $region40
        $region39: #{rfda_forward.20} parent=31 // pred_region
          %171 = dma.done [#allocation5], 128
        $region40: #{rfda_forward.20} parent=31 // pred_fallthru
          _
        %p172 = scmp.lt.s32.totalorder %s16, 1
        %s173 = scalar_select %p172, %s16, 1
        %s174 = smul.addr %s173, 4
        %s175 = scalar_lea.vmem %s0, %s174
        %p176 = pneg %p37
        %p177 = pneg %p34
        %p178 = pneg %p58
        %p179 = pneg %p55
        %p180 = pneg %p79
        %p181 = pneg %p76
        %p182 = pneg %p105
        %p183 = pneg %p102
        %p184 = scmp.lt.s32.totalorder %s16, 1
        %s185 = scalar_select %p184, %s16, 1
        %s186 = smul.addr %s185, 4
        %s187 = scalar_lea.vmem %s3, %s186
        %p188 = scmp.lt.s32.totalorder %s16, 1
        %s189 = scalar_select %p188, %s16, 1
        %s190 = smul.addr %s189, 4
        %s191 = scalar_lea.vmem %s0, %s190
        %p192 = scmp.lt.s32.totalorder %s16, 1
        %s193 = scalar_select %p192, %s16, 1
        %s194 = smul.addr %s193, 4
        %s195 = scalar_lea.vmem %s3, %s194
        %v197 = vld [vmem:[%s191] sm:$0xf]
        %vm198 = vcmask 818176
        %v201 = vsel %vm198, %v197, 0
        %v202 = vld [vmem:[#allocation2] sm:$0xf]
        %v204 = vrot.slane %v201, 4
        %205 = vrot.lane.b32.xlu0 %v204, 127
        %v206 = vpop.permute.xlu0 %205
        %207 = vrot.lane.b32.xlu0 %v201, 126
        %v208 = vpop.permute.xlu0 %207
        %209 = vrot.lane.b32.xlu0 %v204, 118
        %v210 = vpop.permute.xlu0 %209
        %211 = vrot.lane.b32.xlu0 %v201, 117
        %v212 = vpop.permute.xlu0 %211
        %213 = vrot.lane.b32.xlu0 %v204, 116
        %v214 = vpop.permute.xlu0 %213
        %215 = vrot.lane.b32.xlu0 %v201, 108
        %v216 = vpop.permute.xlu0 %215
        %217 = vrot.lane.b32.xlu0 %v204, 107
        %v218 = vpop.permute.xlu0 %217
        %219 = vrot.lane.b32.xlu0 %v201, 106
        %v220 = vpop.permute.xlu0 %219
        %vm221 = vcmask 1043456
        %v223 = vsel %vm221, %v201, %v206
        %v227 = vsel %vm221, %v208, %v210
        %v231 = vsel %vm221, %v212, %v214
        %v235 = vsel %vm221, %v216, %v218
        %v237 = vld [vmem:[#allocation4] sm:$0xff]
        %239 = vset.pattern.permute.xlu0 0
        %240 = vperm.xlu0 %239, %v237
        %v241 = vpop.permute.xlu0 %240
        %vm243 = vcmask 588800
        %v245 = vsel %vm243, %v202, 0
        %v248 = vsel %vm221, %v220, 0
        %250 = vmatpush.bf16.msra.mxu0 0
        %251 = vmatpush.bf16.msra.mxu0 0
        %252 = vmatpush.bf16.msra.mxu0 0
        %253 = vmatpush.bf16.msra.mxu0 %v248
        %254 = vmatpush.bf16.msra.mxu0 %v235
        %255 = vmatpush.bf16.msra.mxu0 %v231
        %256 = vmatpush.bf16.msra.mxu0 %v227
        %257 = vmatpush.bf16.msra.mxu0 %v223
        %258 = vmatmul.bf16.gmra.mxu0 %v245
        %v259 = vpop.f32.mrf.mxu0
        %v260 = vadd.f32 %v241, %v259
        %v261 = vpop.f32.mrf.mxu0
        %262 = vdwg.mxu0
        %v263 = vmax.f32 %v260, 0.0
        %v264 = vpack.c.bf16 %v263, %v263
        %vm265 = vcmask 650240
        %266 = vst.msk [vmem:[%s195] sm:$0xf] %vm265, %v264
        %p267 = scmp.lt.s32.totalorder %s16, 1
        %s268 = scalar_select %p267, %s16, 1
        %s269 = smul.addr %s268, 4
        %s270 = scalar_lea.vmem %s3, %s269
        // Predicated region
        $region41: #{rfda_forward.20} parent=31 // pred_check
          %p271 = pneg %p102
        $region42: #{rfda_forward.20} parent=31 // pred_check_branch
          %273 = sbr.rel (%p271) target = $region44
        $region43: #{rfda_forward.20} parent=31 // pred_region
          _
        $region44: #{rfda_forward.20} parent=31 // pred_fallthru
          _
      $region32: #{rfda_forward.20} parent=5 // pred_fallthru
        _
      %p274 = scmp.le.s32.totalorder 2, %s11
      // Predicated region
      $region45: #{rfda_forward.20} parent=5 // pred_check
        %p275 = pneg %p274
      $region46: #{rfda_forward.20} parent=5 // pred_check_branch
        %277 = sbr.rel (%p275) target = $region48
      $region47: #{rfda_forward.20} parent=5 // pred_region
        %s278 = ssub.s32 %s11, 2
        // Predicated region
        $region49: #{rfda_forward.20} parent=47 // pred_check
          %p279 = pneg %p108
        $region50: #{rfda_forward.20} parent=47 // pred_check_branch
          %281 = sbr.rel (%p279) target = $region52
        $region51: #{rfda_forward.20} parent=47 // pred_region
          %p282 = scmp.lt.s32.totalorder %s17, 1
          %s283 = scalar_select %p282, %s17, 1
          %s284 = smul.addr %s283, 4
          %s285 = scalar_lea.vmem %s3, %s284
        $region52: #{rfda_forward.20} parent=47 // pred_fallthru
          _
      $region48: #{rfda_forward.20} parent=5 // pred_fallthru
        _
    $region6: #{rfda_forward.20} parent=1 // loop_footer
      %s15 = sadd.s32 1, %s11
    $region7: #{rfda_forward.20} parent=1 // loop_footer_branch
      %10 = sbr.rel target = $region3
    $region8: #{rfda_forward.20} parent=1 // loop_exit
      _
    %286 = vsyncpa [#allocation3], 1
    %s287 = scalar_lea.sflag [#allocation3], 1
    %288 = vsyncpa %s287, 1
    %289 = vsyncpa [#allocation5], 1

// kernel: tile.18
$region0: #{tile.18}
  #allocation0 [shape = 's32[1]{0}', space=sflag, size = 0x4, scoped, tag = 'scoped memory for tile.18']
  %s0 = inlined_call_operand.vmem [shape: f32[8], index: 0, kind: input, shape index: {}]
  %s1 = inlined_call_operand.vmem [shape: f32[4,8], index: 1, kind: output, shape index: {}]
  // Predicated region
  $region2: #{tile.18} parent=0 // pred_check
    _
  $region3: #{tile.18} parent=0 // pred_check_branch
    %3 = sbr.rel (0) target = $region5
  $region4: #{tile.18} parent=0 // pred_region
    _
  $region5: #{tile.18} parent=0 // pred_fallthru
    _
  %v4 = vld [vmem:[%s0] ss:$0 sm:$0xff]
  %5 = vst [vmem:[%s1] sm:$0xf] %v4

// kernel: tile.0
$region0: #{tile.0}
  %s0 = inlined_call_operand.vmem [shape: f32[4,8], index: 0, kind: input, shape index: {}]
  %s1 = inlined_call_operand.vmem [shape: f32[32,1], index: 1, kind: output, shape index: {}]
  $region1: #{tile.0} parent=0
    #allocation0 [shape = 'u8[4096]{0}', space=vmem, size = 0x1000, scoped, tag = 'scoped mem for input reshape']
    %s3 = ssub.s32 16, 1
    %v4 = vld [vmem:[%s0] sm:%s3]
    %5 = vst [vmem:[#allocation0] sm:%s3] %v4
    %v6 = vld [vmem:[#allocation0] sm:$0xf]
    %vm7 = vcmask 7168
    %8 = vst.msk [vmem:[%s1] ss:$8 sm:$0xf] %vm7, %v6
    %v9 = vld [vmem:[#allocation0] sm:$0xf]
    %10 = vrot.lane.b32.xlu0 %v9, 127
    %v11 = vpop.permute.xlu0 %10
    %vm12 = vcmask 7168
    %s13 = scalar_lea.vmem %s1, 1
    %14 = vst.msk [vmem:[%s13] ss:$8 sm:$0xf] %vm12, %v11
    %v15 = vld [vmem:[#allocation0] sm:$0xf]
    %16 = vrot.lane.b32.xlu0 %v15, 126
    %v17 = vpop.permute.xlu0 %16
    %vm18 = vcmask 7168
    %s19 = scalar_lea.vmem %s1, 2
    %20 = vst.msk [vmem:[%s19] ss:$8 sm:$0xf] %vm18, %v17
    %v21 = vld [vmem:[#allocation0] sm:$0xf]
    %22 = vrot.lane.b32.xlu0 %v21, 125
    %v23 = vpop.permute.xlu0 %22
    %vm24 = vcmask 7168
    %s25 = scalar_lea.vmem %s1, 3
    %26 = vst.msk [vmem:[%s25] ss:$8 sm:$0xf] %vm24, %v23
    %v27 = vld [vmem:[#allocation0] sm:$0xf]
    %28 = vrot.lane.b32.xlu0 %v27, 124
    %v29 = vpop.permute.xlu0 %28
    %vm30 = vcmask 7168
    %s31 = scalar_lea.vmem %s1, 4
    %32 = vst.msk [vmem:[%s31] ss:$8 sm:$0xf] %vm30, %v29
    %v33 = vld [vmem:[#allocation0] sm:$0xf]
    %34 = vrot.lane.b32.xlu0 %v33, 123
    %v35 = vpop.permute.xlu0 %34
    %vm36 = vcmask 7168
    %s37 = scalar_lea.vmem %s1, 5
    %38 = vst.msk [vmem:[%s37] ss:$8 sm:$0xf] %vm36, %v35
    %v39 = vld [vmem:[#allocation0] sm:$0xf]
    %40 = vrot.lane.b32.xlu0 %v39, 122
    %v41 = vpop.permute.xlu0 %40
    %vm42 = vcmask 7168
    %s43 = scalar_lea.vmem %s1, 6
    %44 = vst.msk [vmem:[%s43] ss:$8 sm:$0xf] %vm42, %v41
    %v45 = vld [vmem:[#allocation0] sm:$0xf]
    %46 = vrot.lane.b32.xlu0 %v45, 121
    %v47 = vpop.permute.xlu0 %46
    %vm48 = vcmask 7168
    %s49 = scalar_lea.vmem %s1, 7
    %50 = vst.msk [vmem:[%s49] ss:$8 sm:$0xf] %vm48, %v47

// kernel: rfda_forward.21
$region0: #{rfda_forward.21}
  #allocation0 [shape = 'u32[]', space=smem, size = 0x4, offset = 0x4, fixed_abs, tag = 'smem constant byte address 0x4 - core index']
  #allocation1 [shape = 'u32[72,128]{1,0:T(1,128)}', space=vmem, size = 0x9000, scoped, tag = 'internal scratch']
  %s0 = inlined_call_operand.vmem [shape: bf16[2,32,25], index: 0, kind: input, shape index: {}]
  %s1 = inlined_call_operand.vmem [shape: bf16[8,128], index: 1, kind: input, shape index: {}]
  %s2 = inlined_call_operand.vmem [shape: f32[8,1], index: 2, kind: input, shape index: {}]
  %s3 = inlined_call_operand.vmem [shape: bf16[2,8,20], index: 3, kind: output, shape index: {}]
  %s4 = sld [smem:[#allocation0]]
  $region45: #{rfda_forward.21} parent=0
    _
  %s6 = ssub.s32 1, %s4
  %s7 = scalar_select 0, %s6, %s4
  loop: start=0, step=1, limit=4
  $region2: #{rfda_forward.21} parent=0 // loop_pre_header
    _
  $region3: #{rfda_forward.21} parent=0 // loop_header
    %s9 = sphi 0, %s13
    %p10 = scmp.ge.s32.totalorder %s9, 4
    %s19 = sphi 0, %s21
    %s22 = sphi 0, %s19
    %s23 = sphi 0, %s22
    %s39 = sphi 0, %s23
    %s43 = sphi 0, %s43
    %s45 = sphi 0, %s43
    %s46 = sphi 0, %s45
    %s60 = sphi 0, %s46
    %s64 = sphi 0, %s64
    %s66 = sphi 0, %s64
    %s67 = sphi 0, %s66
    %s81 = sphi 0, %s67
    %s87 = sphi 0, %s89
    %s90 = sphi 0, %s87
    %s91 = sphi 0, %s90
    %s107 = sphi 0, %s91
  $region4: #{rfda_forward.21} parent=0 // loop_header_branch
    %12 = sbr.rel (%p10) target = $region8
  $region5: #{rfda_forward.21} parent=0 // loop_body
    %s14 = ssub.s32 %s9, 1
    %s15 = ssub.s32 %s9, 2
    %s16 = sadd.s32 %s9, 1
    %s17 = ssub.s32 %s9, %s16
    %p18 = scmp.eq.s32.totalorder %s17, 0
    %s20 = sadd.s32 %s19, 1
    %s21 = scalar_select %p18, %s19, %s20
    %p24 = pneg %p18
    %p25 = scmp.eq.s32.totalorder %s9, 1
    %p26 = por %p24, %p25
    %p27 = scmp.ne.s32.totalorder %s19, %s22
    %p28 = scmp.eq.s32.totalorder %s9, 0
    %p29 = por %p27, %p28
    %p30 = scmp.ne.s32.totalorder %s19, %s22
    %p31 = scmp.eq.s32.totalorder %s14, 1
    %p32 = por %p30, %p31
    %p33 = scmp.ne.s32.totalorder %s22, %s23
    %p34 = scmp.eq.s32.totalorder %s14, 0
    %p35 = por %p33, %p34
    %p36 = scmp.ne.s32.totalorder %s22, %s23
    %p37 = scmp.eq.s32.totalorder %s15, 1
    %p38 = por %p36, %p37
    %p40 = scmp.ne.s32.totalorder %s23, %s39
    %p41 = scmp.eq.s32.totalorder %s15, 0
    %p42 = por %p40, %p41
    %s44 = sadd.s32 %s43, 1
    %p47 = scmp.eq.s32.totalorder %s9, 1
    %p48 = scmp.ne.s32.totalorder %s43, %s45
    %p49 = scmp.eq.s32.totalorder %s9, 0
    %p50 = por %p48, %p49
    %p51 = scmp.ne.s32.totalorder %s43, %s45
    %p52 = scmp.eq.s32.totalorder %s14, 1
    %p53 = por %p51, %p52
    %p54 = scmp.ne.s32.totalorder %s45, %s46
    %p55 = scmp.eq.s32.totalorder %s14, 0
    %p56 = por %p54, %p55
    %p57 = scmp.ne.s32.totalorder %s45, %s46
    %p58 = scmp.eq.s32.totalorder %s15, 1
    %p59 = por %p57, %p58
    %p61 = scmp.ne.s32.totalorder %s46, %s60
    %p62 = scmp.eq.s32.totalorder %s15, 0
    %p63 = por %p61, %p62
    %s65 = sadd.s32 %s64, 1
    %p68 = scmp.eq.s32.totalorder %s9, 1
    %p69 = scmp.ne.s32.totalorder %s64, %s66
    %p70 = scmp.eq.s32.totalorder %s9, 0
    %p71 = por %p69, %p70
    %p72 = scmp.ne.s32.totalorder %s64, %s66
    %p73 = scmp.eq.s32.totalorder %s14, 1
    %p74 = por %p72, %p73
    %p75 = scmp.ne.s32.totalorder %s66, %s67
    %p76 = scmp.eq.s32.totalorder %s14, 0
    %p77 = por %p75, %p76
    %p78 = scmp.ne.s32.totalorder %s66, %s67
    %p79 = scmp.eq.s32.totalorder %s15, 1
    %p80 = por %p78, %p79
    %p82 = scmp.ne.s32.totalorder %s67, %s81
    %p83 = scmp.eq.s32.totalorder %s15, 0
    %p84 = por %p82, %p83
    %s85 = ssub.s32 %s9, %s16
    %p86 = scmp.eq.s32.totalorder %s85, 0
    %s88 = sadd.s32 %s87, 1
    %s89 = scalar_select %p86, %s87, %s88
    %p92 = pneg %p86
    %p93 = scmp.eq.s32.totalorder %s9, 1
    %p94 = por %p92, %p93
    %p95 = scmp.ne.s32.totalorder %s87, %s90
    %p96 = scmp.eq.s32.totalorder %s9, 0
    %p97 = por %p95, %p96
    %p98 = scmp.ne.s32.totalorder %s87, %s90
    %p99 = scmp.eq.s32.totalorder %s14, 1
    %p100 = por %p98, %p99
    %p101 = scmp.ne.s32.totalorder %s90, %s91
    %p102 = scmp.eq.s32.totalorder %s14, 0
    %p103 = por %p101, %p102
    %p104 = scmp.ne.s32.totalorder %s90, %s91
    %p105 = scmp.eq.s32.totalorder %s15, 1
    %p106 = por %p104, %p105
    %p108 = scmp.ne.s32.totalorder %s91, %s107
    %p109 = scmp.eq.s32.totalorder %s15, 0
    %p110 = por %p108, %p109
    %p111 = scmp.le.s32.totalorder 1, %s9
    %p112 = scmp.lt.s32.totalorder %s9, 3
    %p113 = pnand %p111, %p112
    %p114 = pneg %p113
    // Predicated region
    $region9: #{rfda_forward.21} parent=5 // pred_check
      _
    $region10: #{rfda_forward.21} parent=5 // pred_check_branch
      %116 = sbr.rel (%p113) target = $region12
    $region11: #{rfda_forward.21} parent=5 // pred_region
      %s117 = ssub.s32 %s9, 1
      // Predicated region
      $region13: #{rfda_forward.21} parent=11 // pred_check
        %p118 = pneg %p56
      $region14: #{rfda_forward.21} parent=11 // pred_check_branch
        %120 = sbr.rel (%p118) target = $region16
      $region15: #{rfda_forward.21} parent=11 // pred_region
        _
      $region16: #{rfda_forward.21} parent=11 // pred_fallthru
        _
      // Predicated region
      $region17: #{rfda_forward.21} parent=11 // pred_check
        %p121 = pneg %p77
      $region18: #{rfda_forward.21} parent=11 // pred_check_branch
        %123 = sbr.rel (%p121) target = $region20
      $region19: #{rfda_forward.21} parent=11 // pred_region
        _
      $region20: #{rfda_forward.21} parent=11 // pred_fallthru
        _
    $region12: #{rfda_forward.21} parent=5 // pred_fallthru
      _
    %p124 = scmp.lt.s32.totalorder %s9, 2
    // Predicated region
    $region21: #{rfda_forward.21} parent=5 // pred_check
      %p125 = pneg %p124
    $region22: #{rfda_forward.21} parent=5 // pred_check_branch
      %127 = sbr.rel (%p125) target = $region24
    $region23: #{rfda_forward.21} parent=5 // pred_region
      // Predicated region
      $region25: #{rfda_forward.21} parent=23 // pred_check
        %p128 = pneg %p29
      $region26: #{rfda_forward.21} parent=23 // pred_check_branch
        %130 = sbr.rel (%p128) target = $region28
      $region27: #{rfda_forward.21} parent=23 // pred_region
        %p131 = scmp.lt.s32.totalorder %s9, 1
        %s132 = scalar_select %p131, %s9, 1
        %s133 = smul.addr %s132, 4
        %s134 = smul.addr %s133, 4
        %s135 = scalar_lea.vmem %s0, %s134
      $region28: #{rfda_forward.21} parent=23 // pred_fallthru
        _
    $region24: #{rfda_forward.21} parent=5 // pred_fallthru
      _
    %p136 = scmp.le.s32.totalorder 1, %s9
    %p137 = scmp.lt.s32.totalorder %s9, 3
    %p138 = pnand %p136, %p137
    %p139 = pneg %p138
    // Predicated region
    $region29: #{rfda_forward.21} parent=5 // pred_check
      _
    $region30: #{rfda_forward.21} parent=5 // pred_check_branch
      %141 = sbr.rel (%p138) target = $region32
    $region31: #{rfda_forward.21} parent=5 // pred_region
      %s142 = ssub.s32 %s9, 1
      %p143 = scmp.lt.s32.totalorder %s14, 1
      %s144 = scalar_select %p143, %s14, 1
      %s145 = smul.addr %s144, 4
      %s146 = smul.addr %s145, 4
      %s147 = scalar_lea.vmem %s0, %s146
      %p148 = pneg %p35
      %p149 = pneg %p32
      %p150 = pneg %p56
      %p151 = pneg %p53
      %p152 = pneg %p77
      %p153 = pneg %p74
      %p154 = pneg %p103
      %p155 = pneg %p100
      %p156 = scmp.lt.s32.totalorder %s14, 1
      %s157 = scalar_select %p156, %s14, 1
      %s158 = smul.addr %s157, 4
      %s159 = scalar_lea.vmem %s3, %s158
      %p160 = scmp.lt.s32.totalorder %s14, 1
      %s161 = scalar_select %p160, %s14, 1
      %s162 = smul.addr %s161, 4
      %s163 = smul.addr %s162, 4
      %s164 = scalar_lea.vmem %s0, %s163
      %p165 = scmp.lt.s32.totalorder %s14, 1
      %s166 = scalar_select %p165, %s14, 1
      %s167 = smul.addr %s166, 4
      %s168 = scalar_lea.vmem %s3, %s167
      %v170 = vld [vmem:[%s164] sm:$0xf]
      %v171 = vld [vmem:[%s164 + $0x4] sm:$0xf]
      %v172 = vld [vmem:[%s164 + $0x8] sm:$0xf]
      %v173 = vld [vmem:[%s164 + $0xc] sm:$0xf]
      %v178 = vunpack.c.l.b16 %v170
      %v179 = vunpack.c.l.b16 %v171
      %v180 = vunpack.c.l.b16 %v172
      %v181 = vunpack.c.l.b16 %v173
      %v182 = vpack.c.b16 %v179, %v178
      %v183 = vpack.c.b16 %v181, %v180
      %vm184 = vcmask 203776
      %v187 = vsel %vm184, %v182, 0
      %v190 = vsel %vm184, %v183, 0
      %v192 = vld [vmem:[%s1] sm:$0xf]
      %195 = vrot.lane.b32.xlu0 %v187, 127
      %v196 = vpop.permute.xlu0 %195
      %197 = vrot.lane.b32.xlu0 %v190, 127
      %v198 = vpop.permute.xlu0 %197
      %201 = vrot.lane.b32.xlu0 %v187, 123
      %v202 = vpop.permute.xlu0 %201
      %203 = vrot.lane.b32.xlu0 %v190, 123
      %v204 = vpop.permute.xlu0 %203
      %207 = vrot.lane.b32.xlu0 %v187, 122
      %v208 = vpop.permute.xlu0 %207
      %209 = vrot.lane.b32.xlu0 %v190, 122
      %v210 = vpop.permute.xlu0 %209
      %v213 = vld [vmem:[%s2] sm:$0xff]
      %215 = vset.pattern.permute.xlu0 0
      %216 = vperm.xlu0 %215, %v213
      %v217 = vpop.permute.xlu0 %216
      %219 = vmatpush.bf16.msra.mxu0 %v210
      %220 = vmatpush.bf16.msra.mxu0 %v208
      %221 = vmatpush.bf16.msra.mxu0 %v204
      %222 = vmatpush.bf16.msra.mxu0 %v202
      %223 = vmatpush.bf16.msra.mxu0 %v198
      %224 = vmatpush.bf16.msra.mxu0 %v196
      %225 = vmatpush.bf16.msra.mxu0 %v190
      %226 = vmatpush.bf16.msra.mxu0 %v187
      %227 = vmatmul.bf16.gmra.mxu0 %v192
      %v228 = vpop.f32.mrf.mxu0
      %v229 = vadd.f32 %v217, %v228
      %v230 = vpop.f32.mrf.mxu0
      %231 = vdwg.mxu0
      %v232 = vmax.f32 %v229, 0.0
      %v233 = vpack.c.bf16 %v232, %v232
      %vm234 = vcmask 158720
      %235 = vst.msk [vmem:[%s168] sm:$0xf] %vm234, %v233
      %p236 = scmp.lt.s32.totalorder %s14, 1
      %s237 = scalar_select %p236, %s14, 1
      %s238 = smul.addr %s237, 4
      %s239 = scalar_lea.vmem %s3, %s238
      // Predicated region
      $region33: #{rfda_forward.21} parent=31 // pred_check
        %p240 = pneg %p100
      $region34: #{rfda_forward.21} parent=31 // pred_check_branch
        %242 = sbr.rel (%p240) target = $region36
      $region35: #{rfda_forward.21} parent=31 // pred_region
        _
      $region36: #{rfda_forward.21} parent=31 // pred_fallthru
        _
    $region32: #{rfda_forward.21} parent=5 // pred_fallthru
      _
    %p243 = scmp.le.s32.totalorder 2, %s9
    // Predicated region
    $region37: #{rfda_forward.21} parent=5 // pred_check
      %p244 = pneg %p243
    $region38: #{rfda_forward.21} parent=5 // pred_check_branch
      %246 = sbr.rel (%p244) target = $region40
    $region39: #{rfda_forward.21} parent=5 // pred_region
      %s247 = ssub.s32 %s9, 2
      // Predicated region
      $region41: #{rfda_forward.21} parent=39 // pred_check
        %p248 = pneg %p106
      $region42: #{rfda_forward.21} parent=39 // pred_check_branch
        %250 = sbr.rel (%p248) target = $region44
      $region43: #{rfda_forward.21} parent=39 // pred_region
        %p251 = scmp.lt.s32.totalorder %s15, 1
        %s252 = scalar_select %p251, %s15, 1
        %s253 = smul.addr %s252, 4
        %s254 = scalar_lea.vmem %s3, %s253
      $region44: #{rfda_forward.21} parent=39 // pred_fallthru
        _
    $region40: #{rfda_forward.21} parent=5 // pred_fallthru
      _
  $region6: #{rfda_forward.21} parent=0 // loop_footer
    %s13 = sadd.s32 1, %s9
  $region7: #{rfda_forward.21} parent=0 // loop_footer_branch
    %8 = sbr.rel target = $region3
  $region8: #{rfda_forward.21} parent=0 // loop_exit
    _

// kernel: rfda_forward.22
$region0: #{rfda_forward.22}
  #allocation0 [shape = 'u32[]', space=smem, size = 0x4, offset = 0x4, fixed_abs, tag = 'smem constant byte address 0x4 - core index']
  #allocation1 [shape = 'u32[72,128]{1,0:T(1,128)}', space=vmem, size = 0x9000, scoped, tag = 'internal scratch']
  %s0 = inlined_call_operand.vmem [shape: bf16[2,8,36], index: 0, kind: input, shape index: {}]
  %s1 = inlined_call_operand.vmem [shape: bf16[1,24], index: 1, kind: input, shape index: {}]
  %s2 = inlined_call_operand.vmem [shape: bf16[8,72], index: 2, kind: input, shape index: {}]
  %s3 = inlined_call_operand.vmem [shape: f32[8,1], index: 3, kind: input, shape index: {}]
  %s4 = inlined_call_operand.vmem [shape: bf16[32,72], index: 4, kind: input, shape index: {}]
  %s5 = inlined_call_operand.vmem [shape: f32[32,1], index: 5, kind: input, shape index: {}]
  %s6 = inlined_call_operand.vmem [shape: bf16[2,32,24], index: 6, kind: output, shape index: {}]
  %s7 = sld [smem:[#allocation0]]
  $region57: #{rfda_forward.22} parent=0
    _
  %s9 = ssub.s32 1, %s7
  %s10 = scalar_select 0, %s9, %s7
  loop: start=0, step=1, limit=4
  $region2: #{rfda_forward.22} parent=0 // loop_pre_header
    _
  $region3: #{rfda_forward.22} parent=0 // loop_header
    %s12 = sphi 0, %s16
    %p13 = scmp.ge.s32.totalorder %s12, 4
    %s22 = sphi 0, %s24
    %s25 = sphi 0, %s22
    %s26 = sphi 0, %s25
    %s42 = sphi 0, %s26
    %s46 = sphi 0, %s46
    %s48 = sphi 0, %s46
    %s49 = sphi 0, %s48
    %s63 = sphi 0, %s49
    %s67 = sphi 0, %s67
    %s69 = sphi 0, %s67
    %s70 = sphi 0, %s69
    %s84 = sphi 0, %s70
    %s88 = sphi 0, %s88
    %s90 = sphi 0, %s88
    %s91 = sphi 0, %s90
    %s105 = sphi 0, %s91
    %s109 = sphi 0, %s109
    %s111 = sphi 0, %s109
    %s112 = sphi 0, %s111
    %s126 = sphi 0, %s112
    %s130 = sphi 0, %s130
    %s132 = sphi 0, %s130
    %s133 = sphi 0, %s132
    %s147 = sphi 0, %s133
    %s153 = sphi 0, %s155
    %s156 = sphi 0, %s153
    %s157 = sphi 0, %s156
    %s173 = sphi 0, %s157
  $region4: #{rfda_forward.22} parent=0 // loop_header_branch
    %15 = sbr.rel (%p13) target = $region8
  $region5: #{rfda_forward.22} parent=0 // loop_body
    %s17 = ssub.s32 %s12, 1
    %s18 = ssub.s32 %s12, 2
    %s19 = sadd.s32 %s12, 1
    %s20 = ssub.s32 %s12, %s19
    %p21 = scmp.eq.s32.totalorder %s20, 0
    %s23 = sadd.s32 %s22, 1
    %s24 = scalar_select %p21, %s22, %s23
    %p27 = pneg %p21
    %p28 = scmp.eq.s32.totalorder %s12, 1
    %p29 = por %p27, %p28
    %p30 = scmp.ne.s32.totalorder %s22, %s25
    %p31 = scmp.eq.s32.totalorder %s12, 0
    %p32 = por %p30, %p31
    %p33 = scmp.ne.s32.totalorder %s22, %s25
    %p34 = scmp.eq.s32.totalorder %s17, 1
    %p35 = por %p33, %p34
    %p36 = scmp.ne.s32.totalorder %s25, %s26
    %p37 = scmp.eq.s32.totalorder %s17, 0
    %p38 = por %p36, %p37
    %p39 = scmp.ne.s32.totalorder %s25, %s26
    %p40 = scmp.eq.s32.totalorder %s18, 1
    %p41 = por %p39, %p40
    %p43 = scmp.ne.s32.totalorder %s26, %s42
    %p44 = scmp.eq.s32.totalorder %s18, 0
    %p45 = por %p43, %p44
    %s47 = sadd.s32 %s46, 1
    %p50 = scmp.eq.s32.totalorder %s12, 1
    %p51 = scmp.ne.s32.totalorder %s46, %s48
    %p52 = scmp.eq.s32.totalorder %s12, 0
    %p53 = por %p51, %p52
    %p54 = scmp.ne.s32.totalorder %s46, %s48
    %p55 = scmp.eq.s32.totalorder %s17, 1
    %p56 = por %p54, %p55
    %p57 = scmp.ne.s32.totalorder %s48, %s49
    %p58 = scmp.eq.s32.totalorder %s17, 0
    %p59 = por %p57, %p58
    %p60 = scmp.ne.s32.totalorder %s48, %s49
    %p61 = scmp.eq.s32.totalorder %s18, 1
    %p62 = por %p60, %p61
    %p64 = scmp.ne.s32.totalorder %s49, %s63
    %p65 = scmp.eq.s32.totalorder %s18, 0
    %p66 = por %p64, %p65
    %s68 = sadd.s32 %s67, 1
    %p71 = scmp.eq.s32.totalorder %s12, 1
    %p72 = scmp.ne.s32.totalorder %s67, %s69
    %p73 = scmp.eq.s32.totalorder %s12, 0
    %p74 = por %p72, %p73
    %p75 = scmp.ne.s32.totalorder %s67, %s69
    %p76 = scmp.eq.s32.totalorder %s17, 1
    %p77 = por %p75, %p76
    %p78 = scmp.ne.s32.totalorder %s69, %s70
    %p79 = scmp.eq.s32.totalorder %s17, 0
    %p80 = por %p78, %p79
    %p81 = scmp.ne.s32.totalorder %s69, %s70
    %p82 = scmp.eq.s32.totalorder %s18, 1
    %p83 = por %p81, %p82
    %p85 = scmp.ne.s32.totalorder %s70, %s84
    %p86 = scmp.eq.s32.totalorder %s18, 0
    %p87 = por %p85, %p86
    %s89 = sadd.s32 %s88, 1
    %p92 = scmp.eq.s32.totalorder %s12, 1
    %p93 = scmp.ne.s32.totalorder %s88, %s90
    %p94 = scmp.eq.s32.totalorder %s12, 0
    %p95 = por %p93, %p94
    %p96 = scmp.ne.s32.totalorder %s88, %s90
    %p97 = scmp.eq.s32.totalorder %s17, 1
    %p98 = por %p96, %p97
    %p99 = scmp.ne.s32.totalorder %s90, %s91
    %p100 = scmp.eq.s32.totalorder %s17, 0
    %p101 = por %p99, %p100
    %p102 = scmp.ne.s32.totalorder %s90, %s91
    %p103 = scmp.eq.s32.totalorder %s18, 1
    %p104 = por %p102, %p103
    %p106 = scmp.ne.s32.totalorder %s91, %s105
    %p107 = scmp.eq.s32.totalorder %s18, 0
    %p108 = por %p106, %p107
    %s110 = sadd.s32 %s109, 1
    %p113 = scmp.eq.s32.totalorder %s12, 1
    %p114 = scmp.ne.s32.totalorder %s109, %s111
    %p115 = scmp.eq.s32.totalorder %s12, 0
    %p116 = por %p114, %p115
    %p117 = scmp.ne.s32.totalorder %s109, %s111
    %p118 = scmp.eq.s32.totalorder %s17, 1
    %p119 = por %p117, %p118
    %p120 = scmp.ne.s32.totalorder %s111, %s112
    %p121 = scmp.eq.s32.totalorder %s17, 0
    %p122 = por %p120, %p121
    %p123 = scmp.ne.s32.totalorder %s111, %s112
    %p124 = scmp.eq.s32.totalorder %s18, 1
    %p125 = por %p123, %p124
    %p127 = scmp.ne.s32.totalorder %s112, %s126
    %p128 = scmp.eq.s32.totalorder %s18, 0
    %p129 = por %p127, %p128
    %s131 = sadd.s32 %s130, 1
    %p134 = scmp.eq.s32.totalorder %s12, 1
    %p135 = scmp.ne.s32.totalorder %s130, %s132
    %p136 = scmp.eq.s32.totalorder %s12, 0
    %p137 = por %p135, %p136
    %p138 = scmp.ne.s32.totalorder %s130, %s132
    %p139 = scmp.eq.s32.totalorder %s17, 1
    %p140 = por %p138, %p139
    %p141 = scmp.ne.s32.totalorder %s132, %s133
    %p142 = scmp.eq.s32.totalorder %s17, 0
    %p143 = por %p141, %p142
    %p144 = scmp.ne.s32.totalorder %s132, %s133
    %p145 = scmp.eq.s32.totalorder %s18, 1
    %p146 = por %p144, %p145
    %p148 = scmp.ne.s32.totalorder %s133, %s147
    %p149 = scmp.eq.s32.totalorder %s18, 0
    %p150 = por %p148, %p149
    %s151 = ssub.s32 %s12, %s19
    %p152 = scmp.eq.s32.totalorder %s151, 0
    %s154 = sadd.s32 %s153, 1
    %s155 = scalar_select %p152, %s153, %s154
    %p158 = pneg %p152
    %p159 = scmp.eq.s32.totalorder %s12, 1
    %p160 = por %p158, %p159
    %p161 = scmp.ne.s32.totalorder %s153, %s156
    %p162 = scmp.eq.s32.totalorder %s12, 0
    %p163 = por %p161, %p162
    %p164 = scmp.ne.s32.totalorder %s153, %s156
    %p165 = scmp.eq.s32.totalorder %s17, 1
    %p166 = por %p164, %p165
    %p167 = scmp.ne.s32.totalorder %s156, %s157
    %p168 = scmp.eq.s32.totalorder %s17, 0
    %p169 = por %p167, %p168
    %p170 = scmp.ne.s32.totalorder %s156, %s157
    %p171 = scmp.eq.s32.totalorder %s18, 1
    %p172 = por %p170, %p171
    %p174 = scmp.ne.s32.totalorder %s157, %s173
    %p175 = scmp.eq.s32.totalorder %s18, 0
    %p176 = por %p174, %p175
    %p177 = scmp.le.s32.totalorder 1, %s12
    %p178 = scmp.lt.s32.totalorder %s12, 3
    %p179 = pnand %p177, %p178
    %p180 = pneg %p179
    // Predicated region
    $region9: #{rfda_forward.22} parent=5 // pred_check
      _
    $region10: #{rfda_forward.22} parent=5 // pred_check_branch
      %182 = sbr.rel (%p179) target = $region12
    $region11: #{rfda_forward.22} parent=5 // pred_region
      %s183 = ssub.s32 %s12, 1
      // Predicated region
      $region13: #{rfda_forward.22} parent=11 // pred_check
        %p184 = pneg %p59
      $region14: #{rfda_forward.22} parent=11 // pred_check_branch
        %186 = sbr.rel (%p184) target = $region16
      $region15: #{rfda_forward.22} parent=11 // pred_region
        _
      $region16: #{rfda_forward.22} parent=11 // pred_fallthru
        _
      // Predicated region
      $region17: #{rfda_forward.22} parent=11 // pred_check
        %p187 = pneg %p80
      $region18: #{rfda_forward.22} parent=11 // pred_check_branch
        %189 = sbr.rel (%p187) target = $region20
      $region19: #{rfda_forward.22} parent=11 // pred_region
        _
      $region20: #{rfda_forward.22} parent=11 // pred_fallthru
        _
      // Predicated region
      $region21: #{rfda_forward.22} parent=11 // pred_check
        %p190 = pneg %p101
      $region22: #{rfda_forward.22} parent=11 // pred_check_branch
        %192 = sbr.rel (%p190) target = $region24
      $region23: #{rfda_forward.22} parent=11 // pred_region
        _
      $region24: #{rfda_forward.22} parent=11 // pred_fallthru
        _
      // Predicated region
      $region25: #{rfda_forward.22} parent=11 // pred_check
        %p193 = pneg %p122
      $region26: #{rfda_forward.22} parent=11 // pred_check_branch
        %195 = sbr.rel (%p193) target = $region28
      $region27: #{rfda_forward.22} parent=11 // pred_region
        _
      $region28: #{rfda_forward.22} parent=11 // pred_fallthru
        _
      // Predicated region
      $region29: #{rfda_forward.22} parent=11 // pred_check
        %p196 = pneg %p143
      $region30: #{rfda_forward.22} parent=11 // pred_check_branch
        %198 = sbr.rel (%p196) target = $region32
      $region31: #{rfda_forward.22} parent=11 // pred_region
        _
      $region32: #{rfda_forward.22} parent=11 // pred_fallthru
        _
    $region12: #{rfda_forward.22} parent=5 // pred_fallthru
      _
    %p199 = scmp.lt.s32.totalorder %s12, 2
    // Predicated region
    $region33: #{rfda_forward.22} parent=5 // pred_check
      %p200 = pneg %p199
    $region34: #{rfda_forward.22} parent=5 // pred_check_branch
      %202 = sbr.rel (%p200) target = $region36
    $region35: #{rfda_forward.22} parent=5 // pred_region
      // Predicated region
      $region37: #{rfda_forward.22} parent=35 // pred_check
        %p203 = pneg %p32
      $region38: #{rfda_forward.22} parent=35 // pred_check_branch
        %205 = sbr.rel (%p203) target = $region40
      $region39: #{rfda_forward.22} parent=35 // pred_region
        %p206 = scmp.lt.s32.totalorder %s12, 1
        %s207 = scalar_select %p206, %s12, 1
        %s208 = smul.addr %s207, 4
        %s209 = scalar_lea.vmem %s0, %s208
      $region40: #{rfda_forward.22} parent=35 // pred_fallthru
        _
    $region36: #{rfda_forward.22} parent=5 // pred_fallthru
      _
    %p210 = scmp.le.s32.totalorder 1, %s12
    %p211 = scmp.lt.s32.totalorder %s12, 3
    %p212 = pnand %p210, %p211
    %p213 = pneg %p212
    // Predicated region
    $region41: #{rfda_forward.22} parent=5 // pred_check
      _
    $region42: #{rfda_forward.22} parent=5 // pred_check_branch
      %215 = sbr.rel (%p212) target = $region44
    $region43: #{rfda_forward.22} parent=5 // pred_region
      %s216 = ssub.s32 %s12, 1
      %p217 = scmp.lt.s32.totalorder %s17, 1
      %s218 = scalar_select %p217, %s17, 1
      %s219 = smul.addr %s218, 4
      %s220 = scalar_lea.vmem %s0, %s219
      %p221 = pneg %p38
      %p222 = pneg %p35
      %p223 = pneg %p59
      %p224 = pneg %p56
      %p225 = pneg %p80
      %p226 = pneg %p77
      %p227 = pneg %p101
      %p228 = pneg %p98
      %p229 = pneg %p122
      %p230 = pneg %p119
      %p231 = pneg %p143
      %p232 = pneg %p140
      %p233 = pneg %p169
      %p234 = pneg %p166
      %p235 = scmp.lt.s32.totalorder %s17, 1
      %s236 = scalar_select %p235, %s17, 1
      %s237 = smul.addr %s236, 4
      %s238 = smul.addr %s237, 4
      %s239 = scalar_lea.vmem %s6, %s238
      %p240 = scmp.lt.s32.totalorder %s17, 1
      %s241 = scalar_select %p240, %s17, 1
      %s242 = smul.addr %s241, 4
      %s243 = scalar_lea.vmem %s0, %s242
      %p244 = scmp.lt.s32.totalorder %s17, 1
      %s245 = scalar_select %p244, %s17, 1
      %s246 = smul.addr %s245, 4
      %s247 = smul.addr %s246, 4
      %s248 = scalar_lea.vmem %s6, %s247
      %v250 = vld [vmem:[%s1] sm:$0x1]
      %v251 = vld [vmem:[%s243] sm:$0xf]
      %v252 = vld [vmem:[%s2] sm:$0xf]
      %v253 = vld [vmem:[%s3] sm:$0xff]
      %vm254 = vcmask 293888
      %v257 = vsel %vm254, %v251, 0
      %v259 = vrot.slane %v257, 4
      %260 = vrot.lane.b32.xlu0 %v259, 127
      %v261 = vpop.permute.xlu0 %260
      %262 = vrot.lane.b32.xlu0 %v257, 126
      %v263 = vpop.permute.xlu0 %262
      %264 = vrot.lane.b32.xlu0 %v259, 122
      %v265 = vpop.permute.xlu0 %264
      %266 = vrot.lane.b32.xlu0 %v257, 121
      %v267 = vpop.permute.xlu0 %266
      %268 = vrot.lane.b32.xlu0 %v259, 120
      %v269 = vpop.permute.xlu0 %268
      %270 = vrot.lane.b32.xlu0 %v257, 116
      %v271 = vpop.permute.xlu0 %270
      %272 = vrot.lane.b32.xlu0 %v259, 115
      %v273 = vpop.permute.xlu0 %272
      %274 = vrot.lane.b32.xlu0 %v257, 114
      %v275 = vpop.permute.xlu0 %274
      %vm276 = vcmask 1043456
      %v278 = vsel %vm276, %v257, %v261
      %v282 = vsel %vm276, %v263, %v265
      %v286 = vsel %vm276, %v267, %v269
      %v290 = vsel %vm276, %v271, %v273
      %293 = vset.pattern.permute.xlu0 0
      %294 = vperm.xlu0 %293, %v253
      %v295 = vpop.permute.xlu0 %294
      %vm297 = vcmask 588800
      %v299 = vsel %vm297, %v252, 0
      %v302 = vsel %vm276, %v275, 0
      %304 = vmatpush.bf16.msra.mxu0 0
      %305 = vmatpush.bf16.msra.mxu0 0
      %306 = vmatpush.bf16.msra.mxu0 0
      %307 = vmatpush.bf16.msra.mxu0 %v302
      %308 = vmatpush.bf16.msra.mxu0 %v290
      %309 = vmatpush.bf16.msra.mxu0 %v286
      %310 = vmatpush.bf16.msra.mxu0 %v282
      %311 = vmatpush.bf16.msra.mxu0 %v278
      %312 = vmatmul.bf16.gmra.mxu0 %v299
      %v313 = vpop.f32.mrf.mxu0
      %v314 = vadd.f32 %v295, %v313
      %v315 = vpop.f32.mrf.mxu0
      %316 = vdwg.mxu0
      %v317 = vmax.f32 %v314, 0.0
      %v318 = vunpack.c.l.bf16 %v250
      %v319 = vperm.slane %v318, 0
      %v320 = vmul.f32 %v317, %v319
      %v321 = vpack.c.bf16 %v320, %v320
      %v323 = vunpack.c.l.b16 %v321
      %v324 = vpack.c.b16 %v323, %v323
      %325 = vrot.lane.b32.xlu0 %v324, 7
      %v326 = vpop.permute.xlu0 %325
      %vm327 = vcmask 56320
      %v329 = vsel %vm327, 0, %v326
      %vm330 = vcmask 252928
      %v331 = vsel %vm330, %v329, 0
      %v332 = vld [vmem:[%s4] sm:$0xf]
      %v333 = vld [vmem:[%s4 + $0x4] sm:$0xf]
      %v334 = vld [vmem:[%s4 + $0x8] sm:$0xf]
      %v335 = vld [vmem:[%s4 + $0xc] sm:$0xf]
      %v336 = vld [vmem:[%s5] sm:$0xff]
      %v337 = vld [vmem:[%s5 + $0x8] sm:$0xff]
      %v338 = vld [vmem:[%s5 + $0x10] sm:$0xff]
      %v339 = vld [vmem:[%s5 + $0x18] sm:$0xff]
      %v340 = vsel %vm254, %v331, 0
      %v342 = vrot.slane %v340, 4
      %343 = vrot.lane.b32.xlu0 %v342, 127
      %v344 = vpop.permute.xlu0 %343
      %345 = vrot.lane.b32.xlu0 %v340, 126
      %v346 = vpop.permute.xlu0 %345
      %347 = vrot.lane.b32.xlu0 %v342, 122
      %v348 = vpop.permute.xlu0 %347
      %349 = vrot.lane.b32.xlu0 %v340, 121
      %v350 = vpop.permute.xlu0 %349
      %351 = vrot.lane.b32.xlu0 %v342, 120
      %v352 = vpop.permute.xlu0 %351
      %353 = vrot.lane.b32.xlu0 %v340, 116
      %v354 = vpop.permute.xlu0 %353
      %355 = vrot.lane.b32.xlu0 %v342, 115
      %v356 = vpop.permute.xlu0 %355
      %357 = vrot.lane.b32.xlu0 %v340, 114
      %v358 = vpop.permute.xlu0 %357
      %v360 = vsel %vm276, %v340, %v344
      %v364 = vsel %vm276, %v346, %v348
      %v368 = vsel %vm276, %v350, %v352
      %v372 = vsel %vm276, %v354, %v356
      %375 = vset.pattern.permute.xlu0 0
      %376 = vperm.xlu0 %375, %v336
      %v377 = vpop.permute.xlu0 %376
      %380 = vset.pattern.permute.xlu0 0
      %381 = vperm.xlu0 %380, %v337
      %v382 = vpop.permute.xlu0 %381
      %385 = vset.pattern.permute.xlu0 0
      %386 = vperm.xlu0 %385, %v338
      %v387 = vpop.permute.xlu0 %386
      %390 = vset.pattern.permute.xlu0 0
      %391 = vperm.xlu0 %390, %v339
      %v392 = vpop.permute.xlu0 %391
      %v398 = vunpack.c.l.b16 %v332
      %v399 = vunpack.c.l.b16 %v333
      %v400 = vunpack.c.l.b16 %v334
      %v401 = vunpack.c.l.b16 %v335
      %v402 = vpack.c.b16 %v399, %v398
      %v403 = vpack.c.b16 %v401, %v400
      %v405 = vsel %vm297, %v402, 0
      %v408 = vsel %vm297, %v403, 0
      %v411 = vsel %vm276, %v358, 0
      %413 = vmatpush.bf16.msra.mxu0 0
      %414 = vmatpush.bf16.msra.mxu0 0
      %415 = vmatpush.bf16.msra.mxu0 0
      %416 = vmatpush.bf16.msra.mxu0 %v411
      %417 = vmatpush.bf16.msra.mxu0 %v372
      %418 = vmatpush.bf16.msra.mxu0 %v368
      %419 = vmatpush.bf16.msra.mxu0 %v364
      %420 = vmatpush.bf16.msra.mxu0 %v360
      %421 = vmatmul.bf16.gmra.mxu0 %v405
      %v422 = vpop.f32.mrf.mxu0
      %v423 = vadd.f32 %v377, %v422
      %v424 = vpop.f32.mrf.mxu0
      %v425 = vadd.f32 %v382, %v424
      %426 = vmatmul.bf16.gmra.mxu0 %v408
      %v427 = vpop.f32.mrf.mxu0
      %v428 = vadd.f32 %v387, %v427
      %v429 = vpop.f32.mrf.mxu0
      %v430 = vadd.f32 %v392, %v429
      %431 = vdwg.mxu0
      %v432 = vmax.f32 %v423, 0.0
      %v433 = vmax.f32 %v425, 0.0
      %v434 = vmax.f32 %v428, 0.0
      %v435 = vmax.f32 %v430, 0.0
      %v436 = vpack.c.bf16 %v432, %v432
      %v437 = vpack.c.bf16 %v433, %v433
      %v438 = vpack.c.bf16 %v434, %v434
      %v439 = vpack.c.bf16 %v435, %v435
      %vm440 = vcmask 191488
      %441 = vst.msk [vmem:[%s248] sm:$0xf] %vm440, %v436
      %442 = vst.msk [vmem:[%s248 + $0x4] sm:$0xf] %vm440, %v437
      %443 = vst.msk [vmem:[%s248 + $0x8] sm:$0xf] %vm440, %v438
      %444 = vst.msk [vmem:[%s248 + $0xc] sm:$0xf] %vm440, %v439
      %p445 = scmp.lt.s32.totalorder %s17, 1
      %s446 = scalar_select %p445, %s17, 1
      %s447 = smul.addr %s446, 4
      %s448 = smul.addr %s447, 4
      %s449 = scalar_lea.vmem %s6, %s448
      // Predicated region
      $region45: #{rfda_forward.22} parent=43 // pred_check
        %p450 = pneg %p166
      $region46: #{rfda_forward.22} parent=43 // pred_check_branch
        %452 = sbr.rel (%p450) target = $region48
      $region47: #{rfda_forward.22} parent=43 // pred_region
        _
      $region48: #{rfda_forward.22} parent=43 // pred_fallthru
        _
    $region44: #{rfda_forward.22} parent=5 // pred_fallthru
      _
    %p453 = scmp.le.s32.totalorder 2, %s12
    // Predicated region
    $region49: #{rfda_forward.22} parent=5 // pred_check
      %p454 = pneg %p453
    $region50: #{rfda_forward.22} parent=5 // pred_check_branch
      %456 = sbr.rel (%p454) target = $region52
    $region51: #{rfda_forward.22} parent=5 // pred_region
      %s457 = ssub.s32 %s12, 2
      // Predicated region
      $region53: #{rfda_forward.22} parent=51 // pred_check
        %p458 = pneg %p172
      $region54: #{rfda_forward.22} parent=51 // pred_check_branch
        %460 = sbr.rel (%p458) target = $region56
      $region55: #{rfda_forward.22} parent=51 // pred_region
        %p461 = scmp.lt.s32.totalorder %s18, 1
        %s462 = scalar_select %p461, %s18, 1
        %s463 = smul.addr %s462, 4
        %s464 = smul.addr %s463, 4
        %s465 = scalar_lea.vmem %s6, %s464
      $region56: #{rfda_forward.22} parent=51 // pred_fallthru
        _
    $region52: #{rfda_forward.22} parent=5 // pred_fallthru
      _
  $region6: #{rfda_forward.22} parent=0 // loop_footer
    %s16 = sadd.s32 1, %s12
  $region7: #{rfda_forward.22} parent=0 // loop_footer_branch
    %11 = sbr.rel target = $region3
  $region8: #{rfda_forward.22} parent=0 // loop_exit
    _

// kernel: rfda_forward.23
$region0: #{rfda_forward.23}
  #allocation0 [shape = 'u32[]', space=smem, size = 0x4, offset = 0x4, fixed_abs, tag = 'smem constant byte address 0x4 - core index']
  #allocation1 [shape = 'u32[72,128]{1,0:T(1,128)}', space=vmem, size = 0x9000, scoped, tag = 'internal scratch']
  %s0 = inlined_call_operand.vmem [shape: bf16[2,16,100], index: 0, kind: input, shape index: {}]
  %s1 = inlined_call_operand.vmem [shape: bf16[1,80], index: 1, kind: input, shape index: {}]
  %s2 = inlined_call_operand.vmem [shape: bf16[8,144], index: 2, kind: input, shape index: {}]
  %s3 = inlined_call_operand.vmem [shape: f32[8,1], index: 3, kind: input, shape index: {}]
  %s4 = inlined_call_operand.vmem [shape: bf16[32,72], index: 4, kind: input, shape index: {}]
  %s5 = inlined_call_operand.vmem [shape: f32[32,1], index: 5, kind: input, shape index: {}]
  %s6 = inlined_call_operand.vmem [shape: bf16[2,32,80], index: 6, kind: output, shape index: {}]
  %s7 = sld [smem:[#allocation0]]
  $region57: #{rfda_forward.23} parent=0
    _
  %s9 = ssub.s32 1, %s7
  %s10 = scalar_select 0, %s9, %s7
  loop: start=0, step=1, limit=4
  $region2: #{rfda_forward.23} parent=0 // loop_pre_header
    _
  $region3: #{rfda_forward.23} parent=0 // loop_header
    %s12 = sphi 0, %s16
    %p13 = scmp.ge.s32.totalorder %s12, 4
    %s22 = sphi 0, %s24
    %s25 = sphi 0, %s22
    %s26 = sphi 0, %s25
    %s42 = sphi 0, %s26
    %s46 = sphi 0, %s46
    %s48 = sphi 0, %s46
    %s49 = sphi 0, %s48
    %s63 = sphi 0, %s49
    %s67 = sphi 0, %s67
    %s69 = sphi 0, %s67
    %s70 = sphi 0, %s69
    %s84 = sphi 0, %s70
    %s88 = sphi 0, %s88
    %s90 = sphi 0, %s88
    %s91 = sphi 0, %s90
    %s105 = sphi 0, %s91
    %s109 = sphi 0, %s109
    %s111 = sphi 0, %s109
    %s112 = sphi 0, %s111
    %s126 = sphi 0, %s112
    %s130 = sphi 0, %s130
    %s132 = sphi 0, %s130
    %s133 = sphi 0, %s132
    %s147 = sphi 0, %s133
    %s153 = sphi 0, %s155
    %s156 = sphi 0, %s153
    %s157 = sphi 0, %s156
    %s173 = sphi 0, %s157
  $region4: #{rfda_forward.23} parent=0 // loop_header_branch
    %15 = sbr.rel (%p13) target = $region8
  $region5: #{rfda_forward.23} parent=0 // loop_body
    %s17 = ssub.s32 %s12, 1
    %s18 = ssub.s32 %s12, 2
    %s19 = sadd.s32 %s12, 1
    %s20 = ssub.s32 %s12, %s19
    %p21 = scmp.eq.s32.totalorder %s20, 0
    %s23 = sadd.s32 %s22, 1
    %s24 = scalar_select %p21, %s22, %s23
    %p27 = pneg %p21
    %p28 = scmp.eq.s32.totalorder %s12, 1
    %p29 = por %p27, %p28
    %p30 = scmp.ne.s32.totalorder %s22, %s25
    %p31 = scmp.eq.s32.totalorder %s12, 0
    %p32 = por %p30, %p31
    %p33 = scmp.ne.s32.totalorder %s22, %s25
    %p34 = scmp.eq.s32.totalorder %s17, 1
    %p35 = por %p33, %p34
    %p36 = scmp.ne.s32.totalorder %s25, %s26
    %p37 = scmp.eq.s32.totalorder %s17, 0
    %p38 = por %p36, %p37
    %p39 = scmp.ne.s32.totalorder %s25, %s26
    %p40 = scmp.eq.s32.totalorder %s18, 1
    %p41 = por %p39, %p40
    %p43 = scmp.ne.s32.totalorder %s26, %s42
    %p44 = scmp.eq.s32.totalorder %s18, 0
    %p45 = por %p43, %p44
    %s47 = sadd.s32 %s46, 1
    %p50 = scmp.eq.s32.totalorder %s12, 1
    %p51 = scmp.ne.s32.totalorder %s46, %s48
    %p52 = scmp.eq.s32.totalorder %s12, 0
    %p53 = por %p51, %p52
    %p54 = scmp.ne.s32.totalorder %s46, %s48
    %p55 = scmp.eq.s32.totalorder %s17, 1
    %p56 = por %p54, %p55
    %p57 = scmp.ne.s32.totalorder %s48, %s49
    %p58 = scmp.eq.s32.totalorder %s17, 0
    %p59 = por %p57, %p58
    %p60 = scmp.ne.s32.totalorder %s48, %s49
    %p61 = scmp.eq.s32.totalorder %s18, 1
    %p62 = por %p60, %p61
    %p64 = scmp.ne.s32.totalorder %s49, %s63
    %p65 = scmp.eq.s32.totalorder %s18, 0
    %p66 = por %p64, %p65
    %s68 = sadd.s32 %s67, 1
    %p71 = scmp.eq.s32.totalorder %s12, 1
    %p72 = scmp.ne.s32.totalorder %s67, %s69
    %p73 = scmp.eq.s32.totalorder %s12, 0
    %p74 = por %p72, %p73
    %p75 = scmp.ne.s32.totalorder %s67, %s69
    %p76 = scmp.eq.s32.totalorder %s17, 1
    %p77 = por %p75, %p76
    %p78 = scmp.ne.s32.totalorder %s69, %s70
    %p79 = scmp.eq.s32.totalorder %s17, 0
    %p80 = por %p78, %p79
    %p81 = scmp.ne.s32.totalorder %s69, %s70
    %p82 = scmp.eq.s32.totalorder %s18, 1
    %p83 = por %p81, %p82
    %p85 = scmp.ne.s32.totalorder %s70, %s84
    %p86 = scmp.eq.s32.totalorder %s18, 0
    %p87 = por %p85, %p86
    %s89 = sadd.s32 %s88, 1
    %p92 = scmp.eq.s32.totalorder %s12, 1
    %p93 = scmp.ne.s32.totalorder %s88, %s90
    %p94 = scmp.eq.s32.totalorder %s12, 0
    %p95 = por %p93, %p94
    %p96 = scmp.ne.s32.totalorder %s88, %s90
    %p97 = scmp.eq.s32.totalorder %s17, 1
    %p98 = por %p96, %p97
    %p99 = scmp.ne.s32.totalorder %s90, %s91
    %p100 = scmp.eq.s32.totalorder %s17, 0
    %p101 = por %p99, %p100
    %p102 = scmp.ne.s32.totalorder %s90, %s91
    %p103 = scmp.eq.s32.totalorder %s18, 1
    %p104 = por %p102, %p103
    %p106 = scmp.ne.s32.totalorder %s91, %s105
    %p107 = scmp.eq.s32.totalorder %s18, 0
    %p108 = por %p106, %p107
    %s110 = sadd.s32 %s109, 1
    %p113 = scmp.eq.s32.totalorder %s12, 1
    %p114 = scmp.ne.s32.totalorder %s109, %s111
    %p115 = scmp.eq.s32.totalorder %s12, 0
    %p116 = por %p114, %p115
    %p117 = scmp.ne.s32.totalorder %s109, %s111
    %p118 = scmp.eq.s32.totalorder %s17, 1
    %p119 = por %p117, %p118
    %p120 = scmp.ne.s32.totalorder %s111, %s112
    %p121 = scmp.eq.s32.totalorder %s17, 0
    %p122 = por %p120, %p121
    %p123 = scmp.ne.s32.totalorder %s111, %s112
    %p124 = scmp.eq.s32.totalorder %s18, 1
    %p125 = por %p123, %p124
    %p127 = scmp.ne.s32.totalorder %s112, %s126
    %p128 = scmp.eq.s32.totalorder %s18, 0
    %p129 = por %p127, %p128
    %s131 = sadd.s32 %s130, 1
    %p134 = scmp.eq.s32.totalorder %s12, 1
    %p135 = scmp.ne.s32.totalorder %s130, %s132
    %p136 = scmp.eq.s32.totalorder %s12, 0
    %p137 = por %p135, %p136
    %p138 = scmp.ne.s32.totalorder %s130, %s132
    %p139 = scmp.eq.s32.totalorder %s17, 1
    %p140 = por %p138, %p139
    %p141 = scmp.ne.s32.totalorder %s132, %s133
    %p142 = scmp.eq.s32.totalorder %s17, 0
    %p143 = por %p141, %p142
    %p144 = scmp.ne.s32.totalorder %s132, %s133
    %p145 = scmp.eq.s32.totalorder %s18, 1
    %p146 = por %p144, %p145
    %p148 = scmp.ne.s32.totalorder %s133, %s147
    %p149 = scmp.eq.s32.totalorder %s18, 0
    %p150 = por %p148, %p149
    %s151 = ssub.s32 %s12, %s19
    %p152 = scmp.eq.s32.totalorder %s151, 0
    %s154 = sadd.s32 %s153, 1
    %s155 = scalar_select %p152, %s153, %s154
    %p158 = pneg %p152
    %p159 = scmp.eq.s32.totalorder %s12, 1
    %p160 = por %p158, %p159
    %p161 = scmp.ne.s32.totalorder %s153, %s156
    %p162 = scmp.eq.s32.totalorder %s12, 0
    %p163 = por %p161, %p162
    %p164 = scmp.ne.s32.totalorder %s153, %s156
    %p165 = scmp.eq.s32.totalorder %s17, 1
    %p166 = por %p164, %p165
    %p167 = scmp.ne.s32.totalorder %s156, %s157
    %p168 = scmp.eq.s32.totalorder %s17, 0
    %p169 = por %p167, %p168
    %p170 = scmp.ne.s32.totalorder %s156, %s157
    %p171 = scmp.eq.s32.totalorder %s18, 1
    %p172 = por %p170, %p171
    %p174 = scmp.ne.s32.totalorder %s157, %s173
    %p175 = scmp.eq.s32.totalorder %s18, 0
    %p176 = por %p174, %p175
    %p177 = scmp.le.s32.totalorder 1, %s12
    %p178 = scmp.lt.s32.totalorder %s12, 3
    %p179 = pnand %p177, %p178
    %p180 = pneg %p179
    // Predicated region
    $region9: #{rfda_forward.23} parent=5 // pred_check
      _
    $region10: #{rfda_forward.23} parent=5 // pred_check_branch
      %182 = sbr.rel (%p179) target = $region12
    $region11: #{rfda_forward.23} parent=5 // pred_region
      %s183 = ssub.s32 %s12, 1
      // Predicated region
      $region13: #{rfda_forward.23} parent=11 // pred_check
        %p184 = pneg %p59
      $region14: #{rfda_forward.23} parent=11 // pred_check_branch
        %186 = sbr.rel (%p184) target = $region16
      $region15: #{rfda_forward.23} parent=11 // pred_region
        _
      $region16: #{rfda_forward.23} parent=11 // pred_fallthru
        _
      // Predicated region
      $region17: #{rfda_forward.23} parent=11 // pred_check
        %p187 = pneg %p80
      $region18: #{rfda_forward.23} parent=11 // pred_check_branch
        %189 = sbr.rel (%p187) target = $region20
      $region19: #{rfda_forward.23} parent=11 // pred_region
        _
      $region20: #{rfda_forward.23} parent=11 // pred_fallthru
        _
      // Predicated region
      $region21: #{rfda_forward.23} parent=11 // pred_check
        %p190 = pneg %p101
      $region22: #{rfda_forward.23} parent=11 // pred_check_branch
        %192 = sbr.rel (%p190) target = $region24
      $region23: #{rfda_forward.23} parent=11 // pred_region
        _
      $region24: #{rfda_forward.23} parent=11 // pred_fallthru
        _
      // Predicated region
      $region25: #{rfda_forward.23} parent=11 // pred_check
        %p193 = pneg %p122
      $region26: #{rfda_forward.23} parent=11 // pred_check_branch
        %195 = sbr.rel (%p193) target = $region28
      $region27: #{rfda_forward.23} parent=11 // pred_region
        _
      $region28: #{rfda_forward.23} parent=11 // pred_fallthru
        _
      // Predicated region
      $region29: #{rfda_forward.23} parent=11 // pred_check
        %p196 = pneg %p143
      $region30: #{rfda_forward.23} parent=11 // pred_check_branch
        %198 = sbr.rel (%p196) target = $region32
      $region31: #{rfda_forward.23} parent=11 // pred_region
        _
      $region32: #{rfda_forward.23} parent=11 // pred_fallthru
        _
    $region12: #{rfda_forward.23} parent=5 // pred_fallthru
      _
    %p199 = scmp.lt.s32.totalorder %s12, 2
    // Predicated region
    $region33: #{rfda_forward.23} parent=5 // pred_check
      %p200 = pneg %p199
    $region34: #{rfda_forward.23} parent=5 // pred_check_branch
      %202 = sbr.rel (%p200) target = $region36
    $region35: #{rfda_forward.23} parent=5 // pred_region
      // Predicated region
      $region37: #{rfda_forward.23} parent=35 // pred_check
        %p203 = pneg %p32
      $region38: #{rfda_forward.23} parent=35 // pred_check_branch
        %205 = sbr.rel (%p203) target = $region40
      $region39: #{rfda_forward.23} parent=35 // pred_region
        %p206 = scmp.lt.s32.totalorder %s12, 1
        %s207 = scalar_select %p206, %s12, 1
        %s208 = smul.addr %s207, 2
        %s209 = smul.addr %s208, 4
        %s210 = scalar_lea.vmem %s0, %s209
      $region40: #{rfda_forward.23} parent=35 // pred_fallthru
        _
    $region36: #{rfda_forward.23} parent=5 // pred_fallthru
      _
    %p211 = scmp.le.s32.totalorder 1, %s12
    %p212 = scmp.lt.s32.totalorder %s12, 3
    %p213 = pnand %p211, %p212
    %p214 = pneg %p213
    // Predicated region
    $region41: #{rfda_forward.23} parent=5 // pred_check
      _
    $region42: #{rfda_forward.23} parent=5 // pred_check_branch
      %216 = sbr.rel (%p213) target = $region44
    $region43: #{rfda_forward.23} parent=5 // pred_region
      %s217 = ssub.s32 %s12, 1
      %p218 = scmp.lt.s32.totalorder %s17, 1
      %s219 = scalar_select %p218, %s17, 1
      %s220 = smul.addr %s219, 2
      %s221 = smul.addr %s220, 4
      %s222 = scalar_lea.vmem %s0, %s221
      %p223 = pneg %p38
      %p224 = pneg %p35
      %p225 = pneg %p59
      %p226 = pneg %p56
      %p227 = pneg %p80
      %p228 = pneg %p77
      %p229 = pneg %p101
      %p230 = pneg %p98
      %p231 = pneg %p122
      %p232 = pneg %p119
      %p233 = pneg %p143
      %p234 = pneg %p140
      %p235 = pneg %p169
      %p236 = pneg %p166
      %p237 = scmp.lt.s32.totalorder %s17, 1
      %s238 = scalar_select %p237, %s17, 1
      %s239 = smul.addr %s238, 4
      %s240 = smul.addr %s239, 4
      %s241 = scalar_lea.vmem %s6, %s240
      %p242 = scmp.lt.s32.totalorder %s17, 1
      %s243 = scalar_select %p242, %s17, 1
      %s244 = smul.addr %s243, 2
      %s245 = smul.addr %s244, 4
      %s246 = scalar_lea.vmem %s0, %s245
      %p247 = scmp.lt.s32.totalorder %s17, 1
      %s248 = scalar_select %p247, %s17, 1
      %s249 = smul.addr %s248, 4
      %s250 = smul.addr %s249, 4
      %s251 = scalar_lea.vmem %s6, %s250
      %v253 = vld [vmem:[%s1] sm:$0x1]
      %v254 = vld [vmem:[%s246] sm:$0xf]
      %v255 = vld [vmem:[%s246 + $0x4] sm:$0xf]
      %v256 = vld [vmem:[%s2] sm:$0xff]
      %v257 = vld [vmem:[%s3] sm:$0xff]
      %v260 = vunpack.c.l.b16 %v254
      %v261 = vunpack.c.l.b16 %v255
      %v262 = vpack.c.b16 %v261, %v260
      %vm263 = vcmask 818176
      %v266 = vsel %vm263, %v262, 0
      %269 = vrot.lane.b32.xlu0 %v266, 127
      %v270 = vpop.permute.xlu0 %269
      %272 = vrot.lane.b32.xlu0 %v266, 126
      %v273 = vpop.permute.xlu0 %272
      %275 = vrot.lane.b32.xlu0 %v266, 118
      %v276 = vpop.permute.xlu0 %275
      %278 = vrot.lane.b32.xlu0 %v266, 117
      %v279 = vpop.permute.xlu0 %278
      %280 = vrot.lane.b32.xlu0 %v266, 116
      %v281 = vpop.permute.xlu0 %280
      %282 = vrot.lane.b32.xlu0 %v266, 108
      %v283 = vpop.permute.xlu0 %282
      %284 = vrot.lane.b32.xlu0 %v266, 107
      %v285 = vpop.permute.xlu0 %284
      %286 = vrot.lane.b32.xlu0 %v266, 106
      %v287 = vpop.permute.xlu0 %286
      %v289 = vunpack.c.l.b16 %v256
      %v290 = vunpack.c.h.b16 %v256
      %v291 = vpack.c.b16 %v289, %v289
      %v292 = vpack.c.b16 %v290, %v290
      %293 = vrot.lane.b32.xlu0 %v291, 56
      %v294 = vpop.permute.xlu0 %293
      %295 = vrot.lane.b32.xlu0 %v292, 56
      %v296 = vpop.permute.xlu0 %295
      %vm297 = vcmask 457728
      %v298 = vsel %vm297, %v294, %v296
      %vm299 = vcmask 1043456
      %v300 = vrot.slane %v279, 4
      %v301 = vrot.slane %v281, 4
      %v302 = vsel %vm299, %v300, %v301
      %v303 = vrot.slane %v283, 4
      %v304 = vsel %vm299, %v301, %v303
      %v305 = vrot.slane %v285, 4
      %v306 = vsel %vm299, %v303, %v305
      %v307 = vrot.slane %v287, 4
      %v308 = vsel %vm299, %v305, %v307
      %vm313 = vcmask 588800
      %v315 = vsel %vm313, %v298, 0
      %vm317 = vcmask 1043456
      %v319 = vsel %vm317, %v307, 0
      %321 = vmatpush.bf16.msra.mxu0 0
      %322 = vmatpush.bf16.msra.mxu0 0
      %323 = vmatpush.bf16.msra.mxu0 0
      %324 = vmatpush.bf16.msra.mxu0 %v319
      %325 = vmatpush.bf16.msra.mxu0 %v308
      %326 = vmatpush.bf16.msra.mxu0 %v306
      %327 = vmatpush.bf16.msra.mxu0 %v304
      %328 = vmatpush.bf16.msra.mxu0 %v302
      %329 = vmatmul.bf16.gmra.mxu0 %v315
      %v330 = vpop.f32.mrf.mxu0
      %v331 = vadd.f32 0.0, %v330
      %v332 = vpop.f32.mrf.mxu0
      %333 = vdwg.mxu0
      %v335 = vsel %vm313, %v256, 0
      %v338 = vsel %vm317, %v279, 0
      %340 = vmatpush.bf16.msra.mxu0 0
      %341 = vmatpush.bf16.msra.mxu0 0
      %342 = vmatpush.bf16.msra.mxu0 0
      %343 = vmatpush.bf16.msra.mxu0 %v338
      %344 = vmatpush.bf16.msra.mxu0 %v276
      %345 = vmatpush.bf16.msra.mxu0 %v273
      %346 = vmatpush.bf16.msra.mxu0 %v270
      %347 = vmatpush.bf16.msra.mxu0 %v266
      %348 = vmatmul.bf16.gmra.mxu0 %v335
      %v349 = vpop.f32.mrf.mxu0
      %v350 = vadd.f32 %v331, %v349
      %v351 = vpop.f32.mrf.mxu0
      %352 = vdwg.mxu0
      %354 = vset.pattern.permute.xlu0 0
      %355 = vperm.xlu0 %354, %v257
      %v356 = vpop.permute.xlu0 %355
      %v358 = vadd.f32 %v350, %v356
      %v359 = vmax.f32 %v358, 0.0
      %v360 = vunpack.c.l.bf16 %v253
      %v361 = vperm.slane %v360, 0
      %v362 = vmul.f32 %v359, %v361
      %v363 = vpack.c.bf16 %v362, %v362
      %v365 = vunpack.c.l.b16 %v363
      %v366 = vpack.c.b16 %v365, %v365
      %367 = vrot.lane.b32.xlu0 %v366, 11
      %v368 = vpop.permute.xlu0 %367
      %vm369 = vcmask 89088
      %v371 = vsel %vm369, 0, %v368
      %vm372 = vcmask 744448
      %v373 = vsel %vm372, %v371, 0
      %v374 = vld [vmem:[%s4] sm:$0xf]
      %v375 = vld [vmem:[%s4 + $0x4] sm:$0xf]
      %v376 = vld [vmem:[%s4 + $0x8] sm:$0xf]
      %v377 = vld [vmem:[%s4 + $0xc] sm:$0xf]
      %v378 = vld [vmem:[%s5] sm:$0xff]
      %v379 = vld [vmem:[%s5 + $0x8] sm:$0xff]
      %v380 = vld [vmem:[%s5 + $0x10] sm:$0xff]
      %v381 = vld [vmem:[%s5 + $0x18] sm:$0xff]
      %v382 = vsel %vm263, %v373, 0
      %v384 = vrot.slane %v382, 4
      %385 = vrot.lane.b32.xlu0 %v384, 127
      %v386 = vpop.permute.xlu0 %385
      %387 = vrot.lane.b32.xlu0 %v382, 126
      %v388 = vpop.permute.xlu0 %387
      %389 = vrot.lane.b32.xlu0 %v384, 118
      %v390 = vpop.permute.xlu0 %389
      %391 = vrot.lane.b32.xlu0 %v382, 117
      %v392 = vpop.permute.xlu0 %391
      %393 = vrot.lane.b32.xlu0 %v384, 116
      %v394 = vpop.permute.xlu0 %393
      %395 = vrot.lane.b32.xlu0 %v382, 108
      %v396 = vpop.permute.xlu0 %395
      %397 = vrot.lane.b32.xlu0 %v384, 107
      %v398 = vpop.permute.xlu0 %397
      %399 = vrot.lane.b32.xlu0 %v382, 106
      %v400 = vpop.permute.xlu0 %399
      %v402 = vsel %vm317, %v382, %v386
      %v406 = vsel %vm317, %v388, %v390
      %v410 = vsel %vm317, %v392, %v394
      %v414 = vsel %vm317, %v396, %v398
      %417 = vset.pattern.permute.xlu0 0
      %418 = vperm.xlu0 %417, %v378
      %v419 = vpop.permute.xlu0 %418
      %422 = vset.pattern.permute.xlu0 0
      %423 = vperm.xlu0 %422, %v379
      %v424 = vpop.permute.xlu0 %423
      %427 = vset.pattern.permute.xlu0 0
      %428 = vperm.xlu0 %427, %v380
      %v429 = vpop.permute.xlu0 %428
      %432 = vset.pattern.permute.xlu0 0
      %433 = vperm.xlu0 %432, %v381
      %v434 = vpop.permute.xlu0 %433
      %v440 = vunpack.c.l.b16 %v374
      %v441 = vunpack.c.l.b16 %v375
      %v442 = vunpack.c.l.b16 %v376
      %v443 = vunpack.c.l.b16 %v377
      %v444 = vpack.c.b16 %v441, %v440
      %v445 = vpack.c.b16 %v443, %v442
      %v447 = vsel %vm313, %v444, 0
      %v450 = vsel %vm313, %v445, 0
      %v453 = vsel %vm317, %v400, 0
      %455 = vmatpush.bf16.msra.mxu0 0
      %456 = vmatpush.bf16.msra.mxu0 0
      %457 = vmatpush.bf16.msra.mxu0 0
      %458 = vmatpush.bf16.msra.mxu0 %v453
      %459 = vmatpush.bf16.msra.mxu0 %v414
      %460 = vmatpush.bf16.msra.mxu0 %v410
      %461 = vmatpush.bf16.msra.mxu0 %v406
      %462 = vmatpush.bf16.msra.mxu0 %v402
      %463 = vmatmul.bf16.gmra.mxu0 %v447
      %v464 = vpop.f32.mrf.mxu0
      %v465 = vadd.f32 %v419, %v464
      %v466 = vpop.f32.mrf.mxu0
      %v467 = vadd.f32 %v424, %v466
      %468 = vmatmul.bf16.gmra.mxu0 %v450
      %v469 = vpop.f32.mrf.mxu0
      %v470 = vadd.f32 %v429, %v469
      %v471 = vpop.f32.mrf.mxu0
      %v472 = vadd.f32 %v434, %v471
      %473 = vdwg.mxu0
      %v474 = vmax.f32 %v465, 0.0
      %v475 = vmax.f32 %v467, 0.0
      %v476 = vmax.f32 %v470, 0.0
      %v477 = vmax.f32 %v472, 0.0
      %v478 = vpack.c.bf16 %v474, %v474
      %v479 = vpack.c.bf16 %v475, %v475
      %v480 = vpack.c.bf16 %v476, %v476
      %v481 = vpack.c.bf16 %v477, %v477
      %vm482 = vcmask 650240
      %483 = vst.msk [vmem:[%s251] sm:$0xf] %vm482, %v478
      %484 = vst.msk [vmem:[%s251 + $0x4] sm:$0xf] %vm482, %v479
      %485 = vst.msk [vmem:[%s251 + $0x8] sm:$0xf] %vm482, %v480
      %486 = vst.msk [vmem:[%s251 + $0xc] sm:$0xf] %vm482, %v481
      %p487 = scmp.lt.s32.totalorder %s17, 1
      %s488 = scalar_select %p487, %s17, 1
      %s489 = smul.addr %s488, 4
      %s490 = smul.addr %s489, 4
      %s491 = scalar_lea.vmem %s6, %s490
      // Predicated region
      $region45: #{rfda_forward.23} parent=43 // pred_check
        %p492 = pneg %p166
      $region46: #{rfda_forward.23} parent=43 // pred_check_branch
        %494 = sbr.rel (%p492) target = $region48
      $region47: #{rfda_forward.23} parent=43 // pred_region
        _
      $region48: #{rfda_forward.23} parent=43 // pred_fallthru
        _
    $region44: #{rfda_forward.23} parent=5 // pred_fallthru
      _
    %p495 = scmp.le.s32.totalorder 2, %s12
    // Predicated region
    $region49: #{rfda_forward.23} parent=5 // pred_check
      %p496 = pneg %p495
    $region50: #{rfda_forward.23} parent=5 // pred_check_branch
      %498 = sbr.rel (%p496) target = $region52
    $region51: #{rfda_forward.23} parent=5 // pred_region
      %s499 = ssub.s32 %s12, 2
      // Predicated region
      $region53: #{rfda_forward.23} parent=51 // pred_check
        %p500 = pneg %p172
      $region54: #{rfda_forward.23} parent=51 // pred_check_branch
        %502 = sbr.rel (%p500) target = $region56
      $region55: #{rfda_forward.23} parent=51 // pred_region
        %p503 = scmp.lt.s32.totalorder %s18, 1
        %s504 = scalar_select %p503, %s18, 1
        %s505 = smul.addr %s504, 4
        %s506 = smul.addr %s505, 4
        %s507 = scalar_lea.vmem %s6, %s506
      $region56: #{rfda_forward.23} parent=51 // pred_fallthru
        _
    $region52: #{rfda_forward.23} parent=5 // pred_fallthru
      _
  $region6: #{rfda_forward.23} parent=0 // loop_footer
    %s16 = sadd.s32 1, %s12
  $region7: #{rfda_forward.23} parent=0 // loop_footer_branch
    %11 = sbr.rel target = $region3
  $region8: #{rfda_forward.23} parent=0 // loop_exit
    _

// kernel: rfda_forward.24
$region0: #{rfda_forward.24}
  #allocation0 [shape = 'u32[]', space=smem, size = 0x4, offset = 0x4, fixed_abs, tag = 'smem constant byte address 0x4 - core index']
  #allocation1 [shape = 'u32[72,128]{1,0:T(1,128)}', space=vmem, size = 0x9000, scoped, tag = 'internal scratch']
  %s0 = inlined_call_operand.vmem [shape: bf16[2,8,324], index: 0, kind: input, shape index: {}]
  %s1 = inlined_call_operand.vmem [shape: bf16[1,288], index: 1, kind: input, shape index: {}]
  %s2 = inlined_call_operand.vmem [shape: bf16[8,72], index: 2, kind: input, shape index: {}]
  %s3 = inlined_call_operand.vmem [shape: f32[8,1], index: 3, kind: input, shape index: {}]
  %s4 = inlined_call_operand.vmem [shape: bf16[189,72], index: 4, kind: input, shape index: {}]
  %s5 = inlined_call_operand.vmem [shape: f32[189,1], index: 5, kind: input, shape index: {}]
  %s6 = inlined_call_operand.vmem [shape: f32[2,189,288], index: 6, kind: output, shape index: {}]
  %s7 = sld [smem:[#allocation0]]
  $region57: #{rfda_forward.24} parent=0
    _
  %s9 = ssub.s32 1, %s7
  %s10 = scalar_select 0, %s9, %s7
  loop: start=0, step=1, limit=4
  $region2: #{rfda_forward.24} parent=0 // loop_pre_header
    _
  $region3: #{rfda_forward.24} parent=0 // loop_header
    %s12 = sphi 0, %s16
    %p13 = scmp.ge.s32.totalorder %s12, 4
    %s22 = sphi 0, %s24
    %s25 = sphi 0, %s22
    %s26 = sphi 0, %s25
    %s42 = sphi 0, %s26
    %s46 = sphi 0, %s46
    %s48 = sphi 0, %s46
    %s49 = sphi 0, %s48
    %s63 = sphi 0, %s49
    %s67 = sphi 0, %s67
    %s69 = sphi 0, %s67
    %s70 = sphi 0, %s69
    %s84 = sphi 0, %s70
    %s88 = sphi 0, %s88
    %s90 = sphi 0, %s88
    %s91 = sphi 0, %s90
    %s105 = sphi 0, %s91
    %s109 = sphi 0, %s109
    %s111 = sphi 0, %s109
    %s112 = sphi 0, %s111
    %s126 = sphi 0, %s112
    %s130 = sphi 0, %s130
    %s132 = sphi 0, %s130
    %s133 = sphi 0, %s132
    %s147 = sphi 0, %s133
    %s153 = sphi 0, %s155
    %s156 = sphi 0, %s153
    %s157 = sphi 0, %s156
    %s173 = sphi 0, %s157
  $region4: #{rfda_forward.24} parent=0 // loop_header_branch
    %15 = sbr.rel (%p13) target = $region8
  $region5: #{rfda_forward.24} parent=0 // loop_body
    %s17 = ssub.s32 %s12, 1
    %s18 = ssub.s32 %s12, 2
    %s19 = sadd.s32 %s12, 1
    %s20 = ssub.s32 %s12, %s19
    %p21 = scmp.eq.s32.totalorder %s20, 0
    %s23 = sadd.s32 %s22, 1
    %s24 = scalar_select %p21, %s22, %s23
    %p27 = pneg %p21
    %p28 = scmp.eq.s32.totalorder %s12, 1
    %p29 = por %p27, %p28
    %p30 = scmp.ne.s32.totalorder %s22, %s25
    %p31 = scmp.eq.s32.totalorder %s12, 0
    %p32 = por %p30, %p31
    %p33 = scmp.ne.s32.totalorder %s22, %s25
    %p34 = scmp.eq.s32.totalorder %s17, 1
    %p35 = por %p33, %p34
    %p36 = scmp.ne.s32.totalorder %s25, %s26
    %p37 = scmp.eq.s32.totalorder %s17, 0
    %p38 = por %p36, %p37
    %p39 = scmp.ne.s32.totalorder %s25, %s26
    %p40 = scmp.eq.s32.totalorder %s18, 1
    %p41 = por %p39, %p40
    %p43 = scmp.ne.s32.totalorder %s26, %s42
    %p44 = scmp.eq.s32.totalorder %s18, 0
    %p45 = por %p43, %p44
    %s47 = sadd.s32 %s46, 1
    %p50 = scmp.eq.s32.totalorder %s12, 1
    %p51 = scmp.ne.s32.totalorder %s46, %s48
    %p52 = scmp.eq.s32.totalorder %s12, 0
    %p53 = por %p51, %p52
    %p54 = scmp.ne.s32.totalorder %s46, %s48
    %p55 = scmp.eq.s32.totalorder %s17, 1
    %p56 = por %p54, %p55
    %p57 = scmp.ne.s32.totalorder %s48, %s49
    %p58 = scmp.eq.s32.totalorder %s17, 0
    %p59 = por %p57, %p58
    %p60 = scmp.ne.s32.totalorder %s48, %s49
    %p61 = scmp.eq.s32.totalorder %s18, 1
    %p62 = por %p60, %p61
    %p64 = scmp.ne.s32.totalorder %s49, %s63
    %p65 = scmp.eq.s32.totalorder %s18, 0
    %p66 = por %p64, %p65
    %s68 = sadd.s32 %s67, 1
    %p71 = scmp.eq.s32.totalorder %s12, 1
    %p72 = scmp.ne.s32.totalorder %s67, %s69
    %p73 = scmp.eq.s32.totalorder %s12, 0
    %p74 = por %p72, %p73
    %p75 = scmp.ne.s32.totalorder %s67, %s69
    %p76 = scmp.eq.s32.totalorder %s17, 1
    %p77 = por %p75, %p76
    %p78 = scmp.ne.s32.totalorder %s69, %s70
    %p79 = scmp.eq.s32.totalorder %s17, 0
    %p80 = por %p78, %p79
    %p81 = scmp.ne.s32.totalorder %s69, %s70
    %p82 = scmp.eq.s32.totalorder %s18, 1
    %p83 = por %p81, %p82
    %p85 = scmp.ne.s32.totalorder %s70, %s84
    %p86 = scmp.eq.s32.totalorder %s18, 0
    %p87 = por %p85, %p86
    %s89 = sadd.s32 %s88, 1
    %p92 = scmp.eq.s32.totalorder %s12, 1
    %p93 = scmp.ne.s32.totalorder %s88, %s90
    %p94 = scmp.eq.s32.totalorder %s12, 0
    %p95 = por %p93, %p94
    %p96 = scmp.ne.s32.totalorder %s88, %s90
    %p97 = scmp.eq.s32.totalorder %s17, 1
    %p98 = por %p96, %p97
    %p99 = scmp.ne.s32.totalorder %s90, %s91
    %p100 = scmp.eq.s32.totalorder %s17, 0
    %p101 = por %p99, %p100
    %p102 = scmp.ne.s32.totalorder %s90, %s91
    %p103 = scmp.eq.s32.totalorder %s18, 1
    %p104 = por %p102, %p103
    %p106 = scmp.ne.s32.totalorder %s91, %s105
    %p107 = scmp.eq.s32.totalorder %s18, 0
    %p108 = por %p106, %p107
    %s110 = sadd.s32 %s109, 1
    %p113 = scmp.eq.s32.totalorder %s12, 1
    %p114 = scmp.ne.s32.totalorder %s109, %s111
    %p115 = scmp.eq.s32.totalorder %s12, 0
    %p116 = por %p114, %p115
    %p117 = scmp.ne.s32.totalorder %s109, %s111
    %p118 = scmp.eq.s32.totalorder %s17, 1
    %p119 = por %p117, %p118
    %p120 = scmp.ne.s32.totalorder %s111, %s112
    %p121 = scmp.eq.s32.totalorder %s17, 0
    %p122 = por %p120, %p121
    %p123 = scmp.ne.s32.totalorder %s111, %s112
    %p124 = scmp.eq.s32.totalorder %s18, 1
    %p125 = por %p123, %p124
    %p127 = scmp.ne.s32.totalorder %s112, %s126
    %p128 = scmp.eq.s32.totalorder %s18, 0
    %p129 = por %p127, %p128
    %s131 = sadd.s32 %s130, 1
    %p134 = scmp.eq.s32.totalorder %s12, 1
    %p135 = scmp.ne.s32.totalorder %s130, %s132
    %p136 = scmp.eq.s32.totalorder %s12, 0
    %p137 = por %p135, %p136
    %p138 = scmp.ne.s32.totalorder %s130, %s132
    %p139 = scmp.eq.s32.totalorder %s17, 1
    %p140 = por %p138, %p139
    %p141 = scmp.ne.s32.totalorder %s132, %s133
    %p142 = scmp.eq.s32.totalorder %s17, 0
    %p143 = por %p141, %p142
    %p144 = scmp.ne.s32.totalorder %s132, %s133
    %p145 = scmp.eq.s32.totalorder %s18, 1
    %p146 = por %p144, %p145
    %p148 = scmp.ne.s32.totalorder %s133, %s147
    %p149 = scmp.eq.s32.totalorder %s18, 0
    %p150 = por %p148, %p149
    %s151 = ssub.s32 %s12, %s19
    %p152 = scmp.eq.s32.totalorder %s151, 0
    %s154 = sadd.s32 %s153, 1
    %s155 = scalar_select %p152, %s153, %s154
    %p158 = pneg %p152
    %p159 = scmp.eq.s32.totalorder %s12, 1
    %p160 = por %p158, %p159
    %p161 = scmp.ne.s32.totalorder %s153, %s156
    %p162 = scmp.eq.s32.totalorder %s12, 0
    %p163 = por %p161, %p162
    %p164 = scmp.ne.s32.totalorder %s153, %s156
    %p165 = scmp.eq.s32.totalorder %s17, 1
    %p166 = por %p164, %p165
    %p167 = scmp.ne.s32.totalorder %s156, %s157
    %p168 = scmp.eq.s32.totalorder %s17, 0
    %p169 = por %p167, %p168
    %p170 = scmp.ne.s32.totalorder %s156, %s157
    %p171 = scmp.eq.s32.totalorder %s18, 1
    %p172 = por %p170, %p171
    %p174 = scmp.ne.s32.totalorder %s157, %s173
    %p175 = scmp.eq.s32.totalorder %s18, 0
    %p176 = por %p174, %p175
    %p177 = scmp.le.s32.totalorder 1, %s12
    %p178 = scmp.lt.s32.totalorder %s12, 3
    %p179 = pnand %p177, %p178
    %p180 = pneg %p179
    // Predicated region
    $region9: #{rfda_forward.24} parent=5 // pred_check
      _
    $region10: #{rfda_forward.24} parent=5 // pred_check_branch
      %182 = sbr.rel (%p179) target = $region12
    $region11: #{rfda_forward.24} parent=5 // pred_region
      %s183 = ssub.s32 %s12, 1
      // Predicated region
      $region13: #{rfda_forward.24} parent=11 // pred_check
        %p184 = pneg %p59
      $region14: #{rfda_forward.24} parent=11 // pred_check_branch
        %186 = sbr.rel (%p184) target = $region16
      $region15: #{rfda_forward.24} parent=11 // pred_region
        _
      $region16: #{rfda_forward.24} parent=11 // pred_fallthru
        _
      // Predicated region
      $region17: #{rfda_forward.24} parent=11 // pred_check
        %p187 = pneg %p80
      $region18: #{rfda_forward.24} parent=11 // pred_check_branch
        %189 = sbr.rel (%p187) target = $region20
      $region19: #{rfda_forward.24} parent=11 // pred_region
        _
      $region20: #{rfda_forward.24} parent=11 // pred_fallthru
        _
      // Predicated region
      $region21: #{rfda_forward.24} parent=11 // pred_check
        %p190 = pneg %p101
      $region22: #{rfda_forward.24} parent=11 // pred_check_branch
        %192 = sbr.rel (%p190) target = $region24
      $region23: #{rfda_forward.24} parent=11 // pred_region
        _
      $region24: #{rfda_forward.24} parent=11 // pred_fallthru
        _
      // Predicated region
      $region25: #{rfda_forward.24} parent=11 // pred_check
        %p193 = pneg %p122
      $region26: #{rfda_forward.24} parent=11 // pred_check_branch
        %195 = sbr.rel (%p193) target = $region28
      $region27: #{rfda_forward.24} parent=11 // pred_region
        _
      $region28: #{rfda_forward.24} parent=11 // pred_fallthru
        _
      // Predicated region
      $region29: #{rfda_forward.24} parent=11 // pred_check
        %p196 = pneg %p143
      $region30: #{rfda_forward.24} parent=11 // pred_check_branch
        %198 = sbr.rel (%p196) target = $region32
      $region31: #{rfda_forward.24} parent=11 // pred_region
        _
      $region32: #{rfda_forward.24} parent=11 // pred_fallthru
        _
    $region12: #{rfda_forward.24} parent=5 // pred_fallthru
      _
    %p199 = scmp.lt.s32.totalorder %s12, 2
    // Predicated region
    $region33: #{rfda_forward.24} parent=5 // pred_check
      %p200 = pneg %p199
    $region34: #{rfda_forward.24} parent=5 // pred_check_branch
      %202 = sbr.rel (%p200) target = $region36
    $region35: #{rfda_forward.24} parent=5 // pred_region
      // Predicated region
      $region37: #{rfda_forward.24} parent=35 // pred_check
        %p203 = pneg %p32
      $region38: #{rfda_forward.24} parent=35 // pred_check_branch
        %205 = sbr.rel (%p203) target = $region40
      $region39: #{rfda_forward.24} parent=35 // pred_region
        %p206 = scmp.lt.s32.totalorder %s12, 1
        %s207 = scalar_select %p206, %s12, 1
        %s208 = smul.addr %s207, 3
        %s209 = smul.addr %s208, 4
        %s210 = scalar_lea.vmem %s0, %s209
      $region40: #{rfda_forward.24} parent=35 // pred_fallthru
        _
    $region36: #{rfda_forward.24} parent=5 // pred_fallthru
      _
    %p211 = scmp.le.s32.totalorder 1, %s12
    %p212 = scmp.lt.s32.totalorder %s12, 3
    %p213 = pnand %p211, %p212
    %p214 = pneg %p213
    // Predicated region
    $region41: #{rfda_forward.24} parent=5 // pred_check
      _
    $region42: #{rfda_forward.24} parent=5 // pred_check_branch
      %216 = sbr.rel (%p213) target = $region44
    $region43: #{rfda_forward.24} parent=5 // pred_region
      %s217 = ssub.s32 %s12, 1
      %p218 = scmp.lt.s32.totalorder %s17, 1
      %s219 = scalar_select %p218, %s17, 1
      %s220 = smul.addr %s219, 3
      %s221 = smul.addr %s220, 4
      %s222 = scalar_lea.vmem %s0, %s221
      %p223 = pneg %p38
      %p224 = pneg %p35
      %p225 = pneg %p59
      %p226 = pneg %p56
      %p227 = pneg %p80
      %p228 = pneg %p77
      %p229 = pneg %p101
      %p230 = pneg %p98
      %p231 = pneg %p122
      %p232 = pneg %p119
      %p233 = pneg %p143
      %p234 = pneg %p140
      %p235 = pneg %p169
      %p236 = pneg %p166
      %p237 = scmp.lt.s32.totalorder %s17, 1
      %s238 = scalar_select %p237, %s17, 1
      %s239 = smul.addr %s238, 72
      %s240 = smul.addr %s239, 8
      %s241 = scalar_lea.vmem %s6, %s240
      %p242 = scmp.lt.s32.totalorder %s17, 1
      %s243 = scalar_select %p242, %s17, 1
      %s244 = smul.addr %s243, 3
      %s245 = smul.addr %s244, 4
      %s246 = scalar_lea.vmem %s0, %s245
      %p247 = scmp.lt.s32.totalorder %s17, 1
      %s248 = scalar_select %p247, %s17, 1
      %s249 = smul.addr %s248, 72
      %s250 = smul.addr %s249, 8
      %s251 = scalar_lea.vmem %s6, %s250
      %v253 = vld [vmem:[%s1] sm:$0x7]
      %v254 = vld [vmem:[%s246] sm:$0xff]
      %v255 = vld [vmem:[%s246 + $0x8] sm:$0xf]
      %v256 = vld [vmem:[%s2] sm:$0xf]
      %v257 = vld [vmem:[%s3] sm:$0xff]
      %v260 = vunpack.c.l.b16 %v254
      %v261 = vunpack.c.h.b16 %v254
      %v262 = vunpack.c.l.b16 %v255
      %v263 = vpack.c.b16 %v260, %v260
      %v264 = vpack.c.b16 %v261, %v261
      %v265 = vpack.c.b16 %v262, %v262
      %vm266 = vcmask 556032
      %v269 = vsel %vm266, %v265, 0
      %v271 = vrot.slane %v263, 4
      %v272 = vrot.slane %v264, 4
      %v273 = vrot.slane %v269, 4
      %274 = vrot.lane.b32.xlu0 %v271, 127
      %v275 = vpop.permute.xlu0 %274
      %276 = vrot.lane.b32.xlu0 %v272, 127
      %v277 = vpop.permute.xlu0 %276
      %278 = vrot.lane.b32.xlu0 %v273, 127
      %v279 = vpop.permute.xlu0 %278
      %vm280 = vcmask 1039360
      %v281 = vsel %vm280, %v275, %v277
      %v282 = vsel %vm280, %v277, %v279
      %283 = vrot.lane.b32.xlu0 %v263, 126
      %v284 = vpop.permute.xlu0 %283
      %285 = vrot.lane.b32.xlu0 %v264, 126
      %v286 = vpop.permute.xlu0 %285
      %287 = vrot.lane.b32.xlu0 %v269, 126
      %v288 = vpop.permute.xlu0 %287
      %vm289 = vcmask 1031168
      %v290 = vsel %vm289, %v284, %v286
      %v291 = vsel %vm289, %v286, %v288
      %292 = vrot.lane.b32.xlu0 %v271, 110
      %v293 = vpop.permute.xlu0 %292
      %294 = vrot.lane.b32.xlu0 %v272, 110
      %v295 = vpop.permute.xlu0 %294
      %296 = vrot.lane.b32.xlu0 %v273, 110
      %v297 = vpop.permute.xlu0 %296
      %vm298 = vcmask 900096
      %v299 = vsel %vm298, %v293, %v295
      %v300 = vsel %vm298, %v295, %v297
      %301 = vrot.lane.b32.xlu0 %v263, 109
      %v302 = vpop.permute.xlu0 %301
      %303 = vrot.lane.b32.xlu0 %v264, 109
      %v304 = vpop.permute.xlu0 %303
      %305 = vrot.lane.b32.xlu0 %v269, 109
      %v306 = vpop.permute.xlu0 %305
      %vm307 = vcmask 891904
      %v308 = vsel %vm307, %v302, %v304
      %v309 = vsel %vm307, %v304, %v306
      %310 = vrot.lane.b32.xlu0 %v271, 108
      %v311 = vpop.permute.xlu0 %310
      %312 = vrot.lane.b32.xlu0 %v272, 108
      %v313 = vpop.permute.xlu0 %312
      %314 = vrot.lane.b32.xlu0 %v273, 108
      %v315 = vpop.permute.xlu0 %314
      %vm316 = vcmask 883712
      %v317 = vsel %vm316, %v311, %v313
      %v318 = vsel %vm316, %v313, %v315
      %319 = vrot.lane.b32.xlu0 %v263, 92
      %v320 = vpop.permute.xlu0 %319
      %321 = vrot.lane.b32.xlu0 %v264, 92
      %v322 = vpop.permute.xlu0 %321
      %323 = vrot.lane.b32.xlu0 %v269, 92
      %v324 = vpop.permute.xlu0 %323
      %vm325 = vcmask 752640
      %v326 = vsel %vm325, %v320, %v322
      %v327 = vsel %vm325, %v322, %v324
      %328 = vrot.lane.b32.xlu0 %v271, 91
      %v329 = vpop.permute.xlu0 %328
      %330 = vrot.lane.b32.xlu0 %v272, 91
      %v331 = vpop.permute.xlu0 %330
      %332 = vrot.lane.b32.xlu0 %v273, 91
      %v333 = vpop.permute.xlu0 %332
      %vm334 = vcmask 744448
      %v335 = vsel %vm334, %v329, %v331
      %v336 = vsel %vm334, %v331, %v333
      %337 = vrot.lane.b32.xlu0 %v263, 90
      %v338 = vpop.permute.xlu0 %337
      %339 = vrot.lane.b32.xlu0 %v264, 90
      %v340 = vpop.permute.xlu0 %339
      %341 = vrot.lane.b32.xlu0 %v269, 90
      %v342 = vpop.permute.xlu0 %341
      %vm343 = vcmask 736256
      %v344 = vsel %vm343, %v338, %v340
      %v345 = vsel %vm343, %v340, %v342
      %vm346 = vcmask 1043456
      %v349 = vsel %vm346, %v263, %v281
      %v353 = vsel %vm346, %v264, %v282
      %v356 = vsel %vm346, %v269, %v279
      %v360 = vsel %vm346, %v290, %v299
      %v364 = vsel %vm346, %v291, %v300
      %v368 = vsel %vm346, %v288, %v297
      %v372 = vsel %vm346, %v308, %v317
      %v376 = vsel %vm346, %v309, %v318
      %v380 = vsel %vm346, %v306, %v315
      %v384 = vsel %vm346, %v326, %v335
      %v388 = vsel %vm346, %v327, %v336
      %v392 = vsel %vm346, %v324, %v333
      %395 = vset.pattern.permute.xlu0 0
      %396 = vperm.xlu0 %395, %v257
      %v397 = vpop.permute.xlu0 %396
      %vm399 = vcmask 588800
      %v401 = vsel %vm399, %v256, 0
      %v404 = vsel %vm346, %v344, 0
      %v407 = vsel %vm346, %v345, 0
      %v410 = vsel %vm346, %v342, 0
      %412 = vmatpush.bf16.msra.mxu0 0
      %413 = vmatpush.bf16.msra.mxu0 0
      %414 = vmatpush.bf16.msra.mxu0 0
      %415 = vmatpush.bf16.msra.mxu0 %v404
      %416 = vmatpush.bf16.msra.mxu0 %v384
      %417 = vmatpush.bf16.msra.mxu0 %v372
      %418 = vmatpush.bf16.msra.mxu0 %v360
      %419 = vmatpush.bf16.msra.mxu0 %v349
      %420 = vmatmul.bf16.gmra.mxu0 %v401
      %v421 = vpop.f32.mrf.mxu0
      %v422 = vadd.f32 %v397, %v421
      %v423 = vpop.f32.mrf.mxu0
      %424 = vdwg.mxu0
      %425 = vmatpush.bf16.msra.mxu0 0
      %426 = vmatpush.bf16.msra.mxu0 0
      %427 = vmatpush.bf16.msra.mxu0 0
      %428 = vmatpush.bf16.msra.mxu0 %v407
      %429 = vmatpush.bf16.msra.mxu0 %v388
      %430 = vmatpush.bf16.msra.mxu0 %v376
      %431 = vmatpush.bf16.msra.mxu0 %v364
      %432 = vmatpush.bf16.msra.mxu0 %v353
      %433 = vmatmul.bf16.gmra.mxu0 %v401
      %v434 = vpop.f32.mrf.mxu0
      %v435 = vadd.f32 %v397, %v434
      %v436 = vpop.f32.mrf.mxu0
      %437 = vdwg.mxu0
      %438 = vmatpush.bf16.msra.mxu0 0
      %439 = vmatpush.bf16.msra.mxu0 0
      %440 = vmatpush.bf16.msra.mxu0 0
      %441 = vmatpush.bf16.msra.mxu0 %v410
      %442 = vmatpush.bf16.msra.mxu0 %v392
      %443 = vmatpush.bf16.msra.mxu0 %v380
      %444 = vmatpush.bf16.msra.mxu0 %v368
      %445 = vmatpush.bf16.msra.mxu0 %v356
      %446 = vmatmul.bf16.gmra.mxu0 %v401
      %v447 = vpop.f32.mrf.mxu0
      %v448 = vadd.f32 %v397, %v447
      %v449 = vpop.f32.mrf.mxu0
      %450 = vdwg.mxu0
      %v451 = vmax.f32 %v422, 0.0
      %v452 = vmax.f32 %v435, 0.0
      %v453 = vmax.f32 %v448, 0.0
      %v454 = vunpack.c.l.bf16 %v253
      %v456 = vperm.slane %v454, 0
      %v457 = vperm.slane %v454, 2
      %v458 = vperm.slane %v454, 4
      %v462 = vperm.slane %v456, 0
      %v463 = vperm.slane %v457, 0
      %v464 = vperm.slane %v458, 0
      %v465 = vmul.f32 %v451, %v462
      %v466 = vmul.f32 %v452, %v463
      %v467 = vmul.f32 %v453, %v464
      %v468 = vpack.c.bf16 %v466, %v465
      %v469 = vpack.c.bf16 %v467, %v467
      %v472 = vunpack.c.l.b16 %v468
      %v473 = vunpack.c.h.b16 %v468
      %v474 = vunpack.c.l.b16 %v469
      %v475 = vpack.c.b16 %v472, %v472
      %v476 = vpack.c.b16 %v473, %v473
      %v477 = vpack.c.b16 %v474, %v474
      %478 = vrot.lane.b32.xlu0 %v475, 19
      %v479 = vpop.permute.xlu0 %478
      %480 = vrot.lane.b32.xlu0 %v476, 19
      %v481 = vpop.permute.xlu0 %480
      %482 = vrot.lane.b32.xlu0 %v477, 19
      %v483 = vpop.permute.xlu0 %482
      %vm484 = vcmask 154624
      %v485 = vsel %vm484, %v479, %v481
      %v486 = vsel %vm484, %v481, %v483
      %vm487 = vcmask 154624
      %v489 = vsel %vm487, 0, %v479
      %vm490 = vcmask 416768
      %v492 = vsel %vm490, %v486, 0
      %v493 = vld [vmem:[%s4] sm:$0xf]
      %v494 = vld [vmem:[%s4 + $0x4] sm:$0xf]
      %v495 = vld [vmem:[%s4 + $0x8] sm:$0xf]
      %v496 = vld [vmem:[%s4 + $0xc] sm:$0xf]
      %v497 = vld [vmem:[%s4 + $0x10] sm:$0xf]
      %v498 = vld [vmem:[%s4 + $0x14] sm:$0xf]
      %v499 = vld [vmem:[%s4 + $0x18] sm:$0xf]
      %v500 = vld [vmem:[%s4 + $0x1c] sm:$0xf]
      %v501 = vld [vmem:[%s4 + $0x20] sm:$0xf]
      %v502 = vld [vmem:[%s4 + $0x24] sm:$0xf]
      %v503 = vld [vmem:[%s4 + $0x28] sm:$0xf]
      %v504 = vld [vmem:[%s4 + $0x2c] sm:$0xf]
      %v505 = vld [vmem:[%s4 + $0x30] sm:$0xf]
      %v506 = vld [vmem:[%s4 + $0x34] sm:$0xf]
      %v507 = vld [vmem:[%s4 + $0x38] sm:$0xf]
      %v508 = vld [vmem:[%s4 + $0x3c] sm:$0xf]
      %v509 = vld [vmem:[%s4 + $0x40] sm:$0xf]
      %v510 = vld [vmem:[%s4 + $0x44] sm:$0xf]
      %v511 = vld [vmem:[%s4 + $0x48] sm:$0xf]
      %v512 = vld [vmem:[%s4 + $0x4c] sm:$0xf]
      %v513 = vld [vmem:[%s4 + $0x50] sm:$0xf]
      %v514 = vld [vmem:[%s4 + $0x54] sm:$0xf]
      %v515 = vld [vmem:[%s4 + $0x58] sm:$0xf]
      %v516 = vld [vmem:[%s4 + $0x5c] sm:$0x7]
      %v517 = vld [vmem:[%s5] sm:$0xff]
      %v518 = vld [vmem:[%s5 + $0x8] sm:$0xff]
      %v519 = vld [vmem:[%s5 + $0x10] sm:$0xff]
      %v520 = vld [vmem:[%s5 + $0x18] sm:$0xff]
      %v521 = vld [vmem:[%s5 + $0x20] sm:$0xff]
      %v522 = vld [vmem:[%s5 + $0x28] sm:$0xff]
      %v523 = vld [vmem:[%s5 + $0x30] sm:$0xff]
      %v524 = vld [vmem:[%s5 + $0x38] sm:$0xff]
      %v525 = vld [vmem:[%s5 + $0x40] sm:$0xff]
      %v526 = vld [vmem:[%s5 + $0x48] sm:$0xff]
      %v527 = vld [vmem:[%s5 + $0x50] sm:$0xff]
      %v528 = vld [vmem:[%s5 + $0x58] sm:$0xff]
      %v529 = vld [vmem:[%s5 + $0x60] sm:$0xff]
      %v530 = vld [vmem:[%s5 + $0x68] sm:$0xff]
      %v531 = vld [vmem:[%s5 + $0x70] sm:$0xff]
      %v532 = vld [vmem:[%s5 + $0x78] sm:$0xff]
      %v533 = vld [vmem:[%s5 + $0x80] sm:$0xff]
      %v534 = vld [vmem:[%s5 + $0x88] sm:$0xff]
      %v535 = vld [vmem:[%s5 + $0x90] sm:$0xff]
      %v536 = vld [vmem:[%s5 + $0x98] sm:$0xff]
      %v537 = vld [vmem:[%s5 + $0xa0] sm:$0xff]
      %v538 = vld [vmem:[%s5 + $0xa8] sm:$0xff]
      %v539 = vld [vmem:[%s5 + $0xb0] sm:$0xff]
      %v540 = vld [vmem:[%s5 + $0xb8] sm:$0x1f]
      %v541 = vsel %vm266, %v492, 0
      %v544 = vrot.slane %v489, 4
      %v545 = vrot.slane %v485, 4
      %v546 = vrot.slane %v541, 4
      %547 = vrot.lane.b32.xlu0 %v544, 127
      %v548 = vpop.permute.xlu0 %547
      %549 = vrot.lane.b32.xlu0 %v545, 127
      %v550 = vpop.permute.xlu0 %549
      %551 = vrot.lane.b32.xlu0 %v546, 127
      %v552 = vpop.permute.xlu0 %551
      %v553 = vsel %vm280, %v548, %v550
      %v554 = vsel %vm280, %v550, %v552
      %555 = vrot.lane.b32.xlu0 %v489, 126
      %v556 = vpop.permute.xlu0 %555
      %557 = vrot.lane.b32.xlu0 %v485, 126
      %v558 = vpop.permute.xlu0 %557
      %559 = vrot.lane.b32.xlu0 %v541, 126
      %v560 = vpop.permute.xlu0 %559
      %v561 = vsel %vm289, %v556, %v558
      %v562 = vsel %vm289, %v558, %v560
      %563 = vrot.lane.b32.xlu0 %v544, 110
      %v564 = vpop.permute.xlu0 %563
      %565 = vrot.lane.b32.xlu0 %v545, 110
      %v566 = vpop.permute.xlu0 %565
      %567 = vrot.lane.b32.xlu0 %v546, 110
      %v568 = vpop.permute.xlu0 %567
      %v569 = vsel %vm298, %v564, %v566
      %v570 = vsel %vm298, %v566, %v568
      %571 = vrot.lane.b32.xlu0 %v489, 109
      %v572 = vpop.permute.xlu0 %571
      %573 = vrot.lane.b32.xlu0 %v485, 109
      %v574 = vpop.permute.xlu0 %573
      %575 = vrot.lane.b32.xlu0 %v541, 109
      %v576 = vpop.permute.xlu0 %575
      %v577 = vsel %vm307, %v572, %v574
      %v578 = vsel %vm307, %v574, %v576
      %579 = vrot.lane.b32.xlu0 %v544, 108
      %v580 = vpop.permute.xlu0 %579
      %581 = vrot.lane.b32.xlu0 %v545, 108
      %v582 = vpop.permute.xlu0 %581
      %583 = vrot.lane.b32.xlu0 %v546, 108
      %v584 = vpop.permute.xlu0 %583
      %v585 = vsel %vm316, %v580, %v582
      %v586 = vsel %vm316, %v582, %v584
      %587 = vrot.lane.b32.xlu0 %v489, 92
      %v588 = vpop.permute.xlu0 %587
      %589 = vrot.lane.b32.xlu0 %v485, 92
      %v590 = vpop.permute.xlu0 %589
      %591 = vrot.lane.b32.xlu0 %v541, 92
      %v592 = vpop.permute.xlu0 %591
      %v593 = vsel %vm325, %v588, %v590
      %v594 = vsel %vm325, %v590, %v592
      %595 = vrot.lane.b32.xlu0 %v544, 91
      %v596 = vpop.permute.xlu0 %595
      %597 = vrot.lane.b32.xlu0 %v545, 91
      %v598 = vpop.permute.xlu0 %597
      %599 = vrot.lane.b32.xlu0 %v546, 91
      %v600 = vpop.permute.xlu0 %599
      %v601 = vsel %vm334, %v596, %v598
      %v602 = vsel %vm334, %v598, %v600
      %603 = vrot.lane.b32.xlu0 %v489, 90
      %v604 = vpop.permute.xlu0 %603
      %605 = vrot.lane.b32.xlu0 %v485, 90
      %v606 = vpop.permute.xlu0 %605
      %607 = vrot.lane.b32.xlu0 %v541, 90
      %v608 = vpop.permute.xlu0 %607
      %v609 = vsel %vm343, %v604, %v606
      %v610 = vsel %vm343, %v606, %v608
      %v612 = vsel %vm346, %v489, %v553
      %v616 = vsel %vm346, %v485, %v554
      %v619 = vsel %vm346, %v541, %v552
      %v623 = vsel %vm346, %v561, %v569
      %v627 = vsel %vm346, %v562, %v570
      %v631 = vsel %vm346, %v560, %v568
      %v635 = vsel %vm346, %v577, %v585
      %v639 = vsel %vm346, %v578, %v586
      %v643 = vsel %vm346, %v576, %v584
      %v647 = vsel %vm346, %v593, %v601
      %v651 = vsel %vm346, %v594, %v602
      %v655 = vsel %vm346, %v592, %v600
      %658 = vset.pattern.permute.xlu0 0
      %659 = vperm.xlu0 %658, %v517
      %v660 = vpop.permute.xlu0 %659
      %663 = vset.pattern.permute.xlu0 0
      %664 = vperm.xlu0 %663, %v518
      %v665 = vpop.permute.xlu0 %664
      %668 = vset.pattern.permute.xlu0 0
      %669 = vperm.xlu0 %668, %v519
      %v670 = vpop.permute.xlu0 %669
      %673 = vset.pattern.permute.xlu0 0
      %674 = vperm.xlu0 %673, %v520
      %v675 = vpop.permute.xlu0 %674
      %678 = vset.pattern.permute.xlu0 0
      %679 = vperm.xlu0 %678, %v521
      %v680 = vpop.permute.xlu0 %679
      %683 = vset.pattern.permute.xlu0 0
      %684 = vperm.xlu0 %683, %v522
      %v685 = vpop.permute.xlu0 %684
      %688 = vset.pattern.permute.xlu0 0
      %689 = vperm.xlu0 %688, %v523
      %v690 = vpop.permute.xlu0 %689
      %693 = vset.pattern.permute.xlu0 0
      %694 = vperm.xlu0 %693, %v524
      %v695 = vpop.permute.xlu0 %694
      %698 = vset.pattern.permute.xlu0 0
      %699 = vperm.xlu0 %698, %v525
      %v700 = vpop.permute.xlu0 %699
      %703 = vset.pattern.permute.xlu0 0
      %704 = vperm.xlu0 %703, %v526
      %v705 = vpop.permute.xlu0 %704
      %708 = vset.pattern.permute.xlu0 0
      %709 = vperm.xlu0 %708, %v527
      %v710 = vpop.permute.xlu0 %709
      %713 = vset.pattern.permute.xlu0 0
      %714 = vperm.xlu0 %713, %v528
      %v715 = vpop.permute.xlu0 %714
      %718 = vset.pattern.permute.xlu0 0
      %719 = vperm.xlu0 %718, %v529
      %v720 = vpop.permute.xlu0 %719
      %723 = vset.pattern.permute.xlu0 0
      %724 = vperm.xlu0 %723, %v530
      %v725 = vpop.permute.xlu0 %724
      %728 = vset.pattern.permute.xlu0 0
      %729 = vperm.xlu0 %728, %v531
      %v730 = vpop.permute.xlu0 %729
      %733 = vset.pattern.permute.xlu0 0
      %734 = vperm.xlu0 %733, %v532
      %v735 = vpop.permute.xlu0 %734
      %738 = vset.pattern.permute.xlu0 0
      %739 = vperm.xlu0 %738, %v533
      %v740 = vpop.permute.xlu0 %739
      %743 = vset.pattern.permute.xlu0 0
      %744 = vperm.xlu0 %743, %v534
      %v745 = vpop.permute.xlu0 %744
      %748 = vset.pattern.permute.xlu0 0
      %749 = vperm.xlu0 %748, %v535
      %v750 = vpop.permute.xlu0 %749
      %753 = vset.pattern.permute.xlu0 0
      %754 = vperm.xlu0 %753, %v536
      %v755 = vpop.permute.xlu0 %754
      %758 = vset.pattern.permute.xlu0 0
      %759 = vperm.xlu0 %758, %v537
      %v760 = vpop.permute.xlu0 %759
      %763 = vset.pattern.permute.xlu0 0
      %764 = vperm.xlu0 %763, %v538
      %v765 = vpop.permute.xlu0 %764
      %768 = vset.pattern.permute.xlu0 0
      %769 = vperm.xlu0 %768, %v539
      %v770 = vpop.permute.xlu0 %769
      %773 = vset.pattern.permute.xlu0 0
      %774 = vperm.xlu0 %773, %v540
      %v775 = vpop.permute.xlu0 %774
      %v801 = vunpack.c.l.b16 %v493
      %v802 = vunpack.c.l.b16 %v494
      %v803 = vunpack.c.l.b16 %v495
      %v804 = vunpack.c.l.b16 %v496
      %v805 = vunpack.c.l.b16 %v497
      %v806 = vunpack.c.l.b16 %v498
      %v807 = vunpack.c.l.b16 %v499
      %v808 = vunpack.c.l.b16 %v500
      %v809 = vunpack.c.l.b16 %v501
      %v810 = vunpack.c.l.b16 %v502
      %v811 = vunpack.c.l.b16 %v503
      %v812 = vunpack.c.l.b16 %v504
      %v813 = vunpack.c.l.b16 %v505
      %v814 = vunpack.c.l.b16 %v506
      %v815 = vunpack.c.l.b16 %v507
      %v816 = vunpack.c.l.b16 %v508
      %v817 = vunpack.c.l.b16 %v509
      %v818 = vunpack.c.l.b16 %v510
      %v819 = vunpack.c.l.b16 %v511
      %v820 = vunpack.c.l.b16 %v512
      %v821 = vunpack.c.l.b16 %v513
      %v822 = vunpack.c.l.b16 %v514
      %v823 = vunpack.c.l.b16 %v515
      %v824 = vunpack.c.l.b16 %v516
      %v825 = vpack.c.b16 %v802, %v801
      %v826 = vpack.c.b16 %v804, %v803
      %v827 = vpack.c.b16 %v806, %v805
      %v828 = vpack.c.b16 %v808, %v807
      %v829 = vpack.c.b16 %v810, %v809
      %v830 = vpack.c.b16 %v812, %v811
      %v831 = vpack.c.b16 %v814, %v813
      %v832 = vpack.c.b16 %v816, %v815
      %v833 = vpack.c.b16 %v818, %v817
      %v834 = vpack.c.b16 %v820, %v819
      %v835 = vpack.c.b16 %v822, %v821
      %v836 = vpack.c.b16 %v824, %v823
      %v838 = vsel %vm399, %v825, 0
      %v841 = vsel %vm399, %v826, 0
      %v844 = vsel %vm399, %v827, 0
      %v847 = vsel %vm399, %v828, 0
      %v850 = vsel %vm399, %v829, 0
      %v853 = vsel %vm399, %v830, 0
      %v856 = vsel %vm399, %v831, 0
      %v859 = vsel %vm399, %v832, 0
      %v862 = vsel %vm399, %v833, 0
      %v865 = vsel %vm399, %v834, 0
      %v868 = vsel %vm399, %v835, 0
      %v871 = vsel %vm399, %v836, 0
      %v874 = vsel %vm346, %v609, 0
      %v877 = vsel %vm346, %v610, 0
      %v880 = vsel %vm346, %v608, 0
      %882 = vmatpush.bf16.msra.mxu0 0
      %883 = vmatpush.bf16.msra.mxu0 0
      %884 = vmatpush.bf16.msra.mxu0 0
      %885 = vmatpush.bf16.msra.mxu0 %v874
      %886 = vmatpush.bf16.msra.mxu0 %v647
      %887 = vmatpush.bf16.msra.mxu0 %v635
      %888 = vmatpush.bf16.msra.mxu0 %v623
      %889 = vmatpush.bf16.msra.mxu0 %v612
      %890 = vmatmul.bf16.gmra.mxu0 %v838
      %v891 = vpop.f32.mrf.mxu0
      %v892 = vadd.f32 %v660, %v891
      %v893 = vpop.f32.mrf.mxu0
      %v894 = vadd.f32 %v665, %v893
      %895 = vmatmul.bf16.gmra.mxu0 %v841
      %v896 = vpop.f32.mrf.mxu0
      %v897 = vadd.f32 %v670, %v896
      %v898 = vpop.f32.mrf.mxu0
      %v899 = vadd.f32 %v675, %v898
      %900 = vmatmul.bf16.gmra.mxu0 %v844
      %v901 = vpop.f32.mrf.mxu0
      %v902 = vadd.f32 %v680, %v901
      %v903 = vpop.f32.mrf.mxu0
      %v904 = vadd.f32 %v685, %v903
      %905 = vmatmul.bf16.gmra.mxu0 %v847
      %v906 = vpop.f32.mrf.mxu0
      %v907 = vadd.f32 %v690, %v906
      %v908 = vpop.f32.mrf.mxu0
      %v909 = vadd.f32 %v695, %v908
      %910 = vmatmul.bf16.gmra.mxu0 %v850
      %v911 = vpop.f32.mrf.mxu0
      %v912 = vadd.f32 %v700, %v911
      %v913 = vpop.f32.mrf.mxu0
      %v914 = vadd.f32 %v705, %v913
      %915 = vmatmul.bf16.gmra.mxu0 %v853
      %v916 = vpop.f32.mrf.mxu0
      %v917 = vadd.f32 %v710, %v916
      %v918 = vpop.f32.mrf.mxu0
      %v919 = vadd.f32 %v715, %v918
      %920 = vmatmul.bf16.gmra.mxu0 %v856
      %v921 = vpop.f32.mrf.mxu0
      %v922 = vadd.f32 %v720, %v921
      %v923 = vpop.f32.mrf.mxu0
      %v924 = vadd.f32 %v725, %v923
      %925 = vmatmul.bf16.gmra.mxu0 %v859
      %v926 = vpop.f32.mrf.mxu0
      %v927 = vadd.f32 %v730, %v926
      %v928 = vpop.f32.mrf.mxu0
      %v929 = vadd.f32 %v735, %v928
      %930 = vmatmul.bf16.gmra.mxu0 %v862
      %v931 = vpop.f32.mrf.mxu0
      %v932 = vadd.f32 %v740, %v931
      %v933 = vpop.f32.mrf.mxu0
      %v934 = vadd.f32 %v745, %v933
      %935 = vmatmul.bf16.gmra.mxu0 %v865
      %v936 = vpop.f32.mrf.mxu0
      %v937 = vadd.f32 %v750, %v936
      %v938 = vpop.f32.mrf.mxu0
      %v939 = vadd.f32 %v755, %v938
      %940 = vmatmul.bf16.gmra.mxu0 %v868
      %v941 = vpop.f32.mrf.mxu0
      %v942 = vadd.f32 %v760, %v941
      %v943 = vpop.f32.mrf.mxu0
      %v944 = vadd.f32 %v765, %v943
      %945 = vmatmul.bf16.gmra.mxu0 %v871
      %v946 = vpop.f32.mrf.mxu0
      %v947 = vadd.f32 %v770, %v946
      %v948 = vpop.f32.mrf.mxu0
      %v949 = vadd.f32 %v775, %v948
      %950 = vdwg.mxu0
      %951 = vmatpush.bf16.msra.mxu0 0
      %952 = vmatpush.bf16.msra.mxu0 0
      %953 = vmatpush.bf16.msra.mxu0 0
      %954 = vmatpush.bf16.msra.mxu0 %v877
      %955 = vmatpush.bf16.msra.mxu0 %v651
      %956 = vmatpush.bf16.msra.mxu0 %v639
      %957 = vmatpush.bf16.msra.mxu0 %v627
      %958 = vmatpush.bf16.msra.mxu0 %v616
      %959 = vmatmul.bf16.gmra.mxu0 %v838
      %v960 = vpop.f32.mrf.mxu0
      %v961 = vadd.f32 %v660, %v960
      %v962 = vpop.f32.mrf.mxu0
      %v963 = vadd.f32 %v665, %v962
      %964 = vmatmul.bf16.gmra.mxu0 %v841
      %v965 = vpop.f32.mrf.mxu0
      %v966 = vadd.f32 %v670, %v965
      %v967 = vpop.f32.mrf.mxu0
      %v968 = vadd.f32 %v675, %v967
      %969 = vmatmul.bf16.gmra.mxu0 %v844
      %v970 = vpop.f32.mrf.mxu0
      %v971 = vadd.f32 %v680, %v970
      %v972 = vpop.f32.mrf.mxu0
      %v973 = vadd.f32 %v685, %v972
      %974 = vmatmul.bf16.gmra.mxu0 %v847
      %v975 = vpop.f32.mrf.mxu0
      %v976 = vadd.f32 %v690, %v975
      %v977 = vpop.f32.mrf.mxu0
      %v978 = vadd.f32 %v695, %v977
      %979 = vmatmul.bf16.gmra.mxu0 %v850
      %v980 = vpop.f32.mrf.mxu0
      %v981 = vadd.f32 %v700, %v980
      %v982 = vpop.f32.mrf.mxu0
      %v983 = vadd.f32 %v705, %v982
      %984 = vmatmul.bf16.gmra.mxu0 %v853
      %v985 = vpop.f32.mrf.mxu0
      %v986 = vadd.f32 %v710, %v985
      %v987 = vpop.f32.mrf.mxu0
      %v988 = vadd.f32 %v715, %v987
      %989 = vmatmul.bf16.gmra.mxu0 %v856
      %v990 = vpop.f32.mrf.mxu0
      %v991 = vadd.f32 %v720, %v990
      %v992 = vpop.f32.mrf.mxu0
      %v993 = vadd.f32 %v725, %v992
      %994 = vmatmul.bf16.gmra.mxu0 %v859
      %v995 = vpop.f32.mrf.mxu0
      %v996 = vadd.f32 %v730, %v995
      %v997 = vpop.f32.mrf.mxu0
      %v998 = vadd.f32 %v735, %v997
      %999 = vmatmul.bf16.gmra.mxu0 %v862
      %v1000 = vpop.f32.mrf.mxu0
      %v1001 = vadd.f32 %v740, %v1000
      %v1002 = vpop.f32.mrf.mxu0
      %v1003 = vadd.f32 %v745, %v1002
      %1004 = vmatmul.bf16.gmra.mxu0 %v865
      %v1005 = vpop.f32.mrf.mxu0
      %v1006 = vadd.f32 %v750, %v1005
      %v1007 = vpop.f32.mrf.mxu0
      %v1008 = vadd.f32 %v755, %v1007
      %1009 = vmatmul.bf16.gmra.mxu0 %v868
      %v1010 = vpop.f32.mrf.mxu0
      %v1011 = vadd.f32 %v760, %v1010
      %v1012 = vpop.f32.mrf.mxu0
      %v1013 = vadd.f32 %v765, %v1012
      %1014 = vmatmul.bf16.gmra.mxu0 %v871
      %v1015 = vpop.f32.mrf.mxu0
      %v1016 = vadd.f32 %v770, %v1015
      %v1017 = vpop.f32.mrf.mxu0
      %v1018 = vadd.f32 %v775, %v1017
      %1019 = vdwg.mxu0
      %1020 = vmatpush.bf16.msra.mxu0 0
      %1021 = vmatpush.bf16.msra.mxu0 0
      %1022 = vmatpush.bf16.msra.mxu0 0
      %1023 = vmatpush.bf16.msra.mxu0 %v880
      %1024 = vmatpush.bf16.msra.mxu0 %v655
      %1025 = vmatpush.bf16.msra.mxu0 %v643
      %1026 = vmatpush.bf16.msra.mxu0 %v631
      %1027 = vmatpush.bf16.msra.mxu0 %v619
      %1028 = vmatmul.bf16.gmra.mxu0 %v838
      %v1029 = vpop.f32.mrf.mxu0
      %v1030 = vadd.f32 %v660, %v1029
      %v1031 = vpop.f32.mrf.mxu0
      %v1032 = vadd.f32 %v665, %v1031
      %1033 = vmatmul.bf16.gmra.mxu0 %v841
      %v1034 = vpop.f32.mrf.mxu0
      %v1035 = vadd.f32 %v670, %v1034
      %v1036 = vpop.f32.mrf.mxu0
      %v1037 = vadd.f32 %v675, %v1036
      %1038 = vmatmul.bf16.gmra.mxu0 %v844
      %v1039 = vpop.f32.mrf.mxu0
      %v1040 = vadd.f32 %v680, %v1039
      %v1041 = vpop.f32.mrf.mxu0
      %v1042 = vadd.f32 %v685, %v1041
      %1043 = vmatmul.bf16.gmra.mxu0 %v847
      %v1044 = vpop.f32.mrf.mxu0
      %v1045 = vadd.f32 %v690, %v1044
      %v1046 = vpop.f32.mrf.mxu0
      %v1047 = vadd.f32 %v695, %v1046
      %1048 = vmatmul.bf16.gmra.mxu0 %v850
      %v1049 = vpop.f32.mrf.mxu0
      %v1050 = vadd.f32 %v700, %v1049
      %v1051 = vpop.f32.mrf.mxu0
      %v1052 = vadd.f32 %v705, %v1051
      %1053 = vmatmul.bf16.gmra.mxu0 %v853
      %v1054 = vpop.f32.mrf.mxu0
      %v1055 = vadd.f32 %v710, %v1054
      %v1056 = vpop.f32.mrf.mxu0
      %v1057 = vadd.f32 %v715, %v1056
      %1058 = vmatmul.bf16.gmra.mxu0 %v856
      %v1059 = vpop.f32.mrf.mxu0
      %v1060 = vadd.f32 %v720, %v1059
      %v1061 = vpop.f32.mrf.mxu0
      %v1062 = vadd.f32 %v725, %v1061
      %1063 = vmatmul.bf16.gmra.mxu0 %v859
      %v1064 = vpop.f32.mrf.mxu0
      %v1065 = vadd.f32 %v730, %v1064
      %v1066 = vpop.f32.mrf.mxu0
      %v1067 = vadd.f32 %v735, %v1066
      %1068 = vmatmul.bf16.gmra.mxu0 %v862
      %v1069 = vpop.f32.mrf.mxu0
      %v1070 = vadd.f32 %v740, %v1069
      %v1071 = vpop.f32.mrf.mxu0
      %v1072 = vadd.f32 %v745, %v1071
      %1073 = vmatmul.bf16.gmra.mxu0 %v865
      %v1074 = vpop.f32.mrf.mxu0
      %v1075 = vadd.f32 %v750, %v1074
      %v1076 = vpop.f32.mrf.mxu0
      %v1077 = vadd.f32 %v755, %v1076
      %1078 = vmatmul.bf16.gmra.mxu0 %v868
      %v1079 = vpop.f32.mrf.mxu0
      %v1080 = vadd.f32 %v760, %v1079
      %v1081 = vpop.f32.mrf.mxu0
      %v1082 = vadd.f32 %v765, %v1081
      %1083 = vmatmul.bf16.gmra.mxu0 %v871
      %v1084 = vpop.f32.mrf.mxu0
      %v1085 = vadd.f32 %v770, %v1084
      %v1086 = vpop.f32.mrf.mxu0
      %v1087 = vadd.f32 %v775, %v1086
      %1088 = vdwg.mxu0
      %1089 = vst [vmem:[%s251] sm:$0xff] %v892
      %1090 = vst [vmem:[%s251 + $0x8] sm:$0xff] %v961
      %vm1091 = vcmask 261120
      %1092 = vst.msk [vmem:[%s251 + $0x10] sm:$0xff] %vm1091, %v1030
      %1093 = vst [vmem:[%s251 + $0x18] sm:$0xff] %v894
      %1094 = vst [vmem:[%s251 + $0x20] sm:$0xff] %v963
      %1095 = vst.msk [vmem:[%s251 + $0x28] sm:$0xff] %vm1091, %v1032
      %1096 = vst [vmem:[%s251 + $0x30] sm:$0xff] %v897
      %1097 = vst [vmem:[%s251 + $0x38] sm:$0xff] %v966
      %1098 = vst.msk [vmem:[%s251 + $0x40] sm:$0xff] %vm1091, %v1035
      %1099 = vst [vmem:[%s251 + $0x48] sm:$0xff] %v899
      %1100 = vst [vmem:[%s251 + $0x50] sm:$0xff] %v968
      %1101 = vst.msk [vmem:[%s251 + $0x58] sm:$0xff] %vm1091, %v1037
      %1102 = vst [vmem:[%s251 + $0x60] sm:$0xff] %v902
      %1103 = vst [vmem:[%s251 + $0x68] sm:$0xff] %v971
      %1104 = vst.msk [vmem:[%s251 + $0x70] sm:$0xff] %vm1091, %v1040
      %1105 = vst [vmem:[%s251 + $0x78] sm:$0xff] %v904
      %1106 = vst [vmem:[%s251 + $0x80] sm:$0xff] %v973
      %1107 = vst.msk [vmem:[%s251 + $0x88] sm:$0xff] %vm1091, %v1042
      %1108 = vst [vmem:[%s251 + $0x90] sm:$0xff] %v907
      %1109 = vst [vmem:[%s251 + $0x98] sm:$0xff] %v976
      %1110 = vst.msk [vmem:[%s251 + $0xa0] sm:$0xff] %vm1091, %v1045
      %1111 = vst [vmem:[%s251 + $0xa8] sm:$0xff] %v909
      %1112 = vst [vmem:[%s251 + $0xb0] sm:$0xff] %v978
      %1113 = vst.msk [vmem:[%s251 + $0xb8] sm:$0xff] %vm1091, %v1047
      %1114 = vst [vmem:[%s251 + $0xc0] sm:$0xff] %v912
      %1115 = vst [vmem:[%s251 + $0xc8] sm:$0xff] %v981
      %1116 = vst.msk [vmem:[%s251 + $0xd0] sm:$0xff] %vm1091, %v1050
      %1117 = vst [vmem:[%s251 + $0xd8] sm:$0xff] %v914
      %1118 = vst [vmem:[%s251 + $0xe0] sm:$0xff] %v983
      %1119 = vst.msk [vmem:[%s251 + $0xe8] sm:$0xff] %vm1091, %v1052
      %1120 = vst [vmem:[%s251 + $0xf0] sm:$0xff] %v917
      %1121 = vst [vmem:[%s251 + $0xf8] sm:$0xff] %v986
      %1122 = vst.msk [vmem:[%s251 + $0x100] sm:$0xff] %vm1091, %v1055
      %1123 = vst [vmem:[%s251 + $0x108] sm:$0xff] %v919
      %1124 = vst [vmem:[%s251 + $0x110] sm:$0xff] %v988
      %1125 = vst.msk [vmem:[%s251 + $0x118] sm:$0xff] %vm1091, %v1057
      %1126 = vst [vmem:[%s251 + $0x120] sm:$0xff] %v922
      %1127 = vst [vmem:[%s251 + $0x128] sm:$0xff] %v991
      %1128 = vst.msk [vmem:[%s251 + $0x130] sm:$0xff] %vm1091, %v1060
      %1129 = vst [vmem:[%s251 + $0x138] sm:$0xff] %v924
      %1130 = vst [vmem:[%s251 + $0x140] sm:$0xff] %v993
      %1131 = vst.msk [vmem:[%s251 + $0x148] sm:$0xff] %vm1091, %v1062
      %1132 = vst [vmem:[%s251 + $0x150] sm:$0xff] %v927
      %1133 = vst [vmem:[%s251 + $0x158] sm:$0xff] %v996
      %1134 = vst.msk [vmem:[%s251 + $0x160] sm:$0xff] %vm1091, %v1065
      %1135 = vst [vmem:[%s251 + $0x168] sm:$0xff] %v929
      %1136 = vst [vmem:[%s251 + $0x170] sm:$0xff] %v998
      %1137 = vst.msk [vmem:[%s251 + $0x178] sm:$0xff] %vm1091, %v1067
      %1138 = vst [vmem:[%s251 + $0x180] sm:$0xff] %v932
      %1139 = vst [vmem:[%s251 + $0x188] sm:$0xff] %v1001
      %1140 = vst.msk [vmem:[%s251 + $0x190] sm:$0xff] %vm1091, %v1070
      %1141 = vst [vmem:[%s251 + $0x198] sm:$0xff] %v934
      %1142 = vst [vmem:[%s251 + $0x1a0] sm:$0xff] %v1003
      %1143 = vst.msk [vmem:[%s251 + $0x1a8] sm:$0xff] %vm1091, %v1072
      %1144 = vst [vmem:[%s251 + $0x1b0] sm:$0xff] %v937
      %1145 = vst [vmem:[%s251 + $0x1b8] sm:$0xff] %v1006
      %1146 = vst.msk [vmem:[%s251 + $0x1c0] sm:$0xff] %vm1091, %v1075
      %1147 = vst [vmem:[%s251 + $0x1c8] sm:$0xff] %v939
      %1148 = vst [vmem:[%s251 + $0x1d0] sm:$0xff] %v1008
      %1149 = vst.msk [vmem:[%s251 + $0x1d8] sm:$0xff] %vm1091, %v1077
      %1150 = vst [vmem:[%s251 + $0x1e0] sm:$0xff] %v942
      %1151 = vst [vmem:[%s251 + $0x1e8] sm:$0xff] %v1011
      %1152 = vst.msk [vmem:[%s251 + $0x1f0] sm:$0xff] %vm1091, %v1080
      %1153 = vst [vmem:[%s251 + $0x1f8] sm:$0xff] %v944
      %1154 = vst [vmem:[%s251 + $0x200] sm:$0xff] %v1013
      %1155 = vst.msk [vmem:[%s251 + $0x208] sm:$0xff] %vm1091, %v1082
      %1156 = vst [vmem:[%s251 + $0x210] sm:$0xff] %v947
      %1157 = vst [vmem:[%s251 + $0x218] sm:$0xff] %v1016
      %1158 = vst.msk [vmem:[%s251 + $0x220] sm:$0xff] %vm1091, %v1085
      %1159 = vst [vmem:[%s251 + $0x228] sm:$0x1f] %v949
      %1160 = vst [vmem:[%s251 + $0x230] sm:$0x1f] %v1018
      %vm1161 = vcmask 258048
      %1162 = vst.msk [vmem:[%s251 + $0x238] sm:$0x1f] %vm1161, %v1087
      %p1163 = scmp.lt.s32.totalorder %s17, 1
      %s1164 = scalar_select %p1163, %s17, 1
      %s1165 = smul.addr %s1164, 72
      %s1166 = smul.addr %s1165, 8
      %s1167 = scalar_lea.vmem %s6, %s1166
      // Predicated region
      $region45: #{rfda_forward.24} parent=43 // pred_check
        %p1168 = pneg %p166
      $region46: #{rfda_forward.24} parent=43 // pred_check_branch
        %1170 = sbr.rel (%p1168) target = $region48
      $region47: #{rfda_forward.24} parent=43 // pred_region
        _
      $region48: #{rfda_forward.24} parent=43 // pred_fallthru
        _
    $region44: #{rfda_forward.24} parent=5 // pred_fallthru
      _
    %p1171 = scmp.le.s32.totalorder 2, %s12
    // Predicated region
    $region49: #{rfda_forward.24} parent=5 // pred_check
      %p1172 = pneg %p1171
    $region50: #{rfda_forward.24} parent=5 // pred_check_branch
      %1174 = sbr.rel (%p1172) target = $region52
    $region51: #{rfda_forward.24} parent=5 // pred_region
      %s1175 = ssub.s32 %s12, 2
      // Predicated region
      $region53: #{rfda_forward.24} parent=51 // pred_check
        %p1176 = pneg %p172
      $region54: #{rfda_forward.24} parent=51 // pred_check_branch
        %1178 = sbr.rel (%p1176) target = $region56
      $region55: #{rfda_forward.24} parent=51 // pred_region
        %p1179 = scmp.lt.s32.totalorder %s18, 1
        %s1180 = scalar_select %p1179, %s18, 1
        %s1181 = smul.addr %s1180, 72
        %s1182 = smul.addr %s1181, 8
        %s1183 = scalar_lea.vmem %s6, %s1182
      $region56: #{rfda_forward.24} parent=51 // pred_fallthru
        _
    $region52: #{rfda_forward.24} parent=5 // pred_fallthru
      _
  $region6: #{rfda_forward.24} parent=0 // loop_footer
    %s16 = sadd.s32 1, %s12
  $region7: #{rfda_forward.24} parent=0 // loop_footer_branch
    %11 = sbr.rel target = $region3
  $region8: #{rfda_forward.24} parent=0 // loop_exit
    _

// kernel: rfda_forward.25
$region0: #{rfda_forward.25}
  #allocation0 [shape = 'u32[]', space=smem, size = 0x4, offset = 0x4, fixed_abs, tag = 'smem constant byte address 0x4 - core index']
  #allocation1 [shape = 'u32[72,128]{1,0:T(1,128)}', space=vmem, size = 0x9000, scoped, tag = 'internal scratch']
  %s0 = inlined_call_operand.vmem [shape: bf16[2,63,256], index: 0, kind: input, shape index: {}]
  %s1 = inlined_call_operand.vmem [shape: bf16[8,63], index: 1, kind: input, shape index: {}]
  %s2 = inlined_call_operand.vmem [shape: f32[8,1], index: 2, kind: input, shape index: {}]
  %s3 = inlined_call_operand.vmem [shape: bf16[2,8,256], index: 3, kind: output, shape index: {}]
  %s4 = sld [smem:[#allocation0]]
  $region45: #{rfda_forward.25} parent=0
    _
  %s6 = ssub.s32 1, %s4
  %s7 = scalar_select 0, %s6, %s4
  loop: start=0, step=1, limit=4
  $region2: #{rfda_forward.25} parent=0 // loop_pre_header
    _
  $region3: #{rfda_forward.25} parent=0 // loop_header
    %s9 = sphi 0, %s13
    %p10 = scmp.ge.s32.totalorder %s9, 4
    %s19 = sphi 0, %s21
    %s22 = sphi 0, %s19
    %s23 = sphi 0, %s22
    %s39 = sphi 0, %s23
    %s43 = sphi 0, %s43
    %s45 = sphi 0, %s43
    %s46 = sphi 0, %s45
    %s60 = sphi 0, %s46
    %s64 = sphi 0, %s64
    %s66 = sphi 0, %s64
    %s67 = sphi 0, %s66
    %s81 = sphi 0, %s67
    %s87 = sphi 0, %s89
    %s90 = sphi 0, %s87
    %s91 = sphi 0, %s90
    %s107 = sphi 0, %s91
  $region4: #{rfda_forward.25} parent=0 // loop_header_branch
    %12 = sbr.rel (%p10) target = $region8
  $region5: #{rfda_forward.25} parent=0 // loop_body
    %s14 = ssub.s32 %s9, 1
    %s15 = ssub.s32 %s9, 2
    %s16 = sadd.s32 %s9, 1
    %s17 = ssub.s32 %s9, %s16
    %p18 = scmp.eq.s32.totalorder %s17, 0
    %s20 = sadd.s32 %s19, 1
    %s21 = scalar_select %p18, %s19, %s20
    %p24 = pneg %p18
    %p25 = scmp.eq.s32.totalorder %s9, 1
    %p26 = por %p24, %p25
    %p27 = scmp.ne.s32.totalorder %s19, %s22
    %p28 = scmp.eq.s32.totalorder %s9, 0
    %p29 = por %p27, %p28
    %p30 = scmp.ne.s32.totalorder %s19, %s22
    %p31 = scmp.eq.s32.totalorder %s14, 1
    %p32 = por %p30, %p31
    %p33 = scmp.ne.s32.totalorder %s22, %s23
    %p34 = scmp.eq.s32.totalorder %s14, 0
    %p35 = por %p33, %p34
    %p36 = scmp.ne.s32.totalorder %s22, %s23
    %p37 = scmp.eq.s32.totalorder %s15, 1
    %p38 = por %p36, %p37
    %p40 = scmp.ne.s32.totalorder %s23, %s39
    %p41 = scmp.eq.s32.totalorder %s15, 0
    %p42 = por %p40, %p41
    %s44 = sadd.s32 %s43, 1
    %p47 = scmp.eq.s32.totalorder %s9, 1
    %p48 = scmp.ne.s32.totalorder %s43, %s45
    %p49 = scmp.eq.s32.totalorder %s9, 0
    %p50 = por %p48, %p49
    %p51 = scmp.ne.s32.totalorder %s43, %s45
    %p52 = scmp.eq.s32.totalorder %s14, 1
    %p53 = por %p51, %p52
    %p54 = scmp.ne.s32.totalorder %s45, %s46
    %p55 = scmp.eq.s32.totalorder %s14, 0
    %p56 = por %p54, %p55
    %p57 = scmp.ne.s32.totalorder %s45, %s46
    %p58 = scmp.eq.s32.totalorder %s15, 1
    %p59 = por %p57, %p58
    %p61 = scmp.ne.s32.totalorder %s46, %s60
    %p62 = scmp.eq.s32.totalorder %s15, 0
    %p63 = por %p61, %p62
    %s65 = sadd.s32 %s64, 1
    %p68 = scmp.eq.s32.totalorder %s9, 1
    %p69 = scmp.ne.s32.totalorder %s64, %s66
    %p70 = scmp.eq.s32.totalorder %s9, 0
    %p71 = por %p69, %p70
    %p72 = scmp.ne.s32.totalorder %s64, %s66
    %p73 = scmp.eq.s32.totalorder %s14, 1
    %p74 = por %p72, %p73
    %p75 = scmp.ne.s32.totalorder %s66, %s67
    %p76 = scmp.eq.s32.totalorder %s14, 0
    %p77 = por %p75, %p76
    %p78 = scmp.ne.s32.totalorder %s66, %s67
    %p79 = scmp.eq.s32.totalorder %s15, 1
    %p80 = por %p78, %p79
    %p82 = scmp.ne.s32.totalorder %s67, %s81
    %p83 = scmp.eq.s32.totalorder %s15, 0
    %p84 = por %p82, %p83
    %s85 = ssub.s32 %s9, %s16
    %p86 = scmp.eq.s32.totalorder %s85, 0
    %s88 = sadd.s32 %s87, 1
    %s89 = scalar_select %p86, %s87, %s88
    %p92 = pneg %p86
    %p93 = scmp.eq.s32.totalorder %s9, 1
    %p94 = por %p92, %p93
    %p95 = scmp.ne.s32.totalorder %s87, %s90
    %p96 = scmp.eq.s32.totalorder %s9, 0
    %p97 = por %p95, %p96
    %p98 = scmp.ne.s32.totalorder %s87, %s90
    %p99 = scmp.eq.s32.totalorder %s14, 1
    %p100 = por %p98, %p99
    %p101 = scmp.ne.s32.totalorder %s90, %s91
    %p102 = scmp.eq.s32.totalorder %s14, 0
    %p103 = por %p101, %p102
    %p104 = scmp.ne.s32.totalorder %s90, %s91
    %p105 = scmp.eq.s32.totalorder %s15, 1
    %p106 = por %p104, %p105
    %p108 = scmp.ne.s32.totalorder %s91, %s107
    %p109 = scmp.eq.s32.totalorder %s15, 0
    %p110 = por %p108, %p109
    %p111 = scmp.le.s32.totalorder 1, %s9
    %p112 = scmp.lt.s32.totalorder %s9, 3
    %p113 = pnand %p111, %p112
    %p114 = pneg %p113
    // Predicated region
    $region9: #{rfda_forward.25} parent=5 // pred_check
      _
    $region10: #{rfda_forward.25} parent=5 // pred_check_branch
      %116 = sbr.rel (%p113) target = $region12
    $region11: #{rfda_forward.25} parent=5 // pred_region
      %s117 = ssub.s32 %s9, 1
      // Predicated region
      $region13: #{rfda_forward.25} parent=11 // pred_check
        %p118 = pneg %p56
      $region14: #{rfda_forward.25} parent=11 // pred_check_branch
        %120 = sbr.rel (%p118) target = $region16
      $region15: #{rfda_forward.25} parent=11 // pred_region
        _
      $region16: #{rfda_forward.25} parent=11 // pred_fallthru
        _
      // Predicated region
      $region17: #{rfda_forward.25} parent=11 // pred_check
        %p121 = pneg %p77
      $region18: #{rfda_forward.25} parent=11 // pred_check_branch
        %123 = sbr.rel (%p121) target = $region20
      $region19: #{rfda_forward.25} parent=11 // pred_region
        _
      $region20: #{rfda_forward.25} parent=11 // pred_fallthru
        _
    $region12: #{rfda_forward.25} parent=5 // pred_fallthru
      _
    %p124 = scmp.lt.s32.totalorder %s9, 2
    // Predicated region
    $region21: #{rfda_forward.25} parent=5 // pred_check
      %p125 = pneg %p124
    $region22: #{rfda_forward.25} parent=5 // pred_check_branch
      %127 = sbr.rel (%p125) target = $region24
    $region23: #{rfda_forward.25} parent=5 // pred_region
      // Predicated region
      $region25: #{rfda_forward.25} parent=23 // pred_check
        %p128 = pneg %p29
      $region26: #{rfda_forward.25} parent=23 // pred_check_branch
        %130 = sbr.rel (%p128) target = $region28
      $region27: #{rfda_forward.25} parent=23 // pred_region
        %p131 = scmp.lt.s32.totalorder %s9, 1
        %s132 = scalar_select %p131, %s9, 1
        %s133 = smul.addr %s132, 16
        %s134 = smul.addr %s133, 4
        %s135 = scalar_lea.vmem %s0, %s134
      $region28: #{rfda_forward.25} parent=23 // pred_fallthru
        _
    $region24: #{rfda_forward.25} parent=5 // pred_fallthru
      _
    %p136 = scmp.le.s32.totalorder 1, %s9
    %p137 = scmp.lt.s32.totalorder %s9, 3
    %p138 = pnand %p136, %p137
    %p139 = pneg %p138
    // Predicated region
    $region29: #{rfda_forward.25} parent=5 // pred_check
      _
    $region30: #{rfda_forward.25} parent=5 // pred_check_branch
      %141 = sbr.rel (%p138) target = $region32
    $region31: #{rfda_forward.25} parent=5 // pred_region
      %s142 = ssub.s32 %s9, 1
      %p143 = scmp.lt.s32.totalorder %s14, 1
      %s144 = scalar_select %p143, %s14, 1
      %s145 = smul.addr %s144, 16
      %s146 = smul.addr %s145, 4
      %s147 = scalar_lea.vmem %s0, %s146
      %p148 = pneg %p35
      %p149 = pneg %p32
      %p150 = pneg %p56
      %p151 = pneg %p53
      %p152 = pneg %p77
      %p153 = pneg %p74
      %p154 = pneg %p103
      %p155 = pneg %p100
      %p156 = scmp.lt.s32.totalorder %s14, 1
      %s157 = scalar_select %p156, %s14, 1
      %s158 = smul.addr %s157, 2
      %s159 = smul.addr %s158, 4
      %s160 = scalar_lea.vmem %s3, %s159
      %p161 = scmp.lt.s32.totalorder %s14, 1
      %s162 = scalar_select %p161, %s14, 1
      %s163 = smul.addr %s162, 16
      %s164 = smul.addr %s163, 4
      %s165 = scalar_lea.vmem %s0, %s164
      %p166 = scmp.lt.s32.totalorder %s14, 1
      %s167 = scalar_select %p166, %s14, 1
      %s168 = smul.addr %s167, 2
      %s169 = smul.addr %s168, 4
      %s170 = scalar_lea.vmem %s3, %s169
      %v172 = vld [vmem:[%s165] sm:$0xff]
      %v173 = vld [vmem:[%s165 + $0x8] sm:$0xff]
      %v174 = vld [vmem:[%s165 + $0x10] sm:$0xff]
      %v175 = vld [vmem:[%s165 + $0x18] sm:$0xff]
      %v176 = vld [vmem:[%s165 + $0x20] sm:$0xff]
      %v177 = vld [vmem:[%s165 + $0x28] sm:$0xff]
      %v178 = vld [vmem:[%s165 + $0x30] sm:$0xff]
      %v179 = vld [vmem:[%s165 + $0x38] sm:$0xff]
      %v180 = vld [vmem:[%s1] sm:$0xf]
      %v181 = vld [vmem:[%s2] sm:$0xff]
      %183 = vset.pattern.permute.xlu0 0
      %184 = vperm.xlu0 %183, %v181
      %v185 = vpop.permute.xlu0 %184
      %v195 = vunpack.c.l.b16 %v172
      %v196 = vunpack.c.h.b16 %v172
      %v197 = vunpack.c.l.b16 %v173
      %v198 = vunpack.c.h.b16 %v173
      %v199 = vunpack.c.l.b16 %v174
      %v200 = vunpack.c.h.b16 %v174
      %v201 = vunpack.c.l.b16 %v175
      %v202 = vunpack.c.h.b16 %v175
      %v203 = vunpack.c.l.b16 %v176
      %v204 = vunpack.c.h.b16 %v176
      %v205 = vunpack.c.l.b16 %v177
      %v206 = vunpack.c.h.b16 %v177
      %v207 = vunpack.c.l.b16 %v178
      %v208 = vunpack.c.h.b16 %v178
      %v209 = vunpack.c.l.b16 %v179
      %v210 = vunpack.c.h.b16 %v179
      %v211 = vpack.c.b16 %v197, %v195
      %v212 = vpack.c.b16 %v198, %v196
      %v213 = vpack.c.b16 %v201, %v199
      %v214 = vpack.c.b16 %v202, %v200
      %v215 = vpack.c.b16 %v205, %v203
      %v216 = vpack.c.b16 %v206, %v204
      %v217 = vpack.c.b16 %v209, %v207
      %v218 = vpack.c.b16 %v210, %v208
      %vm225 = vcmask 515072
      %v227 = vsel %vm225, %v180, 0
      %vm229 = vcmask 1046528
      %vm230 = vcmask 1047552
      %v231 = vsel %vm229, 4294967295, 65535
      %v232 = vsel %vm230, %v231, 0
      %v234 = vand.u32 %v217, %v232
      %v237 = vand.u32 %v218, %v232
      %239 = vmatpush.bf16.msra.mxu0 0
      %240 = vmatpush.bf16.msra.mxu0 0
      %241 = vmatpush.bf16.msra.mxu0 0
      %242 = vmatpush.bf16.msra.mxu0 0
      %243 = vmatpush.bf16.msra.mxu0 %v234
      %244 = vmatpush.bf16.msra.mxu0 %v215
      %245 = vmatpush.bf16.msra.mxu0 %v213
      %246 = vmatpush.bf16.msra.mxu0 %v211
      %247 = vmatmul.bf16.gmra.mxu0 %v227
      %v248 = vpop.f32.mrf.mxu0
      %v249 = vadd.f32 %v185, %v248
      %v250 = vpop.f32.mrf.mxu0
      %251 = vdwg.mxu0
      %252 = vmatpush.bf16.msra.mxu0 0
      %253 = vmatpush.bf16.msra.mxu0 0
      %254 = vmatpush.bf16.msra.mxu0 0
      %255 = vmatpush.bf16.msra.mxu0 0
      %256 = vmatpush.bf16.msra.mxu0 %v237
      %257 = vmatpush.bf16.msra.mxu0 %v216
      %258 = vmatpush.bf16.msra.mxu0 %v214
      %259 = vmatpush.bf16.msra.mxu0 %v212
      %260 = vmatmul.bf16.gmra.mxu0 %v227
      %v261 = vpop.f32.mrf.mxu0
      %v262 = vadd.f32 %v185, %v261
      %v263 = vpop.f32.mrf.mxu0
      %264 = vdwg.mxu0
      %v265 = vmax.f32 %v249, 0.0
      %v266 = vmax.f32 %v262, 0.0
      %v267 = vpack.c.bf16 %v266, %v265
      %268 = vst [vmem:[%s170] sm:$0xff] %v267
      %p269 = scmp.lt.s32.totalorder %s14, 1
      %s270 = scalar_select %p269, %s14, 1
      %s271 = smul.addr %s270, 2
      %s272 = smul.addr %s271, 4
      %s273 = scalar_lea.vmem %s3, %s272
      // Predicated region
      $region33: #{rfda_forward.25} parent=31 // pred_check
        %p274 = pneg %p100
      $region34: #{rfda_forward.25} parent=31 // pred_check_branch
        %276 = sbr.rel (%p274) target = $region36
      $region35: #{rfda_forward.25} parent=31 // pred_region
        _
      $region36: #{rfda_forward.25} parent=31 // pred_fallthru
        _
    $region32: #{rfda_forward.25} parent=5 // pred_fallthru
      _
    %p277 = scmp.le.s32.totalorder 2, %s9
    // Predicated region
    $region37: #{rfda_forward.25} parent=5 // pred_check
      %p278 = pneg %p277
    $region38: #{rfda_forward.25} parent=5 // pred_check_branch
      %280 = sbr.rel (%p278) target = $region40
    $region39: #{rfda_forward.25} parent=5 // pred_region
      %s281 = ssub.s32 %s9, 2
      // Predicated region
      $region41: #{rfda_forward.25} parent=39 // pred_check
        %p282 = pneg %p106
      $region42: #{rfda_forward.25} parent=39 // pred_check_branch
        %284 = sbr.rel (%p282) target = $region44
      $region43: #{rfda_forward.25} parent=39 // pred_region
        %p285 = scmp.lt.s32.totalorder %s15, 1
        %s286 = scalar_select %p285, %s15, 1
        %s287 = smul.addr %s286, 2
        %s288 = smul.addr %s287, 4
        %s289 = scalar_lea.vmem %s3, %s288
      $region44: #{rfda_forward.25} parent=39 // pred_fallthru
        _
    $region40: #{rfda_forward.25} parent=5 // pred_fallthru
      _
  $region6: #{rfda_forward.25} parent=0 // loop_footer
    %s13 = sadd.s32 1, %s9
  $region7: #{rfda_forward.25} parent=0 // loop_footer_branch
    %8 = sbr.rel target = $region3
  $region8: #{rfda_forward.25} parent=0 // loop_exit
    _

// kernel: rfda_forward.26
$region0: #{rfda_forward.26}
  #allocation0 [shape = 'u32[]', space=smem, size = 0x4, offset = 0x4, fixed_abs, tag = 'smem constant byte address 0x4 - core index']
  #allocation1 [shape = 'u32[72,128]{1,0:T(1,128)}', space=vmem, size = 0x9000, scoped, tag = 'internal scratch']
  %s0 = inlined_call_operand.vmem [shape: bf16[2,16,324], index: 0, kind: input, shape index: {}]
  %s1 = inlined_call_operand.vmem [shape: bf16[8,144], index: 1, kind: input, shape index: {}]
  %s2 = inlined_call_operand.vmem [shape: f32[8,1], index: 2, kind: input, shape index: {}]
  %s3 = inlined_call_operand.vmem [shape: bf16[2,8,288], index: 3, kind: output, shape index: {}]
  %s4 = sld [smem:[#allocation0]]
  $region45: #{rfda_forward.26} parent=0
    _
  %s6 = ssub.s32 1, %s4
  %s7 = scalar_select 0, %s6, %s4
  loop: start=0, step=1, limit=4
  $region2: #{rfda_forward.26} parent=0 // loop_pre_header
    _
  $region3: #{rfda_forward.26} parent=0 // loop_header
    %s9 = sphi 0, %s13
    %p10 = scmp.ge.s32.totalorder %s9, 4
    %s19 = sphi 0, %s21
    %s22 = sphi 0, %s19
    %s23 = sphi 0, %s22
    %s39 = sphi 0, %s23
    %s43 = sphi 0, %s43
    %s45 = sphi 0, %s43
    %s46 = sphi 0, %s45
    %s60 = sphi 0, %s46
    %s64 = sphi 0, %s64
    %s66 = sphi 0, %s64
    %s67 = sphi 0, %s66
    %s81 = sphi 0, %s67
    %s87 = sphi 0, %s89
    %s90 = sphi 0, %s87
    %s91 = sphi 0, %s90
    %s107 = sphi 0, %s91
  $region4: #{rfda_forward.26} parent=0 // loop_header_branch
    %12 = sbr.rel (%p10) target = $region8
  $region5: #{rfda_forward.26} parent=0 // loop_body
    %s14 = ssub.s32 %s9, 1
    %s15 = ssub.s32 %s9, 2
    %s16 = sadd.s32 %s9, 1
    %s17 = ssub.s32 %s9, %s16
    %p18 = scmp.eq.s32.totalorder %s17, 0
    %s20 = sadd.s32 %s19, 1
    %s21 = scalar_select %p18, %s19, %s20
    %p24 = pneg %p18
    %p25 = scmp.eq.s32.totalorder %s9, 1
    %p26 = por %p24, %p25
    %p27 = scmp.ne.s32.totalorder %s19, %s22
    %p28 = scmp.eq.s32.totalorder %s9, 0
    %p29 = por %p27, %p28
    %p30 = scmp.ne.s32.totalorder %s19, %s22
    %p31 = scmp.eq.s32.totalorder %s14, 1
    %p32 = por %p30, %p31
    %p33 = scmp.ne.s32.totalorder %s22, %s23
    %p34 = scmp.eq.s32.totalorder %s14, 0
    %p35 = por %p33, %p34
    %p36 = scmp.ne.s32.totalorder %s22, %s23
    %p37 = scmp.eq.s32.totalorder %s15, 1
    %p38 = por %p36, %p37
    %p40 = scmp.ne.s32.totalorder %s23, %s39
    %p41 = scmp.eq.s32.totalorder %s15, 0
    %p42 = por %p40, %p41
    %s44 = sadd.s32 %s43, 1
    %p47 = scmp.eq.s32.totalorder %s9, 1
    %p48 = scmp.ne.s32.totalorder %s43, %s45
    %p49 = scmp.eq.s32.totalorder %s9, 0
    %p50 = por %p48, %p49
    %p51 = scmp.ne.s32.totalorder %s43, %s45
    %p52 = scmp.eq.s32.totalorder %s14, 1
    %p53 = por %p51, %p52
    %p54 = scmp.ne.s32.totalorder %s45, %s46
    %p55 = scmp.eq.s32.totalorder %s14, 0
    %p56 = por %p54, %p55
    %p57 = scmp.ne.s32.totalorder %s45, %s46
    %p58 = scmp.eq.s32.totalorder %s15, 1
    %p59 = por %p57, %p58
    %p61 = scmp.ne.s32.totalorder %s46, %s60
    %p62 = scmp.eq.s32.totalorder %s15, 0
    %p63 = por %p61, %p62
    %s65 = sadd.s32 %s64, 1
    %p68 = scmp.eq.s32.totalorder %s9, 1
    %p69 = scmp.ne.s32.totalorder %s64, %s66
    %p70 = scmp.eq.s32.totalorder %s9, 0
    %p71 = por %p69, %p70
    %p72 = scmp.ne.s32.totalorder %s64, %s66
    %p73 = scmp.eq.s32.totalorder %s14, 1
    %p74 = por %p72, %p73
    %p75 = scmp.ne.s32.totalorder %s66, %s67
    %p76 = scmp.eq.s32.totalorder %s14, 0
    %p77 = por %p75, %p76
    %p78 = scmp.ne.s32.totalorder %s66, %s67
    %p79 = scmp.eq.s32.totalorder %s15, 1
    %p80 = por %p78, %p79
    %p82 = scmp.ne.s32.totalorder %s67, %s81
    %p83 = scmp.eq.s32.totalorder %s15, 0
    %p84 = por %p82, %p83
    %s85 = ssub.s32 %s9, %s16
    %p86 = scmp.eq.s32.totalorder %s85, 0
    %s88 = sadd.s32 %s87, 1
    %s89 = scalar_select %p86, %s87, %s88
    %p92 = pneg %p86
    %p93 = scmp.eq.s32.totalorder %s9, 1
    %p94 = por %p92, %p93
    %p95 = scmp.ne.s32.totalorder %s87, %s90
    %p96 = scmp.eq.s32.totalorder %s9, 0
    %p97 = por %p95, %p96
    %p98 = scmp.ne.s32.totalorder %s87, %s90
    %p99 = scmp.eq.s32.totalorder %s14, 1
    %p100 = por %p98, %p99
    %p101 = scmp.ne.s32.totalorder %s90, %s91
    %p102 = scmp.eq.s32.totalorder %s14, 0
    %p103 = por %p101, %p102
    %p104 = scmp.ne.s32.totalorder %s90, %s91
    %p105 = scmp.eq.s32.totalorder %s15, 1
    %p106 = por %p104, %p105
    %p108 = scmp.ne.s32.totalorder %s91, %s107
    %p109 = scmp.eq.s32.totalorder %s15, 0
    %p110 = por %p108, %p109
    %p111 = scmp.le.s32.totalorder 1, %s9
    %p112 = scmp.lt.s32.totalorder %s9, 3
    %p113 = pnand %p111, %p112
    %p114 = pneg %p113
    // Predicated region
    $region9: #{rfda_forward.26} parent=5 // pred_check
      _
    $region10: #{rfda_forward.26} parent=5 // pred_check_branch
      %116 = sbr.rel (%p113) target = $region12
    $region11: #{rfda_forward.26} parent=5 // pred_region
      %s117 = ssub.s32 %s9, 1
      // Predicated region
      $region13: #{rfda_forward.26} parent=11 // pred_check
        %p118 = pneg %p56
      $region14: #{rfda_forward.26} parent=11 // pred_check_branch
        %120 = sbr.rel (%p118) target = $region16
      $region15: #{rfda_forward.26} parent=11 // pred_region
        _
      $region16: #{rfda_forward.26} parent=11 // pred_fallthru
        _
      // Predicated region
      $region17: #{rfda_forward.26} parent=11 // pred_check
        %p121 = pneg %p77
      $region18: #{rfda_forward.26} parent=11 // pred_check_branch
        %123 = sbr.rel (%p121) target = $region20
      $region19: #{rfda_forward.26} parent=11 // pred_region
        _
      $region20: #{rfda_forward.26} parent=11 // pred_fallthru
        _
    $region12: #{rfda_forward.26} parent=5 // pred_fallthru
      _
    %p124 = scmp.lt.s32.totalorder %s9, 2
    // Predicated region
    $region21: #{rfda_forward.26} parent=5 // pred_check
      %p125 = pneg %p124
    $region22: #{rfda_forward.26} parent=5 // pred_check_branch
      %127 = sbr.rel (%p125) target = $region24
    $region23: #{rfda_forward.26} parent=5 // pred_region
      // Predicated region
      $region25: #{rfda_forward.26} parent=23 // pred_check
        %p128 = pneg %p29
      $region26: #{rfda_forward.26} parent=23 // pred_check_branch
        %130 = sbr.rel (%p128) target = $region28
      $region27: #{rfda_forward.26} parent=23 // pred_region
        %p131 = scmp.lt.s32.totalorder %s9, 1
        %s132 = scalar_select %p131, %s9, 1
        %s133 = smul.addr %s132, 6
        %s134 = smul.addr %s133, 4
        %s135 = scalar_lea.vmem %s0, %s134
      $region28: #{rfda_forward.26} parent=23 // pred_fallthru
        _
    $region24: #{rfda_forward.26} parent=5 // pred_fallthru
      _
    %p136 = scmp.le.s32.totalorder 1, %s9
    %p137 = scmp.lt.s32.totalorder %s9, 3
    %p138 = pnand %p136, %p137
    %p139 = pneg %p138
    // Predicated region
    $region29: #{rfda_forward.26} parent=5 // pred_check
      _
    $region30: #{rfda_forward.26} parent=5 // pred_check_branch
      %141 = sbr.rel (%p138) target = $region32
    $region31: #{rfda_forward.26} parent=5 // pred_region
      %s142 = ssub.s32 %s9, 1
      %p143 = scmp.lt.s32.totalorder %s14, 1
      %s144 = scalar_select %p143, %s14, 1
      %s145 = smul.addr %s144, 6
      %s146 = smul.addr %s145, 4
      %s147 = scalar_lea.vmem %s0, %s146
      %p148 = pneg %p35
      %p149 = pneg %p32
      %p150 = pneg %p56
      %p151 = pneg %p53
      %p152 = pneg %p77
      %p153 = pneg %p74
      %p154 = pneg %p103
      %p155 = pneg %p100
      %p156 = scmp.lt.s32.totalorder %s14, 1
      %s157 = scalar_select %p156, %s14, 1
      %s158 = smul.addr %s157, 3
      %s159 = smul.addr %s158, 4
      %s160 = scalar_lea.vmem %s3, %s159
      %p161 = scmp.lt.s32.totalorder %s14, 1
      %s162 = scalar_select %p161, %s14, 1
      %s163 = smul.addr %s162, 6
      %s164 = smul.addr %s163, 4
      %s165 = scalar_lea.vmem %s0, %s164
      %p166 = scmp.lt.s32.totalorder %s14, 1
      %s167 = scalar_select %p166, %s14, 1
      %s168 = smul.addr %s167, 3
      %s169 = smul.addr %s168, 4
      %s170 = scalar_lea.vmem %s3, %s169
      %v172 = vld [vmem:[%s165] sm:$0xff]
      %v173 = vld [vmem:[%s165 + $0x8] sm:$0xf]
      %v174 = vld [vmem:[%s165 + $0xc] sm:$0xff]
      %v175 = vld [vmem:[%s165 + $0x14] sm:$0xf]
      %v180 = vunpack.c.l.b16 %v172
      %v181 = vunpack.c.h.b16 %v172
      %v182 = vunpack.c.l.b16 %v173
      %v183 = vunpack.c.l.b16 %v174
      %v184 = vunpack.c.h.b16 %v174
      %v185 = vunpack.c.l.b16 %v175
      %v186 = vpack.c.b16 %v183, %v180
      %v187 = vpack.c.b16 %v184, %v181
      %v188 = vpack.c.b16 %v185, %v182
      %vm191 = vcmask 556032
      %v194 = vsel %vm191, %v188, 0
      %v196 = vld [vmem:[%s1] sm:$0xff]
      %198 = vrot.lane.b32.xlu0 %v186, 127
      %v199 = vpop.permute.xlu0 %198
      %200 = vrot.lane.b32.xlu0 %v187, 127
      %v201 = vpop.permute.xlu0 %200
      %202 = vrot.lane.b32.xlu0 %v194, 127
      %v203 = vpop.permute.xlu0 %202
      %vm204 = vcmask 1039360
      %v205 = vsel %vm204, %v199, %v201
      %v206 = vsel %vm204, %v201, %v203
      %210 = vrot.lane.b32.xlu0 %v186, 126
      %v211 = vpop.permute.xlu0 %210
      %212 = vrot.lane.b32.xlu0 %v187, 126
      %v213 = vpop.permute.xlu0 %212
      %214 = vrot.lane.b32.xlu0 %v194, 126
      %v215 = vpop.permute.xlu0 %214
      %vm216 = vcmask 1031168
      %v217 = vsel %vm216, %v211, %v213
      %v218 = vsel %vm216, %v213, %v215
      %222 = vrot.lane.b32.xlu0 %v186, 110
      %v223 = vpop.permute.xlu0 %222
      %224 = vrot.lane.b32.xlu0 %v187, 110
      %v225 = vpop.permute.xlu0 %224
      %226 = vrot.lane.b32.xlu0 %v194, 110
      %v227 = vpop.permute.xlu0 %226
      %vm228 = vcmask 900096
      %v229 = vsel %vm228, %v223, %v225
      %v230 = vsel %vm228, %v225, %v227
      %234 = vrot.lane.b32.xlu0 %v186, 109
      %v235 = vpop.permute.xlu0 %234
      %236 = vrot.lane.b32.xlu0 %v187, 109
      %v237 = vpop.permute.xlu0 %236
      %238 = vrot.lane.b32.xlu0 %v194, 109
      %v239 = vpop.permute.xlu0 %238
      %vm240 = vcmask 891904
      %v241 = vsel %vm240, %v235, %v237
      %v242 = vsel %vm240, %v237, %v239
      %243 = vrot.lane.b32.xlu0 %v186, 108
      %v244 = vpop.permute.xlu0 %243
      %245 = vrot.lane.b32.xlu0 %v187, 108
      %v246 = vpop.permute.xlu0 %245
      %247 = vrot.lane.b32.xlu0 %v194, 108
      %v248 = vpop.permute.xlu0 %247
      %vm249 = vcmask 883712
      %v250 = vsel %vm249, %v244, %v246
      %v251 = vsel %vm249, %v246, %v248
      %252 = vrot.lane.b32.xlu0 %v186, 92
      %v253 = vpop.permute.xlu0 %252
      %254 = vrot.lane.b32.xlu0 %v187, 92
      %v255 = vpop.permute.xlu0 %254
      %256 = vrot.lane.b32.xlu0 %v194, 92
      %v257 = vpop.permute.xlu0 %256
      %vm258 = vcmask 752640
      %v259 = vsel %vm258, %v253, %v255
      %v260 = vsel %vm258, %v255, %v257
      %261 = vrot.lane.b32.xlu0 %v186, 91
      %v262 = vpop.permute.xlu0 %261
      %263 = vrot.lane.b32.xlu0 %v187, 91
      %v264 = vpop.permute.xlu0 %263
      %265 = vrot.lane.b32.xlu0 %v194, 91
      %v266 = vpop.permute.xlu0 %265
      %vm267 = vcmask 744448
      %v268 = vsel %vm267, %v262, %v264
      %v269 = vsel %vm267, %v264, %v266
      %270 = vrot.lane.b32.xlu0 %v186, 90
      %v271 = vpop.permute.xlu0 %270
      %272 = vrot.lane.b32.xlu0 %v187, 90
      %v273 = vpop.permute.xlu0 %272
      %274 = vrot.lane.b32.xlu0 %v194, 90
      %v275 = vpop.permute.xlu0 %274
      %vm276 = vcmask 736256
      %v277 = vsel %vm276, %v271, %v273
      %v278 = vsel %vm276, %v273, %v275
      %v280 = vunpack.c.l.b16 %v196
      %v281 = vunpack.c.h.b16 %v196
      %v282 = vpack.c.b16 %v280, %v280
      %v283 = vpack.c.b16 %v281, %v281
      %284 = vrot.lane.b32.xlu0 %v282, 56
      %v285 = vpop.permute.xlu0 %284
      %286 = vrot.lane.b32.xlu0 %v283, 56
      %v287 = vpop.permute.xlu0 %286
      %vm288 = vcmask 457728
      %v289 = vsel %vm288, %v285, %v287
      %vm290 = vcmask 1043456
      %v291 = vrot.slane %v241, 4
      %v292 = vrot.slane %v250, 4
      %v293 = vsel %vm290, %v291, %v292
      %v294 = vrot.slane %v242, 4
      %v295 = vrot.slane %v251, 4
      %v296 = vsel %vm290, %v294, %v295
      %v297 = vrot.slane %v239, 4
      %v298 = vrot.slane %v248, 4
      %v299 = vsel %vm290, %v297, %v298
      %v300 = vrot.slane %v259, 4
      %v301 = vsel %vm290, %v292, %v300
      %v302 = vrot.slane %v260, 4
      %v303 = vsel %vm290, %v295, %v302
      %v304 = vrot.slane %v257, 4
      %v305 = vsel %vm290, %v298, %v304
      %v306 = vrot.slane %v268, 4
      %v307 = vsel %vm290, %v300, %v306
      %v308 = vrot.slane %v269, 4
      %v309 = vsel %vm290, %v302, %v308
      %v310 = vrot.slane %v266, 4
      %v311 = vsel %vm290, %v304, %v310
      %v312 = vrot.slane %v277, 4
      %v313 = vsel %vm290, %v306, %v312
      %v314 = vrot.slane %v278, 4
      %v315 = vsel %vm290, %v308, %v314
      %v316 = vrot.slane %v275, 4
      %v317 = vsel %vm290, %v310, %v316
      %vm330 = vcmask 588800
      %v332 = vsel %vm330, %v289, 0
      %vm334 = vcmask 1043456
      %v336 = vsel %vm334, %v312, 0
      %v339 = vsel %vm334, %v314, 0
      %v342 = vsel %vm334, %v316, 0
      %344 = vmatpush.bf16.msra.mxu0 0
      %345 = vmatpush.bf16.msra.mxu0 0
      %346 = vmatpush.bf16.msra.mxu0 0
      %347 = vmatpush.bf16.msra.mxu0 %v336
      %348 = vmatpush.bf16.msra.mxu0 %v313
      %349 = vmatpush.bf16.msra.mxu0 %v307
      %350 = vmatpush.bf16.msra.mxu0 %v301
      %351 = vmatpush.bf16.msra.mxu0 %v293
      %352 = vmatmul.bf16.gmra.mxu0 %v332
      %v353 = vpop.f32.mrf.mxu0
      %v354 = vadd.f32 0.0, %v353
      %v355 = vpop.f32.mrf.mxu0
      %356 = vdwg.mxu0
      %357 = vmatpush.bf16.msra.mxu0 0
      %358 = vmatpush.bf16.msra.mxu0 0
      %359 = vmatpush.bf16.msra.mxu0 0
      %360 = vmatpush.bf16.msra.mxu0 %v339
      %361 = vmatpush.bf16.msra.mxu0 %v315
      %362 = vmatpush.bf16.msra.mxu0 %v309
      %363 = vmatpush.bf16.msra.mxu0 %v303
      %364 = vmatpush.bf16.msra.mxu0 %v296
      %365 = vmatmul.bf16.gmra.mxu0 %v332
      %v366 = vpop.f32.mrf.mxu0
      %v367 = vadd.f32 0.0, %v366
      %v368 = vpop.f32.mrf.mxu0
      %369 = vdwg.mxu0
      %370 = vmatpush.bf16.msra.mxu0 0
      %371 = vmatpush.bf16.msra.mxu0 0
      %372 = vmatpush.bf16.msra.mxu0 0
      %373 = vmatpush.bf16.msra.mxu0 %v342
      %374 = vmatpush.bf16.msra.mxu0 %v317
      %375 = vmatpush.bf16.msra.mxu0 %v311
      %376 = vmatpush.bf16.msra.mxu0 %v305
      %377 = vmatpush.bf16.msra.mxu0 %v299
      %378 = vmatmul.bf16.gmra.mxu0 %v332
      %v379 = vpop.f32.mrf.mxu0
      %v380 = vadd.f32 0.0, %v379
      %v381 = vpop.f32.mrf.mxu0
      %382 = vdwg.mxu0
      %v384 = vsel %vm330, %v196, 0
      %v387 = vsel %vm334, %v241, 0
      %v390 = vsel %vm334, %v242, 0
      %v393 = vsel %vm334, %v239, 0
      %395 = vmatpush.bf16.msra.mxu0 0
      %396 = vmatpush.bf16.msra.mxu0 0
      %397 = vmatpush.bf16.msra.mxu0 0
      %398 = vmatpush.bf16.msra.mxu0 %v387
      %399 = vmatpush.bf16.msra.mxu0 %v229
      %400 = vmatpush.bf16.msra.mxu0 %v217
      %401 = vmatpush.bf16.msra.mxu0 %v205
      %402 = vmatpush.bf16.msra.mxu0 %v186
      %403 = vmatmul.bf16.gmra.mxu0 %v384
      %v404 = vpop.f32.mrf.mxu0
      %v405 = vadd.f32 %v354, %v404
      %v406 = vpop.f32.mrf.mxu0
      %407 = vdwg.mxu0
      %408 = vmatpush.bf16.msra.mxu0 0
      %409 = vmatpush.bf16.msra.mxu0 0
      %410 = vmatpush.bf16.msra.mxu0 0
      %411 = vmatpush.bf16.msra.mxu0 %v390
      %412 = vmatpush.bf16.msra.mxu0 %v230
      %413 = vmatpush.bf16.msra.mxu0 %v218
      %414 = vmatpush.bf16.msra.mxu0 %v206
      %415 = vmatpush.bf16.msra.mxu0 %v187
      %416 = vmatmul.bf16.gmra.mxu0 %v384
      %v417 = vpop.f32.mrf.mxu0
      %v418 = vadd.f32 %v367, %v417
      %v419 = vpop.f32.mrf.mxu0
      %420 = vdwg.mxu0
      %421 = vmatpush.bf16.msra.mxu0 0
      %422 = vmatpush.bf16.msra.mxu0 0
      %423 = vmatpush.bf16.msra.mxu0 0
      %424 = vmatpush.bf16.msra.mxu0 %v393
      %425 = vmatpush.bf16.msra.mxu0 %v227
      %426 = vmatpush.bf16.msra.mxu0 %v215
      %427 = vmatpush.bf16.msra.mxu0 %v203
      %428 = vmatpush.bf16.msra.mxu0 %v194
      %429 = vmatmul.bf16.gmra.mxu0 %v384
      %v430 = vpop.f32.mrf.mxu0
      %v431 = vadd.f32 %v380, %v430
      %v432 = vpop.f32.mrf.mxu0
      %433 = vdwg.mxu0
      %v434 = vld [vmem:[%s2] sm:$0xff]
      %436 = vset.pattern.permute.xlu0 0
      %437 = vperm.xlu0 %436, %v434
      %v438 = vpop.permute.xlu0 %437
      %v440 = vadd.f32 %v405, %v438
      %v441 = vadd.f32 %v418, %v438
      %v442 = vadd.f32 %v431, %v438
      %v443 = vmax.f32 %v440, 0.0
      %v444 = vmax.f32 %v441, 0.0
      %v445 = vmax.f32 %v442, 0.0
      %v446 = vpack.c.bf16 %v444, %v443
      %v447 = vpack.c.bf16 %v445, %v445
      %448 = vst [vmem:[%s170] sm:$0xff] %v446
      %vm449 = vcmask 257024
      %450 = vst.msk [vmem:[%s170 + $0x8] sm:$0xf] %vm449, %v447
      %p451 = scmp.lt.s32.totalorder %s14, 1
      %s452 = scalar_select %p451, %s14, 1
      %s453 = smul.addr %s452, 3
      %s454 = smul.addr %s453, 4
      %s455 = scalar_lea.vmem %s3, %s454
      // Predicated region
      $region33: #{rfda_forward.26} parent=31 // pred_check
        %p456 = pneg %p100
      $region34: #{rfda_forward.26} parent=31 // pred_check_branch
        %458 = sbr.rel (%p456) target = $region36
      $region35: #{rfda_forward.26} parent=31 // pred_region
        _
      $region36: #{rfda_forward.26} parent=31 // pred_fallthru
        _
    $region32: #{rfda_forward.26} parent=5 // pred_fallthru
      _
    %p459 = scmp.le.s32.totalorder 2, %s9
    // Predicated region
    $region37: #{rfda_forward.26} parent=5 // pred_check
      %p460 = pneg %p459
    $region38: #{rfda_forward.26} parent=5 // pred_check_branch
      %462 = sbr.rel (%p460) target = $region40
    $region39: #{rfda_forward.26} parent=5 // pred_region
      %s463 = ssub.s32 %s9, 2
      // Predicated region
      $region41: #{rfda_forward.26} parent=39 // pred_check
        %p464 = pneg %p106
      $region42: #{rfda_forward.26} parent=39 // pred_check_branch
        %466 = sbr.rel (%p464) target = $region44
      $region43: #{rfda_forward.26} parent=39 // pred_region
        %p467 = scmp.lt.s32.totalorder %s15, 1
        %s468 = scalar_select %p467, %s15, 1
        %s469 = smul.addr %s468, 3
        %s470 = smul.addr %s469, 4
        %s471 = scalar_lea.vmem %s3, %s470
      $region44: #{rfda_forward.26} parent=39 // pred_fallthru
        _
    $region40: #{rfda_forward.26} parent=5 // pred_fallthru
      _
  $region6: #{rfda_forward.26} parent=0 // loop_footer
    %s13 = sadd.s32 1, %s9
  $region7: #{rfda_forward.26} parent=0 // loop_footer_branch
    %8 = sbr.rel target = $region3
  $region8: #{rfda_forward.26} parent=0 // loop_exit
    _

// kernel: rfda_forward.27
$region0: #{rfda_forward.27}
  #allocation0 [shape = 'u32[]', space=smem, size = 0x4, offset = 0x4, fixed_abs, tag = 'smem constant byte address 0x4 - core index']
  #allocation1 [shape = 'u32[72,128]{1,0:T(1,128)}', space=vmem, size = 0x9000, scoped, tag = 'internal scratch']
  %s0 = inlined_call_operand.vmem [shape: bf16[2,32,81], index: 0, kind: input, shape index: {}]
  %s1 = inlined_call_operand.vmem [shape: bf16[8,128], index: 1, kind: input, shape index: {}]
  %s2 = inlined_call_operand.vmem [shape: f32[8,1], index: 2, kind: input, shape index: {}]
  %s3 = inlined_call_operand.vmem [shape: bf16[2,8,72], index: 3, kind: output, shape index: {}]
  %s4 = sld [smem:[#allocation0]]
  $region45: #{rfda_forward.27} parent=0
    _
  %s6 = ssub.s32 1, %s4
  %s7 = scalar_select 0, %s6, %s4
  loop: start=0, step=1, limit=4
  $region2: #{rfda_forward.27} parent=0 // loop_pre_header
    _
  $region3: #{rfda_forward.27} parent=0 // loop_header
    %s9 = sphi 0, %s13
    %p10 = scmp.ge.s32.totalorder %s9, 4
    %s19 = sphi 0, %s21
    %s22 = sphi 0, %s19
    %s23 = sphi 0, %s22
    %s39 = sphi 0, %s23
    %s43 = sphi 0, %s43
    %s45 = sphi 0, %s43
    %s46 = sphi 0, %s45
    %s60 = sphi 0, %s46
    %s64 = sphi 0, %s64
    %s66 = sphi 0, %s64
    %s67 = sphi 0, %s66
    %s81 = sphi 0, %s67
    %s87 = sphi 0, %s89
    %s90 = sphi 0, %s87
    %s91 = sphi 0, %s90
    %s107 = sphi 0, %s91
  $region4: #{rfda_forward.27} parent=0 // loop_header_branch
    %12 = sbr.rel (%p10) target = $region8
  $region5: #{rfda_forward.27} parent=0 // loop_body
    %s14 = ssub.s32 %s9, 1
    %s15 = ssub.s32 %s9, 2
    %s16 = sadd.s32 %s9, 1
    %s17 = ssub.s32 %s9, %s16
    %p18 = scmp.eq.s32.totalorder %s17, 0
    %s20 = sadd.s32 %s19, 1
    %s21 = scalar_select %p18, %s19, %s20
    %p24 = pneg %p18
    %p25 = scmp.eq.s32.totalorder %s9, 1
    %p26 = por %p24, %p25
    %p27 = scmp.ne.s32.totalorder %s19, %s22
    %p28 = scmp.eq.s32.totalorder %s9, 0
    %p29 = por %p27, %p28
    %p30 = scmp.ne.s32.totalorder %s19, %s22
    %p31 = scmp.eq.s32.totalorder %s14, 1
    %p32 = por %p30, %p31
    %p33 = scmp.ne.s32.totalorder %s22, %s23
    %p34 = scmp.eq.s32.totalorder %s14, 0
    %p35 = por %p33, %p34
    %p36 = scmp.ne.s32.totalorder %s22, %s23
    %p37 = scmp.eq.s32.totalorder %s15, 1
    %p38 = por %p36, %p37
    %p40 = scmp.ne.s32.totalorder %s23, %s39
    %p41 = scmp.eq.s32.totalorder %s15, 0
    %p42 = por %p40, %p41
    %s44 = sadd.s32 %s43, 1
    %p47 = scmp.eq.s32.totalorder %s9, 1
    %p48 = scmp.ne.s32.totalorder %s43, %s45
    %p49 = scmp.eq.s32.totalorder %s9, 0
    %p50 = por %p48, %p49
    %p51 = scmp.ne.s32.totalorder %s43, %s45
    %p52 = scmp.eq.s32.totalorder %s14, 1
    %p53 = por %p51, %p52
    %p54 = scmp.ne.s32.totalorder %s45, %s46
    %p55 = scmp.eq.s32.totalorder %s14, 0
    %p56 = por %p54, %p55
    %p57 = scmp.ne.s32.totalorder %s45, %s46
    %p58 = scmp.eq.s32.totalorder %s15, 1
    %p59 = por %p57, %p58
    %p61 = scmp.ne.s32.totalorder %s46, %s60
    %p62 = scmp.eq.s32.totalorder %s15, 0
    %p63 = por %p61, %p62
    %s65 = sadd.s32 %s64, 1
    %p68 = scmp.eq.s32.totalorder %s9, 1
    %p69 = scmp.ne.s32.totalorder %s64, %s66
    %p70 = scmp.eq.s32.totalorder %s9, 0
    %p71 = por %p69, %p70
    %p72 = scmp.ne.s32.totalorder %s64, %s66
    %p73 = scmp.eq.s32.totalorder %s14, 1
    %p74 = por %p72, %p73
    %p75 = scmp.ne.s32.totalorder %s66, %s67
    %p76 = scmp.eq.s32.totalorder %s14, 0
    %p77 = por %p75, %p76
    %p78 = scmp.ne.s32.totalorder %s66, %s67
    %p79 = scmp.eq.s32.totalorder %s15, 1
    %p80 = por %p78, %p79
    %p82 = scmp.ne.s32.totalorder %s67, %s81
    %p83 = scmp.eq.s32.totalorder %s15, 0
    %p84 = por %p82, %p83
    %s85 = ssub.s32 %s9, %s16
    %p86 = scmp.eq.s32.totalorder %s85, 0
    %s88 = sadd.s32 %s87, 1
    %s89 = scalar_select %p86, %s87, %s88
    %p92 = pneg %p86
    %p93 = scmp.eq.s32.totalorder %s9, 1
    %p94 = por %p92, %p93
    %p95 = scmp.ne.s32.totalorder %s87, %s90
    %p96 = scmp.eq.s32.totalorder %s9, 0
    %p97 = por %p95, %p96
    %p98 = scmp.ne.s32.totalorder %s87, %s90
    %p99 = scmp.eq.s32.totalorder %s14, 1
    %p100 = por %p98, %p99
    %p101 = scmp.ne.s32.totalorder %s90, %s91
    %p102 = scmp.eq.s32.totalorder %s14, 0
    %p103 = por %p101, %p102
    %p104 = scmp.ne.s32.totalorder %s90, %s91
    %p105 = scmp.eq.s32.totalorder %s15, 1
    %p106 = por %p104, %p105
    %p108 = scmp.ne.s32.totalorder %s91, %s107
    %p109 = scmp.eq.s32.totalorder %s15, 0
    %p110 = por %p108, %p109
    %p111 = scmp.le.s32.totalorder 1, %s9
    %p112 = scmp.lt.s32.totalorder %s9, 3
    %p113 = pnand %p111, %p112
    %p114 = pneg %p113
    // Predicated region
    $region9: #{rfda_forward.27} parent=5 // pred_check
      _
    $region10: #{rfda_forward.27} parent=5 // pred_check_branch
      %116 = sbr.rel (%p113) target = $region12
    $region11: #{rfda_forward.27} parent=5 // pred_region
      %s117 = ssub.s32 %s9, 1
      // Predicated region
      $region13: #{rfda_forward.27} parent=11 // pred_check
        %p118 = pneg %p56
      $region14: #{rfda_forward.27} parent=11 // pred_check_branch
        %120 = sbr.rel (%p118) target = $region16
      $region15: #{rfda_forward.27} parent=11 // pred_region
        _
      $region16: #{rfda_forward.27} parent=11 // pred_fallthru
        _
      // Predicated region
      $region17: #{rfda_forward.27} parent=11 // pred_check
        %p121 = pneg %p77
      $region18: #{rfda_forward.27} parent=11 // pred_check_branch
        %123 = sbr.rel (%p121) target = $region20
      $region19: #{rfda_forward.27} parent=11 // pred_region
        _
      $region20: #{rfda_forward.27} parent=11 // pred_fallthru
        _
    $region12: #{rfda_forward.27} parent=5 // pred_fallthru
      _
    %p124 = scmp.lt.s32.totalorder %s9, 2
    // Predicated region
    $region21: #{rfda_forward.27} parent=5 // pred_check
      %p125 = pneg %p124
    $region22: #{rfda_forward.27} parent=5 // pred_check_branch
      %127 = sbr.rel (%p125) target = $region24
    $region23: #{rfda_forward.27} parent=5 // pred_region
      // Predicated region
      $region25: #{rfda_forward.27} parent=23 // pred_check
        %p128 = pneg %p29
      $region26: #{rfda_forward.27} parent=23 // pred_check_branch
        %130 = sbr.rel (%p128) target = $region28
      $region27: #{rfda_forward.27} parent=23 // pred_region
        %p131 = scmp.lt.s32.totalorder %s9, 1
        %s132 = scalar_select %p131, %s9, 1
        %s133 = smul.addr %s132, 4
        %s134 = smul.addr %s133, 4
        %s135 = scalar_lea.vmem %s0, %s134
      $region28: #{rfda_forward.27} parent=23 // pred_fallthru
        _
    $region24: #{rfda_forward.27} parent=5 // pred_fallthru
      _
    %p136 = scmp.le.s32.totalorder 1, %s9
    %p137 = scmp.lt.s32.totalorder %s9, 3
    %p138 = pnand %p136, %p137
    %p139 = pneg %p138
    // Predicated region
    $region29: #{rfda_forward.27} parent=5 // pred_check
      _
    $region30: #{rfda_forward.27} parent=5 // pred_check_branch
      %141 = sbr.rel (%p138) target = $region32
    $region31: #{rfda_forward.27} parent=5 // pred_region
      %s142 = ssub.s32 %s9, 1
      %p143 = scmp.lt.s32.totalorder %s14, 1
      %s144 = scalar_select %p143, %s14, 1
      %s145 = smul.addr %s144, 4
      %s146 = smul.addr %s145, 4
      %s147 = scalar_lea.vmem %s0, %s146
      %p148 = pneg %p35
      %p149 = pneg %p32
      %p150 = pneg %p56
      %p151 = pneg %p53
      %p152 = pneg %p77
      %p153 = pneg %p74
      %p154 = pneg %p103
      %p155 = pneg %p100
      %p156 = scmp.lt.s32.totalorder %s14, 1
      %s157 = scalar_select %p156, %s14, 1
      %s158 = smul.addr %s157, 4
      %s159 = scalar_lea.vmem %s3, %s158
      %p160 = scmp.lt.s32.totalorder %s14, 1
      %s161 = scalar_select %p160, %s14, 1
      %s162 = smul.addr %s161, 4
      %s163 = smul.addr %s162, 4
      %s164 = scalar_lea.vmem %s0, %s163
      %p165 = scmp.lt.s32.totalorder %s14, 1
      %s166 = scalar_select %p165, %s14, 1
      %s167 = smul.addr %s166, 4
      %s168 = scalar_lea.vmem %s3, %s167
      %v170 = vld [vmem:[%s164] sm:$0xf]
      %v171 = vld [vmem:[%s164 + $0x4] sm:$0xf]
      %v172 = vld [vmem:[%s164 + $0x8] sm:$0xf]
      %v173 = vld [vmem:[%s164 + $0xc] sm:$0xf]
      %v178 = vunpack.c.l.b16 %v170
      %v179 = vunpack.c.l.b16 %v171
      %v180 = vunpack.c.l.b16 %v172
      %v181 = vunpack.c.l.b16 %v173
      %v182 = vpack.c.b16 %v179, %v178
      %v183 = vpack.c.b16 %v181, %v180
      %vm184 = vcmask 662528
      %v187 = vsel %vm184, %v182, 0
      %v190 = vsel %vm184, %v183, 0
      %v192 = vld [vmem:[%s1] sm:$0xf]
      %195 = vrot.lane.b32.xlu0 %v187, 127
      %v196 = vpop.permute.xlu0 %195
      %197 = vrot.lane.b32.xlu0 %v190, 127
      %v198 = vpop.permute.xlu0 %197
      %201 = vrot.lane.b32.xlu0 %v187, 119
      %v202 = vpop.permute.xlu0 %201
      %203 = vrot.lane.b32.xlu0 %v190, 119
      %v204 = vpop.permute.xlu0 %203
      %207 = vrot.lane.b32.xlu0 %v187, 118
      %v208 = vpop.permute.xlu0 %207
      %209 = vrot.lane.b32.xlu0 %v190, 118
      %v210 = vpop.permute.xlu0 %209
      %v213 = vld [vmem:[%s2] sm:$0xff]
      %215 = vset.pattern.permute.xlu0 0
      %216 = vperm.xlu0 %215, %v213
      %v217 = vpop.permute.xlu0 %216
      %219 = vmatpush.bf16.msra.mxu0 %v210
      %220 = vmatpush.bf16.msra.mxu0 %v208
      %221 = vmatpush.bf16.msra.mxu0 %v204
      %222 = vmatpush.bf16.msra.mxu0 %v202
      %223 = vmatpush.bf16.msra.mxu0 %v198
      %224 = vmatpush.bf16.msra.mxu0 %v196
      %225 = vmatpush.bf16.msra.mxu0 %v190
      %226 = vmatpush.bf16.msra.mxu0 %v187
      %227 = vmatmul.bf16.gmra.mxu0 %v192
      %v228 = vpop.f32.mrf.mxu0
      %v229 = vadd.f32 %v217, %v228
      %v230 = vpop.f32.mrf.mxu0
      %231 = vdwg.mxu0
      %v232 = vmax.f32 %v229, 0.0
      %v233 = vpack.c.bf16 %v232, %v232
      %vm234 = vcmask 584704
      %235 = vst.msk [vmem:[%s168] sm:$0xf] %vm234, %v233
      %p236 = scmp.lt.s32.totalorder %s14, 1
      %s237 = scalar_select %p236, %s14, 1
      %s238 = smul.addr %s237, 4
      %s239 = scalar_lea.vmem %s3, %s238
      // Predicated region
      $region33: #{rfda_forward.27} parent=31 // pred_check
        %p240 = pneg %p100
      $region34: #{rfda_forward.27} parent=31 // pred_check_branch
        %242 = sbr.rel (%p240) target = $region36
      $region35: #{rfda_forward.27} parent=31 // pred_region
        _
      $region36: #{rfda_forward.27} parent=31 // pred_fallthru
        _
    $region32: #{rfda_forward.27} parent=5 // pred_fallthru
      _
    %p243 = scmp.le.s32.totalorder 2, %s9
    // Predicated region
    $region37: #{rfda_forward.27} parent=5 // pred_check
      %p244 = pneg %p243
    $region38: #{rfda_forward.27} parent=5 // pred_check_branch
      %246 = sbr.rel (%p244) target = $region40
    $region39: #{rfda_forward.27} parent=5 // pred_region
      %s247 = ssub.s32 %s9, 2
      // Predicated region
      $region41: #{rfda_forward.27} parent=39 // pred_check
        %p248 = pneg %p106
      $region42: #{rfda_forward.27} parent=39 // pred_check_branch
        %250 = sbr.rel (%p248) target = $region44
      $region43: #{rfda_forward.27} parent=39 // pred_region
        %p251 = scmp.lt.s32.totalorder %s15, 1
        %s252 = scalar_select %p251, %s15, 1
        %s253 = smul.addr %s252, 4
        %s254 = scalar_lea.vmem %s3, %s253
      $region44: #{rfda_forward.27} parent=39 // pred_fallthru
        _
    $region40: #{rfda_forward.27} parent=5 // pred_fallthru
      _
  $region6: #{rfda_forward.27} parent=0 // loop_footer
    %s13 = sadd.s32 1, %s9
  $region7: #{rfda_forward.27} parent=0 // loop_footer_branch
    %8 = sbr.rel target = $region3
  $region8: #{rfda_forward.27} parent=0 // loop_exit
    _

// kernel: rfda_forward.28
$region0: #{rfda_forward.28}
  #allocation0 [shape = 'u32[]', space=smem, size = 0x4, offset = 0x4, fixed_abs, tag = 'smem constant byte address 0x4 - core index']
  #allocation1 [shape = 'u32[72,128]{1,0:T(1,128)}', space=vmem, size = 0x9000, scoped, tag = 'internal scratch']
  %s0 = inlined_call_operand.vmem [shape: bf16[2,8,100], index: 0, kind: input, shape index: {}]
  %s1 = inlined_call_operand.vmem [shape: bf16[8,72], index: 1, kind: input, shape index: {}]
  %s2 = inlined_call_operand.vmem [shape: f32[8,1], index: 2, kind: input, shape index: {}]
  %s3 = inlined_call_operand.vmem [shape: bf16[2,8,80], index: 3, kind: output, shape index: {}]
  %s4 = sld [smem:[#allocation0]]
  $region45: #{rfda_forward.28} parent=0
    _
  %s6 = ssub.s32 1, %s4
  %s7 = scalar_select 0, %s6, %s4
  loop: start=0, step=1, limit=4
  $region2: #{rfda_forward.28} parent=0 // loop_pre_header
    _
  $region3: #{rfda_forward.28} parent=0 // loop_header
    %s9 = sphi 0, %s13
    %p10 = scmp.ge.s32.totalorder %s9, 4
    %s19 = sphi 0, %s21
    %s22 = sphi 0, %s19
    %s23 = sphi 0, %s22
    %s39 = sphi 0, %s23
    %s43 = sphi 0, %s43
    %s45 = sphi 0, %s43
    %s46 = sphi 0, %s45
    %s60 = sphi 0, %s46
    %s64 = sphi 0, %s64
    %s66 = sphi 0, %s64
    %s67 = sphi 0, %s66
    %s81 = sphi 0, %s67
    %s87 = sphi 0, %s89
    %s90 = sphi 0, %s87
    %s91 = sphi 0, %s90
    %s107 = sphi 0, %s91
  $region4: #{rfda_forward.28} parent=0 // loop_header_branch
    %12 = sbr.rel (%p10) target = $region8
  $region5: #{rfda_forward.28} parent=0 // loop_body
    %s14 = ssub.s32 %s9, 1
    %s15 = ssub.s32 %s9, 2
    %s16 = sadd.s32 %s9, 1
    %s17 = ssub.s32 %s9, %s16
    %p18 = scmp.eq.s32.totalorder %s17, 0
    %s20 = sadd.s32 %s19, 1
    %s21 = scalar_select %p18, %s19, %s20
    %p24 = pneg %p18
    %p25 = scmp.eq.s32.totalorder %s9, 1
    %p26 = por %p24, %p25
    %p27 = scmp.ne.s32.totalorder %s19, %s22
    %p28 = scmp.eq.s32.totalorder %s9, 0
    %p29 = por %p27, %p28
    %p30 = scmp.ne.s32.totalorder %s19, %s22
    %p31 = scmp.eq.s32.totalorder %s14, 1
    %p32 = por %p30, %p31
    %p33 = scmp.ne.s32.totalorder %s22, %s23
    %p34 = scmp.eq.s32.totalorder %s14, 0
    %p35 = por %p33, %p34
    %p36 = scmp.ne.s32.totalorder %s22, %s23
    %p37 = scmp.eq.s32.totalorder %s15, 1
    %p38 = por %p36, %p37
    %p40 = scmp.ne.s32.totalorder %s23, %s39
    %p41 = scmp.eq.s32.totalorder %s15, 0
    %p42 = por %p40, %p41
    %s44 = sadd.s32 %s43, 1
    %p47 = scmp.eq.s32.totalorder %s9, 1
    %p48 = scmp.ne.s32.totalorder %s43, %s45
    %p49 = scmp.eq.s32.totalorder %s9, 0
    %p50 = por %p48, %p49
    %p51 = scmp.ne.s32.totalorder %s43, %s45
    %p52 = scmp.eq.s32.totalorder %s14, 1
    %p53 = por %p51, %p52
    %p54 = scmp.ne.s32.totalorder %s45, %s46
    %p55 = scmp.eq.s32.totalorder %s14, 0
    %p56 = por %p54, %p55
    %p57 = scmp.ne.s32.totalorder %s45, %s46
    %p58 = scmp.eq.s32.totalorder %s15, 1
    %p59 = por %p57, %p58
    %p61 = scmp.ne.s32.totalorder %s46, %s60
    %p62 = scmp.eq.s32.totalorder %s15, 0
    %p63 = por %p61, %p62
    %s65 = sadd.s32 %s64, 1
    %p68 = scmp.eq.s32.totalorder %s9, 1
    %p69 = scmp.ne.s32.totalorder %s64, %s66
    %p70 = scmp.eq.s32.totalorder %s9, 0
    %p71 = por %p69, %p70
    %p72 = scmp.ne.s32.totalorder %s64, %s66
    %p73 = scmp.eq.s32.totalorder %s14, 1
    %p74 = por %p72, %p73
    %p75 = scmp.ne.s32.totalorder %s66, %s67
    %p76 = scmp.eq.s32.totalorder %s14, 0
    %p77 = por %p75, %p76
    %p78 = scmp.ne.s32.totalorder %s66, %s67
    %p79 = scmp.eq.s32.totalorder %s15, 1
    %p80 = por %p78, %p79
    %p82 = scmp.ne.s32.totalorder %s67, %s81
    %p83 = scmp.eq.s32.totalorder %s15, 0
    %p84 = por %p82, %p83
    %s85 = ssub.s32 %s9, %s16
    %p86 = scmp.eq.s32.totalorder %s85, 0
    %s88 = sadd.s32 %s87, 1
    %s89 = scalar_select %p86, %s87, %s88
    %p92 = pneg %p86
    %p93 = scmp.eq.s32.totalorder %s9, 1
    %p94 = por %p92, %p93
    %p95 = scmp.ne.s32.totalorder %s87, %s90
    %p96 = scmp.eq.s32.totalorder %s9, 0
    %p97 = por %p95, %p96
    %p98 = scmp.ne.s32.totalorder %s87, %s90
    %p99 = scmp.eq.s32.totalorder %s14, 1
    %p100 = por %p98, %p99
    %p101 = scmp.ne.s32.totalorder %s90, %s91
    %p102 = scmp.eq.s32.totalorder %s14, 0
    %p103 = por %p101, %p102
    %p104 = scmp.ne.s32.totalorder %s90, %s91
    %p105 = scmp.eq.s32.totalorder %s15, 1
    %p106 = por %p104, %p105
    %p108 = scmp.ne.s32.totalorder %s91, %s107
    %p109 = scmp.eq.s32.totalorder %s15, 0
    %p110 = por %p108, %p109
    %p111 = scmp.le.s32.totalorder 1, %s9
    %p112 = scmp.lt.s32.totalorder %s9, 3
    %p113 = pnand %p111, %p112
    %p114 = pneg %p113
    // Predicated region
    $region9: #{rfda_forward.28} parent=5 // pred_check
      _
    $region10: #{rfda_forward.28} parent=5 // pred_check_branch
      %116 = sbr.rel (%p113) target = $region12
    $region11: #{rfda_forward.28} parent=5 // pred_region
      %s117 = ssub.s32 %s9, 1
      // Predicated region
      $region13: #{rfda_forward.28} parent=11 // pred_check
        %p118 = pneg %p56
      $region14: #{rfda_forward.28} parent=11 // pred_check_branch
        %120 = sbr.rel (%p118) target = $region16
      $region15: #{rfda_forward.28} parent=11 // pred_region
        _
      $region16: #{rfda_forward.28} parent=11 // pred_fallthru
        _
      // Predicated region
      $region17: #{rfda_forward.28} parent=11 // pred_check
        %p121 = pneg %p77
      $region18: #{rfda_forward.28} parent=11 // pred_check_branch
        %123 = sbr.rel (%p121) target = $region20
      $region19: #{rfda_forward.28} parent=11 // pred_region
        _
      $region20: #{rfda_forward.28} parent=11 // pred_fallthru
        _
    $region12: #{rfda_forward.28} parent=5 // pred_fallthru
      _
    %p124 = scmp.lt.s32.totalorder %s9, 2
    // Predicated region
    $region21: #{rfda_forward.28} parent=5 // pred_check
      %p125 = pneg %p124
    $region22: #{rfda_forward.28} parent=5 // pred_check_branch
      %127 = sbr.rel (%p125) target = $region24
    $region23: #{rfda_forward.28} parent=5 // pred_region
      // Predicated region
      $region25: #{rfda_forward.28} parent=23 // pred_check
        %p128 = pneg %p29
      $region26: #{rfda_forward.28} parent=23 // pred_check_branch
        %130 = sbr.rel (%p128) target = $region28
      $region27: #{rfda_forward.28} parent=23 // pred_region
        %p131 = scmp.lt.s32.totalorder %s9, 1
        %s132 = scalar_select %p131, %s9, 1
        %s133 = smul.addr %s132, 4
        %s134 = scalar_lea.vmem %s0, %s133
      $region28: #{rfda_forward.28} parent=23 // pred_fallthru
        _
    $region24: #{rfda_forward.28} parent=5 // pred_fallthru
      _
    %p135 = scmp.le.s32.totalorder 1, %s9
    %p136 = scmp.lt.s32.totalorder %s9, 3
    %p137 = pnand %p135, %p136
    %p138 = pneg %p137
    // Predicated region
    $region29: #{rfda_forward.28} parent=5 // pred_check
      _
    $region30: #{rfda_forward.28} parent=5 // pred_check_branch
      %140 = sbr.rel (%p137) target = $region32
    $region31: #{rfda_forward.28} parent=5 // pred_region
      %s141 = ssub.s32 %s9, 1
      %p142 = scmp.lt.s32.totalorder %s14, 1
      %s143 = scalar_select %p142, %s14, 1
      %s144 = smul.addr %s143, 4
      %s145 = scalar_lea.vmem %s0, %s144
      %p146 = pneg %p35
      %p147 = pneg %p32
      %p148 = pneg %p56
      %p149 = pneg %p53
      %p150 = pneg %p77
      %p151 = pneg %p74
      %p152 = pneg %p103
      %p153 = pneg %p100
      %p154 = scmp.lt.s32.totalorder %s14, 1
      %s155 = scalar_select %p154, %s14, 1
      %s156 = smul.addr %s155, 4
      %s157 = scalar_lea.vmem %s3, %s156
      %p158 = scmp.lt.s32.totalorder %s14, 1
      %s159 = scalar_select %p158, %s14, 1
      %s160 = smul.addr %s159, 4
      %s161 = scalar_lea.vmem %s0, %s160
      %p162 = scmp.lt.s32.totalorder %s14, 1
      %s163 = scalar_select %p162, %s14, 1
      %s164 = smul.addr %s163, 4
      %s165 = scalar_lea.vmem %s3, %s164
      %v167 = vld [vmem:[%s161] sm:$0xf]
      %vm168 = vcmask 818176
      %v171 = vsel %vm168, %v167, 0
      %v172 = vld [vmem:[%s1] sm:$0xf]
      %v174 = vrot.slane %v171, 4
      %175 = vrot.lane.b32.xlu0 %v174, 127
      %v176 = vpop.permute.xlu0 %175
      %177 = vrot.lane.b32.xlu0 %v171, 126
      %v178 = vpop.permute.xlu0 %177
      %179 = vrot.lane.b32.xlu0 %v174, 118
      %v180 = vpop.permute.xlu0 %179
      %181 = vrot.lane.b32.xlu0 %v171, 117
      %v182 = vpop.permute.xlu0 %181
      %183 = vrot.lane.b32.xlu0 %v174, 116
      %v184 = vpop.permute.xlu0 %183
      %185 = vrot.lane.b32.xlu0 %v171, 108
      %v186 = vpop.permute.xlu0 %185
      %187 = vrot.lane.b32.xlu0 %v174, 107
      %v188 = vpop.permute.xlu0 %187
      %189 = vrot.lane.b32.xlu0 %v171, 106
      %v190 = vpop.permute.xlu0 %189
      %vm191 = vcmask 1043456
      %v193 = vsel %vm191, %v171, %v176
      %v197 = vsel %vm191, %v178, %v180
      %v201 = vsel %vm191, %v182, %v184
      %v205 = vsel %vm191, %v186, %v188
      %v207 = vld [vmem:[%s2] sm:$0xff]
      %209 = vset.pattern.permute.xlu0 0
      %210 = vperm.xlu0 %209, %v207
      %v211 = vpop.permute.xlu0 %210
      %vm213 = vcmask 588800
      %v215 = vsel %vm213, %v172, 0
      %v218 = vsel %vm191, %v190, 0
      %220 = vmatpush.bf16.msra.mxu0 0
      %221 = vmatpush.bf16.msra.mxu0 0
      %222 = vmatpush.bf16.msra.mxu0 0
      %223 = vmatpush.bf16.msra.mxu0 %v218
      %224 = vmatpush.bf16.msra.mxu0 %v205
      %225 = vmatpush.bf16.msra.mxu0 %v201
      %226 = vmatpush.bf16.msra.mxu0 %v197
      %227 = vmatpush.bf16.msra.mxu0 %v193
      %228 = vmatmul.bf16.gmra.mxu0 %v215
      %v229 = vpop.f32.mrf.mxu0
      %v230 = vadd.f32 %v211, %v229
      %v231 = vpop.f32.mrf.mxu0
      %232 = vdwg.mxu0
      %v233 = vmax.f32 %v230, 0.0
      %v234 = vpack.c.bf16 %v233, %v233
      %vm235 = vcmask 650240
      %236 = vst.msk [vmem:[%s165] sm:$0xf] %vm235, %v234
      %p237 = scmp.lt.s32.totalorder %s14, 1
      %s238 = scalar_select %p237, %s14, 1
      %s239 = smul.addr %s238, 4
      %s240 = scalar_lea.vmem %s3, %s239
      // Predicated region
      $region33: #{rfda_forward.28} parent=31 // pred_check
        %p241 = pneg %p100
      $region34: #{rfda_forward.28} parent=31 // pred_check_branch
        %243 = sbr.rel (%p241) target = $region36
      $region35: #{rfda_forward.28} parent=31 // pred_region
        _
      $region36: #{rfda_forward.28} parent=31 // pred_fallthru
        _
    $region32: #{rfda_forward.28} parent=5 // pred_fallthru
      _
    %p244 = scmp.le.s32.totalorder 2, %s9
    // Predicated region
    $region37: #{rfda_forward.28} parent=5 // pred_check
      %p245 = pneg %p244
    $region38: #{rfda_forward.28} parent=5 // pred_check_branch
      %247 = sbr.rel (%p245) target = $region40
    $region39: #{rfda_forward.28} parent=5 // pred_region
      %s248 = ssub.s32 %s9, 2
      // Predicated region
      $region41: #{rfda_forward.28} parent=39 // pred_check
        %p249 = pneg %p106
      $region42: #{rfda_forward.28} parent=39 // pred_check_branch
        %251 = sbr.rel (%p249) target = $region44
      $region43: #{rfda_forward.28} parent=39 // pred_region
        %p252 = scmp.lt.s32.totalorder %s15, 1
        %s253 = scalar_select %p252, %s15, 1
        %s254 = smul.addr %s253, 4
        %s255 = scalar_lea.vmem %s3, %s254
      $region44: #{rfda_forward.28} parent=39 // pred_fallthru
        _
    $region40: #{rfda_forward.28} parent=5 // pred_fallthru
      _
  $region6: #{rfda_forward.28} parent=0 // loop_footer
    %s13 = sadd.s32 1, %s9
  $region7: #{rfda_forward.28} parent=0 // loop_footer_branch
    %8 = sbr.rel target = $region3
  $region8: #{rfda_forward.28} parent=0 // loop_exit
    _

// kernel: rfda_forward.32
$region0: #{rfda_forward.32}
  #allocation0 [shape = 'u32[]', space=smem, size = 0x4, offset = 0x4, fixed_abs, tag = 'smem constant byte address 0x4 - core index']
  #allocation1 [shape = 'u32[72,128]{1,0:T(1,128)}', space=vmem, size = 0x9000, scoped, tag = 'internal scratch']
  %s0 = inlined_call_operand.vmem [shape: bf16[2,8,324], index: 0, kind: input, shape index: {}]
  %s1 = inlined_call_operand.vmem [shape: bf16[1,288], index: 1, kind: input, shape index: {}]
  %s2 = inlined_call_operand.vmem [shape: bf16[8,72], index: 2, kind: input, shape index: {}]
  %s3 = inlined_call_operand.vmem [shape: f32[8,1], index: 3, kind: input, shape index: {}]
  %s4 = inlined_call_operand.vmem [shape: bf16[48,72], index: 4, kind: input, shape index: {}]
  %s5 = inlined_call_operand.vmem [shape: f32[48,1], index: 5, kind: input, shape index: {}]
  %s6 = inlined_call_operand.vmem [shape: f32[2,48,288], index: 6, kind: output, shape index: {}]
  %s7 = sld [smem:[#allocation0]]
  $region57: #{rfda_forward.32} parent=0
    _
  %s9 = ssub.s32 1, %s7
  %s10 = scalar_select 0, %s9, %s7
  loop: start=0, step=1, limit=4
  $region2: #{rfda_forward.32} parent=0 // loop_pre_header
    _
  $region3: #{rfda_forward.32} parent=0 // loop_header
    %s12 = sphi 0, %s16
    %p13 = scmp.ge.s32.totalorder %s12, 4
    %s22 = sphi 0, %s24
    %s25 = sphi 0, %s22
    %s26 = sphi 0, %s25
    %s42 = sphi 0, %s26
    %s46 = sphi 0, %s46
    %s48 = sphi 0, %s46
    %s49 = sphi 0, %s48
    %s63 = sphi 0, %s49
    %s67 = sphi 0, %s67
    %s69 = sphi 0, %s67
    %s70 = sphi 0, %s69
    %s84 = sphi 0, %s70
    %s88 = sphi 0, %s88
    %s90 = sphi 0, %s88
    %s91 = sphi 0, %s90
    %s105 = sphi 0, %s91
    %s109 = sphi 0, %s109
    %s111 = sphi 0, %s109
    %s112 = sphi 0, %s111
    %s126 = sphi 0, %s112
    %s130 = sphi 0, %s130
    %s132 = sphi 0, %s130
    %s133 = sphi 0, %s132
    %s147 = sphi 0, %s133
    %s153 = sphi 0, %s155
    %s156 = sphi 0, %s153
    %s157 = sphi 0, %s156
    %s173 = sphi 0, %s157
  $region4: #{rfda_forward.32} parent=0 // loop_header_branch
    %15 = sbr.rel (%p13) target = $region8
  $region5: #{rfda_forward.32} parent=0 // loop_body
    %s17 = ssub.s32 %s12, 1
    %s18 = ssub.s32 %s12, 2
    %s19 = sadd.s32 %s12, 1
    %s20 = ssub.s32 %s12, %s19
    %p21 = scmp.eq.s32.totalorder %s20, 0
    %s23 = sadd.s32 %s22, 1
    %s24 = scalar_select %p21, %s22, %s23
    %p27 = pneg %p21
    %p28 = scmp.eq.s32.totalorder %s12, 1
    %p29 = por %p27, %p28
    %p30 = scmp.ne.s32.totalorder %s22, %s25
    %p31 = scmp.eq.s32.totalorder %s12, 0
    %p32 = por %p30, %p31
    %p33 = scmp.ne.s32.totalorder %s22, %s25
    %p34 = scmp.eq.s32.totalorder %s17, 1
    %p35 = por %p33, %p34
    %p36 = scmp.ne.s32.totalorder %s25, %s26
    %p37 = scmp.eq.s32.totalorder %s17, 0
    %p38 = por %p36, %p37
    %p39 = scmp.ne.s32.totalorder %s25, %s26
    %p40 = scmp.eq.s32.totalorder %s18, 1
    %p41 = por %p39, %p40
    %p43 = scmp.ne.s32.totalorder %s26, %s42
    %p44 = scmp.eq.s32.totalorder %s18, 0
    %p45 = por %p43, %p44
    %s47 = sadd.s32 %s46, 1
    %p50 = scmp.eq.s32.totalorder %s12, 1
    %p51 = scmp.ne.s32.totalorder %s46, %s48
    %p52 = scmp.eq.s32.totalorder %s12, 0
    %p53 = por %p51, %p52
    %p54 = scmp.ne.s32.totalorder %s46, %s48
    %p55 = scmp.eq.s32.totalorder %s17, 1
    %p56 = por %p54, %p55
    %p57 = scmp.ne.s32.totalorder %s48, %s49
    %p58 = scmp.eq.s32.totalorder %s17, 0
    %p59 = por %p57, %p58
    %p60 = scmp.ne.s32.totalorder %s48, %s49
    %p61 = scmp.eq.s32.totalorder %s18, 1
    %p62 = por %p60, %p61
    %p64 = scmp.ne.s32.totalorder %s49, %s63
    %p65 = scmp.eq.s32.totalorder %s18, 0
    %p66 = por %p64, %p65
    %s68 = sadd.s32 %s67, 1
    %p71 = scmp.eq.s32.totalorder %s12, 1
    %p72 = scmp.ne.s32.totalorder %s67, %s69
    %p73 = scmp.eq.s32.totalorder %s12, 0
    %p74 = por %p72, %p73
    %p75 = scmp.ne.s32.totalorder %s67, %s69
    %p76 = scmp.eq.s32.totalorder %s17, 1
    %p77 = por %p75, %p76
    %p78 = scmp.ne.s32.totalorder %s69, %s70
    %p79 = scmp.eq.s32.totalorder %s17, 0
    %p80 = por %p78, %p79
    %p81 = scmp.ne.s32.totalorder %s69, %s70
    %p82 = scmp.eq.s32.totalorder %s18, 1
    %p83 = por %p81, %p82
    %p85 = scmp.ne.s32.totalorder %s70, %s84
    %p86 = scmp.eq.s32.totalorder %s18, 0
    %p87 = por %p85, %p86
    %s89 = sadd.s32 %s88, 1
    %p92 = scmp.eq.s32.totalorder %s12, 1
    %p93 = scmp.ne.s32.totalorder %s88, %s90
    %p94 = scmp.eq.s32.totalorder %s12, 0
    %p95 = por %p93, %p94
    %p96 = scmp.ne.s32.totalorder %s88, %s90
    %p97 = scmp.eq.s32.totalorder %s17, 1
    %p98 = por %p96, %p97
    %p99 = scmp.ne.s32.totalorder %s90, %s91
    %p100 = scmp.eq.s32.totalorder %s17, 0
    %p101 = por %p99, %p100
    %p102 = scmp.ne.s32.totalorder %s90, %s91
    %p103 = scmp.eq.s32.totalorder %s18, 1
    %p104 = por %p102, %p103
    %p106 = scmp.ne.s32.totalorder %s91, %s105
    %p107 = scmp.eq.s32.totalorder %s18, 0
    %p108 = por %p106, %p107
    %s110 = sadd.s32 %s109, 1
    %p113 = scmp.eq.s32.totalorder %s12, 1
    %p114 = scmp.ne.s32.totalorder %s109, %s111
    %p115 = scmp.eq.s32.totalorder %s12, 0
    %p116 = por %p114, %p115
    %p117 = scmp.ne.s32.totalorder %s109, %s111
    %p118 = scmp.eq.s32.totalorder %s17, 1
    %p119 = por %p117, %p118
    %p120 = scmp.ne.s32.totalorder %s111, %s112
    %p121 = scmp.eq.s32.totalorder %s17, 0
    %p122 = por %p120, %p121
    %p123 = scmp.ne.s32.totalorder %s111, %s112
    %p124 = scmp.eq.s32.totalorder %s18, 1
    %p125 = por %p123, %p124
    %p127 = scmp.ne.s32.totalorder %s112, %s126
    %p128 = scmp.eq.s32.totalorder %s18, 0
    %p129 = por %p127, %p128
    %s131 = sadd.s32 %s130, 1
    %p134 = scmp.eq.s32.totalorder %s12, 1
    %p135 = scmp.ne.s32.totalorder %s130, %s132
    %p136 = scmp.eq.s32.totalorder %s12, 0
    %p137 = por %p135, %p136
    %p138 = scmp.ne.s32.totalorder %s130, %s132
    %p139 = scmp.eq.s32.totalorder %s17, 1
    %p140 = por %p138, %p139
    %p141 = scmp.ne.s32.totalorder %s132, %s133
    %p142 = scmp.eq.s32.totalorder %s17, 0
    %p143 = por %p141, %p142
    %p144 = scmp.ne.s32.totalorder %s132, %s133
    %p145 = scmp.eq.s32.totalorder %s18, 1
    %p146 = por %p144, %p145
    %p148 = scmp.ne.s32.totalorder %s133, %s147
    %p149 = scmp.eq.s32.totalorder %s18, 0
    %p150 = por %p148, %p149
    %s151 = ssub.s32 %s12, %s19
    %p152 = scmp.eq.s32.totalorder %s151, 0
    %s154 = sadd.s32 %s153, 1
    %s155 = scalar_select %p152, %s153, %s154
    %p158 = pneg %p152
    %p159 = scmp.eq.s32.totalorder %s12, 1
    %p160 = por %p158, %p159
    %p161 = scmp.ne.s32.totalorder %s153, %s156
    %p162 = scmp.eq.s32.totalorder %s12, 0
    %p163 = por %p161, %p162
    %p164 = scmp.ne.s32.totalorder %s153, %s156
    %p165 = scmp.eq.s32.totalorder %s17, 1
    %p166 = por %p164, %p165
    %p167 = scmp.ne.s32.totalorder %s156, %s157
    %p168 = scmp.eq.s32.totalorder %s17, 0
    %p169 = por %p167, %p168
    %p170 = scmp.ne.s32.totalorder %s156, %s157
    %p171 = scmp.eq.s32.totalorder %s18, 1
    %p172 = por %p170, %p171
    %p174 = scmp.ne.s32.totalorder %s157, %s173
    %p175 = scmp.eq.s32.totalorder %s18, 0
    %p176 = por %p174, %p175
    %p177 = scmp.le.s32.totalorder 1, %s12
    %p178 = scmp.lt.s32.totalorder %s12, 3
    %p179 = pnand %p177, %p178
    %p180 = pneg %p179
    // Predicated region
    $region9: #{rfda_forward.32} parent=5 // pred_check
      _
    $region10: #{rfda_forward.32} parent=5 // pred_check_branch
      %182 = sbr.rel (%p179) target = $region12
    $region11: #{rfda_forward.32} parent=5 // pred_region
      %s183 = ssub.s32 %s12, 1
      // Predicated region
      $region13: #{rfda_forward.32} parent=11 // pred_check
        %p184 = pneg %p59
      $region14: #{rfda_forward.32} parent=11 // pred_check_branch
        %186 = sbr.rel (%p184) target = $region16
      $region15: #{rfda_forward.32} parent=11 // pred_region
        _
      $region16: #{rfda_forward.32} parent=11 // pred_fallthru
        _
      // Predicated region
      $region17: #{rfda_forward.32} parent=11 // pred_check
        %p187 = pneg %p80
      $region18: #{rfda_forward.32} parent=11 // pred_check_branch
        %189 = sbr.rel (%p187) target = $region20
      $region19: #{rfda_forward.32} parent=11 // pred_region
        _
      $region20: #{rfda_forward.32} parent=11 // pred_fallthru
        _
      // Predicated region
      $region21: #{rfda_forward.32} parent=11 // pred_check
        %p190 = pneg %p101
      $region22: #{rfda_forward.32} parent=11 // pred_check_branch
        %192 = sbr.rel (%p190) target = $region24
      $region23: #{rfda_forward.32} parent=11 // pred_region
        _
      $region24: #{rfda_forward.32} parent=11 // pred_fallthru
        _
      // Predicated region
      $region25: #{rfda_forward.32} parent=11 // pred_check
        %p193 = pneg %p122
      $region26: #{rfda_forward.32} parent=11 // pred_check_branch
        %195 = sbr.rel (%p193) target = $region28
      $region27: #{rfda_forward.32} parent=11 // pred_region
        _
      $region28: #{rfda_forward.32} parent=11 // pred_fallthru
        _
      // Predicated region
      $region29: #{rfda_forward.32} parent=11 // pred_check
        %p196 = pneg %p143
      $region30: #{rfda_forward.32} parent=11 // pred_check_branch
        %198 = sbr.rel (%p196) target = $region32
      $region31: #{rfda_forward.32} parent=11 // pred_region
        _
      $region32: #{rfda_forward.32} parent=11 // pred_fallthru
        _
    $region12: #{rfda_forward.32} parent=5 // pred_fallthru
      _
    %p199 = scmp.lt.s32.totalorder %s12, 2
    // Predicated region
    $region33: #{rfda_forward.32} parent=5 // pred_check
      %p200 = pneg %p199
    $region34: #{rfda_forward.32} parent=5 // pred_check_branch
      %202 = sbr.rel (%p200) target = $region36
    $region35: #{rfda_forward.32} parent=5 // pred_region
      // Predicated region
      $region37: #{rfda_forward.32} parent=35 // pred_check
        %p203 = pneg %p32
      $region38: #{rfda_forward.32} parent=35 // pred_check_branch
        %205 = sbr.rel (%p203) target = $region40
      $region39: #{rfda_forward.32} parent=35 // pred_region
        %p206 = scmp.lt.s32.totalorder %s12, 1
        %s207 = scalar_select %p206, %s12, 1
        %s208 = smul.addr %s207, 3
        %s209 = smul.addr %s208, 4
        %s210 = scalar_lea.vmem %s0, %s209
      $region40: #{rfda_forward.32} parent=35 // pred_fallthru
        _
    $region36: #{rfda_forward.32} parent=5 // pred_fallthru
      _
    %p211 = scmp.le.s32.totalorder 1, %s12
    %p212 = scmp.lt.s32.totalorder %s12, 3
    %p213 = pnand %p211, %p212
    %p214 = pneg %p213
    // Predicated region
    $region41: #{rfda_forward.32} parent=5 // pred_check
      _
    $region42: #{rfda_forward.32} parent=5 // pred_check_branch
      %216 = sbr.rel (%p213) target = $region44
    $region43: #{rfda_forward.32} parent=5 // pred_region
      %s217 = ssub.s32 %s12, 1
      %p218 = scmp.lt.s32.totalorder %s17, 1
      %s219 = scalar_select %p218, %s17, 1
      %s220 = smul.addr %s219, 3
      %s221 = smul.addr %s220, 4
      %s222 = scalar_lea.vmem %s0, %s221
      %p223 = pneg %p38
      %p224 = pneg %p35
      %p225 = pneg %p59
      %p226 = pneg %p56
      %p227 = pneg %p80
      %p228 = pneg %p77
      %p229 = pneg %p101
      %p230 = pneg %p98
      %p231 = pneg %p122
      %p232 = pneg %p119
      %p233 = pneg %p143
      %p234 = pneg %p140
      %p235 = pneg %p169
      %p236 = pneg %p166
      %p237 = scmp.lt.s32.totalorder %s17, 1
      %s238 = scalar_select %p237, %s17, 1
      %s239 = smul.addr %s238, 18
      %s240 = smul.addr %s239, 8
      %s241 = scalar_lea.vmem %s6, %s240
      %p242 = scmp.lt.s32.totalorder %s17, 1
      %s243 = scalar_select %p242, %s17, 1
      %s244 = smul.addr %s243, 3
      %s245 = smul.addr %s244, 4
      %s246 = scalar_lea.vmem %s0, %s245
      %p247 = scmp.lt.s32.totalorder %s17, 1
      %s248 = scalar_select %p247, %s17, 1
      %s249 = smul.addr %s248, 18
      %s250 = smul.addr %s249, 8
      %s251 = scalar_lea.vmem %s6, %s250
      %v253 = vld [vmem:[%s1] sm:$0x7]
      %v254 = vld [vmem:[%s246] sm:$0xff]
      %v255 = vld [vmem:[%s246 + $0x8] sm:$0xf]
      %v256 = vld [vmem:[%s2] sm:$0xf]
      %v257 = vld [vmem:[%s3] sm:$0xff]
      %v260 = vunpack.c.l.b16 %v254
      %v261 = vunpack.c.h.b16 %v254
      %v262 = vunpack.c.l.b16 %v255
      %v263 = vpack.c.b16 %v260, %v260
      %v264 = vpack.c.b16 %v261, %v261
      %v265 = vpack.c.b16 %v262, %v262
      %vm266 = vcmask 556032
      %v269 = vsel %vm266, %v265, 0
      %v271 = vrot.slane %v263, 4
      %v272 = vrot.slane %v264, 4
      %v273 = vrot.slane %v269, 4
      %274 = vrot.lane.b32.xlu0 %v271, 127
      %v275 = vpop.permute.xlu0 %274
      %276 = vrot.lane.b32.xlu0 %v272, 127
      %v277 = vpop.permute.xlu0 %276
      %278 = vrot.lane.b32.xlu0 %v273, 127
      %v279 = vpop.permute.xlu0 %278
      %vm280 = vcmask 1039360
      %v281 = vsel %vm280, %v275, %v277
      %v282 = vsel %vm280, %v277, %v279
      %283 = vrot.lane.b32.xlu0 %v263, 126
      %v284 = vpop.permute.xlu0 %283
      %285 = vrot.lane.b32.xlu0 %v264, 126
      %v286 = vpop.permute.xlu0 %285
      %287 = vrot.lane.b32.xlu0 %v269, 126
      %v288 = vpop.permute.xlu0 %287
      %vm289 = vcmask 1031168
      %v290 = vsel %vm289, %v284, %v286
      %v291 = vsel %vm289, %v286, %v288
      %292 = vrot.lane.b32.xlu0 %v271, 110
      %v293 = vpop.permute.xlu0 %292
      %294 = vrot.lane.b32.xlu0 %v272, 110
      %v295 = vpop.permute.xlu0 %294
      %296 = vrot.lane.b32.xlu0 %v273, 110
      %v297 = vpop.permute.xlu0 %296
      %vm298 = vcmask 900096
      %v299 = vsel %vm298, %v293, %v295
      %v300 = vsel %vm298, %v295, %v297
      %301 = vrot.lane.b32.xlu0 %v263, 109
      %v302 = vpop.permute.xlu0 %301
      %303 = vrot.lane.b32.xlu0 %v264, 109
      %v304 = vpop.permute.xlu0 %303
      %305 = vrot.lane.b32.xlu0 %v269, 109
      %v306 = vpop.permute.xlu0 %305
      %vm307 = vcmask 891904
      %v308 = vsel %vm307, %v302, %v304
      %v309 = vsel %vm307, %v304, %v306
      %310 = vrot.lane.b32.xlu0 %v271, 108
      %v311 = vpop.permute.xlu0 %310
      %312 = vrot.lane.b32.xlu0 %v272, 108
      %v313 = vpop.permute.xlu0 %312
      %314 = vrot.lane.b32.xlu0 %v273, 108
      %v315 = vpop.permute.xlu0 %314
      %vm316 = vcmask 883712
      %v317 = vsel %vm316, %v311, %v313
      %v318 = vsel %vm316, %v313, %v315
      %319 = vrot.lane.b32.xlu0 %v263, 92
      %v320 = vpop.permute.xlu0 %319
      %321 = vrot.lane.b32.xlu0 %v264, 92
      %v322 = vpop.permute.xlu0 %321
      %323 = vrot.lane.b32.xlu0 %v269, 92
      %v324 = vpop.permute.xlu0 %323
      %vm325 = vcmask 752640
      %v326 = vsel %vm325, %v320, %v322
      %v327 = vsel %vm325, %v322, %v324
      %328 = vrot.lane.b32.xlu0 %v271, 91
      %v329 = vpop.permute.xlu0 %328
      %330 = vrot.lane.b32.xlu0 %v272, 91
      %v331 = vpop.permute.xlu0 %330
      %332 = vrot.lane.b32.xlu0 %v273, 91
      %v333 = vpop.permute.xlu0 %332
      %vm334 = vcmask 744448
      %v335 = vsel %vm334, %v329, %v331
      %v336 = vsel %vm334, %v331, %v333
      %337 = vrot.lane.b32.xlu0 %v263, 90
      %v338 = vpop.permute.xlu0 %337
      %339 = vrot.lane.b32.xlu0 %v264, 90
      %v340 = vpop.permute.xlu0 %339
      %341 = vrot.lane.b32.xlu0 %v269, 90
      %v342 = vpop.permute.xlu0 %341
      %vm343 = vcmask 736256
      %v344 = vsel %vm343, %v338, %v340
      %v345 = vsel %vm343, %v340, %v342
      %vm346 = vcmask 1043456
      %v349 = vsel %vm346, %v263, %v281
      %v353 = vsel %vm346, %v264, %v282
      %v356 = vsel %vm346, %v269, %v279
      %v360 = vsel %vm346, %v290, %v299
      %v364 = vsel %vm346, %v291, %v300
      %v368 = vsel %vm346, %v288, %v297
      %v372 = vsel %vm346, %v308, %v317
      %v376 = vsel %vm346, %v309, %v318
      %v380 = vsel %vm346, %v306, %v315
      %v384 = vsel %vm346, %v326, %v335
      %v388 = vsel %vm346, %v327, %v336
      %v392 = vsel %vm346, %v324, %v333
      %395 = vset.pattern.permute.xlu0 0
      %396 = vperm.xlu0 %395, %v257
      %v397 = vpop.permute.xlu0 %396
      %vm399 = vcmask 588800
      %v401 = vsel %vm399, %v256, 0
      %v404 = vsel %vm346, %v344, 0
      %v407 = vsel %vm346, %v345, 0
      %v410 = vsel %vm346, %v342, 0
      %412 = vmatpush.bf16.msra.mxu0 0
      %413 = vmatpush.bf16.msra.mxu0 0
      %414 = vmatpush.bf16.msra.mxu0 0
      %415 = vmatpush.bf16.msra.mxu0 %v404
      %416 = vmatpush.bf16.msra.mxu0 %v384
      %417 = vmatpush.bf16.msra.mxu0 %v372
      %418 = vmatpush.bf16.msra.mxu0 %v360
      %419 = vmatpush.bf16.msra.mxu0 %v349
      %420 = vmatmul.bf16.gmra.mxu0 %v401
      %v421 = vpop.f32.mrf.mxu0
      %v422 = vadd.f32 %v397, %v421
      %v423 = vpop.f32.mrf.mxu0
      %424 = vdwg.mxu0
      %425 = vmatpush.bf16.msra.mxu0 0
      %426 = vmatpush.bf16.msra.mxu0 0
      %427 = vmatpush.bf16.msra.mxu0 0
      %428 = vmatpush.bf16.msra.mxu0 %v407
      %429 = vmatpush.bf16.msra.mxu0 %v388
      %430 = vmatpush.bf16.msra.mxu0 %v376
      %431 = vmatpush.bf16.msra.mxu0 %v364
      %432 = vmatpush.bf16.msra.mxu0 %v353
      %433 = vmatmul.bf16.gmra.mxu0 %v401
      %v434 = vpop.f32.mrf.mxu0
      %v435 = vadd.f32 %v397, %v434
      %v436 = vpop.f32.mrf.mxu0
      %437 = vdwg.mxu0
      %438 = vmatpush.bf16.msra.mxu0 0
      %439 = vmatpush.bf16.msra.mxu0 0
      %440 = vmatpush.bf16.msra.mxu0 0
      %441 = vmatpush.bf16.msra.mxu0 %v410
      %442 = vmatpush.bf16.msra.mxu0 %v392
      %443 = vmatpush.bf16.msra.mxu0 %v380
      %444 = vmatpush.bf16.msra.mxu0 %v368
      %445 = vmatpush.bf16.msra.mxu0 %v356
      %446 = vmatmul.bf16.gmra.mxu0 %v401
      %v447 = vpop.f32.mrf.mxu0
      %v448 = vadd.f32 %v397, %v447
      %v449 = vpop.f32.mrf.mxu0
      %450 = vdwg.mxu0
      %v451 = vmax.f32 %v422, 0.0
      %v452 = vmax.f32 %v435, 0.0
      %v453 = vmax.f32 %v448, 0.0
      %v454 = vunpack.c.l.bf16 %v253
      %v456 = vperm.slane %v454, 0
      %v457 = vperm.slane %v454, 2
      %v458 = vperm.slane %v454, 4
      %v462 = vperm.slane %v456, 0
      %v463 = vperm.slane %v457, 0
      %v464 = vperm.slane %v458, 0
      %v465 = vmul.f32 %v451, %v462
      %v466 = vmul.f32 %v452, %v463
      %v467 = vmul.f32 %v453, %v464
      %v468 = vpack.c.bf16 %v466, %v465
      %v469 = vpack.c.bf16 %v467, %v467
      %v472 = vunpack.c.l.b16 %v468
      %v473 = vunpack.c.h.b16 %v468
      %v474 = vunpack.c.l.b16 %v469
      %v475 = vpack.c.b16 %v472, %v472
      %v476 = vpack.c.b16 %v473, %v473
      %v477 = vpack.c.b16 %v474, %v474
      %478 = vrot.lane.b32.xlu0 %v475, 19
      %v479 = vpop.permute.xlu0 %478
      %480 = vrot.lane.b32.xlu0 %v476, 19
      %v481 = vpop.permute.xlu0 %480
      %482 = vrot.lane.b32.xlu0 %v477, 19
      %v483 = vpop.permute.xlu0 %482
      %vm484 = vcmask 154624
      %v485 = vsel %vm484, %v479, %v481
      %v486 = vsel %vm484, %v481, %v483
      %vm487 = vcmask 154624
      %v489 = vsel %vm487, 0, %v479
      %vm490 = vcmask 416768
      %v492 = vsel %vm490, %v486, 0
      %v493 = vld [vmem:[%s4] sm:$0xf]
      %v494 = vld [vmem:[%s4 + $0x4] sm:$0xf]
      %v495 = vld [vmem:[%s4 + $0x8] sm:$0xf]
      %v496 = vld [vmem:[%s4 + $0xc] sm:$0xf]
      %v497 = vld [vmem:[%s4 + $0x10] sm:$0xf]
      %v498 = vld [vmem:[%s4 + $0x14] sm:$0xf]
      %v499 = vld [vmem:[%s5] sm:$0xff]
      %v500 = vld [vmem:[%s5 + $0x8] sm:$0xff]
      %v501 = vld [vmem:[%s5 + $0x10] sm:$0xff]
      %v502 = vld [vmem:[%s5 + $0x18] sm:$0xff]
      %v503 = vld [vmem:[%s5 + $0x20] sm:$0xff]
      %v504 = vld [vmem:[%s5 + $0x28] sm:$0xff]
      %v505 = vsel %vm266, %v492, 0
      %v508 = vrot.slane %v489, 4
      %v509 = vrot.slane %v485, 4
      %v510 = vrot.slane %v505, 4
      %511 = vrot.lane.b32.xlu0 %v508, 127
      %v512 = vpop.permute.xlu0 %511
      %513 = vrot.lane.b32.xlu0 %v509, 127
      %v514 = vpop.permute.xlu0 %513
      %515 = vrot.lane.b32.xlu0 %v510, 127
      %v516 = vpop.permute.xlu0 %515
      %v517 = vsel %vm280, %v512, %v514
      %v518 = vsel %vm280, %v514, %v516
      %519 = vrot.lane.b32.xlu0 %v489, 126
      %v520 = vpop.permute.xlu0 %519
      %521 = vrot.lane.b32.xlu0 %v485, 126
      %v522 = vpop.permute.xlu0 %521
      %523 = vrot.lane.b32.xlu0 %v505, 126
      %v524 = vpop.permute.xlu0 %523
      %v525 = vsel %vm289, %v520, %v522
      %v526 = vsel %vm289, %v522, %v524
      %527 = vrot.lane.b32.xlu0 %v508, 110
      %v528 = vpop.permute.xlu0 %527
      %529 = vrot.lane.b32.xlu0 %v509, 110
      %v530 = vpop.permute.xlu0 %529
      %531 = vrot.lane.b32.xlu0 %v510, 110
      %v532 = vpop.permute.xlu0 %531
      %v533 = vsel %vm298, %v528, %v530
      %v534 = vsel %vm298, %v530, %v532
      %535 = vrot.lane.b32.xlu0 %v489, 109
      %v536 = vpop.permute.xlu0 %535
      %537 = vrot.lane.b32.xlu0 %v485, 109
      %v538 = vpop.permute.xlu0 %537
      %539 = vrot.lane.b32.xlu0 %v505, 109
      %v540 = vpop.permute.xlu0 %539
      %v541 = vsel %vm307, %v536, %v538
      %v542 = vsel %vm307, %v538, %v540
      %543 = vrot.lane.b32.xlu0 %v508, 108
      %v544 = vpop.permute.xlu0 %543
      %545 = vrot.lane.b32.xlu0 %v509, 108
      %v546 = vpop.permute.xlu0 %545
      %547 = vrot.lane.b32.xlu0 %v510, 108
      %v548 = vpop.permute.xlu0 %547
      %v549 = vsel %vm316, %v544, %v546
      %v550 = vsel %vm316, %v546, %v548
      %551 = vrot.lane.b32.xlu0 %v489, 92
      %v552 = vpop.permute.xlu0 %551
      %553 = vrot.lane.b32.xlu0 %v485, 92
      %v554 = vpop.permute.xlu0 %553
      %555 = vrot.lane.b32.xlu0 %v505, 92
      %v556 = vpop.permute.xlu0 %555
      %v557 = vsel %vm325, %v552, %v554
      %v558 = vsel %vm325, %v554, %v556
      %559 = vrot.lane.b32.xlu0 %v508, 91
      %v560 = vpop.permute.xlu0 %559
      %561 = vrot.lane.b32.xlu0 %v509, 91
      %v562 = vpop.permute.xlu0 %561
      %563 = vrot.lane.b32.xlu0 %v510, 91
      %v564 = vpop.permute.xlu0 %563
      %v565 = vsel %vm334, %v560, %v562
      %v566 = vsel %vm334, %v562, %v564
      %567 = vrot.lane.b32.xlu0 %v489, 90
      %v568 = vpop.permute.xlu0 %567
      %569 = vrot.lane.b32.xlu0 %v485, 90
      %v570 = vpop.permute.xlu0 %569
      %571 = vrot.lane.b32.xlu0 %v505, 90
      %v572 = vpop.permute.xlu0 %571
      %v573 = vsel %vm343, %v568, %v570
      %v574 = vsel %vm343, %v570, %v572
      %v576 = vsel %vm346, %v489, %v517
      %v580 = vsel %vm346, %v485, %v518
      %v583 = vsel %vm346, %v505, %v516
      %v587 = vsel %vm346, %v525, %v533
      %v591 = vsel %vm346, %v526, %v534
      %v595 = vsel %vm346, %v524, %v532
      %v599 = vsel %vm346, %v541, %v549
      %v603 = vsel %vm346, %v542, %v550
      %v607 = vsel %vm346, %v540, %v548
      %v611 = vsel %vm346, %v557, %v565
      %v615 = vsel %vm346, %v558, %v566
      %v619 = vsel %vm346, %v556, %v564
      %622 = vset.pattern.permute.xlu0 0
      %623 = vperm.xlu0 %622, %v499
      %v624 = vpop.permute.xlu0 %623
      %627 = vset.pattern.permute.xlu0 0
      %628 = vperm.xlu0 %627, %v500
      %v629 = vpop.permute.xlu0 %628
      %632 = vset.pattern.permute.xlu0 0
      %633 = vperm.xlu0 %632, %v501
      %v634 = vpop.permute.xlu0 %633
      %637 = vset.pattern.permute.xlu0 0
      %638 = vperm.xlu0 %637, %v502
      %v639 = vpop.permute.xlu0 %638
      %642 = vset.pattern.permute.xlu0 0
      %643 = vperm.xlu0 %642, %v503
      %v644 = vpop.permute.xlu0 %643
      %647 = vset.pattern.permute.xlu0 0
      %648 = vperm.xlu0 %647, %v504
      %v649 = vpop.permute.xlu0 %648
      %v657 = vunpack.c.l.b16 %v493
      %v658 = vunpack.c.l.b16 %v494
      %v659 = vunpack.c.l.b16 %v495
      %v660 = vunpack.c.l.b16 %v496
      %v661 = vunpack.c.l.b16 %v497
      %v662 = vunpack.c.l.b16 %v498
      %v663 = vpack.c.b16 %v658, %v657
      %v664 = vpack.c.b16 %v660, %v659
      %v665 = vpack.c.b16 %v662, %v661
      %v667 = vsel %vm399, %v663, 0
      %v670 = vsel %vm399, %v664, 0
      %v673 = vsel %vm399, %v665, 0
      %v676 = vsel %vm346, %v573, 0
      %v679 = vsel %vm346, %v574, 0
      %v682 = vsel %vm346, %v572, 0
      %684 = vmatpush.bf16.msra.mxu0 0
      %685 = vmatpush.bf16.msra.mxu0 0
      %686 = vmatpush.bf16.msra.mxu0 0
      %687 = vmatpush.bf16.msra.mxu0 %v676
      %688 = vmatpush.bf16.msra.mxu0 %v611
      %689 = vmatpush.bf16.msra.mxu0 %v599
      %690 = vmatpush.bf16.msra.mxu0 %v587
      %691 = vmatpush.bf16.msra.mxu0 %v576
      %692 = vmatmul.bf16.gmra.mxu0 %v667
      %v693 = vpop.f32.mrf.mxu0
      %v694 = vadd.f32 %v624, %v693
      %v695 = vpop.f32.mrf.mxu0
      %v696 = vadd.f32 %v629, %v695
      %697 = vmatmul.bf16.gmra.mxu0 %v670
      %v698 = vpop.f32.mrf.mxu0
      %v699 = vadd.f32 %v634, %v698
      %v700 = vpop.f32.mrf.mxu0
      %v701 = vadd.f32 %v639, %v700
      %702 = vmatmul.bf16.gmra.mxu0 %v673
      %v703 = vpop.f32.mrf.mxu0
      %v704 = vadd.f32 %v644, %v703
      %v705 = vpop.f32.mrf.mxu0
      %v706 = vadd.f32 %v649, %v705
      %707 = vdwg.mxu0
      %708 = vmatpush.bf16.msra.mxu0 0
      %709 = vmatpush.bf16.msra.mxu0 0
      %710 = vmatpush.bf16.msra.mxu0 0
      %711 = vmatpush.bf16.msra.mxu0 %v679
      %712 = vmatpush.bf16.msra.mxu0 %v615
      %713 = vmatpush.bf16.msra.mxu0 %v603
      %714 = vmatpush.bf16.msra.mxu0 %v591
      %715 = vmatpush.bf16.msra.mxu0 %v580
      %716 = vmatmul.bf16.gmra.mxu0 %v667
      %v717 = vpop.f32.mrf.mxu0
      %v718 = vadd.f32 %v624, %v717
      %v719 = vpop.f32.mrf.mxu0
      %v720 = vadd.f32 %v629, %v719
      %721 = vmatmul.bf16.gmra.mxu0 %v670
      %v722 = vpop.f32.mrf.mxu0
      %v723 = vadd.f32 %v634, %v722
      %v724 = vpop.f32.mrf.mxu0
      %v725 = vadd.f32 %v639, %v724
      %726 = vmatmul.bf16.gmra.mxu0 %v673
      %v727 = vpop.f32.mrf.mxu0
      %v728 = vadd.f32 %v644, %v727
      %v729 = vpop.f32.mrf.mxu0
      %v730 = vadd.f32 %v649, %v729
      %731 = vdwg.mxu0
      %732 = vmatpush.bf16.msra.mxu0 0
      %733 = vmatpush.bf16.msra.mxu0 0
      %734 = vmatpush.bf16.msra.mxu0 0
      %735 = vmatpush.bf16.msra.mxu0 %v682
      %736 = vmatpush.bf16.msra.mxu0 %v619
      %737 = vmatpush.bf16.msra.mxu0 %v607
      %738 = vmatpush.bf16.msra.mxu0 %v595
      %739 = vmatpush.bf16.msra.mxu0 %v583
      %740 = vmatmul.bf16.gmra.mxu0 %v667
      %v741 = vpop.f32.mrf.mxu0
      %v742 = vadd.f32 %v624, %v741
      %v743 = vpop.f32.mrf.mxu0
      %v744 = vadd.f32 %v629, %v743
      %745 = vmatmul.bf16.gmra.mxu0 %v670
      %v746 = vpop.f32.mrf.mxu0
      %v747 = vadd.f32 %v634, %v746
      %v748 = vpop.f32.mrf.mxu0
      %v749 = vadd.f32 %v639, %v748
      %750 = vmatmul.bf16.gmra.mxu0 %v673
      %v751 = vpop.f32.mrf.mxu0
      %v752 = vadd.f32 %v644, %v751
      %v753 = vpop.f32.mrf.mxu0
      %v754 = vadd.f32 %v649, %v753
      %755 = vdwg.mxu0
      %756 = vst [vmem:[%s251] sm:$0xff] %v694
      %757 = vst [vmem:[%s251 + $0x8] sm:$0xff] %v718
      %vm758 = vcmask 261120
      %759 = vst.msk [vmem:[%s251 + $0x10] sm:$0xff] %vm758, %v742
      %760 = vst [vmem:[%s251 + $0x18] sm:$0xff] %v696
      %761 = vst [vmem:[%s251 + $0x20] sm:$0xff] %v720
      %762 = vst.msk [vmem:[%s251 + $0x28] sm:$0xff] %vm758, %v744
      %763 = vst [vmem:[%s251 + $0x30] sm:$0xff] %v699
      %764 = vst [vmem:[%s251 + $0x38] sm:$0xff] %v723
      %765 = vst.msk [vmem:[%s251 + $0x40] sm:$0xff] %vm758, %v747
      %766 = vst [vmem:[%s251 + $0x48] sm:$0xff] %v701
      %767 = vst [vmem:[%s251 + $0x50] sm:$0xff] %v725
      %768 = vst.msk [vmem:[%s251 + $0x58] sm:$0xff] %vm758, %v749
      %769 = vst [vmem:[%s251 + $0x60] sm:$0xff] %v704
      %770 = vst [vmem:[%s251 + $0x68] sm:$0xff] %v728
      %771 = vst.msk [vmem:[%s251 + $0x70] sm:$0xff] %vm758, %v752
      %772 = vst [vmem:[%s251 + $0x78] sm:$0xff] %v706
      %773 = vst [vmem:[%s251 + $0x80] sm:$0xff] %v730
      %774 = vst.msk [vmem:[%s251 + $0x88] sm:$0xff] %vm758, %v754
      %p775 = scmp.lt.s32.totalorder %s17, 1
      %s776 = scalar_select %p775, %s17, 1
      %s777 = smul.addr %s776, 18
      %s778 = smul.addr %s777, 8
      %s779 = scalar_lea.vmem %s6, %s778
      // Predicated region
      $region45: #{rfda_forward.32} parent=43 // pred_check
        %p780 = pneg %p166
      $region46: #{rfda_forward.32} parent=43 // pred_check_branch
        %782 = sbr.rel (%p780) target = $region48
      $region47: #{rfda_forward.32} parent=43 // pred_region
        _
      $region48: #{rfda_forward.32} parent=43 // pred_fallthru
        _
    $region44: #{rfda_forward.32} parent=5 // pred_fallthru
      _
    %p783 = scmp.le.s32.totalorder 2, %s12
    // Predicated region
    $region49: #{rfda_forward.32} parent=5 // pred_check
      %p784 = pneg %p783
    $region50: #{rfda_forward.32} parent=5 // pred_check_branch
      %786 = sbr.rel (%p784) target = $region52
    $region51: #{rfda_forward.32} parent=5 // pred_region
      %s787 = ssub.s32 %s12, 2
      // Predicated region
      $region53: #{rfda_forward.32} parent=51 // pred_check
        %p788 = pneg %p172
      $region54: #{rfda_forward.32} parent=51 // pred_check_branch
        %790 = sbr.rel (%p788) target = $region56
      $region55: #{rfda_forward.32} parent=51 // pred_region
        %p791 = scmp.lt.s32.totalorder %s18, 1
        %s792 = scalar_select %p791, %s18, 1
        %s793 = smul.addr %s792, 18
        %s794 = smul.addr %s793, 8
        %s795 = scalar_lea.vmem %s6, %s794
      $region56: #{rfda_forward.32} parent=51 // pred_fallthru
        _
    $region52: #{rfda_forward.32} parent=5 // pred_fallthru
      _
  $region6: #{rfda_forward.32} parent=0 // loop_footer
    %s16 = sadd.s32 1, %s12
  $region7: #{rfda_forward.32} parent=0 // loop_footer_branch
    %11 = sbr.rel target = $region3
  $region8: #{rfda_forward.32} parent=0 // loop_exit
    _

// kernel: rfda_forward.33
$region0: #{rfda_forward.33}
  #allocation0 [shape = 'u32[]', space=smem, size = 0x4, offset = 0x4, fixed_abs, tag = 'smem constant byte address 0x4 - core index']
  #allocation1 [shape = 'u32[72,128]{1,0:T(1,128)}', space=vmem, size = 0x9000, scoped, tag = 'internal scratch']
  %s0 = inlined_call_operand.vmem [shape: bf16[2,16,256], index: 0, kind: input, shape index: {}]
  %s1 = inlined_call_operand.vmem [shape: bf16[8,16], index: 1, kind: input, shape index: {}]
  %s2 = inlined_call_operand.vmem [shape: f32[8,1], index: 2, kind: input, shape index: {}]
  %s3 = inlined_call_operand.vmem [shape: bf16[2,8,256], index: 3, kind: output, shape index: {}]
  %s4 = sld [smem:[#allocation0]]
  $region45: #{rfda_forward.33} parent=0
    _
  %s6 = ssub.s32 1, %s4
  %s7 = scalar_select 0, %s6, %s4
  loop: start=0, step=1, limit=4
  $region2: #{rfda_forward.33} parent=0 // loop_pre_header
    _
  $region3: #{rfda_forward.33} parent=0 // loop_header
    %s9 = sphi 0, %s13
    %p10 = scmp.ge.s32.totalorder %s9, 4
    %s19 = sphi 0, %s21
    %s22 = sphi 0, %s19
    %s23 = sphi 0, %s22
    %s39 = sphi 0, %s23
    %s43 = sphi 0, %s43
    %s45 = sphi 0, %s43
    %s46 = sphi 0, %s45
    %s60 = sphi 0, %s46
    %s64 = sphi 0, %s64
    %s66 = sphi 0, %s64
    %s67 = sphi 0, %s66
    %s81 = sphi 0, %s67
    %s87 = sphi 0, %s89
    %s90 = sphi 0, %s87
    %s91 = sphi 0, %s90
    %s107 = sphi 0, %s91
  $region4: #{rfda_forward.33} parent=0 // loop_header_branch
    %12 = sbr.rel (%p10) target = $region8
  $region5: #{rfda_forward.33} parent=0 // loop_body
    %s14 = ssub.s32 %s9, 1
    %s15 = ssub.s32 %s9, 2
    %s16 = sadd.s32 %s9, 1
    %s17 = ssub.s32 %s9, %s16
    %p18 = scmp.eq.s32.totalorder %s17, 0
    %s20 = sadd.s32 %s19, 1
    %s21 = scalar_select %p18, %s19, %s20
    %p24 = pneg %p18
    %p25 = scmp.eq.s32.totalorder %s9, 1
    %p26 = por %p24, %p25
    %p27 = scmp.ne.s32.totalorder %s19, %s22
    %p28 = scmp.eq.s32.totalorder %s9, 0
    %p29 = por %p27, %p28
    %p30 = scmp.ne.s32.totalorder %s19, %s22
    %p31 = scmp.eq.s32.totalorder %s14, 1
    %p32 = por %p30, %p31
    %p33 = scmp.ne.s32.totalorder %s22, %s23
    %p34 = scmp.eq.s32.totalorder %s14, 0
    %p35 = por %p33, %p34
    %p36 = scmp.ne.s32.totalorder %s22, %s23
    %p37 = scmp.eq.s32.totalorder %s15, 1
    %p38 = por %p36, %p37
    %p40 = scmp.ne.s32.totalorder %s23, %s39
    %p41 = scmp.eq.s32.totalorder %s15, 0
    %p42 = por %p40, %p41
    %s44 = sadd.s32 %s43, 1
    %p47 = scmp.eq.s32.totalorder %s9, 1
    %p48 = scmp.ne.s32.totalorder %s43, %s45
    %p49 = scmp.eq.s32.totalorder %s9, 0
    %p50 = por %p48, %p49
    %p51 = scmp.ne.s32.totalorder %s43, %s45
    %p52 = scmp.eq.s32.totalorder %s14, 1
    %p53 = por %p51, %p52
    %p54 = scmp.ne.s32.totalorder %s45, %s46
    %p55 = scmp.eq.s32.totalorder %s14, 0
    %p56 = por %p54, %p55
    %p57 = scmp.ne.s32.totalorder %s45, %s46
    %p58 = scmp.eq.s32.totalorder %s15, 1
    %p59 = por %p57, %p58
    %p61 = scmp.ne.s32.totalorder %s46, %s60
    %p62 = scmp.eq.s32.totalorder %s15, 0
    %p63 = por %p61, %p62
    %s65 = sadd.s32 %s64, 1
    %p68 = scmp.eq.s32.totalorder %s9, 1
    %p69 = scmp.ne.s32.totalorder %s64, %s66
    %p70 = scmp.eq.s32.totalorder %s9, 0
    %p71 = por %p69, %p70
    %p72 = scmp.ne.s32.totalorder %s64, %s66
    %p73 = scmp.eq.s32.totalorder %s14, 1
    %p74 = por %p72, %p73
    %p75 = scmp.ne.s32.totalorder %s66, %s67
    %p76 = scmp.eq.s32.totalorder %s14, 0
    %p77 = por %p75, %p76
    %p78 = scmp.ne.s32.totalorder %s66, %s67
    %p79 = scmp.eq.s32.totalorder %s15, 1
    %p80 = por %p78, %p79
    %p82 = scmp.ne.s32.totalorder %s67, %s81
    %p83 = scmp.eq.s32.totalorder %s15, 0
    %p84 = por %p82, %p83
    %s85 = ssub.s32 %s9, %s16
    %p86 = scmp.eq.s32.totalorder %s85, 0
    %s88 = sadd.s32 %s87, 1
    %s89 = scalar_select %p86, %s87, %s88
    %p92 = pneg %p86
    %p93 = scmp.eq.s32.totalorder %s9, 1
    %p94 = por %p92, %p93
    %p95 = scmp.ne.s32.totalorder %s87, %s90
    %p96 = scmp.eq.s32.totalorder %s9, 0
    %p97 = por %p95, %p96
    %p98 = scmp.ne.s32.totalorder %s87, %s90
    %p99 = scmp.eq.s32.totalorder %s14, 1
    %p100 = por %p98, %p99
    %p101 = scmp.ne.s32.totalorder %s90, %s91
    %p102 = scmp.eq.s32.totalorder %s14, 0
    %p103 = por %p101, %p102
    %p104 = scmp.ne.s32.totalorder %s90, %s91
    %p105 = scmp.eq.s32.totalorder %s15, 1
    %p106 = por %p104, %p105
    %p108 = scmp.ne.s32.totalorder %s91, %s107
    %p109 = scmp.eq.s32.totalorder %s15, 0
    %p110 = por %p108, %p109
    %p111 = scmp.le.s32.totalorder 1, %s9
    %p112 = scmp.lt.s32.totalorder %s9, 3
    %p113 = pnand %p111, %p112
    %p114 = pneg %p113
    // Predicated region
    $region9: #{rfda_forward.33} parent=5 // pred_check
      _
    $region10: #{rfda_forward.33} parent=5 // pred_check_branch
      %116 = sbr.rel (%p113) target = $region12
    $region11: #{rfda_forward.33} parent=5 // pred_region
      %s117 = ssub.s32 %s9, 1
      // Predicated region
      $region13: #{rfda_forward.33} parent=11 // pred_check
        %p118 = pneg %p56
      $region14: #{rfda_forward.33} parent=11 // pred_check_branch
        %120 = sbr.rel (%p118) target = $region16
      $region15: #{rfda_forward.33} parent=11 // pred_region
        _
      $region16: #{rfda_forward.33} parent=11 // pred_fallthru
        _
      // Predicated region
      $region17: #{rfda_forward.33} parent=11 // pred_check
        %p121 = pneg %p77
      $region18: #{rfda_forward.33} parent=11 // pred_check_branch
        %123 = sbr.rel (%p121) target = $region20
      $region19: #{rfda_forward.33} parent=11 // pred_region
        _
      $region20: #{rfda_forward.33} parent=11 // pred_fallthru
        _
    $region12: #{rfda_forward.33} parent=5 // pred_fallthru
      _
    %p124 = scmp.lt.s32.totalorder %s9, 2
    // Predicated region
    $region21: #{rfda_forward.33} parent=5 // pred_check
      %p125 = pneg %p124
    $region22: #{rfda_forward.33} parent=5 // pred_check_branch
      %127 = sbr.rel (%p125) target = $region24
    $region23: #{rfda_forward.33} parent=5 // pred_region
      // Predicated region
      $region25: #{rfda_forward.33} parent=23 // pred_check
        %p128 = pneg %p29
      $region26: #{rfda_forward.33} parent=23 // pred_check_branch
        %130 = sbr.rel (%p128) target = $region28
      $region27: #{rfda_forward.33} parent=23 // pred_region
        %p131 = scmp.lt.s32.totalorder %s9, 1
        %s132 = scalar_select %p131, %s9, 1
        %s133 = smul.addr %s132, 4
        %s134 = smul.addr %s133, 4
        %s135 = scalar_lea.vmem %s0, %s134
      $region28: #{rfda_forward.33} parent=23 // pred_fallthru
        _
    $region24: #{rfda_forward.33} parent=5 // pred_fallthru
      _
    %p136 = scmp.le.s32.totalorder 1, %s9
    %p137 = scmp.lt.s32.totalorder %s9, 3
    %p138 = pnand %p136, %p137
    %p139 = pneg %p138
    // Predicated region
    $region29: #{rfda_forward.33} parent=5 // pred_check
      _
    $region30: #{rfda_forward.33} parent=5 // pred_check_branch
      %141 = sbr.rel (%p138) target = $region32
    $region31: #{rfda_forward.33} parent=5 // pred_region
      %s142 = ssub.s32 %s9, 1
      %p143 = scmp.lt.s32.totalorder %s14, 1
      %s144 = scalar_select %p143, %s14, 1
      %s145 = smul.addr %s144, 4
      %s146 = smul.addr %s145, 4
      %s147 = scalar_lea.vmem %s0, %s146
      %p148 = pneg %p35
      %p149 = pneg %p32
      %p150 = pneg %p56
      %p151 = pneg %p53
      %p152 = pneg %p77
      %p153 = pneg %p74
      %p154 = pneg %p103
      %p155 = pneg %p100
      %p156 = scmp.lt.s32.totalorder %s14, 1
      %s157 = scalar_select %p156, %s14, 1
      %s158 = smul.addr %s157, 2
      %s159 = smul.addr %s158, 4
      %s160 = scalar_lea.vmem %s3, %s159
      %p161 = scmp.lt.s32.totalorder %s14, 1
      %s162 = scalar_select %p161, %s14, 1
      %s163 = smul.addr %s162, 4
      %s164 = smul.addr %s163, 4
      %s165 = scalar_lea.vmem %s0, %s164
      %p166 = scmp.lt.s32.totalorder %s14, 1
      %s167 = scalar_select %p166, %s14, 1
      %s168 = smul.addr %s167, 2
      %s169 = smul.addr %s168, 4
      %s170 = scalar_lea.vmem %s3, %s169
      %v172 = vld [vmem:[%s165] sm:$0xff]
      %v173 = vld [vmem:[%s165 + $0x8] sm:$0xff]
      %v174 = vld [vmem:[%s1] sm:$0xf]
      %v175 = vld [vmem:[%s2] sm:$0xff]
      %177 = vset.pattern.permute.xlu0 0
      %178 = vperm.xlu0 %177, %v175
      %v179 = vpop.permute.xlu0 %178
      %v183 = vunpack.c.l.b16 %v172
      %v184 = vunpack.c.h.b16 %v172
      %v185 = vunpack.c.l.b16 %v173
      %v186 = vunpack.c.h.b16 %v173
      %v187 = vpack.c.b16 %v185, %v183
      %v188 = vpack.c.b16 %v186, %v184
      %vm191 = vcmask 130048
      %v193 = vsel %vm191, %v174, 0
      %195 = vmatpush.bf16.msra.mxu0 0
      %196 = vmatpush.bf16.msra.mxu0 0
      %197 = vmatpush.bf16.msra.mxu0 0
      %198 = vmatpush.bf16.msra.mxu0 0
      %199 = vmatpush.bf16.msra.mxu0 0
      %200 = vmatpush.bf16.msra.mxu0 0
      %201 = vmatpush.bf16.msra.mxu0 0
      %202 = vmatpush.bf16.msra.mxu0 %v187
      %203 = vmatmul.bf16.gmra.mxu0 %v193
      %v204 = vpop.f32.mrf.mxu0
      %v205 = vadd.f32 %v179, %v204
      %v206 = vpop.f32.mrf.mxu0
      %207 = vdwg.mxu0
      %208 = vmatpush.bf16.msra.mxu0 0
      %209 = vmatpush.bf16.msra.mxu0 0
      %210 = vmatpush.bf16.msra.mxu0 0
      %211 = vmatpush.bf16.msra.mxu0 0
      %212 = vmatpush.bf16.msra.mxu0 0
      %213 = vmatpush.bf16.msra.mxu0 0
      %214 = vmatpush.bf16.msra.mxu0 0
      %215 = vmatpush.bf16.msra.mxu0 %v188
      %216 = vmatmul.bf16.gmra.mxu0 %v193
      %v217 = vpop.f32.mrf.mxu0
      %v218 = vadd.f32 %v179, %v217
      %v219 = vpop.f32.mrf.mxu0
      %220 = vdwg.mxu0
      %v221 = vmax.f32 %v205, 0.0
      %v222 = vmax.f32 %v218, 0.0
      %v223 = vpack.c.bf16 %v222, %v221
      %224 = vst [vmem:[%s170] sm:$0xff] %v223
      %p225 = scmp.lt.s32.totalorder %s14, 1
      %s226 = scalar_select %p225, %s14, 1
      %s227 = smul.addr %s226, 2
      %s228 = smul.addr %s227, 4
      %s229 = scalar_lea.vmem %s3, %s228
      // Predicated region
      $region33: #{rfda_forward.33} parent=31 // pred_check
        %p230 = pneg %p100
      $region34: #{rfda_forward.33} parent=31 // pred_check_branch
        %232 = sbr.rel (%p230) target = $region36
      $region35: #{rfda_forward.33} parent=31 // pred_region
        _
      $region36: #{rfda_forward.33} parent=31 // pred_fallthru
        _
    $region32: #{rfda_forward.33} parent=5 // pred_fallthru
      _
    %p233 = scmp.le.s32.totalorder 2, %s9
    // Predicated region
    $region37: #{rfda_forward.33} parent=5 // pred_check
      %p234 = pneg %p233
    $region38: #{rfda_forward.33} parent=5 // pred_check_branch
      %236 = sbr.rel (%p234) target = $region40
    $region39: #{rfda_forward.33} parent=5 // pred_region
      %s237 = ssub.s32 %s9, 2
      // Predicated region
      $region41: #{rfda_forward.33} parent=39 // pred_check
        %p238 = pneg %p106
      $region42: #{rfda_forward.33} parent=39 // pred_check_branch
        %240 = sbr.rel (%p238) target = $region44
      $region43: #{rfda_forward.33} parent=39 // pred_region
        %p241 = scmp.lt.s32.totalorder %s15, 1
        %s242 = scalar_select %p241, %s15, 1
        %s243 = smul.addr %s242, 2
        %s244 = smul.addr %s243, 4
        %s245 = scalar_lea.vmem %s3, %s244
      $region44: #{rfda_forward.33} parent=39 // pred_fallthru
        _
    $region40: #{rfda_forward.33} parent=5 // pred_fallthru
      _
  $region6: #{rfda_forward.33} parent=0 // loop_footer
    %s13 = sadd.s32 1, %s9
  $region7: #{rfda_forward.33} parent=0 // loop_footer_branch
    %8 = sbr.rel target = $region3
  $region8: #{rfda_forward.33} parent=0 // loop_exit
    _

// kernel: rfda_forward.34
$region0: #{rfda_forward.34}
  #allocation0 [shape = 'u32[]', space=smem, size = 0x4, offset = 0x4, fixed_abs, tag = 'smem constant byte address 0x4 - core index']
  #allocation1 [shape = 'u32[72,128]{1,0:T(1,128)}', space=vmem, size = 0x9000, scoped, tag = 'internal scratch']
  %s0 = inlined_call_operand.vmem [shape: bf16[2,16,324], index: 0, kind: input, shape index: {}]
  %s1 = inlined_call_operand.vmem [shape: bf16[1,288], index: 1, kind: input, shape index: {}]
  %s2 = inlined_call_operand.vmem [shape: bf16[8,144], index: 2, kind: input, shape index: {}]
  %s3 = inlined_call_operand.vmem [shape: f32[8,1], index: 3, kind: input, shape index: {}]
  %s4 = inlined_call_operand.vmem [shape: bf16[8,72], index: 4, kind: input, shape index: {}]
  %s5 = inlined_call_operand.vmem [shape: f32[8,1], index: 5, kind: input, shape index: {}]
  %s6 = inlined_call_operand.vmem [shape: bf16[2,8,288], index: 6, kind: output, shape index: {}]
  %s7 = sld [smem:[#allocation0]]
  $region57: #{rfda_forward.34} parent=0
    _
  %s9 = ssub.s32 1, %s7
  %s10 = scalar_select 0, %s9, %s7
  loop: start=0, step=1, limit=4
  $region2: #{rfda_forward.34} parent=0 // loop_pre_header
    _
  $region3: #{rfda_forward.34} parent=0 // loop_header
    %s12 = sphi 0, %s16
    %p13 = scmp.ge.s32.totalorder %s12, 4
    %s22 = sphi 0, %s24
    %s25 = sphi 0, %s22
    %s26 = sphi 0, %s25
    %s42 = sphi 0, %s26
    %s46 = sphi 0, %s46
    %s48 = sphi 0, %s46
    %s49 = sphi 0, %s48
    %s63 = sphi 0, %s49
    %s67 = sphi 0, %s67
    %s69 = sphi 0, %s67
    %s70 = sphi 0, %s69
    %s84 = sphi 0, %s70
    %s88 = sphi 0, %s88
    %s90 = sphi 0, %s88
    %s91 = sphi 0, %s90
    %s105 = sphi 0, %s91
    %s109 = sphi 0, %s109
    %s111 = sphi 0, %s109
    %s112 = sphi 0, %s111
    %s126 = sphi 0, %s112
    %s130 = sphi 0, %s130
    %s132 = sphi 0, %s130
    %s133 = sphi 0, %s132
    %s147 = sphi 0, %s133
    %s153 = sphi 0, %s155
    %s156 = sphi 0, %s153
    %s157 = sphi 0, %s156
    %s173 = sphi 0, %s157
  $region4: #{rfda_forward.34} parent=0 // loop_header_branch
    %15 = sbr.rel (%p13) target = $region8
  $region5: #{rfda_forward.34} parent=0 // loop_body
    %s17 = ssub.s32 %s12, 1
    %s18 = ssub.s32 %s12, 2
    %s19 = sadd.s32 %s12, 1
    %s20 = ssub.s32 %s12, %s19
    %p21 = scmp.eq.s32.totalorder %s20, 0
    %s23 = sadd.s32 %s22, 1
    %s24 = scalar_select %p21, %s22, %s23
    %p27 = pneg %p21
    %p28 = scmp.eq.s32.totalorder %s12, 1
    %p29 = por %p27, %p28
    %p30 = scmp.ne.s32.totalorder %s22, %s25
    %p31 = scmp.eq.s32.totalorder %s12, 0
    %p32 = por %p30, %p31
    %p33 = scmp.ne.s32.totalorder %s22, %s25
    %p34 = scmp.eq.s32.totalorder %s17, 1
    %p35 = por %p33, %p34
    %p36 = scmp.ne.s32.totalorder %s25, %s26
    %p37 = scmp.eq.s32.totalorder %s17, 0
    %p38 = por %p36, %p37
    %p39 = scmp.ne.s32.totalorder %s25, %s26
    %p40 = scmp.eq.s32.totalorder %s18, 1
    %p41 = por %p39, %p40
    %p43 = scmp.ne.s32.totalorder %s26, %s42
    %p44 = scmp.eq.s32.totalorder %s18, 0
    %p45 = por %p43, %p44
    %s47 = sadd.s32 %s46, 1
    %p50 = scmp.eq.s32.totalorder %s12, 1
    %p51 = scmp.ne.s32.totalorder %s46, %s48
    %p52 = scmp.eq.s32.totalorder %s12, 0
    %p53 = por %p51, %p52
    %p54 = scmp.ne.s32.totalorder %s46, %s48
    %p55 = scmp.eq.s32.totalorder %s17, 1
    %p56 = por %p54, %p55
    %p57 = scmp.ne.s32.totalorder %s48, %s49
    %p58 = scmp.eq.s32.totalorder %s17, 0
    %p59 = por %p57, %p58
    %p60 = scmp.ne.s32.totalorder %s48, %s49
    %p61 = scmp.eq.s32.totalorder %s18, 1
    %p62 = por %p60, %p61
    %p64 = scmp.ne.s32.totalorder %s49, %s63
    %p65 = scmp.eq.s32.totalorder %s18, 0
    %p66 = por %p64, %p65
    %s68 = sadd.s32 %s67, 1
    %p71 = scmp.eq.s32.totalorder %s12, 1
    %p72 = scmp.ne.s32.totalorder %s67, %s69
    %p73 = scmp.eq.s32.totalorder %s12, 0
    %p74 = por %p72, %p73
    %p75 = scmp.ne.s32.totalorder %s67, %s69
    %p76 = scmp.eq.s32.totalorder %s17, 1
    %p77 = por %p75, %p76
    %p78 = scmp.ne.s32.totalorder %s69, %s70
    %p79 = scmp.eq.s32.totalorder %s17, 0
    %p80 = por %p78, %p79
    %p81 = scmp.ne.s32.totalorder %s69, %s70
    %p82 = scmp.eq.s32.totalorder %s18, 1
    %p83 = por %p81, %p82
    %p85 = scmp.ne.s32.totalorder %s70, %s84
    %p86 = scmp.eq.s32.totalorder %s18, 0
    %p87 = por %p85, %p86
    %s89 = sadd.s32 %s88, 1
    %p92 = scmp.eq.s32.totalorder %s12, 1
    %p93 = scmp.ne.s32.totalorder %s88, %s90
    %p94 = scmp.eq.s32.totalorder %s12, 0
    %p95 = por %p93, %p94
    %p96 = scmp.ne.s32.totalorder %s88, %s90
    %p97 = scmp.eq.s32.totalorder %s17, 1
    %p98 = por %p96, %p97
    %p99 = scmp.ne.s32.totalorder %s90, %s91
    %p100 = scmp.eq.s32.totalorder %s17, 0
    %p101 = por %p99, %p100
    %p102 = scmp.ne.s32.totalorder %s90, %s91
    %p103 = scmp.eq.s32.totalorder %s18, 1
    %p104 = por %p102, %p103
    %p106 = scmp.ne.s32.totalorder %s91, %s105
    %p107 = scmp.eq.s32.totalorder %s18, 0
    %p108 = por %p106, %p107
    %s110 = sadd.s32 %s109, 1
    %p113 = scmp.eq.s32.totalorder %s12, 1
    %p114 = scmp.ne.s32.totalorder %s109, %s111
    %p115 = scmp.eq.s32.totalorder %s12, 0
    %p116 = por %p114, %p115
    %p117 = scmp.ne.s32.totalorder %s109, %s111
    %p118 = scmp.eq.s32.totalorder %s17, 1
    %p119 = por %p117, %p118
    %p120 = scmp.ne.s32.totalorder %s111, %s112
    %p121 = scmp.eq.s32.totalorder %s17, 0
    %p122 = por %p120, %p121
    %p123 = scmp.ne.s32.totalorder %s111, %s112
    %p124 = scmp.eq.s32.totalorder %s18, 1
    %p125 = por %p123, %p124
    %p127 = scmp.ne.s32.totalorder %s112, %s126
    %p128 = scmp.eq.s32.totalorder %s18, 0
    %p129 = por %p127, %p128
    %s131 = sadd.s32 %s130, 1
    %p134 = scmp.eq.s32.totalorder %s12, 1
    %p135 = scmp.ne.s32.totalorder %s130, %s132
    %p136 = scmp.eq.s32.totalorder %s12, 0
    %p137 = por %p135, %p136
    %p138 = scmp.ne.s32.totalorder %s130, %s132
    %p139 = scmp.eq.s32.totalorder %s17, 1
    %p140 = por %p138, %p139
    %p141 = scmp.ne.s32.totalorder %s132, %s133
    %p142 = scmp.eq.s32.totalorder %s17, 0
    %p143 = por %p141, %p142
    %p144 = scmp.ne.s32.totalorder %s132, %s133
    %p145 = scmp.eq.s32.totalorder %s18, 1
    %p146 = por %p144, %p145
    %p148 = scmp.ne.s32.totalorder %s133, %s147
    %p149 = scmp.eq.s32.totalorder %s18, 0
    %p150 = por %p148, %p149
    %s151 = ssub.s32 %s12, %s19
    %p152 = scmp.eq.s32.totalorder %s151, 0
    %s154 = sadd.s32 %s153, 1
    %s155 = scalar_select %p152, %s153, %s154
    %p158 = pneg %p152
    %p159 = scmp.eq.s32.totalorder %s12, 1
    %p160 = por %p158, %p159
    %p161 = scmp.ne.s32.totalorder %s153, %s156
    %p162 = scmp.eq.s32.totalorder %s12, 0
    %p163 = por %p161, %p162
    %p164 = scmp.ne.s32.totalorder %s153, %s156
    %p165 = scmp.eq.s32.totalorder %s17, 1
    %p166 = por %p164, %p165
    %p167 = scmp.ne.s32.totalorder %s156, %s157
    %p168 = scmp.eq.s32.totalorder %s17, 0
    %p169 = por %p167, %p168
    %p170 = scmp.ne.s32.totalorder %s156, %s157
    %p171 = scmp.eq.s32.totalorder %s18, 1
    %p172 = por %p170, %p171
    %p174 = scmp.ne.s32.totalorder %s157, %s173
    %p175 = scmp.eq.s32.totalorder %s18, 0
    %p176 = por %p174, %p175
    %p177 = scmp.le.s32.totalorder 1, %s12
    %p178 = scmp.lt.s32.totalorder %s12, 3
    %p179 = pnand %p177, %p178
    %p180 = pneg %p179
    // Predicated region
    $region9: #{rfda_forward.34} parent=5 // pred_check
      _
    $region10: #{rfda_forward.34} parent=5 // pred_check_branch
      %182 = sbr.rel (%p179) target = $region12
    $region11: #{rfda_forward.34} parent=5 // pred_region
      %s183 = ssub.s32 %s12, 1
      // Predicated region
      $region13: #{rfda_forward.34} parent=11 // pred_check
        %p184 = pneg %p59
      $region14: #{rfda_forward.34} parent=11 // pred_check_branch
        %186 = sbr.rel (%p184) target = $region16
      $region15: #{rfda_forward.34} parent=11 // pred_region
        _
      $region16: #{rfda_forward.34} parent=11 // pred_fallthru
        _
      // Predicated region
      $region17: #{rfda_forward.34} parent=11 // pred_check
        %p187 = pneg %p80
      $region18: #{rfda_forward.34} parent=11 // pred_check_branch
        %189 = sbr.rel (%p187) target = $region20
      $region19: #{rfda_forward.34} parent=11 // pred_region
        _
      $region20: #{rfda_forward.34} parent=11 // pred_fallthru
        _
      // Predicated region
      $region21: #{rfda_forward.34} parent=11 // pred_check
        %p190 = pneg %p101
      $region22: #{rfda_forward.34} parent=11 // pred_check_branch
        %192 = sbr.rel (%p190) target = $region24
      $region23: #{rfda_forward.34} parent=11 // pred_region
        _
      $region24: #{rfda_forward.34} parent=11 // pred_fallthru
        _
      // Predicated region
      $region25: #{rfda_forward.34} parent=11 // pred_check
        %p193 = pneg %p122
      $region26: #{rfda_forward.34} parent=11 // pred_check_branch
        %195 = sbr.rel (%p193) target = $region28
      $region27: #{rfda_forward.34} parent=11 // pred_region
        _
      $region28: #{rfda_forward.34} parent=11 // pred_fallthru
        _
      // Predicated region
      $region29: #{rfda_forward.34} parent=11 // pred_check
        %p196 = pneg %p143
      $region30: #{rfda_forward.34} parent=11 // pred_check_branch
        %198 = sbr.rel (%p196) target = $region32
      $region31: #{rfda_forward.34} parent=11 // pred_region
        _
      $region32: #{rfda_forward.34} parent=11 // pred_fallthru
        _
    $region12: #{rfda_forward.34} parent=5 // pred_fallthru
      _
    %p199 = scmp.lt.s32.totalorder %s12, 2
    // Predicated region
    $region33: #{rfda_forward.34} parent=5 // pred_check
      %p200 = pneg %p199
    $region34: #{rfda_forward.34} parent=5 // pred_check_branch
      %202 = sbr.rel (%p200) target = $region36
    $region35: #{rfda_forward.34} parent=5 // pred_region
      // Predicated region
      $region37: #{rfda_forward.34} parent=35 // pred_check
        %p203 = pneg %p32
      $region38: #{rfda_forward.34} parent=35 // pred_check_branch
        %205 = sbr.rel (%p203) target = $region40
      $region39: #{rfda_forward.34} parent=35 // pred_region
        %p206 = scmp.lt.s32.totalorder %s12, 1
        %s207 = scalar_select %p206, %s12, 1
        %s208 = smul.addr %s207, 6
        %s209 = smul.addr %s208, 4
        %s210 = scalar_lea.vmem %s0, %s209
      $region40: #{rfda_forward.34} parent=35 // pred_fallthru
        _
    $region36: #{rfda_forward.34} parent=5 // pred_fallthru
      _
    %p211 = scmp.le.s32.totalorder 1, %s12
    %p212 = scmp.lt.s32.totalorder %s12, 3
    %p213 = pnand %p211, %p212
    %p214 = pneg %p213
    // Predicated region
    $region41: #{rfda_forward.34} parent=5 // pred_check
      _
    $region42: #{rfda_forward.34} parent=5 // pred_check_branch
      %216 = sbr.rel (%p213) target = $region44
    $region43: #{rfda_forward.34} parent=5 // pred_region
      %s217 = ssub.s32 %s12, 1
      %p218 = scmp.lt.s32.totalorder %s17, 1
      %s219 = scalar_select %p218, %s17, 1
      %s220 = smul.addr %s219, 6
      %s221 = smul.addr %s220, 4
      %s222 = scalar_lea.vmem %s0, %s221
      %p223 = pneg %p38
      %p224 = pneg %p35
      %p225 = pneg %p59
      %p226 = pneg %p56
      %p227 = pneg %p80
      %p228 = pneg %p77
      %p229 = pneg %p101
      %p230 = pneg %p98
      %p231 = pneg %p122
      %p232 = pneg %p119
      %p233 = pneg %p143
      %p234 = pneg %p140
      %p235 = pneg %p169
      %p236 = pneg %p166
      %p237 = scmp.lt.s32.totalorder %s17, 1
      %s238 = scalar_select %p237, %s17, 1
      %s239 = smul.addr %s238, 3
      %s240 = smul.addr %s239, 4
      %s241 = scalar_lea.vmem %s6, %s240
      %p242 = scmp.lt.s32.totalorder %s17, 1
      %s243 = scalar_select %p242, %s17, 1
      %s244 = smul.addr %s243, 6
      %s245 = smul.addr %s244, 4
      %s246 = scalar_lea.vmem %s0, %s245
      %p247 = scmp.lt.s32.totalorder %s17, 1
      %s248 = scalar_select %p247, %s17, 1
      %s249 = smul.addr %s248, 3
      %s250 = smul.addr %s249, 4
      %s251 = scalar_lea.vmem %s6, %s250
      %v253 = vld [vmem:[%s1] sm:$0x7]
      %v254 = vld [vmem:[%s246] sm:$0xff]
      %v255 = vld [vmem:[%s246 + $0x8] sm:$0xf]
      %v256 = vld [vmem:[%s246 + $0xc] sm:$0xff]
      %v257 = vld [vmem:[%s246 + $0x14] sm:$0xf]
      %v258 = vld [vmem:[%s2] sm:$0xff]
      %v259 = vld [vmem:[%s3] sm:$0xff]
      %v264 = vunpack.c.l.b16 %v254
      %v265 = vunpack.c.h.b16 %v254
      %v266 = vunpack.c.l.b16 %v255
      %v267 = vunpack.c.l.b16 %v256
      %v268 = vunpack.c.h.b16 %v256
      %v269 = vunpack.c.l.b16 %v257
      %v270 = vpack.c.b16 %v267, %v264
      %v271 = vpack.c.b16 %v268, %v265
      %v272 = vpack.c.b16 %v269, %v266
      %vm275 = vcmask 556032
      %v278 = vsel %vm275, %v272, 0
      %281 = vrot.lane.b32.xlu0 %v270, 127
      %v282 = vpop.permute.xlu0 %281
      %283 = vrot.lane.b32.xlu0 %v271, 127
      %v284 = vpop.permute.xlu0 %283
      %285 = vrot.lane.b32.xlu0 %v278, 127
      %v286 = vpop.permute.xlu0 %285
      %vm287 = vcmask 1039360
      %v288 = vsel %vm287, %v282, %v284
      %v289 = vsel %vm287, %v284, %v286
      %293 = vrot.lane.b32.xlu0 %v270, 126
      %v294 = vpop.permute.xlu0 %293
      %295 = vrot.lane.b32.xlu0 %v271, 126
      %v296 = vpop.permute.xlu0 %295
      %297 = vrot.lane.b32.xlu0 %v278, 126
      %v298 = vpop.permute.xlu0 %297
      %vm299 = vcmask 1031168
      %v300 = vsel %vm299, %v294, %v296
      %v301 = vsel %vm299, %v296, %v298
      %305 = vrot.lane.b32.xlu0 %v270, 110
      %v306 = vpop.permute.xlu0 %305
      %307 = vrot.lane.b32.xlu0 %v271, 110
      %v308 = vpop.permute.xlu0 %307
      %309 = vrot.lane.b32.xlu0 %v278, 110
      %v310 = vpop.permute.xlu0 %309
      %vm311 = vcmask 900096
      %v312 = vsel %vm311, %v306, %v308
      %v313 = vsel %vm311, %v308, %v310
      %317 = vrot.lane.b32.xlu0 %v270, 109
      %v318 = vpop.permute.xlu0 %317
      %319 = vrot.lane.b32.xlu0 %v271, 109
      %v320 = vpop.permute.xlu0 %319
      %321 = vrot.lane.b32.xlu0 %v278, 109
      %v322 = vpop.permute.xlu0 %321
      %vm323 = vcmask 891904
      %v324 = vsel %vm323, %v318, %v320
      %v325 = vsel %vm323, %v320, %v322
      %326 = vrot.lane.b32.xlu0 %v270, 108
      %v327 = vpop.permute.xlu0 %326
      %328 = vrot.lane.b32.xlu0 %v271, 108
      %v329 = vpop.permute.xlu0 %328
      %330 = vrot.lane.b32.xlu0 %v278, 108
      %v331 = vpop.permute.xlu0 %330
      %vm332 = vcmask 883712
      %v333 = vsel %vm332, %v327, %v329
      %v334 = vsel %vm332, %v329, %v331
      %335 = vrot.lane.b32.xlu0 %v270, 92
      %v336 = vpop.permute.xlu0 %335
      %337 = vrot.lane.b32.xlu0 %v271, 92
      %v338 = vpop.permute.xlu0 %337
      %339 = vrot.lane.b32.xlu0 %v278, 92
      %v340 = vpop.permute.xlu0 %339
      %vm341 = vcmask 752640
      %v342 = vsel %vm341, %v336, %v338
      %v343 = vsel %vm341, %v338, %v340
      %344 = vrot.lane.b32.xlu0 %v270, 91
      %v345 = vpop.permute.xlu0 %344
      %346 = vrot.lane.b32.xlu0 %v271, 91
      %v347 = vpop.permute.xlu0 %346
      %348 = vrot.lane.b32.xlu0 %v278, 91
      %v349 = vpop.permute.xlu0 %348
      %vm350 = vcmask 744448
      %v351 = vsel %vm350, %v345, %v347
      %v352 = vsel %vm350, %v347, %v349
      %353 = vrot.lane.b32.xlu0 %v270, 90
      %v354 = vpop.permute.xlu0 %353
      %355 = vrot.lane.b32.xlu0 %v271, 90
      %v356 = vpop.permute.xlu0 %355
      %357 = vrot.lane.b32.xlu0 %v278, 90
      %v358 = vpop.permute.xlu0 %357
      %vm359 = vcmask 736256
      %v360 = vsel %vm359, %v354, %v356
      %v361 = vsel %vm359, %v356, %v358
      %v363 = vunpack.c.l.b16 %v258
      %v364 = vunpack.c.h.b16 %v258
      %v365 = vpack.c.b16 %v363, %v363
      %v366 = vpack.c.b16 %v364, %v364
      %367 = vrot.lane.b32.xlu0 %v365, 56
      %v368 = vpop.permute.xlu0 %367
      %369 = vrot.lane.b32.xlu0 %v366, 56
      %v370 = vpop.permute.xlu0 %369
      %vm371 = vcmask 457728
      %v372 = vsel %vm371, %v368, %v370
      %vm373 = vcmask 1043456
      %v374 = vrot.slane %v324, 4
      %v375 = vrot.slane %v333, 4
      %v376 = vsel %vm373, %v374, %v375
      %v377 = vrot.slane %v325, 4
      %v378 = vrot.slane %v334, 4
      %v379 = vsel %vm373, %v377, %v378
      %v380 = vrot.slane %v322, 4
      %v381 = vrot.slane %v331, 4
      %v382 = vsel %vm373, %v380, %v381
      %v383 = vrot.slane %v342, 4
      %v384 = vsel %vm373, %v375, %v383
      %v385 = vrot.slane %v343, 4
      %v386 = vsel %vm373, %v378, %v385
      %v387 = vrot.slane %v340, 4
      %v388 = vsel %vm373, %v381, %v387
      %v389 = vrot.slane %v351, 4
      %v390 = vsel %vm373, %v383, %v389
      %v391 = vrot.slane %v352, 4
      %v392 = vsel %vm373, %v385, %v391
      %v393 = vrot.slane %v349, 4
      %v394 = vsel %vm373, %v387, %v393
      %v395 = vrot.slane %v360, 4
      %v396 = vsel %vm373, %v389, %v395
      %v397 = vrot.slane %v361, 4
      %v398 = vsel %vm373, %v391, %v397
      %v399 = vrot.slane %v358, 4
      %v400 = vsel %vm373, %v393, %v399
      %vm413 = vcmask 588800
      %v415 = vsel %vm413, %v372, 0
      %vm417 = vcmask 1043456
      %v419 = vsel %vm417, %v395, 0
      %v422 = vsel %vm417, %v397, 0
      %v425 = vsel %vm417, %v399, 0
      %427 = vmatpush.bf16.msra.mxu0 0
      %428 = vmatpush.bf16.msra.mxu0 0
      %429 = vmatpush.bf16.msra.mxu0 0
      %430 = vmatpush.bf16.msra.mxu0 %v419
      %431 = vmatpush.bf16.msra.mxu0 %v396
      %432 = vmatpush.bf16.msra.mxu0 %v390
      %433 = vmatpush.bf16.msra.mxu0 %v384
      %434 = vmatpush.bf16.msra.mxu0 %v376
      %435 = vmatmul.bf16.gmra.mxu0 %v415
      %v436 = vpop.f32.mrf.mxu0
      %v437 = vadd.f32 0.0, %v436
      %v438 = vpop.f32.mrf.mxu0
      %439 = vdwg.mxu0
      %440 = vmatpush.bf16.msra.mxu0 0
      %441 = vmatpush.bf16.msra.mxu0 0
      %442 = vmatpush.bf16.msra.mxu0 0
      %443 = vmatpush.bf16.msra.mxu0 %v422
      %444 = vmatpush.bf16.msra.mxu0 %v398
      %445 = vmatpush.bf16.msra.mxu0 %v392
      %446 = vmatpush.bf16.msra.mxu0 %v386
      %447 = vmatpush.bf16.msra.mxu0 %v379
      %448 = vmatmul.bf16.gmra.mxu0 %v415
      %v449 = vpop.f32.mrf.mxu0
      %v450 = vadd.f32 0.0, %v449
      %v451 = vpop.f32.mrf.mxu0
      %452 = vdwg.mxu0
      %453 = vmatpush.bf16.msra.mxu0 0
      %454 = vmatpush.bf16.msra.mxu0 0
      %455 = vmatpush.bf16.msra.mxu0 0
      %456 = vmatpush.bf16.msra.mxu0 %v425
      %457 = vmatpush.bf16.msra.mxu0 %v400
      %458 = vmatpush.bf16.msra.mxu0 %v394
      %459 = vmatpush.bf16.msra.mxu0 %v388
      %460 = vmatpush.bf16.msra.mxu0 %v382
      %461 = vmatmul.bf16.gmra.mxu0 %v415
      %v462 = vpop.f32.mrf.mxu0
      %v463 = vadd.f32 0.0, %v462
      %v464 = vpop.f32.mrf.mxu0
      %465 = vdwg.mxu0
      %v467 = vsel %vm413, %v258, 0
      %v470 = vsel %vm417, %v324, 0
      %v473 = vsel %vm417, %v325, 0
      %v476 = vsel %vm417, %v322, 0
      %478 = vmatpush.bf16.msra.mxu0 0
      %479 = vmatpush.bf16.msra.mxu0 0
      %480 = vmatpush.bf16.msra.mxu0 0
      %481 = vmatpush.bf16.msra.mxu0 %v470
      %482 = vmatpush.bf16.msra.mxu0 %v312
      %483 = vmatpush.bf16.msra.mxu0 %v300
      %484 = vmatpush.bf16.msra.mxu0 %v288
      %485 = vmatpush.bf16.msra.mxu0 %v270
      %486 = vmatmul.bf16.gmra.mxu0 %v467
      %v487 = vpop.f32.mrf.mxu0
      %v488 = vadd.f32 %v437, %v487
      %v489 = vpop.f32.mrf.mxu0
      %490 = vdwg.mxu0
      %491 = vmatpush.bf16.msra.mxu0 0
      %492 = vmatpush.bf16.msra.mxu0 0
      %493 = vmatpush.bf16.msra.mxu0 0
      %494 = vmatpush.bf16.msra.mxu0 %v473
      %495 = vmatpush.bf16.msra.mxu0 %v313
      %496 = vmatpush.bf16.msra.mxu0 %v301
      %497 = vmatpush.bf16.msra.mxu0 %v289
      %498 = vmatpush.bf16.msra.mxu0 %v271
      %499 = vmatmul.bf16.gmra.mxu0 %v467
      %v500 = vpop.f32.mrf.mxu0
      %v501 = vadd.f32 %v450, %v500
      %v502 = vpop.f32.mrf.mxu0
      %503 = vdwg.mxu0
      %504 = vmatpush.bf16.msra.mxu0 0
      %505 = vmatpush.bf16.msra.mxu0 0
      %506 = vmatpush.bf16.msra.mxu0 0
      %507 = vmatpush.bf16.msra.mxu0 %v476
      %508 = vmatpush.bf16.msra.mxu0 %v310
      %509 = vmatpush.bf16.msra.mxu0 %v298
      %510 = vmatpush.bf16.msra.mxu0 %v286
      %511 = vmatpush.bf16.msra.mxu0 %v278
      %512 = vmatmul.bf16.gmra.mxu0 %v467
      %v513 = vpop.f32.mrf.mxu0
      %v514 = vadd.f32 %v463, %v513
      %v515 = vpop.f32.mrf.mxu0
      %516 = vdwg.mxu0
      %518 = vset.pattern.permute.xlu0 0
      %519 = vperm.xlu0 %518, %v259
      %v520 = vpop.permute.xlu0 %519
      %v522 = vadd.f32 %v488, %v520
      %v523 = vadd.f32 %v501, %v520
      %v524 = vadd.f32 %v514, %v520
      %v525 = vmax.f32 %v522, 0.0
      %v526 = vmax.f32 %v523, 0.0
      %v527 = vmax.f32 %v524, 0.0
      %v528 = vunpack.c.l.bf16 %v253
      %v530 = vperm.slane %v528, 0
      %v531 = vperm.slane %v528, 2
      %v532 = vperm.slane %v528, 4
      %v536 = vperm.slane %v530, 0
      %v537 = vperm.slane %v531, 0
      %v538 = vperm.slane %v532, 0
      %v539 = vmul.f32 %v525, %v536
      %v540 = vmul.f32 %v526, %v537
      %v541 = vmul.f32 %v527, %v538
      %v542 = vpack.c.bf16 %v540, %v539
      %v543 = vpack.c.bf16 %v541, %v541
      %v546 = vunpack.c.l.b16 %v542
      %v547 = vunpack.c.h.b16 %v542
      %v548 = vunpack.c.l.b16 %v543
      %v549 = vpack.c.b16 %v546, %v546
      %v550 = vpack.c.b16 %v547, %v547
      %v551 = vpack.c.b16 %v548, %v548
      %552 = vrot.lane.b32.xlu0 %v549, 19
      %v553 = vpop.permute.xlu0 %552
      %554 = vrot.lane.b32.xlu0 %v550, 19
      %v555 = vpop.permute.xlu0 %554
      %556 = vrot.lane.b32.xlu0 %v551, 19
      %v557 = vpop.permute.xlu0 %556
      %vm558 = vcmask 154624
      %v559 = vsel %vm558, %v553, %v555
      %v560 = vsel %vm558, %v555, %v557
      %vm561 = vcmask 154624
      %v563 = vsel %vm561, 0, %v553
      %vm564 = vcmask 416768
      %v566 = vsel %vm564, %v560, 0
      %v567 = vld [vmem:[%s4] sm:$0xf]
      %v568 = vld [vmem:[%s5] sm:$0xff]
      %v569 = vsel %vm275, %v566, 0
      %v572 = vrot.slane %v563, 4
      %v573 = vrot.slane %v559, 4
      %v574 = vrot.slane %v569, 4
      %575 = vrot.lane.b32.xlu0 %v572, 127
      %v576 = vpop.permute.xlu0 %575
      %577 = vrot.lane.b32.xlu0 %v573, 127
      %v578 = vpop.permute.xlu0 %577
      %579 = vrot.lane.b32.xlu0 %v574, 127
      %v580 = vpop.permute.xlu0 %579
      %v581 = vsel %vm287, %v576, %v578
      %v582 = vsel %vm287, %v578, %v580
      %583 = vrot.lane.b32.xlu0 %v563, 126
      %v584 = vpop.permute.xlu0 %583
      %585 = vrot.lane.b32.xlu0 %v559, 126
      %v586 = vpop.permute.xlu0 %585
      %587 = vrot.lane.b32.xlu0 %v569, 126
      %v588 = vpop.permute.xlu0 %587
      %v589 = vsel %vm299, %v584, %v586
      %v590 = vsel %vm299, %v586, %v588
      %591 = vrot.lane.b32.xlu0 %v572, 110
      %v592 = vpop.permute.xlu0 %591
      %593 = vrot.lane.b32.xlu0 %v573, 110
      %v594 = vpop.permute.xlu0 %593
      %595 = vrot.lane.b32.xlu0 %v574, 110
      %v596 = vpop.permute.xlu0 %595
      %v597 = vsel %vm311, %v592, %v594
      %v598 = vsel %vm311, %v594, %v596
      %599 = vrot.lane.b32.xlu0 %v563, 109
      %v600 = vpop.permute.xlu0 %599
      %601 = vrot.lane.b32.xlu0 %v559, 109
      %v602 = vpop.permute.xlu0 %601
      %603 = vrot.lane.b32.xlu0 %v569, 109
      %v604 = vpop.permute.xlu0 %603
      %v605 = vsel %vm323, %v600, %v602
      %v606 = vsel %vm323, %v602, %v604
      %607 = vrot.lane.b32.xlu0 %v572, 108
      %v608 = vpop.permute.xlu0 %607
      %609 = vrot.lane.b32.xlu0 %v573, 108
      %v610 = vpop.permute.xlu0 %609
      %611 = vrot.lane.b32.xlu0 %v574, 108
      %v612 = vpop.permute.xlu0 %611
      %v613 = vsel %vm332, %v608, %v610
      %v614 = vsel %vm332, %v610, %v612
      %615 = vrot.lane.b32.xlu0 %v563, 92
      %v616 = vpop.permute.xlu0 %615
      %617 = vrot.lane.b32.xlu0 %v559, 92
      %v618 = vpop.permute.xlu0 %617
      %619 = vrot.lane.b32.xlu0 %v569, 92
      %v620 = vpop.permute.xlu0 %619
      %v621 = vsel %vm341, %v616, %v618
      %v622 = vsel %vm341, %v618, %v620
      %623 = vrot.lane.b32.xlu0 %v572, 91
      %v624 = vpop.permute.xlu0 %623
      %625 = vrot.lane.b32.xlu0 %v573, 91
      %v626 = vpop.permute.xlu0 %625
      %627 = vrot.lane.b32.xlu0 %v574, 91
      %v628 = vpop.permute.xlu0 %627
      %v629 = vsel %vm350, %v624, %v626
      %v630 = vsel %vm350, %v626, %v628
      %631 = vrot.lane.b32.xlu0 %v563, 90
      %v632 = vpop.permute.xlu0 %631
      %633 = vrot.lane.b32.xlu0 %v559, 90
      %v634 = vpop.permute.xlu0 %633
      %635 = vrot.lane.b32.xlu0 %v569, 90
      %v636 = vpop.permute.xlu0 %635
      %v637 = vsel %vm359, %v632, %v634
      %v638 = vsel %vm359, %v634, %v636
      %v640 = vsel %vm417, %v563, %v581
      %v644 = vsel %vm417, %v559, %v582
      %v647 = vsel %vm417, %v569, %v580
      %v651 = vsel %vm417, %v589, %v597
      %v655 = vsel %vm417, %v590, %v598
      %v659 = vsel %vm417, %v588, %v596
      %v663 = vsel %vm417, %v605, %v613
      %v667 = vsel %vm417, %v606, %v614
      %v671 = vsel %vm417, %v604, %v612
      %v675 = vsel %vm417, %v621, %v629
      %v679 = vsel %vm417, %v622, %v630
      %v683 = vsel %vm417, %v620, %v628
      %686 = vset.pattern.permute.xlu0 0
      %687 = vperm.xlu0 %686, %v568
      %v688 = vpop.permute.xlu0 %687
      %v691 = vsel %vm413, %v567, 0
      %v694 = vsel %vm417, %v637, 0
      %v697 = vsel %vm417, %v638, 0
      %v700 = vsel %vm417, %v636, 0
      %702 = vmatpush.bf16.msra.mxu0 0
      %703 = vmatpush.bf16.msra.mxu0 0
      %704 = vmatpush.bf16.msra.mxu0 0
      %705 = vmatpush.bf16.msra.mxu0 %v694
      %706 = vmatpush.bf16.msra.mxu0 %v675
      %707 = vmatpush.bf16.msra.mxu0 %v663
      %708 = vmatpush.bf16.msra.mxu0 %v651
      %709 = vmatpush.bf16.msra.mxu0 %v640
      %710 = vmatmul.bf16.gmra.mxu0 %v691
      %v711 = vpop.f32.mrf.mxu0
      %v712 = vadd.f32 %v688, %v711
      %v713 = vpop.f32.mrf.mxu0
      %714 = vdwg.mxu0
      %715 = vmatpush.bf16.msra.mxu0 0
      %716 = vmatpush.bf16.msra.mxu0 0
      %717 = vmatpush.bf16.msra.mxu0 0
      %718 = vmatpush.bf16.msra.mxu0 %v697
      %719 = vmatpush.bf16.msra.mxu0 %v679
      %720 = vmatpush.bf16.msra.mxu0 %v667
      %721 = vmatpush.bf16.msra.mxu0 %v655
      %722 = vmatpush.bf16.msra.mxu0 %v644
      %723 = vmatmul.bf16.gmra.mxu0 %v691
      %v724 = vpop.f32.mrf.mxu0
      %v725 = vadd.f32 %v688, %v724
      %v726 = vpop.f32.mrf.mxu0
      %727 = vdwg.mxu0
      %728 = vmatpush.bf16.msra.mxu0 0
      %729 = vmatpush.bf16.msra.mxu0 0
      %730 = vmatpush.bf16.msra.mxu0 0
      %731 = vmatpush.bf16.msra.mxu0 %v700
      %732 = vmatpush.bf16.msra.mxu0 %v683
      %733 = vmatpush.bf16.msra.mxu0 %v671
      %734 = vmatpush.bf16.msra.mxu0 %v659
      %735 = vmatpush.bf16.msra.mxu0 %v647
      %736 = vmatmul.bf16.gmra.mxu0 %v691
      %v737 = vpop.f32.mrf.mxu0
      %v738 = vadd.f32 %v688, %v737
      %v739 = vpop.f32.mrf.mxu0
      %740 = vdwg.mxu0
      %v741 = vmax.f32 %v712, 0.0
      %v742 = vmax.f32 %v725, 0.0
      %v743 = vmax.f32 %v738, 0.0
      %v744 = vpack.c.bf16 %v742, %v741
      %v745 = vpack.c.bf16 %v743, %v743
      %746 = vst [vmem:[%s251] sm:$0xff] %v744
      %vm747 = vcmask 257024
      %748 = vst.msk [vmem:[%s251 + $0x8] sm:$0xf] %vm747, %v745
      %p749 = scmp.lt.s32.totalorder %s17, 1
      %s750 = scalar_select %p749, %s17, 1
      %s751 = smul.addr %s750, 3
      %s752 = smul.addr %s751, 4
      %s753 = scalar_lea.vmem %s6, %s752
      // Predicated region
      $region45: #{rfda_forward.34} parent=43 // pred_check
        %p754 = pneg %p166
      $region46: #{rfda_forward.34} parent=43 // pred_check_branch
        %756 = sbr.rel (%p754) target = $region48
      $region47: #{rfda_forward.34} parent=43 // pred_region
        _
      $region48: #{rfda_forward.34} parent=43 // pred_fallthru
        _
    $region44: #{rfda_forward.34} parent=5 // pred_fallthru
      _
    %p757 = scmp.le.s32.totalorder 2, %s12
    // Predicated region
    $region49: #{rfda_forward.34} parent=5 // pred_check
      %p758 = pneg %p757
    $region50: #{rfda_forward.34} parent=5 // pred_check_branch
      %760 = sbr.rel (%p758) target = $region52
    $region51: #{rfda_forward.34} parent=5 // pred_region
      %s761 = ssub.s32 %s12, 2
      // Predicated region
      $region53: #{rfda_forward.34} parent=51 // pred_check
        %p762 = pneg %p172
      $region54: #{rfda_forward.34} parent=51 // pred_check_branch
        %764 = sbr.rel (%p762) target = $region56
      $region55: #{rfda_forward.34} parent=51 // pred_region
        %p765 = scmp.lt.s32.totalorder %s18, 1
        %s766 = scalar_select %p765, %s18, 1
        %s767 = smul.addr %s766, 3
        %s768 = smul.addr %s767, 4
        %s769 = scalar_lea.vmem %s6, %s768
      $region56: #{rfda_forward.34} parent=51 // pred_fallthru
        _
    $region52: #{rfda_forward.34} parent=5 // pred_fallthru
      _
  $region6: #{rfda_forward.34} parent=0 // loop_footer
    %s16 = sadd.s32 1, %s12
  $region7: #{rfda_forward.34} parent=0 // loop_footer_branch
    %11 = sbr.rel target = $region3
  $region8: #{rfda_forward.34} parent=0 // loop_exit
    _

// kernel: rfda_forward.35
$region0: #{rfda_forward.35}
  #allocation0 [shape = 'u32[]', space=smem, size = 0x4, offset = 0x4, fixed_abs, tag = 'smem constant byte address 0x4 - core index']
  #allocation1 [shape = 'u32[72,128]{1,0:T(1,128)}', space=vmem, size = 0x9000, scoped, tag = 'internal scratch']
  #allocation2 [shape = 'f32[1,1]{1,0:T(1,128)S(1)}', space=vmem, size = 0x200, scoped, tag = 'scoped memory for rfda_forward.35']
  %s0 = inlined_call_operand.vmem [shape: bf16[2,8,324], index: 0, kind: input, shape index: {}]
  %s1 = inlined_call_operand.vmem [shape: bf16[1,288], index: 1, kind: input, shape index: {}]
  %s2 = inlined_call_operand.vmem [shape: bf16[8,72], index: 2, kind: input, shape index: {}]
  %s3 = inlined_call_operand.vmem [shape: f32[8,1], index: 3, kind: input, shape index: {}]
  %s4 = inlined_call_operand.vmem [shape: bf16[8,72], index: 4, kind: input, shape index: {}]
  %s5 = inlined_call_operand.vmem [shape: f32[8,1], index: 5, kind: input, shape index: {}]
  %s6 = inlined_call_operand.vmem [shape: bf16[1,72], index: 6, kind: input, shape index: {}]
  %s7 = inlined_call_operand.<no memory space> [shape: f32[1,1], index: 7, kind: input, shape index: {}]
  %s8 = inlined_call_operand.vmem [shape: f32[2,1,288], index: 8, kind: output, shape index: {}]
  %s9 = sld [smem:[#allocation0]]
  $region65: #{rfda_forward.35} parent=0
    _
  %s11 = ssub.s32 1, %s9
  %s12 = scalar_select 0, %s11, %s9
  %v13 = vstv %s7
  %14 = vst [vmem:[#allocation2] sm:$0x1] %v13
  loop: start=0, step=1, limit=4
  $region2: #{rfda_forward.35} parent=0 // loop_pre_header
    _
  $region3: #{rfda_forward.35} parent=0 // loop_header
    %s16 = sphi 0, %s20
    %p17 = scmp.ge.s32.totalorder %s16, 4
    %s26 = sphi 0, %s28
    %s29 = sphi 0, %s26
    %s30 = sphi 0, %s29
    %s46 = sphi 0, %s30
    %s50 = sphi 0, %s50
    %s52 = sphi 0, %s50
    %s53 = sphi 0, %s52
    %s67 = sphi 0, %s53
    %s71 = sphi 0, %s71
    %s73 = sphi 0, %s71
    %s74 = sphi 0, %s73
    %s88 = sphi 0, %s74
    %s92 = sphi 0, %s92
    %s94 = sphi 0, %s92
    %s95 = sphi 0, %s94
    %s109 = sphi 0, %s95
    %s113 = sphi 0, %s113
    %s115 = sphi 0, %s113
    %s116 = sphi 0, %s115
    %s130 = sphi 0, %s116
    %s134 = sphi 0, %s134
    %s136 = sphi 0, %s134
    %s137 = sphi 0, %s136
    %s151 = sphi 0, %s137
    %s155 = sphi 0, %s155
    %s157 = sphi 0, %s155
    %s158 = sphi 0, %s157
    %s172 = sphi 0, %s158
    %s176 = sphi 0, %s176
    %s178 = sphi 0, %s176
    %s179 = sphi 0, %s178
    %s193 = sphi 0, %s179
    %s199 = sphi 0, %s201
    %s202 = sphi 0, %s199
    %s203 = sphi 0, %s202
    %s219 = sphi 0, %s203
  $region4: #{rfda_forward.35} parent=0 // loop_header_branch
    %19 = sbr.rel (%p17) target = $region8
  $region5: #{rfda_forward.35} parent=0 // loop_body
    %s21 = ssub.s32 %s16, 1
    %s22 = ssub.s32 %s16, 2
    %s23 = sadd.s32 %s16, 1
    %s24 = ssub.s32 %s16, %s23
    %p25 = scmp.eq.s32.totalorder %s24, 0
    %s27 = sadd.s32 %s26, 1
    %s28 = scalar_select %p25, %s26, %s27
    %p31 = pneg %p25
    %p32 = scmp.eq.s32.totalorder %s16, 1
    %p33 = por %p31, %p32
    %p34 = scmp.ne.s32.totalorder %s26, %s29
    %p35 = scmp.eq.s32.totalorder %s16, 0
    %p36 = por %p34, %p35
    %p37 = scmp.ne.s32.totalorder %s26, %s29
    %p38 = scmp.eq.s32.totalorder %s21, 1
    %p39 = por %p37, %p38
    %p40 = scmp.ne.s32.totalorder %s29, %s30
    %p41 = scmp.eq.s32.totalorder %s21, 0
    %p42 = por %p40, %p41
    %p43 = scmp.ne.s32.totalorder %s29, %s30
    %p44 = scmp.eq.s32.totalorder %s22, 1
    %p45 = por %p43, %p44
    %p47 = scmp.ne.s32.totalorder %s30, %s46
    %p48 = scmp.eq.s32.totalorder %s22, 0
    %p49 = por %p47, %p48
    %s51 = sadd.s32 %s50, 1
    %p54 = scmp.eq.s32.totalorder %s16, 1
    %p55 = scmp.ne.s32.totalorder %s50, %s52
    %p56 = scmp.eq.s32.totalorder %s16, 0
    %p57 = por %p55, %p56
    %p58 = scmp.ne.s32.totalorder %s50, %s52
    %p59 = scmp.eq.s32.totalorder %s21, 1
    %p60 = por %p58, %p59
    %p61 = scmp.ne.s32.totalorder %s52, %s53
    %p62 = scmp.eq.s32.totalorder %s21, 0
    %p63 = por %p61, %p62
    %p64 = scmp.ne.s32.totalorder %s52, %s53
    %p65 = scmp.eq.s32.totalorder %s22, 1
    %p66 = por %p64, %p65
    %p68 = scmp.ne.s32.totalorder %s53, %s67
    %p69 = scmp.eq.s32.totalorder %s22, 0
    %p70 = por %p68, %p69
    %s72 = sadd.s32 %s71, 1
    %p75 = scmp.eq.s32.totalorder %s16, 1
    %p76 = scmp.ne.s32.totalorder %s71, %s73
    %p77 = scmp.eq.s32.totalorder %s16, 0
    %p78 = por %p76, %p77
    %p79 = scmp.ne.s32.totalorder %s71, %s73
    %p80 = scmp.eq.s32.totalorder %s21, 1
    %p81 = por %p79, %p80
    %p82 = scmp.ne.s32.totalorder %s73, %s74
    %p83 = scmp.eq.s32.totalorder %s21, 0
    %p84 = por %p82, %p83
    %p85 = scmp.ne.s32.totalorder %s73, %s74
    %p86 = scmp.eq.s32.totalorder %s22, 1
    %p87 = por %p85, %p86
    %p89 = scmp.ne.s32.totalorder %s74, %s88
    %p90 = scmp.eq.s32.totalorder %s22, 0
    %p91 = por %p89, %p90
    %s93 = sadd.s32 %s92, 1
    %p96 = scmp.eq.s32.totalorder %s16, 1
    %p97 = scmp.ne.s32.totalorder %s92, %s94
    %p98 = scmp.eq.s32.totalorder %s16, 0
    %p99 = por %p97, %p98
    %p100 = scmp.ne.s32.totalorder %s92, %s94
    %p101 = scmp.eq.s32.totalorder %s21, 1
    %p102 = por %p100, %p101
    %p103 = scmp.ne.s32.totalorder %s94, %s95
    %p104 = scmp.eq.s32.totalorder %s21, 0
    %p105 = por %p103, %p104
    %p106 = scmp.ne.s32.totalorder %s94, %s95
    %p107 = scmp.eq.s32.totalorder %s22, 1
    %p108 = por %p106, %p107
    %p110 = scmp.ne.s32.totalorder %s95, %s109
    %p111 = scmp.eq.s32.totalorder %s22, 0
    %p112 = por %p110, %p111
    %s114 = sadd.s32 %s113, 1
    %p117 = scmp.eq.s32.totalorder %s16, 1
    %p118 = scmp.ne.s32.totalorder %s113, %s115
    %p119 = scmp.eq.s32.totalorder %s16, 0
    %p120 = por %p118, %p119
    %p121 = scmp.ne.s32.totalorder %s113, %s115
    %p122 = scmp.eq.s32.totalorder %s21, 1
    %p123 = por %p121, %p122
    %p124 = scmp.ne.s32.totalorder %s115, %s116
    %p125 = scmp.eq.s32.totalorder %s21, 0
    %p126 = por %p124, %p125
    %p127 = scmp.ne.s32.totalorder %s115, %s116
    %p128 = scmp.eq.s32.totalorder %s22, 1
    %p129 = por %p127, %p128
    %p131 = scmp.ne.s32.totalorder %s116, %s130
    %p132 = scmp.eq.s32.totalorder %s22, 0
    %p133 = por %p131, %p132
    %s135 = sadd.s32 %s134, 1
    %p138 = scmp.eq.s32.totalorder %s16, 1
    %p139 = scmp.ne.s32.totalorder %s134, %s136
    %p140 = scmp.eq.s32.totalorder %s16, 0
    %p141 = por %p139, %p140
    %p142 = scmp.ne.s32.totalorder %s134, %s136
    %p143 = scmp.eq.s32.totalorder %s21, 1
    %p144 = por %p142, %p143
    %p145 = scmp.ne.s32.totalorder %s136, %s137
    %p146 = scmp.eq.s32.totalorder %s21, 0
    %p147 = por %p145, %p146
    %p148 = scmp.ne.s32.totalorder %s136, %s137
    %p149 = scmp.eq.s32.totalorder %s22, 1
    %p150 = por %p148, %p149
    %p152 = scmp.ne.s32.totalorder %s137, %s151
    %p153 = scmp.eq.s32.totalorder %s22, 0
    %p154 = por %p152, %p153
    %s156 = sadd.s32 %s155, 1
    %p159 = scmp.eq.s32.totalorder %s16, 1
    %p160 = scmp.ne.s32.totalorder %s155, %s157
    %p161 = scmp.eq.s32.totalorder %s16, 0
    %p162 = por %p160, %p161
    %p163 = scmp.ne.s32.totalorder %s155, %s157
    %p164 = scmp.eq.s32.totalorder %s21, 1
    %p165 = por %p163, %p164
    %p166 = scmp.ne.s32.totalorder %s157, %s158
    %p167 = scmp.eq.s32.totalorder %s21, 0
    %p168 = por %p166, %p167
    %p169 = scmp.ne.s32.totalorder %s157, %s158
    %p170 = scmp.eq.s32.totalorder %s22, 1
    %p171 = por %p169, %p170
    %p173 = scmp.ne.s32.totalorder %s158, %s172
    %p174 = scmp.eq.s32.totalorder %s22, 0
    %p175 = por %p173, %p174
    %s177 = sadd.s32 %s176, 1
    %p180 = scmp.eq.s32.totalorder %s16, 1
    %p181 = scmp.ne.s32.totalorder %s176, %s178
    %p182 = scmp.eq.s32.totalorder %s16, 0
    %p183 = por %p181, %p182
    %p184 = scmp.ne.s32.totalorder %s176, %s178
    %p185 = scmp.eq.s32.totalorder %s21, 1
    %p186 = por %p184, %p185
    %p187 = scmp.ne.s32.totalorder %s178, %s179
    %p188 = scmp.eq.s32.totalorder %s21, 0
    %p189 = por %p187, %p188
    %p190 = scmp.ne.s32.totalorder %s178, %s179
    %p191 = scmp.eq.s32.totalorder %s22, 1
    %p192 = por %p190, %p191
    %p194 = scmp.ne.s32.totalorder %s179, %s193
    %p195 = scmp.eq.s32.totalorder %s22, 0
    %p196 = por %p194, %p195
    %s197 = ssub.s32 %s16, %s23
    %p198 = scmp.eq.s32.totalorder %s197, 0
    %s200 = sadd.s32 %s199, 1
    %s201 = scalar_select %p198, %s199, %s200
    %p204 = pneg %p198
    %p205 = scmp.eq.s32.totalorder %s16, 1
    %p206 = por %p204, %p205
    %p207 = scmp.ne.s32.totalorder %s199, %s202
    %p208 = scmp.eq.s32.totalorder %s16, 0
    %p209 = por %p207, %p208
    %p210 = scmp.ne.s32.totalorder %s199, %s202
    %p211 = scmp.eq.s32.totalorder %s21, 1
    %p212 = por %p210, %p211
    %p213 = scmp.ne.s32.totalorder %s202, %s203
    %p214 = scmp.eq.s32.totalorder %s21, 0
    %p215 = por %p213, %p214
    %p216 = scmp.ne.s32.totalorder %s202, %s203
    %p217 = scmp.eq.s32.totalorder %s22, 1
    %p218 = por %p216, %p217
    %p220 = scmp.ne.s32.totalorder %s203, %s219
    %p221 = scmp.eq.s32.totalorder %s22, 0
    %p222 = por %p220, %p221
    %p223 = scmp.le.s32.totalorder 1, %s16
    %p224 = scmp.lt.s32.totalorder %s16, 3
    %p225 = pnand %p223, %p224
    %p226 = pneg %p225
    // Predicated region
    $region9: #{rfda_forward.35} parent=5 // pred_check
      _
    $region10: #{rfda_forward.35} parent=5 // pred_check_branch
      %228 = sbr.rel (%p225) target = $region12
    $region11: #{rfda_forward.35} parent=5 // pred_region
      %s229 = ssub.s32 %s16, 1
      // Predicated region
      $region13: #{rfda_forward.35} parent=11 // pred_check
        %p230 = pneg %p63
      $region14: #{rfda_forward.35} parent=11 // pred_check_branch
        %232 = sbr.rel (%p230) target = $region16
      $region15: #{rfda_forward.35} parent=11 // pred_region
        _
      $region16: #{rfda_forward.35} parent=11 // pred_fallthru
        _
      // Predicated region
      $region17: #{rfda_forward.35} parent=11 // pred_check
        %p233 = pneg %p84
      $region18: #{rfda_forward.35} parent=11 // pred_check_branch
        %235 = sbr.rel (%p233) target = $region20
      $region19: #{rfda_forward.35} parent=11 // pred_region
        _
      $region20: #{rfda_forward.35} parent=11 // pred_fallthru
        _
      // Predicated region
      $region21: #{rfda_forward.35} parent=11 // pred_check
        %p236 = pneg %p105
      $region22: #{rfda_forward.35} parent=11 // pred_check_branch
        %238 = sbr.rel (%p236) target = $region24
      $region23: #{rfda_forward.35} parent=11 // pred_region
        _
      $region24: #{rfda_forward.35} parent=11 // pred_fallthru
        _
      // Predicated region
      $region25: #{rfda_forward.35} parent=11 // pred_check
        %p239 = pneg %p126
      $region26: #{rfda_forward.35} parent=11 // pred_check_branch
        %241 = sbr.rel (%p239) target = $region28
      $region27: #{rfda_forward.35} parent=11 // pred_region
        _
      $region28: #{rfda_forward.35} parent=11 // pred_fallthru
        _
      // Predicated region
      $region29: #{rfda_forward.35} parent=11 // pred_check
        %p242 = pneg %p147
      $region30: #{rfda_forward.35} parent=11 // pred_check_branch
        %244 = sbr.rel (%p242) target = $region32
      $region31: #{rfda_forward.35} parent=11 // pred_region
        _
      $region32: #{rfda_forward.35} parent=11 // pred_fallthru
        _
      // Predicated region
      $region33: #{rfda_forward.35} parent=11 // pred_check
        %p245 = pneg %p168
      $region34: #{rfda_forward.35} parent=11 // pred_check_branch
        %247 = sbr.rel (%p245) target = $region36
      $region35: #{rfda_forward.35} parent=11 // pred_region
        _
      $region36: #{rfda_forward.35} parent=11 // pred_fallthru
        _
      // Predicated region
      $region37: #{rfda_forward.35} parent=11 // pred_check
        %p248 = pneg %p189
      $region38: #{rfda_forward.35} parent=11 // pred_check_branch
        %250 = sbr.rel (%p248) target = $region40
      $region39: #{rfda_forward.35} parent=11 // pred_region
        _
      $region40: #{rfda_forward.35} parent=11 // pred_fallthru
        _
    $region12: #{rfda_forward.35} parent=5 // pred_fallthru
      _
    %p251 = scmp.lt.s32.totalorder %s16, 2
    // Predicated region
    $region41: #{rfda_forward.35} parent=5 // pred_check
      %p252 = pneg %p251
    $region42: #{rfda_forward.35} parent=5 // pred_check_branch
      %254 = sbr.rel (%p252) target = $region44
    $region43: #{rfda_forward.35} parent=5 // pred_region
      // Predicated region
      $region45: #{rfda_forward.35} parent=43 // pred_check
        %p255 = pneg %p36
      $region46: #{rfda_forward.35} parent=43 // pred_check_branch
        %257 = sbr.rel (%p255) target = $region48
      $region47: #{rfda_forward.35} parent=43 // pred_region
        %p258 = scmp.lt.s32.totalorder %s16, 1
        %s259 = scalar_select %p258, %s16, 1
        %s260 = smul.addr %s259, 3
        %s261 = smul.addr %s260, 4
        %s262 = scalar_lea.vmem %s0, %s261
      $region48: #{rfda_forward.35} parent=43 // pred_fallthru
        _
    $region44: #{rfda_forward.35} parent=5 // pred_fallthru
      _
    %p263 = scmp.le.s32.totalorder 1, %s16
    %p264 = scmp.lt.s32.totalorder %s16, 3
    %p265 = pnand %p263, %p264
    %p266 = pneg %p265
    // Predicated region
    $region49: #{rfda_forward.35} parent=5 // pred_check
      _
    $region50: #{rfda_forward.35} parent=5 // pred_check_branch
      %268 = sbr.rel (%p265) target = $region52
    $region51: #{rfda_forward.35} parent=5 // pred_region
      %s269 = ssub.s32 %s16, 1
      %p270 = scmp.lt.s32.totalorder %s21, 1
      %s271 = scalar_select %p270, %s21, 1
      %s272 = smul.addr %s271, 3
      %s273 = smul.addr %s272, 4
      %s274 = scalar_lea.vmem %s0, %s273
      %p275 = pneg %p42
      %p276 = pneg %p39
      %p277 = pneg %p63
      %p278 = pneg %p60
      %p279 = pneg %p84
      %p280 = pneg %p81
      %p281 = pneg %p105
      %p282 = pneg %p102
      %p283 = pneg %p126
      %p284 = pneg %p123
      %p285 = pneg %p147
      %p286 = pneg %p144
      %p287 = pneg %p168
      %p288 = pneg %p165
      %p289 = pneg %p189
      %p290 = pneg %p186
      %p291 = pneg %p215
      %p292 = pneg %p212
      %p293 = scmp.lt.s32.totalorder %s21, 1
      %s294 = scalar_select %p293, %s21, 1
      %s295 = smul.addr %s294, 3
      %s296 = scalar_lea.vmem %s8, %s295
      %p297 = scmp.lt.s32.totalorder %s21, 1
      %s298 = scalar_select %p297, %s21, 1
      %s299 = smul.addr %s298, 3
      %s300 = smul.addr %s299, 4
      %s301 = scalar_lea.vmem %s0, %s300
      %p302 = scmp.lt.s32.totalorder %s21, 1
      %s303 = scalar_select %p302, %s21, 1
      %s304 = smul.addr %s303, 3
      %s305 = scalar_lea.vmem %s8, %s304
      %v307 = vld [vmem:[%s1] sm:$0x7]
      %v308 = vld [vmem:[%s301] sm:$0xff]
      %v309 = vld [vmem:[%s301 + $0x8] sm:$0xf]
      %v310 = vld [vmem:[%s2] sm:$0xf]
      %v311 = vld [vmem:[%s3] sm:$0xff]
      %v314 = vunpack.c.l.b16 %v308
      %v315 = vunpack.c.h.b16 %v308
      %v316 = vunpack.c.l.b16 %v309
      %v317 = vpack.c.b16 %v314, %v314
      %v318 = vpack.c.b16 %v315, %v315
      %v319 = vpack.c.b16 %v316, %v316
      %vm320 = vcmask 556032
      %v323 = vsel %vm320, %v319, 0
      %v325 = vrot.slane %v317, 4
      %v326 = vrot.slane %v318, 4
      %v327 = vrot.slane %v323, 4
      %328 = vrot.lane.b32.xlu0 %v325, 127
      %v329 = vpop.permute.xlu0 %328
      %330 = vrot.lane.b32.xlu0 %v326, 127
      %v331 = vpop.permute.xlu0 %330
      %332 = vrot.lane.b32.xlu0 %v327, 127
      %v333 = vpop.permute.xlu0 %332
      %vm334 = vcmask 1039360
      %v335 = vsel %vm334, %v329, %v331
      %v336 = vsel %vm334, %v331, %v333
      %337 = vrot.lane.b32.xlu0 %v317, 126
      %v338 = vpop.permute.xlu0 %337
      %339 = vrot.lane.b32.xlu0 %v318, 126
      %v340 = vpop.permute.xlu0 %339
      %341 = vrot.lane.b32.xlu0 %v323, 126
      %v342 = vpop.permute.xlu0 %341
      %vm343 = vcmask 1031168
      %v344 = vsel %vm343, %v338, %v340
      %v345 = vsel %vm343, %v340, %v342
      %346 = vrot.lane.b32.xlu0 %v325, 110
      %v347 = vpop.permute.xlu0 %346
      %348 = vrot.lane.b32.xlu0 %v326, 110
      %v349 = vpop.permute.xlu0 %348
      %350 = vrot.lane.b32.xlu0 %v327, 110
      %v351 = vpop.permute.xlu0 %350
      %vm352 = vcmask 900096
      %v353 = vsel %vm352, %v347, %v349
      %v354 = vsel %vm352, %v349, %v351
      %355 = vrot.lane.b32.xlu0 %v317, 109
      %v356 = vpop.permute.xlu0 %355
      %357 = vrot.lane.b32.xlu0 %v318, 109
      %v358 = vpop.permute.xlu0 %357
      %359 = vrot.lane.b32.xlu0 %v323, 109
      %v360 = vpop.permute.xlu0 %359
      %vm361 = vcmask 891904
      %v362 = vsel %vm361, %v356, %v358
      %v363 = vsel %vm361, %v358, %v360
      %364 = vrot.lane.b32.xlu0 %v325, 108
      %v365 = vpop.permute.xlu0 %364
      %366 = vrot.lane.b32.xlu0 %v326, 108
      %v367 = vpop.permute.xlu0 %366
      %368 = vrot.lane.b32.xlu0 %v327, 108
      %v369 = vpop.permute.xlu0 %368
      %vm370 = vcmask 883712
      %v371 = vsel %vm370, %v365, %v367
      %v372 = vsel %vm370, %v367, %v369
      %373 = vrot.lane.b32.xlu0 %v317, 92
      %v374 = vpop.permute.xlu0 %373
      %375 = vrot.lane.b32.xlu0 %v318, 92
      %v376 = vpop.permute.xlu0 %375
      %377 = vrot.lane.b32.xlu0 %v323, 92
      %v378 = vpop.permute.xlu0 %377
      %vm379 = vcmask 752640
      %v380 = vsel %vm379, %v374, %v376
      %v381 = vsel %vm379, %v376, %v378
      %382 = vrot.lane.b32.xlu0 %v325, 91
      %v383 = vpop.permute.xlu0 %382
      %384 = vrot.lane.b32.xlu0 %v326, 91
      %v385 = vpop.permute.xlu0 %384
      %386 = vrot.lane.b32.xlu0 %v327, 91
      %v387 = vpop.permute.xlu0 %386
      %vm388 = vcmask 744448
      %v389 = vsel %vm388, %v383, %v385
      %v390 = vsel %vm388, %v385, %v387
      %391 = vrot.lane.b32.xlu0 %v317, 90
      %v392 = vpop.permute.xlu0 %391
      %393 = vrot.lane.b32.xlu0 %v318, 90
      %v394 = vpop.permute.xlu0 %393
      %395 = vrot.lane.b32.xlu0 %v323, 90
      %v396 = vpop.permute.xlu0 %395
      %vm397 = vcmask 736256
      %v398 = vsel %vm397, %v392, %v394
      %v399 = vsel %vm397, %v394, %v396
      %vm400 = vcmask 1043456
      %v403 = vsel %vm400, %v317, %v335
      %v407 = vsel %vm400, %v318, %v336
      %v410 = vsel %vm400, %v323, %v333
      %v414 = vsel %vm400, %v344, %v353
      %v418 = vsel %vm400, %v345, %v354
      %v422 = vsel %vm400, %v342, %v351
      %v426 = vsel %vm400, %v362, %v371
      %v430 = vsel %vm400, %v363, %v372
      %v434 = vsel %vm400, %v360, %v369
      %v438 = vsel %vm400, %v380, %v389
      %v442 = vsel %vm400, %v381, %v390
      %v446 = vsel %vm400, %v378, %v387
      %449 = vset.pattern.permute.xlu0 0
      %450 = vperm.xlu0 %449, %v311
      %v451 = vpop.permute.xlu0 %450
      %vm453 = vcmask 588800
      %v455 = vsel %vm453, %v310, 0
      %v458 = vsel %vm400, %v398, 0
      %v461 = vsel %vm400, %v399, 0
      %v464 = vsel %vm400, %v396, 0
      %466 = vmatpush.bf16.msra.mxu0 0
      %467 = vmatpush.bf16.msra.mxu0 0
      %468 = vmatpush.bf16.msra.mxu0 0
      %469 = vmatpush.bf16.msra.mxu0 %v458
      %470 = vmatpush.bf16.msra.mxu0 %v438
      %471 = vmatpush.bf16.msra.mxu0 %v426
      %472 = vmatpush.bf16.msra.mxu0 %v414
      %473 = vmatpush.bf16.msra.mxu0 %v403
      %474 = vmatmul.bf16.gmra.mxu0 %v455
      %v475 = vpop.f32.mrf.mxu0
      %v476 = vadd.f32 %v451, %v475
      %v477 = vpop.f32.mrf.mxu0
      %478 = vdwg.mxu0
      %479 = vmatpush.bf16.msra.mxu0 0
      %480 = vmatpush.bf16.msra.mxu0 0
      %481 = vmatpush.bf16.msra.mxu0 0
      %482 = vmatpush.bf16.msra.mxu0 %v461
      %483 = vmatpush.bf16.msra.mxu0 %v442
      %484 = vmatpush.bf16.msra.mxu0 %v430
      %485 = vmatpush.bf16.msra.mxu0 %v418
      %486 = vmatpush.bf16.msra.mxu0 %v407
      %487 = vmatmul.bf16.gmra.mxu0 %v455
      %v488 = vpop.f32.mrf.mxu0
      %v489 = vadd.f32 %v451, %v488
      %v490 = vpop.f32.mrf.mxu0
      %491 = vdwg.mxu0
      %492 = vmatpush.bf16.msra.mxu0 0
      %493 = vmatpush.bf16.msra.mxu0 0
      %494 = vmatpush.bf16.msra.mxu0 0
      %495 = vmatpush.bf16.msra.mxu0 %v464
      %496 = vmatpush.bf16.msra.mxu0 %v446
      %497 = vmatpush.bf16.msra.mxu0 %v434
      %498 = vmatpush.bf16.msra.mxu0 %v422
      %499 = vmatpush.bf16.msra.mxu0 %v410
      %500 = vmatmul.bf16.gmra.mxu0 %v455
      %v501 = vpop.f32.mrf.mxu0
      %v502 = vadd.f32 %v451, %v501
      %v503 = vpop.f32.mrf.mxu0
      %504 = vdwg.mxu0
      %v505 = vmax.f32 %v476, 0.0
      %v506 = vmax.f32 %v489, 0.0
      %v507 = vmax.f32 %v502, 0.0
      %v508 = vunpack.c.l.bf16 %v307
      %v510 = vperm.slane %v508, 0
      %v511 = vperm.slane %v508, 2
      %v512 = vperm.slane %v508, 4
      %v516 = vperm.slane %v510, 0
      %v517 = vperm.slane %v511, 0
      %v518 = vperm.slane %v512, 0
      %v519 = vmul.f32 %v505, %v516
      %v520 = vmul.f32 %v506, %v517
      %v521 = vmul.f32 %v507, %v518
      %v522 = vpack.c.bf16 %v520, %v519
      %v523 = vpack.c.bf16 %v521, %v521
      %v526 = vunpack.c.l.b16 %v522
      %v527 = vunpack.c.h.b16 %v522
      %v528 = vunpack.c.l.b16 %v523
      %v529 = vpack.c.b16 %v526, %v526
      %v530 = vpack.c.b16 %v527, %v527
      %v531 = vpack.c.b16 %v528, %v528
      %532 = vrot.lane.b32.xlu0 %v529, 19
      %v533 = vpop.permute.xlu0 %532
      %534 = vrot.lane.b32.xlu0 %v530, 19
      %v535 = vpop.permute.xlu0 %534
      %536 = vrot.lane.b32.xlu0 %v531, 19
      %v537 = vpop.permute.xlu0 %536
      %vm538 = vcmask 154624
      %v539 = vsel %vm538, %v533, %v535
      %v540 = vsel %vm538, %v535, %v537
      %vm541 = vcmask 154624
      %v543 = vsel %vm541, 0, %v533
      %vm544 = vcmask 416768
      %v546 = vsel %vm544, %v540, 0
      %v547 = vld [vmem:[%s4] sm:$0xf]
      %v548 = vld [vmem:[%s5] sm:$0xff]
      %v549 = vsel %vm320, %v546, 0
      %v552 = vrot.slane %v543, 4
      %v553 = vrot.slane %v539, 4
      %v554 = vrot.slane %v549, 4
      %555 = vrot.lane.b32.xlu0 %v552, 127
      %v556 = vpop.permute.xlu0 %555
      %557 = vrot.lane.b32.xlu0 %v553, 127
      %v558 = vpop.permute.xlu0 %557
      %559 = vrot.lane.b32.xlu0 %v554, 127
      %v560 = vpop.permute.xlu0 %559
      %v561 = vsel %vm334, %v556, %v558
      %v562 = vsel %vm334, %v558, %v560
      %563 = vrot.lane.b32.xlu0 %v543, 126
      %v564 = vpop.permute.xlu0 %563
      %565 = vrot.lane.b32.xlu0 %v539, 126
      %v566 = vpop.permute.xlu0 %565
      %567 = vrot.lane.b32.xlu0 %v549, 126
      %v568 = vpop.permute.xlu0 %567
      %v569 = vsel %vm343, %v564, %v566
      %v570 = vsel %vm343, %v566, %v568
      %571 = vrot.lane.b32.xlu0 %v552, 110
      %v572 = vpop.permute.xlu0 %571
      %573 = vrot.lane.b32.xlu0 %v553, 110
      %v574 = vpop.permute.xlu0 %573
      %575 = vrot.lane.b32.xlu0 %v554, 110
      %v576 = vpop.permute.xlu0 %575
      %v577 = vsel %vm352, %v572, %v574
      %v578 = vsel %vm352, %v574, %v576
      %579 = vrot.lane.b32.xlu0 %v543, 109
      %v580 = vpop.permute.xlu0 %579
      %581 = vrot.lane.b32.xlu0 %v539, 109
      %v582 = vpop.permute.xlu0 %581
      %583 = vrot.lane.b32.xlu0 %v549, 109
      %v584 = vpop.permute.xlu0 %583
      %v585 = vsel %vm361, %v580, %v582
      %v586 = vsel %vm361, %v582, %v584
      %587 = vrot.lane.b32.xlu0 %v552, 108
      %v588 = vpop.permute.xlu0 %587
      %589 = vrot.lane.b32.xlu0 %v553, 108
      %v590 = vpop.permute.xlu0 %589
      %591 = vrot.lane.b32.xlu0 %v554, 108
      %v592 = vpop.permute.xlu0 %591
      %v593 = vsel %vm370, %v588, %v590
      %v594 = vsel %vm370, %v590, %v592
      %595 = vrot.lane.b32.xlu0 %v543, 92
      %v596 = vpop.permute.xlu0 %595
      %597 = vrot.lane.b32.xlu0 %v539, 92
      %v598 = vpop.permute.xlu0 %597
      %599 = vrot.lane.b32.xlu0 %v549, 92
      %v600 = vpop.permute.xlu0 %599
      %v601 = vsel %vm379, %v596, %v598
      %v602 = vsel %vm379, %v598, %v600
      %603 = vrot.lane.b32.xlu0 %v552, 91
      %v604 = vpop.permute.xlu0 %603
      %605 = vrot.lane.b32.xlu0 %v553, 91
      %v606 = vpop.permute.xlu0 %605
      %607 = vrot.lane.b32.xlu0 %v554, 91
      %v608 = vpop.permute.xlu0 %607
      %v609 = vsel %vm388, %v604, %v606
      %v610 = vsel %vm388, %v606, %v608
      %611 = vrot.lane.b32.xlu0 %v543, 90
      %v612 = vpop.permute.xlu0 %611
      %613 = vrot.lane.b32.xlu0 %v539, 90
      %v614 = vpop.permute.xlu0 %613
      %615 = vrot.lane.b32.xlu0 %v549, 90
      %v616 = vpop.permute.xlu0 %615
      %v617 = vsel %vm397, %v612, %v614
      %v618 = vsel %vm397, %v614, %v616
      %v620 = vsel %vm400, %v543, %v561
      %v624 = vsel %vm400, %v539, %v562
      %v627 = vsel %vm400, %v549, %v560
      %v631 = vsel %vm400, %v569, %v577
      %v635 = vsel %vm400, %v570, %v578
      %v639 = vsel %vm400, %v568, %v576
      %v643 = vsel %vm400, %v585, %v593
      %v647 = vsel %vm400, %v586, %v594
      %v651 = vsel %vm400, %v584, %v592
      %v655 = vsel %vm400, %v601, %v609
      %v659 = vsel %vm400, %v602, %v610
      %v663 = vsel %vm400, %v600, %v608
      %666 = vset.pattern.permute.xlu0 0
      %667 = vperm.xlu0 %666, %v548
      %v668 = vpop.permute.xlu0 %667
      %v671 = vsel %vm453, %v547, 0
      %v674 = vsel %vm400, %v617, 0
      %v677 = vsel %vm400, %v618, 0
      %v680 = vsel %vm400, %v616, 0
      %682 = vmatpush.bf16.msra.mxu0 0
      %683 = vmatpush.bf16.msra.mxu0 0
      %684 = vmatpush.bf16.msra.mxu0 0
      %685 = vmatpush.bf16.msra.mxu0 %v674
      %686 = vmatpush.bf16.msra.mxu0 %v655
      %687 = vmatpush.bf16.msra.mxu0 %v643
      %688 = vmatpush.bf16.msra.mxu0 %v631
      %689 = vmatpush.bf16.msra.mxu0 %v620
      %690 = vmatmul.bf16.gmra.mxu0 %v671
      %v691 = vpop.f32.mrf.mxu0
      %v692 = vadd.f32 %v668, %v691
      %v693 = vpop.f32.mrf.mxu0
      %694 = vdwg.mxu0
      %695 = vmatpush.bf16.msra.mxu0 0
      %696 = vmatpush.bf16.msra.mxu0 0
      %697 = vmatpush.bf16.msra.mxu0 0
      %698 = vmatpush.bf16.msra.mxu0 %v677
      %699 = vmatpush.bf16.msra.mxu0 %v659
      %700 = vmatpush.bf16.msra.mxu0 %v647
      %701 = vmatpush.bf16.msra.mxu0 %v635
      %702 = vmatpush.bf16.msra.mxu0 %v624
      %703 = vmatmul.bf16.gmra.mxu0 %v671
      %v704 = vpop.f32.mrf.mxu0
      %v705 = vadd.f32 %v668, %v704
      %v706 = vpop.f32.mrf.mxu0
      %707 = vdwg.mxu0
      %708 = vmatpush.bf16.msra.mxu0 0
      %709 = vmatpush.bf16.msra.mxu0 0
      %710 = vmatpush.bf16.msra.mxu0 0
      %711 = vmatpush.bf16.msra.mxu0 %v680
      %712 = vmatpush.bf16.msra.mxu0 %v663
      %713 = vmatpush.bf16.msra.mxu0 %v651
      %714 = vmatpush.bf16.msra.mxu0 %v639
      %715 = vmatpush.bf16.msra.mxu0 %v627
      %716 = vmatmul.bf16.gmra.mxu0 %v671
      %v717 = vpop.f32.mrf.mxu0
      %v718 = vadd.f32 %v668, %v717
      %v719 = vpop.f32.mrf.mxu0
      %720 = vdwg.mxu0
      %v721 = vmax.f32 %v692, 0.0
      %v722 = vmax.f32 %v705, 0.0
      %v723 = vmax.f32 %v718, 0.0
      %v724 = vmul.f32 %v721, %v516
      %v725 = vmul.f32 %v722, %v517
      %v726 = vmul.f32 %v723, %v518
      %v727 = vpack.c.bf16 %v725, %v724
      %v728 = vpack.c.bf16 %v726, %v726
      %v731 = vunpack.c.l.b16 %v727
      %v732 = vunpack.c.h.b16 %v727
      %v733 = vunpack.c.l.b16 %v728
      %v734 = vpack.c.b16 %v731, %v731
      %v735 = vpack.c.b16 %v732, %v732
      %v736 = vpack.c.b16 %v733, %v733
      %737 = vrot.lane.b32.xlu0 %v734, 19
      %v738 = vpop.permute.xlu0 %737
      %739 = vrot.lane.b32.xlu0 %v735, 19
      %v740 = vpop.permute.xlu0 %739
      %741 = vrot.lane.b32.xlu0 %v736, 19
      %v742 = vpop.permute.xlu0 %741
      %v743 = vsel %vm538, %v738, %v740
      %v744 = vsel %vm538, %v740, %v742
      %v746 = vsel %vm541, 0, %v738
      %v748 = vsel %vm544, %v744, 0
      %v749 = vld [vmem:[%s6] sm:$0x1]
      %v750 = vld [vmem:[#allocation2] sm:$0x1]
      %v751 = vsel %vm320, %v748, 0
      %v754 = vrot.slane %v746, 4
      %v755 = vrot.slane %v743, 4
      %v756 = vrot.slane %v751, 4
      %757 = vrot.lane.b32.xlu0 %v754, 127
      %v758 = vpop.permute.xlu0 %757
      %759 = vrot.lane.b32.xlu0 %v755, 127
      %v760 = vpop.permute.xlu0 %759
      %761 = vrot.lane.b32.xlu0 %v756, 127
      %v762 = vpop.permute.xlu0 %761
      %v763 = vsel %vm334, %v758, %v760
      %v764 = vsel %vm334, %v760, %v762
      %765 = vrot.lane.b32.xlu0 %v746, 126
      %v766 = vpop.permute.xlu0 %765
      %767 = vrot.lane.b32.xlu0 %v743, 126
      %v768 = vpop.permute.xlu0 %767
      %769 = vrot.lane.b32.xlu0 %v751, 126
      %v770 = vpop.permute.xlu0 %769
      %v771 = vsel %vm343, %v766, %v768
      %v772 = vsel %vm343, %v768, %v770
      %773 = vrot.lane.b32.xlu0 %v754, 110
      %v774 = vpop.permute.xlu0 %773
      %775 = vrot.lane.b32.xlu0 %v755, 110
      %v776 = vpop.permute.xlu0 %775
      %777 = vrot.lane.b32.xlu0 %v756, 110
      %v778 = vpop.permute.xlu0 %777
      %v779 = vsel %vm352, %v774, %v776
      %v780 = vsel %vm352, %v776, %v778
      %781 = vrot.lane.b32.xlu0 %v746, 109
      %v782 = vpop.permute.xlu0 %781
      %783 = vrot.lane.b32.xlu0 %v743, 109
      %v784 = vpop.permute.xlu0 %783
      %785 = vrot.lane.b32.xlu0 %v751, 109
      %v786 = vpop.permute.xlu0 %785
      %v787 = vsel %vm361, %v782, %v784
      %v788 = vsel %vm361, %v784, %v786
      %789 = vrot.lane.b32.xlu0 %v754, 108
      %v790 = vpop.permute.xlu0 %789
      %791 = vrot.lane.b32.xlu0 %v755, 108
      %v792 = vpop.permute.xlu0 %791
      %793 = vrot.lane.b32.xlu0 %v756, 108
      %v794 = vpop.permute.xlu0 %793
      %v795 = vsel %vm370, %v790, %v792
      %v796 = vsel %vm370, %v792, %v794
      %797 = vrot.lane.b32.xlu0 %v746, 92
      %v798 = vpop.permute.xlu0 %797
      %799 = vrot.lane.b32.xlu0 %v743, 92
      %v800 = vpop.permute.xlu0 %799
      %801 = vrot.lane.b32.xlu0 %v751, 92
      %v802 = vpop.permute.xlu0 %801
      %v803 = vsel %vm379, %v798, %v800
      %v804 = vsel %vm379, %v800, %v802
      %805 = vrot.lane.b32.xlu0 %v754, 91
      %v806 = vpop.permute.xlu0 %805
      %807 = vrot.lane.b32.xlu0 %v755, 91
      %v808 = vpop.permute.xlu0 %807
      %809 = vrot.lane.b32.xlu0 %v756, 91
      %v810 = vpop.permute.xlu0 %809
      %v811 = vsel %vm388, %v806, %v808
      %v812 = vsel %vm388, %v808, %v810
      %813 = vrot.lane.b32.xlu0 %v746, 90
      %v814 = vpop.permute.xlu0 %813
      %815 = vrot.lane.b32.xlu0 %v743, 90
      %v816 = vpop.permute.xlu0 %815
      %817 = vrot.lane.b32.xlu0 %v751, 90
      %v818 = vpop.permute.xlu0 %817
      %v819 = vsel %vm397, %v814, %v816
      %v820 = vsel %vm397, %v816, %v818
      %v822 = vsel %vm400, %v746, %v763
      %v826 = vsel %vm400, %v743, %v764
      %v829 = vsel %vm400, %v751, %v762
      %v833 = vsel %vm400, %v771, %v779
      %v837 = vsel %vm400, %v772, %v780
      %v841 = vsel %vm400, %v770, %v778
      %v845 = vsel %vm400, %v787, %v795
      %v849 = vsel %vm400, %v788, %v796
      %v853 = vsel %vm400, %v786, %v794
      %v857 = vsel %vm400, %v803, %v811
      %v861 = vsel %vm400, %v804, %v812
      %v865 = vsel %vm400, %v802, %v810
      %868 = vset.pattern.permute.xlu0 0
      %869 = vperm.xlu0 %868, %v750
      %v870 = vpop.permute.xlu0 %869
      %v872 = vperm.slane %v870, 0
      %v874 = vsel %vm453, %v749, 0
      %v877 = vsel %vm400, %v819, 0
      %v880 = vsel %vm400, %v820, 0
      %v883 = vsel %vm400, %v818, 0
      %885 = vmatpush.bf16.msra.mxu0 0
      %886 = vmatpush.bf16.msra.mxu0 0
      %887 = vmatpush.bf16.msra.mxu0 0
      %888 = vmatpush.bf16.msra.mxu0 %v877
      %889 = vmatpush.bf16.msra.mxu0 %v857
      %890 = vmatpush.bf16.msra.mxu0 %v845
      %891 = vmatpush.bf16.msra.mxu0 %v833
      %892 = vmatpush.bf16.msra.mxu0 %v822
      %893 = vmatmul.bf16.gmra.mxu0 %v874
      %v894 = vpop.f32.mrf.mxu0
      %v895 = vadd.f32 %v872, %v894
      %v896 = vpop.f32.mrf.mxu0
      %897 = vdwg.mxu0
      %898 = vmatpush.bf16.msra.mxu0 0
      %899 = vmatpush.bf16.msra.mxu0 0
      %900 = vmatpush.bf16.msra.mxu0 0
      %901 = vmatpush.bf16.msra.mxu0 %v880
      %902 = vmatpush.bf16.msra.mxu0 %v861
      %903 = vmatpush.bf16.msra.mxu0 %v849
      %904 = vmatpush.bf16.msra.mxu0 %v837
      %905 = vmatpush.bf16.msra.mxu0 %v826
      %906 = vmatmul.bf16.gmra.mxu0 %v874
      %v907 = vpop.f32.mrf.mxu0
      %v908 = vadd.f32 %v872, %v907
      %v909 = vpop.f32.mrf.mxu0
      %910 = vdwg.mxu0
      %911 = vmatpush.bf16.msra.mxu0 0
      %912 = vmatpush.bf16.msra.mxu0 0
      %913 = vmatpush.bf16.msra.mxu0 0
      %914 = vmatpush.bf16.msra.mxu0 %v883
      %915 = vmatpush.bf16.msra.mxu0 %v865
      %916 = vmatpush.bf16.msra.mxu0 %v853
      %917 = vmatpush.bf16.msra.mxu0 %v841
      %918 = vmatpush.bf16.msra.mxu0 %v829
      %919 = vmatmul.bf16.gmra.mxu0 %v874
      %v920 = vpop.f32.mrf.mxu0
      %v921 = vadd.f32 %v872, %v920
      %v922 = vpop.f32.mrf.mxu0
      %923 = vdwg.mxu0
      %v927 = vrot.slane %v908, 7
      %v928 = vrot.slane %v921, 6
      %vm929 = vcmask 1040384
      %v930 = vsel %vm929, %v895, %v927
      %vm931 = vcmask 1041408
      %v932 = vsel %vm931, %v930, %v928
      %v934 = vlaneseq
      %vm935 = vcmp.ge.s32.totalorder %v934, 0
      %vm936 = vcmp.lt.s32.totalorder %v934, 288
      %vm937 = vmand %vm935, %vm936
      %938 = vst.msk [vmem:[%s305] sm:$0x7] %vm937, %v932
      %p939 = scmp.lt.s32.totalorder %s21, 1
      %s940 = scalar_select %p939, %s21, 1
      %s941 = smul.addr %s940, 3
      %s942 = scalar_lea.vmem %s8, %s941
      // Predicated region
      $region53: #{rfda_forward.35} parent=51 // pred_check
        %p943 = pneg %p212
      $region54: #{rfda_forward.35} parent=51 // pred_check_branch
        %945 = sbr.rel (%p943) target = $region56
      $region55: #{rfda_forward.35} parent=51 // pred_region
        _
      $region56: #{rfda_forward.35} parent=51 // pred_fallthru
        _
    $region52: #{rfda_forward.35} parent=5 // pred_fallthru
      _
    %p946 = scmp.le.s32.totalorder 2, %s16
    // Predicated region
    $region57: #{rfda_forward.35} parent=5 // pred_check
      %p947 = pneg %p946
    $region58: #{rfda_forward.35} parent=5 // pred_check_branch
      %949 = sbr.rel (%p947) target = $region60
    $region59: #{rfda_forward.35} parent=5 // pred_region
      %s950 = ssub.s32 %s16, 2
      // Predicated region
      $region61: #{rfda_forward.35} parent=59 // pred_check
        %p951 = pneg %p218
      $region62: #{rfda_forward.35} parent=59 // pred_check_branch
        %953 = sbr.rel (%p951) target = $region64
      $region63: #{rfda_forward.35} parent=59 // pred_region
        %p954 = scmp.lt.s32.totalorder %s22, 1
        %s955 = scalar_select %p954, %s22, 1
        %s956 = smul.addr %s955, 3
        %s957 = scalar_lea.vmem %s8, %s956
      $region64: #{rfda_forward.35} parent=59 // pred_fallthru
        _
    $region60: #{rfda_forward.35} parent=5 // pred_fallthru
      _
  $region6: #{rfda_forward.35} parent=0 // loop_footer
    %s20 = sadd.s32 1, %s16
  $region7: #{rfda_forward.35} parent=0 // loop_footer_branch
    %15 = sbr.rel target = $region3
  $region8: #{rfda_forward.35} parent=0 // loop_exit
    _

</llo_original>
